<compile_context>
chip_gen: v5e
topology: v5e:2x2
jax: 0.10.0
libtpu: 0.0.40
codegen_flags: <defaults>
</compile_context>

<pallas_src>
import functools
import math

import jax
import jax.numpy as jnp
from jax.experimental import pallas as pl
from jax.experimental.pallas import tpu as pltpu

# ----------------------------- config -----------------------------
HID_DIM = 32
N_HEADS = 4
HEAD_DIM = HID_DIM // N_HEADS
PF_DIM = 64
N_LAYERS = 2
SRC_VOCAB = 20
TRG_VOCAB = 22
TYPE_VOCAB = 4
MAX_LEN = 32
SRC_PAD_IDX = 0
TRG_PAD_IDX = 0
LN_EPS = 1e-5
NEG_INF = -1e10
INV_SQRT_HEAD = 1.0 / math.sqrt(HEAD_DIM)
EMB_SCALE = math.sqrt(HID_DIM)
LOGIT_PAD = 128          # lane-dense logits (TRG_VOCAB padded to 128 lanes)
SUBLANE = 8              # sequence lengths padded to a multiple of this


# ----------------------- in-kernel helper math -----------------------

def _layer_norm(x, g, b):
    """x: [M, H]; g, b: [1, H]. PyTorch nn.LayerNorm (eps=1e-5)."""
    mean = jnp.mean(x, axis=-1, keepdims=True)
    cen = x - mean
    var = jnp.mean(cen * cen, axis=-1, keepdims=True)
    return cen * jax.lax.rsqrt(var + LN_EPS) * g + b


def _mha(q2d, k2d, v2d, bias, wo, bo, batch, lq, lk, attn_ref=None):
    """Multi-head attention with the output projection (Wo) fused in.

    q2d: [batch*lq, H]   (1/sqrt(head_dim) already folded into the Q weights)
    k2d, v2d: [batch*lk, H]
    bias: [batch, lq, lk] additive mask (0 visible / -1e10 masked), head-shared
    wo: [H, H]; bo: [1, H]
    Returns [batch*lq, H] = sum_h (softmax(q_h k_h^T + bias) v_h) @ Wo[h*HD:(h+1)*HD, :]
    If attn_ref ([N_HEADS, batch, lq, lk]) is given, the exact attention
    probabilities are stored there.
    """
    # lq/lk are padded to multiples of 8, so these reshapes are aligned relabels.
    q3 = q2d.reshape(batch, lq, HID_DIM)
    k3 = k2d.reshape(batch, lk, HID_DIM)
    v3 = v2d.reshape(batch, lk, HID_DIM)
    out = None
    for h in range(N_HEADS):                       # static unroll, no concatenates
        cs = slice(h * HEAD_DIM, (h + 1) * HEAD_DIM)
        qh = q3[:, :, cs]                          # [B, lq, HD]
        kh = k3[:, :, cs]                          # [B, lk, HD]
        vh = v3[:, :, cs]                          # [B, lk, HD]
        # scores: contract last dims directly (no materialized k.T)
        s = jnp.einsum("bqd,bkd->bqk", qh, kh,
                       preferred_element_type=jnp.float32) + bias
        s = s - jnp.max(s, axis=-1, keepdims=True)
        p = jnp.exp(s)
        denom = jnp.sum(p, axis=-1, keepdims=True)
        if attn_ref is not None:
            p = p / denom                          # exact: this one is a model output
            attn_ref[h] = p
        else:
            p = p * pl.reciprocal(denom, approx=True)   # EUP slot
        oh = jnp.einsum("bqk,bkd->bqd", p, vh,
                        preferred_element_type=jnp.float32)         # [B, lq, HD]
        part = jnp.dot(oh.reshape(batch * lq, HEAD_DIM), wo[cs, :],
                       preferred_element_type=jnp.float32)          # [B*lq, H]
        out = part if out is None else out + part
    return out + bo


# --------------------------- fused kernel ---------------------------

def _seq2seq_kernel(
        xe_ref, xd_ref, sbias_ref, tbias_ref, cbias_ref,
        # encoder weights (stacked over layers)
        e_wqkv, e_bqkv, e_wo, e_bo, e_ln1g, e_ln1b,
        e_w1, e_b1, e_w2, e_b2, e_ln2g, e_ln2b,
        # decoder weights
        s_wqkv, s_bqkv, s_wo, s_bo, d_ln1g, d_ln1b,
        c_wq, c_bq, c_wkv, c_bkv, c_wo, c_bo, d_ln2g, d_ln2b,
        d_w1, d_b1, d_w2, d_b2, d_ln3g, d_ln3b,
        w_out, b_out,
        # outputs
        logits_ref, attn_ref,
        *, batch, slen, tlen):
    f32 = jnp.float32

    # ------------------------------ encoder ------------------------------
    x = xe_ref[...]                                          # [B*S, H]
    sbias = sbias_ref[...]                                   # [B, S, S]
    for l in range(N_LAYERS):
        qkv = jnp.dot(x, e_wqkv[l], preferred_element_type=f32) + e_bqkv[l]
        a = _mha(qkv[:, :HID_DIM], qkv[:, HID_DIM:2 * HID_DIM],
                 qkv[:, 2 * HID_DIM:], sbias, e_wo[l], e_bo[l],
                 batch, slen, slen)                          # encoder attn not returned
        x = _layer_norm(x + a, e_ln1g[l], e_ln1b[l])
        hdn = jnp.maximum(jnp.dot(x, e_w1[l], preferred_element_type=f32) + e_b1[l], 0.0)
        hdn = jnp.dot(hdn, e_w2[l], preferred_element_type=f32) + e_b2[l]
        x = _layer_norm(x + hdn, e_ln2g[l], e_ln2b[l])
    enc = x                                                  # stays resident in VMEM

    # ------------------------------ decoder ------------------------------
    tbias = tbias_ref[...]                                   # [B, T, T]
    cbias = cbias_ref[...]                                   # [B, T, S]
    # hoisted cross-attention K/V for ALL layers in one 128-lane-dense matmul
    ckv = jnp.dot(enc, c_wkv[...], preferred_element_type=f32) + c_bkv[...]   # [B*S, 128]

    x = xd_ref[...]                                          # [B*T, H]
    for l in range(N_LAYERS):
        # masked self-attention
        qkv = jnp.dot(x, s_wqkv[l], preferred_element_type=f32) + s_bqkv[l]
        a = _mha(qkv[:, :HID_DIM], qkv[:, HID_DIM:2 * HID_DIM],
                 qkv[:, 2 * HID_DIM:], tbias, s_wo[l], s_bo[l],
                 batch, tlen, tlen)
        x = _layer_norm(x + a, d_ln1g[l], d_ln1b[l])

        # cross-attention (probabilities emitted only for the last layer)
        q = jnp.dot(x, c_wq[l], preferred_element_type=f32) + c_bq[l]
        off = l * 2 * HID_DIM
        a = _mha(q, ckv[:, off:off + HID_DIM],
                 ckv[:, off + HID_DIM:off + 2 * HID_DIM],
                 cbias, c_wo[l], c_bo[l], batch, tlen, slen,
                 attn_ref if l == N_LAYERS - 1 else None)
        x = _layer_norm(x + a, d_ln2g[l], d_ln2b[l])

        # position-wise feed-forward
        hdn = jnp.maximum(jnp.dot(x, d_w1[l], preferred_element_type=f32) + d_b1[l], 0.0)
        hdn = jnp.dot(hdn, d_w2[l], preferred_element_type=f32) + d_b2[l]
        x = _layer_norm(x + hdn, d_ln3g[l], d_ln3b[l])

    # lane-dense (128-wide) logits; the wrapper slices back to TRG_VOCAB
    logits_ref[...] = jnp.dot(x, w_out[...], preferred_element_type=f32) + b_out[...]


# --------------------------- model wrappers ---------------------------

def _round_up(n, m):
    return (n + m - 1) // m * m


def _pad_axis(x, target, axis, value):
    pad = target - x.shape[axis]
    if pad == 0:
        return x
    widths = [(0, 0)] * x.ndim
    widths[axis] = (0, pad)
    return jnp.pad(x, widths, constant_values=value)


def make_src_bias(src, q_len):
    """(src != pad) -> additive bias [B, q_len, S]: 0 visible, -1e10 masked."""
    B, S = src.shape
    bias = jnp.where(src != SRC_PAD_IDX, 0.0, NEG_INF).astype(jnp.float32)
    return jnp.broadcast_to(bias[:, None, :], (B, q_len, S))


def make_trg_bias(trg):
    """pad mask [B,1,T] & tril [T,T] -> additive bias [B, T, T]."""
    B, T = trg.shape
    pad = (trg != TRG_PAD_IDX)[:, None, :]
    sub = jnp.tril(jnp.ones((T, T), dtype=bool))[None, :, :]
    return jnp.where(pad & sub, 0.0, NEG_INF).astype(jnp.float32)


def seq2seq_forward(params, src, trg, tok_types):
    B, S = src.shape
    T = trg.shape[1]
    ep, dp = params["encoder"], params["decoder"]

    # Pad sequence lengths to a sublane multiple: padded positions are pad
    # tokens (masked as keys); padded query rows are sliced off below.
    S_P, T_P = _round_up(S, SUBLANE), _round_up(T, SUBLANE)
    src_p = _pad_axis(src, S_P, 1, SRC_PAD_IDX)
    trg_p = _pad_axis(trg, T_P, 1, TRG_PAD_IDX)
    typ_p = _pad_axis(tok_types, S_P, 1, 0)

    src_bias = make_src_bias(src_p, S_P)      # [B, S_P, S_P] encoder self-attn
    cross_bias = make_src_bias(src_p, T_P)    # [B, T_P, S_P] decoder cross-attn
    trg_bias = make_trg_bias(trg_p)           # [B, T_P, T_P] decoder self-attn

    xe = (ep["tok_emb"][src_p] * EMB_SCALE
          + ep["pos_emb"][jnp.arange(S_P)][None, :, :]
          + ep["type_emb"][typ_p]).reshape(B * S_P, HID_DIM)
    xd = (dp["tok_emb"][trg_p] * EMB_SCALE
          + dp["pos_emb"][jnp.arange(T_P)][None, :, :]).reshape(B * T_P, HID_DIM)

    kernel = functools.partial(_seq2seq_kernel, batch=B, slen=S_P, tlen=T_P)
    logits_pad, attn_raw = pl.pallas_call(
        kernel,
        out_shape=(jax.ShapeDtypeStruct((B * T_P, LOGIT_PAD), jnp.float32),
                   jax.ShapeDtypeStruct((N_HEADS, B, T_P, S_P), jnp.float32)),
        compiler_params=pltpu.CompilerParams(),
        cost_estimate=pl.CostEstimate(flops=2_000_000, transcendentals=4_000,
                                      bytes_accessed=220_000),
    )(xe, xd, src_bias, trg_bias, cross_bias,
      ep["wqkv"], ep["bqkv"], ep["wo"], ep["bo"], ep["ln1_g"], ep["ln1_b"],
      ep["w1"], ep["b1"], ep["w2"], ep["b2"], ep["ln2_g"], ep["ln2_b"],
      dp["s_wqkv"], dp["s_bqkv"], dp["s_wo"], dp["s_bo"], dp["ln1_g"], dp["ln1_b"],
      dp["c_wq"], dp["c_bq"], dp["c_wkv"], dp["c_bkv"], dp["c_wo"], dp["c_bo"],
      dp["ln2_g"], dp["ln2_b"],
      dp["w1"], dp["b1"], dp["w2"], dp["b2"], dp["ln3_g"], dp["ln3_b"],
      dp["w_out"], dp["b_out"])

    output = logits_pad.reshape(B, T_P, LOGIT_PAD)[:, :T, :TRG_VOCAB]
    attention = jnp.transpose(attn_raw, (1, 0, 2, 3))[:, :, :T, :S]
    return output, attention


# --------------------------- deterministic params ---------------------------

def _w(key, fan_in, fan_out):
    return 0.02 * jax.random.normal(key, (fan_in, fan_out), jnp.float32)


def _stack_linear(key, fan_in, fan_out, n=N_LAYERS):
    ks = jax.random.split(key, n)
    w = jnp.stack([_w(k, fan_in, fan_out) for k in ks])        # [L, in, out]
    b = jnp.zeros((n, 1, fan_out), jnp.float32)                # [L, 1, out]
    return w, b


def _stack_ln(n=N_LAYERS):
    return (jnp.ones((n, 1, HID_DIM), jnp.float32),
            jnp.zeros((n, 1, HID_DIM), jnp.float32))


def _fold_q_scale(w, b, q_cols=HID_DIM):
    """Fold 1/sqrt(head_dim) into the Q output columns at init time."""
    w = w.at[..., :q_cols].multiply(INV_SQRT_HEAD)
    b = b.at[..., :q_cols].multiply(INV_SQRT_HEAD)
    return w, b


def init_params(key):
    ke, kd = jax.random.split(key)
    ek = jax.random.split(ke, 7)
    dk = jax.random.split(kd, 10)

    e_wqkv, e_bqkv = _fold_q_scale(*_stack_linear(ek[3], HID_DIM, 3 * HID_DIM))
    e_wo, e_bo = _stack_linear(ek[4], HID_DIM, HID_DIM)
    e_w1, e_b1 = _stack_linear(ek[5], HID_DIM, PF_DIM)
    e_w2, e_b2 = _stack_linear(ek[6], PF_DIM, HID_DIM)
    e_ln1, e_ln2 = _stack_ln(), _stack_ln()
    encoder = {
        "tok_emb": 0.02 * jax.random.normal(ek[0], (SRC_VOCAB, HID_DIM), jnp.float32),
        "pos_emb": 0.02 * jax.random.normal(ek[1], (MAX_LEN, HID_DIM), jnp.float32),
        "type_emb": 0.02 * jax.random.normal(ek[2], (TYPE_VOCAB, HID_DIM), jnp.float32),
        "wqkv": e_wqkv, "bqkv": e_bqkv, "wo": e_wo, "bo": e_bo,
        "ln1_g": e_ln1[0], "ln1_b": e_ln1[1],
        "w1": e_w1, "b1": e_b1, "w2": e_w2, "b2": e_b2,
        "ln2_g": e_ln2[0], "ln2_b": e_ln2[1],
    }

    d_s_wqkv, d_s_bqkv = _fold_q_scale(*_stack_linear(dk[2], HID_DIM, 3 * HID_DIM))
    d_s_wo, d_s_bo = _stack_linear(dk[3], HID_DIM, HID_DIM)
    d_c_wq, d_c_bq = _fold_q_scale(*_stack_linear(dk[4], HID_DIM, HID_DIM))
    # cross-attention K/V for all layers fused into one [32, 128] weight
    kv_keys = jax.random.split(dk[5], N_LAYERS)
    d_c_wkv = jnp.concatenate([_w(k, HID_DIM, 2 * HID_DIM) for k in kv_keys], axis=1)
    d_c_bkv = jnp.zeros((1, N_LAYERS * 2 * HID_DIM), jnp.float32)
    d_c_wo, d_c_bo = _stack_linear(dk[6], HID_DIM, HID_DIM)
    d_w1, d_b1 = _stack_linear(dk[7], HID_DIM, PF_DIM)
    d_w2, d_b2 = _stack_linear(dk[8], PF_DIM, HID_DIM)
    ln1, ln2, ln3 = _stack_ln(), _stack_ln(), _stack_ln()
    # output projection padded to 128 lanes (columns >= TRG_VOCAB stay zero and
    # are sliced off in the wrapper before any downstream use)
    w_out = jnp.zeros((HID_DIM, LOGIT_PAD), jnp.float32)
    w_out = w_out.at[:, :TRG_VOCAB].set(_w(dk[9], HID_DIM, TRG_VOCAB))
    b_out = jnp.zeros((1, LOGIT_PAD), jnp.float32)
    decoder = {
        "tok_emb": 0.02 * jax.random.normal(dk[0], (TRG_VOCAB, HID_DIM), jnp.float32),
        "pos_emb": 0.02 * jax.random.normal(dk[1], (MAX_LEN, HID_DIM), jnp.float32),
        "s_wqkv": d_s_wqkv, "s_bqkv": d_s_bqkv, "s_wo": d_s_wo, "s_bo": d_s_bo,
        "ln1_g": ln1[0], "ln1_b": ln1[1],
        "c_wq": d_c_wq, "c_bq": d_c_bq, "c_wkv": d_c_wkv, "c_bkv": d_c_bkv,
        "c_wo": d_c_wo, "c_bo": d_c_bo,
        "ln2_g": ln2[0], "ln2_b": ln2[1],
        "w1": d_w1, "b1": d_b1, "w2": d_w2, "b2": d_b2,
        "ln3_g": ln3[0], "ln3_b": ln3[1],
        "w_out": w_out, "b_out": b_out,
    }
    return {"encoder": encoder, "decoder": decoder}


# ------------------------------- main -------------------------------

if __name__ == "__main__":
    B, S, T = 2, 8, 7
    key = jax.random.PRNGKey(0)
    kp, ks, kt, ky = jax.random.split(key, 4)

    params = init_params(kp)

    src = jax.random.randint(ks, (B, S), 1, SRC_VOCAB).astype(jnp.int32)
    src = src.at[:, -2:].set(SRC_PAD_IDX)                    # some padding tokens
    trg = jax.random.randint(kt, (B, T), 1, TRG_VOCAB).astype(jnp.int32)
    trg = trg.at[:, -1:].set(TRG_PAD_IDX)
    tok_types = jax.random.randint(ky, (B, S), 0, TYPE_VOCAB).astype(jnp.int32)

    fwd = jax.jit(seq2seq_forward)
    output, attention = fwd(params, src, trg, tok_types)
    jax.block_until_ready((output, attention))

    assert output.shape == (B, T, TRG_VOCAB)
    assert attention.shape == (B, N_HEADS, T, S)
    assert bool(jnp.all(jnp.isfinite(output)))
    assert bool(jnp.all(jnp.isfinite(attention)))
    # returned cross-attention uses exact softmax normalization -> rows sum to 1
    row_sums = jnp.sum(attention, axis=-1)
    assert bool(jnp.all(jnp.abs(row_sums - 1.0) < 1e-3))
    print("KERNEL_OK")
</pallas_src>

<mosaic_0001>
module attributes {stable_mosaic.version = 11 : i64} {
  func.func @_seq2seq_kernel(%arg0: memref<16x32xf32, #tpu.memory_space<vmem>>, %arg1: memref<16x32xf32, #tpu.memory_space<vmem>>, %arg2: memref<2x8x8xf32, #tpu.memory_space<vmem>>, %arg3: memref<2x8x8xf32, #tpu.memory_space<vmem>>, %arg4: memref<2x8x8xf32, #tpu.memory_space<vmem>>, %arg5: memref<2x32x96xf32, #tpu.memory_space<vmem>>, %arg6: memref<2x1x96xf32, #tpu.memory_space<vmem>>, %arg7: memref<2x32x32xf32, #tpu.memory_space<vmem>>, %arg8: memref<2x1x32xf32, #tpu.memory_space<vmem>>, %arg9: memref<2x1x32xf32, #tpu.memory_space<vmem>>, %arg10: memref<2x1x32xf32, #tpu.memory_space<vmem>>, %arg11: memref<2x32x64xf32, #tpu.memory_space<vmem>>, %arg12: memref<2x1x64xf32, #tpu.memory_space<vmem>>, %arg13: memref<2x64x32xf32, #tpu.memory_space<vmem>>, %arg14: memref<2x1x32xf32, #tpu.memory_space<vmem>>, %arg15: memref<2x1x32xf32, #tpu.memory_space<vmem>>, %arg16: memref<2x1x32xf32, #tpu.memory_space<vmem>>, %arg17: memref<2x32x96xf32, #tpu.memory_space<vmem>>, %arg18: memref<2x1x96xf32, #tpu.memory_space<vmem>>, %arg19: memref<2x32x32xf32, #tpu.memory_space<vmem>>, %arg20: memref<2x1x32xf32, #tpu.memory_space<vmem>>, %arg21: memref<2x1x32xf32, #tpu.memory_space<vmem>>, %arg22: memref<2x1x32xf32, #tpu.memory_space<vmem>>, %arg23: memref<2x32x32xf32, #tpu.memory_space<vmem>>, %arg24: memref<2x1x32xf32, #tpu.memory_space<vmem>>, %arg25: memref<32x128xf32, #tpu.memory_space<vmem>>, %arg26: memref<1x128xf32, #tpu.memory_space<vmem>>, %arg27: memref<2x32x32xf32, #tpu.memory_space<vmem>>, %arg28: memref<2x1x32xf32, #tpu.memory_space<vmem>>, %arg29: memref<2x1x32xf32, #tpu.memory_space<vmem>>, %arg30: memref<2x1x32xf32, #tpu.memory_space<vmem>>, %arg31: memref<2x32x64xf32, #tpu.memory_space<vmem>>, %arg32: memref<2x1x64xf32, #tpu.memory_space<vmem>>, %arg33: memref<2x64x32xf32, #tpu.memory_space<vmem>>, %arg34: memref<2x1x32xf32, #tpu.memory_space<vmem>>, %arg35: memref<2x1x32xf32, #tpu.memory_space<vmem>>, %arg36: memref<2x1x32xf32, #tpu.memory_space<vmem>>, %arg37: memref<32x128xf32, #tpu.memory_space<vmem>>, %arg38: memref<1x128xf32, #tpu.memory_space<vmem>>, %arg39: memref<16x128xf32, #tpu.memory_space<vmem>>, %arg40: memref<4x2x8x8xf32, #tpu.memory_space<vmem>>) attributes {dimension_semantics = [], scalar_prefetch = 0 : i64, scratch_operands = 0 : i64, tpu.core_type = #tpu.core_type<tc>} {
    %c0 = arith.constant 0 : index
    %c0_0 = arith.constant 0 : index
    %0 = vector.load %arg0[%c0, %c0_0] : memref<16x32xf32, #tpu.memory_space<vmem>>, vector<16x32xf32>
    %c0_1 = arith.constant 0 : index
    %c0_2 = arith.constant 0 : index
    %c0_3 = arith.constant 0 : index
    %1 = vector.load %arg2[%c0_1, %c0_2, %c0_3] : memref<2x8x8xf32, #tpu.memory_space<vmem>>, vector<2x8x8xf32>
    %c0_4 = arith.constant 0 : index
    %c0_5 = arith.constant 0 : index
    %c0_6 = arith.constant 0 : index
    %2 = vector.load %arg5[%c0_4, %c0_5, %c0_6] : memref<2x32x96xf32, #tpu.memory_space<vmem>>, vector<1x32x96xf32>
    %3 = vector.shape_cast %2 : vector<1x32x96xf32> to vector<32x96xf32>
    %cst = arith.constant dense<0.000000e+00> : vector<16x96xf32>
    %4 = tpu.matmul %0, %3, %cst {dimension_numbers = #tpu.dot_dimension_numbers<[1], [0], [0], [1], [0, 0, 1, 1], [], []>} : vector<16x32xf32>, vector<32x96xf32>, vector<16x96xf32> -> vector<16x96xf32>
    %c0_7 = arith.constant 0 : index
    %c0_8 = arith.constant 0 : index
    %c0_9 = arith.constant 0 : index
    %5 = vector.load %arg6[%c0_7, %c0_8, %c0_9] : memref<2x1x96xf32, #tpu.memory_space<vmem>>, vector<1x1x96xf32>
    %6 = vector.shape_cast %5 : vector<1x1x96xf32> to vector<1x96xf32>
    %7 = vector.broadcast %6 : vector<1x96xf32> to vector<16x96xf32>
    %8 = arith.addf %4, %7 : vector<16x96xf32>
    %9 = vector.extract_strided_slice %8 {offsets = [0, 0], sizes = [16, 32], strides = [1, 1]} : vector<16x96xf32> to vector<16x32xf32>
    %10 = vector.extract_strided_slice %8 {offsets = [0, 32], sizes = [16, 32], strides = [1, 1]} : vector<16x96xf32> to vector<16x32xf32>
    %11 = vector.extract_strided_slice %8 {offsets = [0, 64], sizes = [16, 32], strides = [1, 1]} : vector<16x96xf32> to vector<16x32xf32>
    %c0_10 = arith.constant 0 : index
    %c0_11 = arith.constant 0 : index
    %c0_12 = arith.constant 0 : index
    %12 = vector.load %arg7[%c0_10, %c0_11, %c0_12] : memref<2x32x32xf32, #tpu.memory_space<vmem>>, vector<1x32x32xf32>
    %13 = vector.shape_cast %12 : vector<1x32x32xf32> to vector<32x32xf32>
    %c0_13 = arith.constant 0 : index
    %c0_14 = arith.constant 0 : index
    %c0_15 = arith.constant 0 : index
    %14 = vector.load %arg8[%c0_13, %c0_14, %c0_15] : memref<2x1x32xf32, #tpu.memory_space<vmem>>, vector<1x1x32xf32>
    %15 = vector.shape_cast %14 : vector<1x1x32xf32> to vector<1x32xf32>
    %16 = vector.shape_cast %9 : vector<16x32xf32> to vector<2x8x32xf32>
    %17 = vector.shape_cast %10 : vector<16x32xf32> to vector<2x8x32xf32>
    %18 = vector.shape_cast %11 : vector<16x32xf32> to vector<2x8x32xf32>
    %19 = vector.extract_strided_slice %16 {offsets = [0, 0, 0], sizes = [2, 8, 8], strides = [1, 1, 1]} : vector<2x8x32xf32> to vector<2x8x8xf32>
    %20 = vector.extract_strided_slice %17 {offsets = [0, 0, 0], sizes = [2, 8, 8], strides = [1, 1, 1]} : vector<2x8x32xf32> to vector<2x8x8xf32>
    %21 = vector.extract_strided_slice %18 {offsets = [0, 0, 0], sizes = [2, 8, 8], strides = [1, 1, 1]} : vector<2x8x32xf32> to vector<2x8x8xf32>
    "tpu.trace_start"() <{level = 10 : i32, message = "bqd,bkd->bqk"}> : () -> ()
    %cst_16 = arith.constant dense<0.000000e+00> : vector<2x8x8xf32>
    %22 = tpu.matmul %19, %20, %cst_16 {dimension_numbers = #tpu.dot_dimension_numbers<[2], [2], [1], [1], [0, 0, 0, 1, 1, 1], [0], [0]>} : vector<2x8x8xf32>, vector<2x8x8xf32>, vector<2x8x8xf32> -> vector<2x8x8xf32>
    "tpu.trace_stop"() : () -> ()
    %23 = arith.addf %22, %1 : vector<2x8x8xf32>
    %cst_17 = arith.constant dense<0xFF800000> : vector<2x8xf32>
    %24 = vector.multi_reduction <maximumf>, %23, %cst_17 [2] : vector<2x8x8xf32> to vector<2x8xf32>
    %25 = vector.shape_cast %24 : vector<2x8xf32> to vector<2x8x1xf32>
    %26 = vector.broadcast %25 : vector<2x8x1xf32> to vector<2x8x8xf32>
    %27 = arith.subf %23, %26 : vector<2x8x8xf32>
    %28 = math.exp %27 : vector<2x8x8xf32>
    %cst_18 = arith.constant dense<0.000000e+00> : vector<2x8xf32>
    %29 = vector.multi_reduction <add>, %28, %cst_18 [2] : vector<2x8x8xf32> to vector<2x8xf32>
    %30 = vector.shape_cast %29 : vector<2x8xf32> to vector<2x8x1xf32>
    %31 = tpu.reciprocal %30 {approx = true} : vector<2x8x1xf32> -> vector<2x8x1xf32>
    %32 = vector.broadcast %31 : vector<2x8x1xf32> to vector<2x8x8xf32>
    %33 = arith.mulf %28, %32 : vector<2x8x8xf32>
    "tpu.trace_start"() <{level = 10 : i32, message = "bqk,bkd->bqd"}> : () -> ()
    %cst_19 = arith.constant dense<0.000000e+00> : vector<2x8x8xf32>
    %34 = tpu.matmul %33, %21, %cst_19 {dimension_numbers = #tpu.dot_dimension_numbers<[2], [1], [1], [2], [0, 0, 0, 1, 1, 2], [0], [0]>} : vector<2x8x8xf32>, vector<2x8x8xf32>, vector<2x8x8xf32> -> vector<2x8x8xf32>
    "tpu.trace_stop"() : () -> ()
    %35 = vector.shape_cast %34 : vector<2x8x8xf32> to vector<16x8xf32>
    %36 = vector.extract_strided_slice %13 {offsets = [0, 0], sizes = [8, 32], strides = [1, 1]} : vector<32x32xf32> to vector<8x32xf32>
    %cst_20 = arith.constant dense<0.000000e+00> : vector<16x32xf32>
    %37 = tpu.matmul %35, %36, %cst_20 {dimension_numbers = #tpu.dot_dimension_numbers<[1], [0], [0], [1], [0, 0, 1, 1], [], []>} : vector<16x8xf32>, vector<8x32xf32>, vector<16x32xf32> -> vector<16x32xf32>
    %38 = vector.extract_strided_slice %16 {offsets = [0, 0, 8], sizes = [2, 8, 8], strides = [1, 1, 1]} : vector<2x8x32xf32> to vector<2x8x8xf32>
    %39 = vector.extract_strided_slice %17 {offsets = [0, 0, 8], sizes = [2, 8, 8], strides = [1, 1, 1]} : vector<2x8x32xf32> to vector<2x8x8xf32>
    %40 = vector.extract_strided_slice %18 {offsets = [0, 0, 8], sizes = [2, 8, 8], strides = [1, 1, 1]} : vector<2x8x32xf32> to vector<2x8x8xf32>
    "tpu.trace_start"() <{level = 10 : i32, message = "bqd,bkd->bqk"}> : () -> ()
    %cst_21 = arith.constant dense<0.000000e+00> : vector<2x8x8xf32>
    %41 = tpu.matmul %38, %39, %cst_21 {dimension_numbers = #tpu.dot_dimension_numbers<[2], [2], [1], [1], [0, 0, 0, 1, 1, 1], [0], [0]>} : vector<2x8x8xf32>, vector<2x8x8xf32>, vector<2x8x8xf32> -> vector<2x8x8xf32>
    "tpu.trace_stop"() : () -> ()
    %42 = arith.addf %41, %1 : vector<2x8x8xf32>
    %cst_22 = arith.constant dense<0xFF800000> : vector<2x8xf32>
    %43 = vector.multi_reduction <maximumf>, %42, %cst_22 [2] : vector<2x8x8xf32> to vector<2x8xf32>
    %44 = vector.shape_cast %43 : vector<2x8xf32> to vector<2x8x1xf32>
    %45 = vector.broadcast %44 : vector<2x8x1xf32> to vector<2x8x8xf32>
    %46 = arith.subf %42, %45 : vector<2x8x8xf32>
    %47 = math.exp %46 : vector<2x8x8xf32>
    %cst_23 = arith.constant dense<0.000000e+00> : vector<2x8xf32>
    %48 = vector.multi_reduction <add>, %47, %cst_23 [2] : vector<2x8x8xf32> to vector<2x8xf32>
    %49 = vector.shape_cast %48 : vector<2x8xf32> to vector<2x8x1xf32>
    %50 = tpu.reciprocal %49 {approx = true} : vector<2x8x1xf32> -> vector<2x8x1xf32>
    %51 = vector.broadcast %50 : vector<2x8x1xf32> to vector<2x8x8xf32>
    %52 = arith.mulf %47, %51 : vector<2x8x8xf32>
    "tpu.trace_start"() <{level = 10 : i32, message = "bqk,bkd->bqd"}> : () -> ()
    %cst_24 = arith.constant dense<0.000000e+00> : vector<2x8x8xf32>
    %53 = tpu.matmul %52, %40, %cst_24 {dimension_numbers = #tpu.dot_dimension_numbers<[2], [1], [1], [2], [0, 0, 0, 1, 1, 2], [0], [0]>} : vector<2x8x8xf32>, vector<2x8x8xf32>, vector<2x8x8xf32> -> vector<2x8x8xf32>
    "tpu.trace_stop"() : () -> ()
    %54 = vector.shape_cast %53 : vector<2x8x8xf32> to vector<16x8xf32>
    %55 = vector.extract_strided_slice %13 {offsets = [8, 0], sizes = [8, 32], strides = [1, 1]} : vector<32x32xf32> to vector<8x32xf32>
    %cst_25 = arith.constant dense<0.000000e+00> : vector<16x32xf32>
    %56 = tpu.matmul %54, %55, %cst_25 {dimension_numbers = #tpu.dot_dimension_numbers<[1], [0], [0], [1], [0, 0, 1, 1], [], []>} : vector<16x8xf32>, vector<8x32xf32>, vector<16x32xf32> -> vector<16x32xf32>
    %57 = arith.addf %37, %56 : vector<16x32xf32>
    %58 = vector.extract_strided_slice %16 {offsets = [0, 0, 16], sizes = [2, 8, 8], strides = [1, 1, 1]} : vector<2x8x32xf32> to vector<2x8x8xf32>
    %59 = vector.extract_strided_slice %17 {offsets = [0, 0, 16], sizes = [2, 8, 8], strides = [1, 1, 1]} : vector<2x8x32xf32> to vector<2x8x8xf32>
    %60 = vector.extract_strided_slice %18 {offsets = [0, 0, 16], sizes = [2, 8, 8], strides = [1, 1, 1]} : vector<2x8x32xf32> to vector<2x8x8xf32>
    "tpu.trace_start"() <{level = 10 : i32, message = "bqd,bkd->bqk"}> : () -> ()
    %cst_26 = arith.constant dense<0.000000e+00> : vector<2x8x8xf32>
    %61 = tpu.matmul %58, %59, %cst_26 {dimension_numbers = #tpu.dot_dimension_numbers<[2], [2], [1], [1], [0, 0, 0, 1, 1, 1], [0], [0]>} : vector<2x8x8xf32>, vector<2x8x8xf32>, vector<2x8x8xf32> -> vector<2x8x8xf32>
    "tpu.trace_stop"() : () -> ()
    %62 = arith.addf %61, %1 : vector<2x8x8xf32>
    %cst_27 = arith.constant dense<0xFF800000> : vector<2x8xf32>
    %63 = vector.multi_reduction <maximumf>, %62, %cst_27 [2] : vector<2x8x8xf32> to vector<2x8xf32>
    %64 = vector.shape_cast %63 : vector<2x8xf32> to vector<2x8x1xf32>
    %65 = vector.broadcast %64 : vector<2x8x1xf32> to vector<2x8x8xf32>
    %66 = arith.subf %62, %65 : vector<2x8x8xf32>
    %67 = math.exp %66 : vector<2x8x8xf32>
    %cst_28 = arith.constant dense<0.000000e+00> : vector<2x8xf32>
    %68 = vector.multi_reduction <add>, %67, %cst_28 [2] : vector<2x8x8xf32> to vector<2x8xf32>
    %69 = vector.shape_cast %68 : vector<2x8xf32> to vector<2x8x1xf32>
    %70 = tpu.reciprocal %69 {approx = true} : vector<2x8x1xf32> -> vector<2x8x1xf32>
    %71 = vector.broadcast %70 : vector<2x8x1xf32> to vector<2x8x8xf32>
    %72 = arith.mulf %67, %71 : vector<2x8x8xf32>
    "tpu.trace_start"() <{level = 10 : i32, message = "bqk,bkd->bqd"}> : () -> ()
    %cst_29 = arith.constant dense<0.000000e+00> : vector<2x8x8xf32>
    %73 = tpu.matmul %72, %60, %cst_29 {dimension_numbers = #tpu.dot_dimension_numbers<[2], [1], [1], [2], [0, 0, 0, 1, 1, 2], [0], [0]>} : vector<2x8x8xf32>, vector<2x8x8xf32>, vector<2x8x8xf32> -> vector<2x8x8xf32>
    "tpu.trace_stop"() : () -> ()
    %74 = vector.shape_cast %73 : vector<2x8x8xf32> to vector<16x8xf32>
    %75 = vector.extract_strided_slice %13 {offsets = [16, 0], sizes = [8, 32], strides = [1, 1]} : vector<32x32xf32> to vector<8x32xf32>
    %cst_30 = arith.constant dense<0.000000e+00> : vector<16x32xf32>
    %76 = tpu.matmul %74, %75, %cst_30 {dimension_numbers = #tpu.dot_dimension_numbers<[1], [0], [0], [1], [0, 0, 1, 1], [], []>} : vector<16x8xf32>, vector<8x32xf32>, vector<16x32xf32> -> vector<16x32xf32>
    %77 = arith.addf %57, %76 : vector<16x32xf32>
    %78 = vector.extract_strided_slice %16 {offsets = [0, 0, 24], sizes = [2, 8, 8], strides = [1, 1, 1]} : vector<2x8x32xf32> to vector<2x8x8xf32>
    %79 = vector.extract_strided_slice %17 {offsets = [0, 0, 24], sizes = [2, 8, 8], strides = [1, 1, 1]} : vector<2x8x32xf32> to vector<2x8x8xf32>
    %80 = vector.extract_strided_slice %18 {offsets = [0, 0, 24], sizes = [2, 8, 8], strides = [1, 1, 1]} : vector<2x8x32xf32> to vector<2x8x8xf32>
    "tpu.trace_start"() <{level = 10 : i32, message = "bqd,bkd->bqk"}> : () -> ()
    %cst_31 = arith.constant dense<0.000000e+00> : vector<2x8x8xf32>
    %81 = tpu.matmul %78, %79, %cst_31 {dimension_numbers = #tpu.dot_dimension_numbers<[2], [2], [1], [1], [0, 0, 0, 1, 1, 1], [0], [0]>} : vector<2x8x8xf32>, vector<2x8x8xf32>, vector<2x8x8xf32> -> vector<2x8x8xf32>
    "tpu.trace_stop"() : () -> ()
    %82 = arith.addf %81, %1 : vector<2x8x8xf32>
    %cst_32 = arith.constant dense<0xFF800000> : vector<2x8xf32>
    %83 = vector.multi_reduction <maximumf>, %82, %cst_32 [2] : vector<2x8x8xf32> to vector<2x8xf32>
    %84 = vector.shape_cast %83 : vector<2x8xf32> to vector<2x8x1xf32>
    %85 = vector.broadcast %84 : vector<2x8x1xf32> to vector<2x8x8xf32>
    %86 = arith.subf %82, %85 : vector<2x8x8xf32>
    %87 = math.exp %86 : vector<2x8x8xf32>
    %cst_33 = arith.constant dense<0.000000e+00> : vector<2x8xf32>
    %88 = vector.multi_reduction <add>, %87, %cst_33 [2] : vector<2x8x8xf32> to vector<2x8xf32>
    %89 = vector.shape_cast %88 : vector<2x8xf32> to vector<2x8x1xf32>
    %90 = tpu.reciprocal %89 {approx = true} : vector<2x8x1xf32> -> vector<2x8x1xf32>
    %91 = vector.broadcast %90 : vector<2x8x1xf32> to vector<2x8x8xf32>
    %92 = arith.mulf %87, %91 : vector<2x8x8xf32>
    "tpu.trace_start"() <{level = 10 : i32, message = "bqk,bkd->bqd"}> : () -> ()
    %cst_34 = arith.constant dense<0.000000e+00> : vector<2x8x8xf32>
    %93 = tpu.matmul %92, %80, %cst_34 {dimension_numbers = #tpu.dot_dimension_numbers<[2], [1], [1], [2], [0, 0, 0, 1, 1, 2], [0], [0]>} : vector<2x8x8xf32>, vector<2x8x8xf32>, vector<2x8x8xf32> -> vector<2x8x8xf32>
    "tpu.trace_stop"() : () -> ()
    %94 = vector.shape_cast %93 : vector<2x8x8xf32> to vector<16x8xf32>
    %95 = vector.extract_strided_slice %13 {offsets = [24, 0], sizes = [8, 32], strides = [1, 1]} : vector<32x32xf32> to vector<8x32xf32>
    %cst_35 = arith.constant dense<0.000000e+00> : vector<16x32xf32>
    %96 = tpu.matmul %94, %95, %cst_35 {dimension_numbers = #tpu.dot_dimension_numbers<[1], [0], [0], [1], [0, 0, 1, 1], [], []>} : vector<16x8xf32>, vector<8x32xf32>, vector<16x32xf32> -> vector<16x32xf32>
    %97 = arith.addf %77, %96 : vector<16x32xf32>
    %98 = vector.broadcast %15 : vector<1x32xf32> to vector<16x32xf32>
    %99 = arith.addf %97, %98 : vector<16x32xf32>
    %100 = arith.addf %0, %99 : vector<16x32xf32>
    %c0_36 = arith.constant 0 : index
    %c0_37 = arith.constant 0 : index
    %c0_38 = arith.constant 0 : index
    %101 = vector.load %arg9[%c0_36, %c0_37, %c0_38] : memref<2x1x32xf32, #tpu.memory_space<vmem>>, vector<1x1x32xf32>
    %102 = vector.shape_cast %101 : vector<1x1x32xf32> to vector<1x32xf32>
    %c0_39 = arith.constant 0 : index
    %c0_40 = arith.constant 0 : index
    %c0_41 = arith.constant 0 : index
    %103 = vector.load %arg10[%c0_39, %c0_40, %c0_41] : memref<2x1x32xf32, #tpu.memory_space<vmem>>, vector<1x1x32xf32>
    %104 = vector.shape_cast %103 : vector<1x1x32xf32> to vector<1x32xf32>
    %cst_42 = arith.constant dense<0.000000e+00> : vector<16xf32>
    %105 = vector.multi_reduction <add>, %100, %cst_42 [1] : vector<16x32xf32> to vector<16xf32>
    %106 = vector.shape_cast %105 : vector<16xf32> to vector<16x1xf32>
    %cst_43 = arith.constant 3.200000e+01 : f32
    %107 = vector.broadcast %cst_43 : f32 to vector<16x1xf32>
    %108 = arith.divf %106, %107 : vector<16x1xf32>
    %109 = vector.broadcast %108 : vector<16x1xf32> to vector<16x32xf32>
    %110 = arith.subf %100, %109 : vector<16x32xf32>
    %111 = arith.mulf %110, %110 : vector<16x32xf32>
    %cst_44 = arith.constant dense<0.000000e+00> : vector<16xf32>
    %112 = vector.multi_reduction <add>, %111, %cst_44 [1] : vector<16x32xf32> to vector<16xf32>
    %113 = vector.shape_cast %112 : vector<16xf32> to vector<16x1xf32>
    %cst_45 = arith.constant 3.200000e+01 : f32
    %114 = vector.broadcast %cst_45 : f32 to vector<16x1xf32>
    %115 = arith.divf %113, %114 : vector<16x1xf32>
    %cst_46 = arith.constant 9.99999974E-6 : f32
    %116 = vector.broadcast %cst_46 : f32 to vector<16x1xf32>
    %117 = arith.addf %115, %116 : vector<16x1xf32>
    %118 = math.rsqrt %117 : vector<16x1xf32>
    %119 = vector.broadcast %118 : vector<16x1xf32> to vector<16x32xf32>
    %120 = arith.mulf %110, %119 : vector<16x32xf32>
    %121 = vector.broadcast %102 : vector<1x32xf32> to vector<16x32xf32>
    %122 = arith.mulf %120, %121 : vector<16x32xf32>
    %123 = vector.broadcast %104 : vector<1x32xf32> to vector<16x32xf32>
    %124 = arith.addf %122, %123 : vector<16x32xf32>
    %c0_47 = arith.constant 0 : index
    %c0_48 = arith.constant 0 : index
    %c0_49 = arith.constant 0 : index
    %125 = vector.load %arg11[%c0_47, %c0_48, %c0_49] : memref<2x32x64xf32, #tpu.memory_space<vmem>>, vector<1x32x64xf32>
    %126 = vector.shape_cast %125 : vector<1x32x64xf32> to vector<32x64xf32>
    %cst_50 = arith.constant dense<0.000000e+00> : vector<16x64xf32>
    %127 = tpu.matmul %124, %126, %cst_50 {dimension_numbers = #tpu.dot_dimension_numbers<[1], [0], [0], [1], [0, 0, 1, 1], [], []>} : vector<16x32xf32>, vector<32x64xf32>, vector<16x64xf32> -> vector<16x64xf32>
    %c0_51 = arith.constant 0 : index
    %c0_52 = arith.constant 0 : index
    %c0_53 = arith.constant 0 : index
    %128 = vector.load %arg12[%c0_51, %c0_52, %c0_53] : memref<2x1x64xf32, #tpu.memory_space<vmem>>, vector<1x1x64xf32>
    %129 = vector.shape_cast %128 : vector<1x1x64xf32> to vector<1x64xf32>
    %130 = vector.broadcast %129 : vector<1x64xf32> to vector<16x64xf32>
    %131 = arith.addf %127, %130 : vector<16x64xf32>
    %cst_54 = arith.constant 0.000000e+00 : f32
    %132 = vector.broadcast %cst_54 : f32 to vector<16x64xf32>
    %133 = arith.maximumf %131, %132 : vector<16x64xf32>
    %c0_55 = arith.constant 0 : index
    %c0_56 = arith.constant 0 : index
    %c0_57 = arith.constant 0 : index
    %134 = vector.load %arg13[%c0_55, %c0_56, %c0_57] : memref<2x64x32xf32, #tpu.memory_space<vmem>>, vector<1x64x32xf32>
    %135 = vector.shape_cast %134 : vector<1x64x32xf32> to vector<64x32xf32>
    %cst_58 = arith.constant dense<0.000000e+00> : vector<16x32xf32>
    %136 = tpu.matmul %133, %135, %cst_58 {dimension_numbers = #tpu.dot_dimension_numbers<[1], [0], [0], [1], [0, 0, 1, 1], [], []>} : vector<16x64xf32>, vector<64x32xf32>, vector<16x32xf32> -> vector<16x32xf32>
    %c0_59 = arith.constant 0 : index
    %c0_60 = arith.constant 0 : index
    %c0_61 = arith.constant 0 : index
    %137 = vector.load %arg14[%c0_59, %c0_60, %c0_61] : memref<2x1x32xf32, #tpu.memory_space<vmem>>, vector<1x1x32xf32>
    %138 = vector.shape_cast %137 : vector<1x1x32xf32> to vector<1x32xf32>
    %139 = vector.broadcast %138 : vector<1x32xf32> to vector<16x32xf32>
    %140 = arith.addf %136, %139 : vector<16x32xf32>
    %141 = arith.addf %124, %140 : vector<16x32xf32>
    %c0_62 = arith.constant 0 : index
    %c0_63 = arith.constant 0 : index
    %c0_64 = arith.constant 0 : index
    %142 = vector.load %arg15[%c0_62, %c0_63, %c0_64] : memref<2x1x32xf32, #tpu.memory_space<vmem>>, vector<1x1x32xf32>
    %143 = vector.shape_cast %142 : vector<1x1x32xf32> to vector<1x32xf32>
    %c0_65 = arith.constant 0 : index
    %c0_66 = arith.constant 0 : index
    %c0_67 = arith.constant 0 : index
    %144 = vector.load %arg16[%c0_65, %c0_66, %c0_67] : memref<2x1x32xf32, #tpu.memory_space<vmem>>, vector<1x1x32xf32>
    %145 = vector.shape_cast %144 : vector<1x1x32xf32> to vector<1x32xf32>
    %cst_68 = arith.constant dense<0.000000e+00> : vector<16xf32>
    %146 = vector.multi_reduction <add>, %141, %cst_68 [1] : vector<16x32xf32> to vector<16xf32>
    %147 = vector.shape_cast %146 : vector<16xf32> to vector<16x1xf32>
    %cst_69 = arith.constant 3.200000e+01 : f32
    %148 = vector.broadcast %cst_69 : f32 to vector<16x1xf32>
    %149 = arith.divf %147, %148 : vector<16x1xf32>
    %150 = vector.broadcast %149 : vector<16x1xf32> to vector<16x32xf32>
    %151 = arith.subf %141, %150 : vector<16x32xf32>
    %152 = arith.mulf %151, %151 : vector<16x32xf32>
    %cst_70 = arith.constant dense<0.000000e+00> : vector<16xf32>
    %153 = vector.multi_reduction <add>, %152, %cst_70 [1] : vector<16x32xf32> to vector<16xf32>
    %154 = vector.shape_cast %153 : vector<16xf32> to vector<16x1xf32>
    %cst_71 = arith.constant 3.200000e+01 : f32
    %155 = vector.broadcast %cst_71 : f32 to vector<16x1xf32>
    %156 = arith.divf %154, %155 : vector<16x1xf32>
    %cst_72 = arith.constant 9.99999974E-6 : f32
    %157 = vector.broadcast %cst_72 : f32 to vector<16x1xf32>
    %158 = arith.addf %156, %157 : vector<16x1xf32>
    %159 = math.rsqrt %158 : vector<16x1xf32>
    %160 = vector.broadcast %159 : vector<16x1xf32> to vector<16x32xf32>
    %161 = arith.mulf %151, %160 : vector<16x32xf32>
    %162 = vector.broadcast %143 : vector<1x32xf32> to vector<16x32xf32>
    %163 = arith.mulf %161, %162 : vector<16x32xf32>
    %164 = vector.broadcast %145 : vector<1x32xf32> to vector<16x32xf32>
    %165 = arith.addf %163, %164 : vector<16x32xf32>
    %c1 = arith.constant 1 : index
    %c0_73 = arith.constant 0 : index
    %c0_74 = arith.constant 0 : index
    %166 = vector.load %arg5[%c1, %c0_73, %c0_74] : memref<2x32x96xf32, #tpu.memory_space<vmem>>, vector<1x32x96xf32>
    %167 = vector.shape_cast %166 : vector<1x32x96xf32> to vector<32x96xf32>
    %cst_75 = arith.constant dense<0.000000e+00> : vector<16x96xf32>
    %168 = tpu.matmul %165, %167, %cst_75 {dimension_numbers = #tpu.dot_dimension_numbers<[1], [0], [0], [1], [0, 0, 1, 1], [], []>} : vector<16x32xf32>, vector<32x96xf32>, vector<16x96xf32> -> vector<16x96xf32>
    %c1_76 = arith.constant 1 : index
    %c0_77 = arith.constant 0 : index
    %c0_78 = arith.constant 0 : index
    %169 = vector.load %arg6[%c1_76, %c0_77, %c0_78] : memref<2x1x96xf32, #tpu.memory_space<vmem>>, vector<1x1x96xf32>
    %170 = vector.shape_cast %169 : vector<1x1x96xf32> to vector<1x96xf32>
    %171 = vector.broadcast %170 : vector<1x96xf32> to vector<16x96xf32>
    %172 = arith.addf %168, %171 : vector<16x96xf32>
    %173 = vector.extract_strided_slice %172 {offsets = [0, 0], sizes = [16, 32], strides = [1, 1]} : vector<16x96xf32> to vector<16x32xf32>
    %174 = vector.extract_strided_slice %172 {offsets = [0, 32], sizes = [16, 32], strides = [1, 1]} : vector<16x96xf32> to vector<16x32xf32>
    %175 = vector.extract_strided_slice %172 {offsets = [0, 64], sizes = [16, 32], strides = [1, 1]} : vector<16x96xf32> to vector<16x32xf32>
    %c1_79 = arith.constant 1 : index
    %c0_80 = arith.constant 0 : index
    %c0_81 = arith.constant 0 : index
    %176 = vector.load %arg7[%c1_79, %c0_80, %c0_81] : memref<2x32x32xf32, #tpu.memory_space<vmem>>, vector<1x32x32xf32>
    %177 = vector.shape_cast %176 : vector<1x32x32xf32> to vector<32x32xf32>
    %c1_82 = arith.constant 1 : index
    %c0_83 = arith.constant 0 : index
    %c0_84 = arith.constant 0 : index
    %178 = vector.load %arg8[%c1_82, %c0_83, %c0_84] : memref<2x1x32xf32, #tpu.memory_space<vmem>>, vector<1x1x32xf32>
    %179 = vector.shape_cast %178 : vector<1x1x32xf32> to vector<1x32xf32>
    %180 = vector.shape_cast %173 : vector<16x32xf32> to vector<2x8x32xf32>
    %181 = vector.shape_cast %174 : vector<16x32xf32> to vector<2x8x32xf32>
    %182 = vector.shape_cast %175 : vector<16x32xf32> to vector<2x8x32xf32>
    %183 = vector.extract_strided_slice %180 {offsets = [0, 0, 0], sizes = [2, 8, 8], strides = [1, 1, 1]} : vector<2x8x32xf32> to vector<2x8x8xf32>
    %184 = vector.extract_strided_slice %181 {offsets = [0, 0, 0], sizes = [2, 8, 8], strides = [1, 1, 1]} : vector<2x8x32xf32> to vector<2x8x8xf32>
    %185 = vector.extract_strided_slice %182 {offsets = [0, 0, 0], sizes = [2, 8, 8], strides = [1, 1, 1]} : vector<2x8x32xf32> to vector<2x8x8xf32>
    "tpu.trace_start"() <{level = 10 : i32, message = "bqd,bkd->bqk"}> : () -> ()
    %cst_85 = arith.constant dense<0.000000e+00> : vector<2x8x8xf32>
    %186 = tpu.matmul %183, %184, %cst_85 {dimension_numbers = #tpu.dot_dimension_numbers<[2], [2], [1], [1], [0, 0, 0, 1, 1, 1], [0], [0]>} : vector<2x8x8xf32>, vector<2x8x8xf32>, vector<2x8x8xf32> -> vector<2x8x8xf32>
    "tpu.trace_stop"() : () -> ()
    %187 = arith.addf %186, %1 : vector<2x8x8xf32>
    %cst_86 = arith.constant dense<0xFF800000> : vector<2x8xf32>
    %188 = vector.multi_reduction <maximumf>, %187, %cst_86 [2] : vector<2x8x8xf32> to vector<2x8xf32>
    %189 = vector.shape_cast %188 : vector<2x8xf32> to vector<2x8x1xf32>
    %190 = vector.broadcast %189 : vector<2x8x1xf32> to vector<2x8x8xf32>
    %191 = arith.subf %187, %190 : vector<2x8x8xf32>
    %192 = math.exp %191 : vector<2x8x8xf32>
    %cst_87 = arith.constant dense<0.000000e+00> : vector<2x8xf32>
    %193 = vector.multi_reduction <add>, %192, %cst_87 [2] : vector<2x8x8xf32> to vector<2x8xf32>
    %194 = vector.shape_cast %193 : vector<2x8xf32> to vector<2x8x1xf32>
    %195 = tpu.reciprocal %194 {approx = true} : vector<2x8x1xf32> -> vector<2x8x1xf32>
    %196 = vector.broadcast %195 : vector<2x8x1xf32> to vector<2x8x8xf32>
    %197 = arith.mulf %192, %196 : vector<2x8x8xf32>
    "tpu.trace_start"() <{level = 10 : i32, message = "bqk,bkd->bqd"}> : () -> ()
    %cst_88 = arith.constant dense<0.000000e+00> : vector<2x8x8xf32>
    %198 = tpu.matmul %197, %185, %cst_88 {dimension_numbers = #tpu.dot_dimension_numbers<[2], [1], [1], [2], [0, 0, 0, 1, 1, 2], [0], [0]>} : vector<2x8x8xf32>, vector<2x8x8xf32>, vector<2x8x8xf32> -> vector<2x8x8xf32>
    "tpu.trace_stop"() : () -> ()
    %199 = vector.shape_cast %198 : vector<2x8x8xf32> to vector<16x8xf32>
    %200 = vector.extract_strided_slice %177 {offsets = [0, 0], sizes = [8, 32], strides = [1, 1]} : vector<32x32xf32> to vector<8x32xf32>
    %cst_89 = arith.constant dense<0.000000e+00> : vector<16x32xf32>
    %201 = tpu.matmul %199, %200, %cst_89 {dimension_numbers = #tpu.dot_dimension_numbers<[1], [0], [0], [1], [0, 0, 1, 1], [], []>} : vector<16x8xf32>, vector<8x32xf32>, vector<16x32xf32> -> vector<16x32xf32>
    %202 = vector.extract_strided_slice %180 {offsets = [0, 0, 8], sizes = [2, 8, 8], strides = [1, 1, 1]} : vector<2x8x32xf32> to vector<2x8x8xf32>
    %203 = vector.extract_strided_slice %181 {offsets = [0, 0, 8], sizes = [2, 8, 8], strides = [1, 1, 1]} : vector<2x8x32xf32> to vector<2x8x8xf32>
    %204 = vector.extract_strided_slice %182 {offsets = [0, 0, 8], sizes = [2, 8, 8], strides = [1, 1, 1]} : vector<2x8x32xf32> to vector<2x8x8xf32>
    "tpu.trace_start"() <{level = 10 : i32, message = "bqd,bkd->bqk"}> : () -> ()
    %cst_90 = arith.constant dense<0.000000e+00> : vector<2x8x8xf32>
    %205 = tpu.matmul %202, %203, %cst_90 {dimension_numbers = #tpu.dot_dimension_numbers<[2], [2], [1], [1], [0, 0, 0, 1, 1, 1], [0], [0]>} : vector<2x8x8xf32>, vector<2x8x8xf32>, vector<2x8x8xf32> -> vector<2x8x8xf32>
    "tpu.trace_stop"() : () -> ()
    %206 = arith.addf %205, %1 : vector<2x8x8xf32>
    %cst_91 = arith.constant dense<0xFF800000> : vector<2x8xf32>
    %207 = vector.multi_reduction <maximumf>, %206, %cst_91 [2] : vector<2x8x8xf32> to vector<2x8xf32>
    %208 = vector.shape_cast %207 : vector<2x8xf32> to vector<2x8x1xf32>
    %209 = vector.broadcast %208 : vector<2x8x1xf32> to vector<2x8x8xf32>
    %210 = arith.subf %206, %209 : vector<2x8x8xf32>
    %211 = math.exp %210 : vector<2x8x8xf32>
    %cst_92 = arith.constant dense<0.000000e+00> : vector<2x8xf32>
    %212 = vector.multi_reduction <add>, %211, %cst_92 [2] : vector<2x8x8xf32> to vector<2x8xf32>
    %213 = vector.shape_cast %212 : vector<2x8xf32> to vector<2x8x1xf32>
    %214 = tpu.reciprocal %213 {approx = true} : vector<2x8x1xf32> -> vector<2x8x1xf32>
    %215 = vector.broadcast %214 : vector<2x8x1xf32> to vector<2x8x8xf32>
    %216 = arith.mulf %211, %215 : vector<2x8x8xf32>
    "tpu.trace_start"() <{level = 10 : i32, message = "bqk,bkd->bqd"}> : () -> ()
    %cst_93 = arith.constant dense<0.000000e+00> : vector<2x8x8xf32>
    %217 = tpu.matmul %216, %204, %cst_93 {dimension_numbers = #tpu.dot_dimension_numbers<[2], [1], [1], [2], [0, 0, 0, 1, 1, 2], [0], [0]>} : vector<2x8x8xf32>, vector<2x8x8xf32>, vector<2x8x8xf32> -> vector<2x8x8xf32>
    "tpu.trace_stop"() : () -> ()
    %218 = vector.shape_cast %217 : vector<2x8x8xf32> to vector<16x8xf32>
    %219 = vector.extract_strided_slice %177 {offsets = [8, 0], sizes = [8, 32], strides = [1, 1]} : vector<32x32xf32> to vector<8x32xf32>
    %cst_94 = arith.constant dense<0.000000e+00> : vector<16x32xf32>
    %220 = tpu.matmul %218, %219, %cst_94 {dimension_numbers = #tpu.dot_dimension_numbers<[1], [0], [0], [1], [0, 0, 1, 1], [], []>} : vector<16x8xf32>, vector<8x32xf32>, vector<16x32xf32> -> vector<16x32xf32>
    %221 = arith.addf %201, %220 : vector<16x32xf32>
    %222 = vector.extract_strided_slice %180 {offsets = [0, 0, 16], sizes = [2, 8, 8], strides = [1, 1, 1]} : vector<2x8x32xf32> to vector<2x8x8xf32>
    %223 = vector.extract_strided_slice %181 {offsets = [0, 0, 16], sizes = [2, 8, 8], strides = [1, 1, 1]} : vector<2x8x32xf32> to vector<2x8x8xf32>
    %224 = vector.extract_strided_slice %182 {offsets = [0, 0, 16], sizes = [2, 8, 8], strides = [1, 1, 1]} : vector<2x8x32xf32> to vector<2x8x8xf32>
    "tpu.trace_start"() <{level = 10 : i32, message = "bqd,bkd->bqk"}> : () -> ()
    %cst_95 = arith.constant dense<0.000000e+00> : vector<2x8x8xf32>
    %225 = tpu.matmul %222, %223, %cst_95 {dimension_numbers = #tpu.dot_dimension_numbers<[2], [2], [1], [1], [0, 0, 0, 1, 1, 1], [0], [0]>} : vector<2x8x8xf32>, vector<2x8x8xf32>, vector<2x8x8xf32> -> vector<2x8x8xf32>
    "tpu.trace_stop"() : () -> ()
    %226 = arith.addf %225, %1 : vector<2x8x8xf32>
    %cst_96 = arith.constant dense<0xFF800000> : vector<2x8xf32>
    %227 = vector.multi_reduction <maximumf>, %226, %cst_96 [2] : vector<2x8x8xf32> to vector<2x8xf32>
    %228 = vector.shape_cast %227 : vector<2x8xf32> to vector<2x8x1xf32>
    %229 = vector.broadcast %228 : vector<2x8x1xf32> to vector<2x8x8xf32>
    %230 = arith.subf %226, %229 : vector<2x8x8xf32>
    %231 = math.exp %230 : vector<2x8x8xf32>
    %cst_97 = arith.constant dense<0.000000e+00> : vector<2x8xf32>
    %232 = vector.multi_reduction <add>, %231, %cst_97 [2] : vector<2x8x8xf32> to vector<2x8xf32>
    %233 = vector.shape_cast %232 : vector<2x8xf32> to vector<2x8x1xf32>
    %234 = tpu.reciprocal %233 {approx = true} : vector<2x8x1xf32> -> vector<2x8x1xf32>
    %235 = vector.broadcast %234 : vector<2x8x1xf32> to vector<2x8x8xf32>
    %236 = arith.mulf %231, %235 : vector<2x8x8xf32>
    "tpu.trace_start"() <{level = 10 : i32, message = "bqk,bkd->bqd"}> : () -> ()
    %cst_98 = arith.constant dense<0.000000e+00> : vector<2x8x8xf32>
    %237 = tpu.matmul %236, %224, %cst_98 {dimension_numbers = #tpu.dot_dimension_numbers<[2], [1], [1], [2], [0, 0, 0, 1, 1, 2], [0], [0]>} : vector<2x8x8xf32>, vector<2x8x8xf32>, vector<2x8x8xf32> -> vector<2x8x8xf32>
    "tpu.trace_stop"() : () -> ()
    %238 = vector.shape_cast %237 : vector<2x8x8xf32> to vector<16x8xf32>
    %239 = vector.extract_strided_slice %177 {offsets = [16, 0], sizes = [8, 32], strides = [1, 1]} : vector<32x32xf32> to vector<8x32xf32>
    %cst_99 = arith.constant dense<0.000000e+00> : vector<16x32xf32>
    %240 = tpu.matmul %238, %239, %cst_99 {dimension_numbers = #tpu.dot_dimension_numbers<[1], [0], [0], [1], [0, 0, 1, 1], [], []>} : vector<16x8xf32>, vector<8x32xf32>, vector<16x32xf32> -> vector<16x32xf32>
    %241 = arith.addf %221, %240 : vector<16x32xf32>
    %242 = vector.extract_strided_slice %180 {offsets = [0, 0, 24], sizes = [2, 8, 8], strides = [1, 1, 1]} : vector<2x8x32xf32> to vector<2x8x8xf32>
    %243 = vector.extract_strided_slice %181 {offsets = [0, 0, 24], sizes = [2, 8, 8], strides = [1, 1, 1]} : vector<2x8x32xf32> to vector<2x8x8xf32>
    %244 = vector.extract_strided_slice %182 {offsets = [0, 0, 24], sizes = [2, 8, 8], strides = [1, 1, 1]} : vector<2x8x32xf32> to vector<2x8x8xf32>
    "tpu.trace_start"() <{level = 10 : i32, message = "bqd,bkd->bqk"}> : () -> ()
    %cst_100 = arith.constant dense<0.000000e+00> : vector<2x8x8xf32>
    %245 = tpu.matmul %242, %243, %cst_100 {dimension_numbers = #tpu.dot_dimension_numbers<[2], [2], [1], [1], [0, 0, 0, 1, 1, 1], [0], [0]>} : vector<2x8x8xf32>, vector<2x8x8xf32>, vector<2x8x8xf32> -> vector<2x8x8xf32>
    "tpu.trace_stop"() : () -> ()
    %246 = arith.addf %245, %1 : vector<2x8x8xf32>
    %cst_101 = arith.constant dense<0xFF800000> : vector<2x8xf32>
    %247 = vector.multi_reduction <maximumf>, %246, %cst_101 [2] : vector<2x8x8xf32> to vector<2x8xf32>
    %248 = vector.shape_cast %247 : vector<2x8xf32> to vector<2x8x1xf32>
    %249 = vector.broadcast %248 : vector<2x8x1xf32> to vector<2x8x8xf32>
    %250 = arith.subf %246, %249 : vector<2x8x8xf32>
    %251 = math.exp %250 : vector<2x8x8xf32>
    %cst_102 = arith.constant dense<0.000000e+00> : vector<2x8xf32>
    %252 = vector.multi_reduction <add>, %251, %cst_102 [2] : vector<2x8x8xf32> to vector<2x8xf32>
    %253 = vector.shape_cast %252 : vector<2x8xf32> to vector<2x8x1xf32>
    %254 = tpu.reciprocal %253 {approx = true} : vector<2x8x1xf32> -> vector<2x8x1xf32>
    %255 = vector.broadcast %254 : vector<2x8x1xf32> to vector<2x8x8xf32>
    %256 = arith.mulf %251, %255 : vector<2x8x8xf32>
    "tpu.trace_start"() <{level = 10 : i32, message = "bqk,bkd->bqd"}> : () -> ()
    %cst_103 = arith.constant dense<0.000000e+00> : vector<2x8x8xf32>
    %257 = tpu.matmul %256, %244, %cst_103 {dimension_numbers = #tpu.dot_dimension_numbers<[2], [1], [1], [2], [0, 0, 0, 1, 1, 2], [0], [0]>} : vector<2x8x8xf32>, vector<2x8x8xf32>, vector<2x8x8xf32> -> vector<2x8x8xf32>
    "tpu.trace_stop"() : () -> ()
    %258 = vector.shape_cast %257 : vector<2x8x8xf32> to vector<16x8xf32>
    %259 = vector.extract_strided_slice %177 {offsets = [24, 0], sizes = [8, 32], strides = [1, 1]} : vector<32x32xf32> to vector<8x32xf32>
    %cst_104 = arith.constant dense<0.000000e+00> : vector<16x32xf32>
    %260 = tpu.matmul %258, %259, %cst_104 {dimension_numbers = #tpu.dot_dimension_numbers<[1], [0], [0], [1], [0, 0, 1, 1], [], []>} : vector<16x8xf32>, vector<8x32xf32>, vector<16x32xf32> -> vector<16x32xf32>
    %261 = arith.addf %241, %260 : vector<16x32xf32>
    %262 = vector.broadcast %179 : vector<1x32xf32> to vector<16x32xf32>
    %263 = arith.addf %261, %262 : vector<16x32xf32>
    %264 = arith.addf %165, %263 : vector<16x32xf32>
    %c1_105 = arith.constant 1 : index
    %c0_106 = arith.constant 0 : index
    %c0_107 = arith.constant 0 : index
    %265 = vector.load %arg9[%c1_105, %c0_106, %c0_107] : memref<2x1x32xf32, #tpu.memory_space<vmem>>, vector<1x1x32xf32>
    %266 = vector.shape_cast %265 : vector<1x1x32xf32> to vector<1x32xf32>
    %c1_108 = arith.constant 1 : index
    %c0_109 = arith.constant 0 : index
    %c0_110 = arith.constant 0 : index
    %267 = vector.load %arg10[%c1_108, %c0_109, %c0_110] : memref<2x1x32xf32, #tpu.memory_space<vmem>>, vector<1x1x32xf32>
    %268 = vector.shape_cast %267 : vector<1x1x32xf32> to vector<1x32xf32>
    %cst_111 = arith.constant dense<0.000000e+00> : vector<16xf32>
    %269 = vector.multi_reduction <add>, %264, %cst_111 [1] : vector<16x32xf32> to vector<16xf32>
    %270 = vector.shape_cast %269 : vector<16xf32> to vector<16x1xf32>
    %cst_112 = arith.constant 3.200000e+01 : f32
    %271 = vector.broadcast %cst_112 : f32 to vector<16x1xf32>
    %272 = arith.divf %270, %271 : vector<16x1xf32>
    %273 = vector.broadcast %272 : vector<16x1xf32> to vector<16x32xf32>
    %274 = arith.subf %264, %273 : vector<16x32xf32>
    %275 = arith.mulf %274, %274 : vector<16x32xf32>
    %cst_113 = arith.constant dense<0.000000e+00> : vector<16xf32>
    %276 = vector.multi_reduction <add>, %275, %cst_113 [1] : vector<16x32xf32> to vector<16xf32>
    %277 = vector.shape_cast %276 : vector<16xf32> to vector<16x1xf32>
    %cst_114 = arith.constant 3.200000e+01 : f32
    %278 = vector.broadcast %cst_114 : f32 to vector<16x1xf32>
    %279 = arith.divf %277, %278 : vector<16x1xf32>
    %cst_115 = arith.constant 9.99999974E-6 : f32
    %280 = vector.broadcast %cst_115 : f32 to vector<16x1xf32>
    %281 = arith.addf %279, %280 : vector<16x1xf32>
    %282 = math.rsqrt %281 : vector<16x1xf32>
    %283 = vector.broadcast %282 : vector<16x1xf32> to vector<16x32xf32>
    %284 = arith.mulf %274, %283 : vector<16x32xf32>
    %285 = vector.broadcast %266 : vector<1x32xf32> to vector<16x32xf32>
    %286 = arith.mulf %284, %285 : vector<16x32xf32>
    %287 = vector.broadcast %268 : vector<1x32xf32> to vector<16x32xf32>
    %288 = arith.addf %286, %287 : vector<16x32xf32>
    %c1_116 = arith.constant 1 : index
    %c0_117 = arith.constant 0 : index
    %c0_118 = arith.constant 0 : index
    %289 = vector.load %arg11[%c1_116, %c0_117, %c0_118] : memref<2x32x64xf32, #tpu.memory_space<vmem>>, vector<1x32x64xf32>
    %290 = vector.shape_cast %289 : vector<1x32x64xf32> to vector<32x64xf32>
    %cst_119 = arith.constant dense<0.000000e+00> : vector<16x64xf32>
    %291 = tpu.matmul %288, %290, %cst_119 {dimension_numbers = #tpu.dot_dimension_numbers<[1], [0], [0], [1], [0, 0, 1, 1], [], []>} : vector<16x32xf32>, vector<32x64xf32>, vector<16x64xf32> -> vector<16x64xf32>
    %c1_120 = arith.constant 1 : index
    %c0_121 = arith.constant 0 : index
    %c0_122 = arith.constant 0 : index
    %292 = vector.load %arg12[%c1_120, %c0_121, %c0_122] : memref<2x1x64xf32, #tpu.memory_space<vmem>>, vector<1x1x64xf32>
    %293 = vector.shape_cast %292 : vector<1x1x64xf32> to vector<1x64xf32>
    %294 = vector.broadcast %293 : vector<1x64xf32> to vector<16x64xf32>
    %295 = arith.addf %291, %294 : vector<16x64xf32>
    %cst_123 = arith.constant 0.000000e+00 : f32
    %296 = vector.broadcast %cst_123 : f32 to vector<16x64xf32>
    %297 = arith.maximumf %295, %296 : vector<16x64xf32>
    %c1_124 = arith.constant 1 : index
    %c0_125 = arith.constant 0 : index
    %c0_126 = arith.constant 0 : index
    %298 = vector.load %arg13[%c1_124, %c0_125, %c0_126] : memref<2x64x32xf32, #tpu.memory_space<vmem>>, vector<1x64x32xf32>
    %299 = vector.shape_cast %298 : vector<1x64x32xf32> to vector<64x32xf32>
    %cst_127 = arith.constant dense<0.000000e+00> : vector<16x32xf32>
    %300 = tpu.matmul %297, %299, %cst_127 {dimension_numbers = #tpu.dot_dimension_numbers<[1], [0], [0], [1], [0, 0, 1, 1], [], []>} : vector<16x64xf32>, vector<64x32xf32>, vector<16x32xf32> -> vector<16x32xf32>
    %c1_128 = arith.constant 1 : index
    %c0_129 = arith.constant 0 : index
    %c0_130 = arith.constant 0 : index
    %301 = vector.load %arg14[%c1_128, %c0_129, %c0_130] : memref<2x1x32xf32, #tpu.memory_space<vmem>>, vector<1x1x32xf32>
    %302 = vector.shape_cast %301 : vector<1x1x32xf32> to vector<1x32xf32>
    %303 = vector.broadcast %302 : vector<1x32xf32> to vector<16x32xf32>
    %304 = arith.addf %300, %303 : vector<16x32xf32>
    %305 = arith.addf %288, %304 : vector<16x32xf32>
    %c1_131 = arith.constant 1 : index
    %c0_132 = arith.constant 0 : index
    %c0_133 = arith.constant 0 : index
    %306 = vector.load %arg15[%c1_131, %c0_132, %c0_133] : memref<2x1x32xf32, #tpu.memory_space<vmem>>, vector<1x1x32xf32>
    %307 = vector.shape_cast %306 : vector<1x1x32xf32> to vector<1x32xf32>
    %c1_134 = arith.constant 1 : index
    %c0_135 = arith.constant 0 : index
    %c0_136 = arith.constant 0 : index
    %308 = vector.load %arg16[%c1_134, %c0_135, %c0_136] : memref<2x1x32xf32, #tpu.memory_space<vmem>>, vector<1x1x32xf32>
    %309 = vector.shape_cast %308 : vector<1x1x32xf32> to vector<1x32xf32>
    %cst_137 = arith.constant dense<0.000000e+00> : vector<16xf32>
    %310 = vector.multi_reduction <add>, %305, %cst_137 [1] : vector<16x32xf32> to vector<16xf32>
    %311 = vector.shape_cast %310 : vector<16xf32> to vector<16x1xf32>
    %cst_138 = arith.constant 3.200000e+01 : f32
    %312 = vector.broadcast %cst_138 : f32 to vector<16x1xf32>
    %313 = arith.divf %311, %312 : vector<16x1xf32>
    %314 = vector.broadcast %313 : vector<16x1xf32> to vector<16x32xf32>
    %315 = arith.subf %305, %314 : vector<16x32xf32>
    %316 = arith.mulf %315, %315 : vector<16x32xf32>
    %cst_139 = arith.constant dense<0.000000e+00> : vector<16xf32>
    %317 = vector.multi_reduction <add>, %316, %cst_139 [1] : vector<16x32xf32> to vector<16xf32>
    %318 = vector.shape_cast %317 : vector<16xf32> to vector<16x1xf32>
    %cst_140 = arith.constant 3.200000e+01 : f32
    %319 = vector.broadcast %cst_140 : f32 to vector<16x1xf32>
    %320 = arith.divf %318, %319 : vector<16x1xf32>
    %cst_141 = arith.constant 9.99999974E-6 : f32
    %321 = vector.broadcast %cst_141 : f32 to vector<16x1xf32>
    %322 = arith.addf %320, %321 : vector<16x1xf32>
    %323 = math.rsqrt %322 : vector<16x1xf32>
    %324 = vector.broadcast %323 : vector<16x1xf32> to vector<16x32xf32>
    %325 = arith.mulf %315, %324 : vector<16x32xf32>
    %326 = vector.broadcast %307 : vector<1x32xf32> to vector<16x32xf32>
    %327 = arith.mulf %325, %326 : vector<16x32xf32>
    %328 = vector.broadcast %309 : vector<1x32xf32> to vector<16x32xf32>
    %329 = arith.addf %327, %328 : vector<16x32xf32>
    %c0_142 = arith.constant 0 : index
    %c0_143 = arith.constant 0 : index
    %c0_144 = arith.constant 0 : index
    %330 = vector.load %arg3[%c0_142, %c0_143, %c0_144] : memref<2x8x8xf32, #tpu.memory_space<vmem>>, vector<2x8x8xf32>
    %c0_145 = arith.constant 0 : index
    %c0_146 = arith.constant 0 : index
    %c0_147 = arith.constant 0 : index
    %331 = vector.load %arg4[%c0_145, %c0_146, %c0_147] : memref<2x8x8xf32, #tpu.memory_space<vmem>>, vector<2x8x8xf32>
    %c0_148 = arith.constant 0 : index
    %c0_149 = arith.constant 0 : index
    %332 = vector.load %arg25[%c0_148, %c0_149] : memref<32x128xf32, #tpu.memory_space<vmem>>, vector<32x128xf32>
    %cst_150 = arith.constant dense<0.000000e+00> : vector<16x128xf32>
    %333 = tpu.matmul %329, %332, %cst_150 {dimension_numbers = #tpu.dot_dimension_numbers<[1], [0], [0], [1], [0, 0, 1, 1], [], []>} : vector<16x32xf32>, vector<32x128xf32>, vector<16x128xf32> -> vector<16x128xf32>
    %c0_151 = arith.constant 0 : index
    %c0_152 = arith.constant 0 : index
    %334 = vector.load %arg26[%c0_151, %c0_152] : memref<1x128xf32, #tpu.memory_space<vmem>>, vector<1x128xf32>
    %335 = vector.broadcast %334 : vector<1x128xf32> to vector<16x128xf32>
    %336 = arith.addf %333, %335 : vector<16x128xf32>
    %c0_153 = arith.constant 0 : index
    %c0_154 = arith.constant 0 : index
    %337 = vector.load %arg1[%c0_153, %c0_154] : memref<16x32xf32, #tpu.memory_space<vmem>>, vector<16x32xf32>
    %c0_155 = arith.constant 0 : index
    %c0_156 = arith.constant 0 : index
    %c0_157 = arith.constant 0 : index
    %338 = vector.load %arg17[%c0_155, %c0_156, %c0_157] : memref<2x32x96xf32, #tpu.memory_space<vmem>>, vector<1x32x96xf32>
    %339 = vector.shape_cast %338 : vector<1x32x96xf32> to vector<32x96xf32>
    %cst_158 = arith.constant dense<0.000000e+00> : vector<16x96xf32>
    %340 = tpu.matmul %337, %339, %cst_158 {dimension_numbers = #tpu.dot_dimension_numbers<[1], [0], [0], [1], [0, 0, 1, 1], [], []>} : vector<16x32xf32>, vector<32x96xf32>, vector<16x96xf32> -> vector<16x96xf32>
    %c0_159 = arith.constant 0 : index
    %c0_160 = arith.constant 0 : index
    %c0_161 = arith.constant 0 : index
    %341 = vector.load %arg18[%c0_159, %c0_160, %c0_161] : memref<2x1x96xf32, #tpu.memory_space<vmem>>, vector<1x1x96xf32>
    %342 = vector.shape_cast %341 : vector<1x1x96xf32> to vector<1x96xf32>
    %343 = vector.broadcast %342 : vector<1x96xf32> to vector<16x96xf32>
    %344 = arith.addf %340, %343 : vector<16x96xf32>
    %345 = vector.extract_strided_slice %344 {offsets = [0, 0], sizes = [16, 32], strides = [1, 1]} : vector<16x96xf32> to vector<16x32xf32>
    %346 = vector.extract_strided_slice %344 {offsets = [0, 32], sizes = [16, 32], strides = [1, 1]} : vector<16x96xf32> to vector<16x32xf32>
    %347 = vector.extract_strided_slice %344 {offsets = [0, 64], sizes = [16, 32], strides = [1, 1]} : vector<16x96xf32> to vector<16x32xf32>
    %c0_162 = arith.constant 0 : index
    %c0_163 = arith.constant 0 : index
    %c0_164 = arith.constant 0 : index
    %348 = vector.load %arg19[%c0_162, %c0_163, %c0_164] : memref<2x32x32xf32, #tpu.memory_space<vmem>>, vector<1x32x32xf32>
    %349 = vector.shape_cast %348 : vector<1x32x32xf32> to vector<32x32xf32>
    %c0_165 = arith.constant 0 : index
    %c0_166 = arith.constant 0 : index
    %c0_167 = arith.constant 0 : index
    %350 = vector.load %arg20[%c0_165, %c0_166, %c0_167] : memref<2x1x32xf32, #tpu.memory_space<vmem>>, vector<1x1x32xf32>
    %351 = vector.shape_cast %350 : vector<1x1x32xf32> to vector<1x32xf32>
    %352 = vector.shape_cast %345 : vector<16x32xf32> to vector<2x8x32xf32>
    %353 = vector.shape_cast %346 : vector<16x32xf32> to vector<2x8x32xf32>
    %354 = vector.shape_cast %347 : vector<16x32xf32> to vector<2x8x32xf32>
    %355 = vector.extract_strided_slice %352 {offsets = [0, 0, 0], sizes = [2, 8, 8], strides = [1, 1, 1]} : vector<2x8x32xf32> to vector<2x8x8xf32>
    %356 = vector.extract_strided_slice %353 {offsets = [0, 0, 0], sizes = [2, 8, 8], strides = [1, 1, 1]} : vector<2x8x32xf32> to vector<2x8x8xf32>
    %357 = vector.extract_strided_slice %354 {offsets = [0, 0, 0], sizes = [2, 8, 8], strides = [1, 1, 1]} : vector<2x8x32xf32> to vector<2x8x8xf32>
    "tpu.trace_start"() <{level = 10 : i32, message = "bqd,bkd->bqk"}> : () -> ()
    %cst_168 = arith.constant dense<0.000000e+00> : vector<2x8x8xf32>
    %358 = tpu.matmul %355, %356, %cst_168 {dimension_numbers = #tpu.dot_dimension_numbers<[2], [2], [1], [1], [0, 0, 0, 1, 1, 1], [0], [0]>} : vector<2x8x8xf32>, vector<2x8x8xf32>, vector<2x8x8xf32> -> vector<2x8x8xf32>
    "tpu.trace_stop"() : () -> ()
    %359 = arith.addf %358, %330 : vector<2x8x8xf32>
    %cst_169 = arith.constant dense<0xFF800000> : vector<2x8xf32>
    %360 = vector.multi_reduction <maximumf>, %359, %cst_169 [2] : vector<2x8x8xf32> to vector<2x8xf32>
    %361 = vector.shape_cast %360 : vector<2x8xf32> to vector<2x8x1xf32>
    %362 = vector.broadcast %361 : vector<2x8x1xf32> to vector<2x8x8xf32>
    %363 = arith.subf %359, %362 : vector<2x8x8xf32>
    %364 = math.exp %363 : vector<2x8x8xf32>
    %cst_170 = arith.constant dense<0.000000e+00> : vector<2x8xf32>
    %365 = vector.multi_reduction <add>, %364, %cst_170 [2] : vector<2x8x8xf32> to vector<2x8xf32>
    %366 = vector.shape_cast %365 : vector<2x8xf32> to vector<2x8x1xf32>
    %367 = tpu.reciprocal %366 {approx = true} : vector<2x8x1xf32> -> vector<2x8x1xf32>
    %368 = vector.broadcast %367 : vector<2x8x1xf32> to vector<2x8x8xf32>
    %369 = arith.mulf %364, %368 : vector<2x8x8xf32>
    "tpu.trace_start"() <{level = 10 : i32, message = "bqk,bkd->bqd"}> : () -> ()
    %cst_171 = arith.constant dense<0.000000e+00> : vector<2x8x8xf32>
    %370 = tpu.matmul %369, %357, %cst_171 {dimension_numbers = #tpu.dot_dimension_numbers<[2], [1], [1], [2], [0, 0, 0, 1, 1, 2], [0], [0]>} : vector<2x8x8xf32>, vector<2x8x8xf32>, vector<2x8x8xf32> -> vector<2x8x8xf32>
    "tpu.trace_stop"() : () -> ()
    %371 = vector.shape_cast %370 : vector<2x8x8xf32> to vector<16x8xf32>
    %372 = vector.extract_strided_slice %349 {offsets = [0, 0], sizes = [8, 32], strides = [1, 1]} : vector<32x32xf32> to vector<8x32xf32>
    %cst_172 = arith.constant dense<0.000000e+00> : vector<16x32xf32>
    %373 = tpu.matmul %371, %372, %cst_172 {dimension_numbers = #tpu.dot_dimension_numbers<[1], [0], [0], [1], [0, 0, 1, 1], [], []>} : vector<16x8xf32>, vector<8x32xf32>, vector<16x32xf32> -> vector<16x32xf32>
    %374 = vector.extract_strided_slice %352 {offsets = [0, 0, 8], sizes = [2, 8, 8], strides = [1, 1, 1]} : vector<2x8x32xf32> to vector<2x8x8xf32>
    %375 = vector.extract_strided_slice %353 {offsets = [0, 0, 8], sizes = [2, 8, 8], strides = [1, 1, 1]} : vector<2x8x32xf32> to vector<2x8x8xf32>
    %376 = vector.extract_strided_slice %354 {offsets = [0, 0, 8], sizes = [2, 8, 8], strides = [1, 1, 1]} : vector<2x8x32xf32> to vector<2x8x8xf32>
    "tpu.trace_start"() <{level = 10 : i32, message = "bqd,bkd->bqk"}> : () -> ()
    %cst_173 = arith.constant dense<0.000000e+00> : vector<2x8x8xf32>
    %377 = tpu.matmul %374, %375, %cst_173 {dimension_numbers = #tpu.dot_dimension_numbers<[2], [2], [1], [1], [0, 0, 0, 1, 1, 1], [0], [0]>} : vector<2x8x8xf32>, vector<2x8x8xf32>, vector<2x8x8xf32> -> vector<2x8x8xf32>
    "tpu.trace_stop"() : () -> ()
    %378 = arith.addf %377, %330 : vector<2x8x8xf32>
    %cst_174 = arith.constant dense<0xFF800000> : vector<2x8xf32>
    %379 = vector.multi_reduction <maximumf>, %378, %cst_174 [2] : vector<2x8x8xf32> to vector<2x8xf32>
    %380 = vector.shape_cast %379 : vector<2x8xf32> to vector<2x8x1xf32>
    %381 = vector.broadcast %380 : vector<2x8x1xf32> to vector<2x8x8xf32>
    %382 = arith.subf %378, %381 : vector<2x8x8xf32>
    %383 = math.exp %382 : vector<2x8x8xf32>
    %cst_175 = arith.constant dense<0.000000e+00> : vector<2x8xf32>
    %384 = vector.multi_reduction <add>, %383, %cst_175 [2] : vector<2x8x8xf32> to vector<2x8xf32>
    %385 = vector.shape_cast %384 : vector<2x8xf32> to vector<2x8x1xf32>
    %386 = tpu.reciprocal %385 {approx = true} : vector<2x8x1xf32> -> vector<2x8x1xf32>
    %387 = vector.broadcast %386 : vector<2x8x1xf32> to vector<2x8x8xf32>
    %388 = arith.mulf %383, %387 : vector<2x8x8xf32>
    "tpu.trace_start"() <{level = 10 : i32, message = "bqk,bkd->bqd"}> : () -> ()
    %cst_176 = arith.constant dense<0.000000e+00> : vector<2x8x8xf32>
    %389 = tpu.matmul %388, %376, %cst_176 {dimension_numbers = #tpu.dot_dimension_numbers<[2], [1], [1], [2], [0, 0, 0, 1, 1, 2], [0], [0]>} : vector<2x8x8xf32>, vector<2x8x8xf32>, vector<2x8x8xf32> -> vector<2x8x8xf32>
    "tpu.trace_stop"() : () -> ()
    %390 = vector.shape_cast %389 : vector<2x8x8xf32> to vector<16x8xf32>
    %391 = vector.extract_strided_slice %349 {offsets = [8, 0], sizes = [8, 32], strides = [1, 1]} : vector<32x32xf32> to vector<8x32xf32>
    %cst_177 = arith.constant dense<0.000000e+00> : vector<16x32xf32>
    %392 = tpu.matmul %390, %391, %cst_177 {dimension_numbers = #tpu.dot_dimension_numbers<[1], [0], [0], [1], [0, 0, 1, 1], [], []>} : vector<16x8xf32>, vector<8x32xf32>, vector<16x32xf32> -> vector<16x32xf32>
    %393 = arith.addf %373, %392 : vector<16x32xf32>
    %394 = vector.extract_strided_slice %352 {offsets = [0, 0, 16], sizes = [2, 8, 8], strides = [1, 1, 1]} : vector<2x8x32xf32> to vector<2x8x8xf32>
    %395 = vector.extract_strided_slice %353 {offsets = [0, 0, 16], sizes = [2, 8, 8], strides = [1, 1, 1]} : vector<2x8x32xf32> to vector<2x8x8xf32>
    %396 = vector.extract_strided_slice %354 {offsets = [0, 0, 16], sizes = [2, 8, 8], strides = [1, 1, 1]} : vector<2x8x32xf32> to vector<2x8x8xf32>
    "tpu.trace_start"() <{level = 10 : i32, message = "bqd,bkd->bqk"}> : () -> ()
    %cst_178 = arith.constant dense<0.000000e+00> : vector<2x8x8xf32>
    %397 = tpu.matmul %394, %395, %cst_178 {dimension_numbers = #tpu.dot_dimension_numbers<[2], [2], [1], [1], [0, 0, 0, 1, 1, 1], [0], [0]>} : vector<2x8x8xf32>, vector<2x8x8xf32>, vector<2x8x8xf32> -> vector<2x8x8xf32>
    "tpu.trace_stop"() : () -> ()
    %398 = arith.addf %397, %330 : vector<2x8x8xf32>
    %cst_179 = arith.constant dense<0xFF800000> : vector<2x8xf32>
    %399 = vector.multi_reduction <maximumf>, %398, %cst_179 [2] : vector<2x8x8xf32> to vector<2x8xf32>
    %400 = vector.shape_cast %399 : vector<2x8xf32> to vector<2x8x1xf32>
    %401 = vector.broadcast %400 : vector<2x8x1xf32> to vector<2x8x8xf32>
    %402 = arith.subf %398, %401 : vector<2x8x8xf32>
    %403 = math.exp %402 : vector<2x8x8xf32>
    %cst_180 = arith.constant dense<0.000000e+00> : vector<2x8xf32>
    %404 = vector.multi_reduction <add>, %403, %cst_180 [2] : vector<2x8x8xf32> to vector<2x8xf32>
    %405 = vector.shape_cast %404 : vector<2x8xf32> to vector<2x8x1xf32>
    %406 = tpu.reciprocal %405 {approx = true} : vector<2x8x1xf32> -> vector<2x8x1xf32>
    %407 = vector.broadcast %406 : vector<2x8x1xf32> to vector<2x8x8xf32>
    %408 = arith.mulf %403, %407 : vector<2x8x8xf32>
    "tpu.trace_start"() <{level = 10 : i32, message = "bqk,bkd->bqd"}> : () -> ()
    %cst_181 = arith.constant dense<0.000000e+00> : vector<2x8x8xf32>
    %409 = tpu.matmul %408, %396, %cst_181 {dimension_numbers = #tpu.dot_dimension_numbers<[2], [1], [1], [2], [0, 0, 0, 1, 1, 2], [0], [0]>} : vector<2x8x8xf32>, vector<2x8x8xf32>, vector<2x8x8xf32> -> vector<2x8x8xf32>
    "tpu.trace_stop"() : () -> ()
    %410 = vector.shape_cast %409 : vector<2x8x8xf32> to vector<16x8xf32>
    %411 = vector.extract_strided_slice %349 {offsets = [16, 0], sizes = [8, 32], strides = [1, 1]} : vector<32x32xf32> to vector<8x32xf32>
    %cst_182 = arith.constant dense<0.000000e+00> : vector<16x32xf32>
    %412 = tpu.matmul %410, %411, %cst_182 {dimension_numbers = #tpu.dot_dimension_numbers<[1], [0], [0], [1], [0, 0, 1, 1], [], []>} : vector<16x8xf32>, vector<8x32xf32>, vector<16x32xf32> -> vector<16x32xf32>
    %413 = arith.addf %393, %412 : vector<16x32xf32>
    %414 = vector.extract_strided_slice %352 {offsets = [0, 0, 24], sizes = [2, 8, 8], strides = [1, 1, 1]} : vector<2x8x32xf32> to vector<2x8x8xf32>
    %415 = vector.extract_strided_slice %353 {offsets = [0, 0, 24], sizes = [2, 8, 8], strides = [1, 1, 1]} : vector<2x8x32xf32> to vector<2x8x8xf32>
    %416 = vector.extract_strided_slice %354 {offsets = [0, 0, 24], sizes = [2, 8, 8], strides = [1, 1, 1]} : vector<2x8x32xf32> to vector<2x8x8xf32>
    "tpu.trace_start"() <{level = 10 : i32, message = "bqd,bkd->bqk"}> : () -> ()
    %cst_183 = arith.constant dense<0.000000e+00> : vector<2x8x8xf32>
    %417 = tpu.matmul %414, %415, %cst_183 {dimension_numbers = #tpu.dot_dimension_numbers<[2], [2], [1], [1], [0, 0, 0, 1, 1, 1], [0], [0]>} : vector<2x8x8xf32>, vector<2x8x8xf32>, vector<2x8x8xf32> -> vector<2x8x8xf32>
    "tpu.trace_stop"() : () -> ()
    %418 = arith.addf %417, %330 : vector<2x8x8xf32>
    %cst_184 = arith.constant dense<0xFF800000> : vector<2x8xf32>
    %419 = vector.multi_reduction <maximumf>, %418, %cst_184 [2] : vector<2x8x8xf32> to vector<2x8xf32>
    %420 = vector.shape_cast %419 : vector<2x8xf32> to vector<2x8x1xf32>
    %421 = vector.broadcast %420 : vector<2x8x1xf32> to vector<2x8x8xf32>
    %422 = arith.subf %418, %421 : vector<2x8x8xf32>
    %423 = math.exp %422 : vector<2x8x8xf32>
    %cst_185 = arith.constant dense<0.000000e+00> : vector<2x8xf32>
    %424 = vector.multi_reduction <add>, %423, %cst_185 [2] : vector<2x8x8xf32> to vector<2x8xf32>
    %425 = vector.shape_cast %424 : vector<2x8xf32> to vector<2x8x1xf32>
    %426 = tpu.reciprocal %425 {approx = true} : vector<2x8x1xf32> -> vector<2x8x1xf32>
    %427 = vector.broadcast %426 : vector<2x8x1xf32> to vector<2x8x8xf32>
    %428 = arith.mulf %423, %427 : vector<2x8x8xf32>
    "tpu.trace_start"() <{level = 10 : i32, message = "bqk,bkd->bqd"}> : () -> ()
    %cst_186 = arith.constant dense<0.000000e+00> : vector<2x8x8xf32>
    %429 = tpu.matmul %428, %416, %cst_186 {dimension_numbers = #tpu.dot_dimension_numbers<[2], [1], [1], [2], [0, 0, 0, 1, 1, 2], [0], [0]>} : vector<2x8x8xf32>, vector<2x8x8xf32>, vector<2x8x8xf32> -> vector<2x8x8xf32>
    "tpu.trace_stop"() : () -> ()
    %430 = vector.shape_cast %429 : vector<2x8x8xf32> to vector<16x8xf32>
    %431 = vector.extract_strided_slice %349 {offsets = [24, 0], sizes = [8, 32], strides = [1, 1]} : vector<32x32xf32> to vector<8x32xf32>
    %cst_187 = arith.constant dense<0.000000e+00> : vector<16x32xf32>
    %432 = tpu.matmul %430, %431, %cst_187 {dimension_numbers = #tpu.dot_dimension_numbers<[1], [0], [0], [1], [0, 0, 1, 1], [], []>} : vector<16x8xf32>, vector<8x32xf32>, vector<16x32xf32> -> vector<16x32xf32>
    %433 = arith.addf %413, %432 : vector<16x32xf32>
    %434 = vector.broadcast %351 : vector<1x32xf32> to vector<16x32xf32>
    %435 = arith.addf %433, %434 : vector<16x32xf32>
    %436 = arith.addf %337, %435 : vector<16x32xf32>
    %c0_188 = arith.constant 0 : index
    %c0_189 = arith.constant 0 : index
    %c0_190 = arith.constant 0 : index
    %437 = vector.load %arg21[%c0_188, %c0_189, %c0_190] : memref<2x1x32xf32, #tpu.memory_space<vmem>>, vector<1x1x32xf32>
    %438 = vector.shape_cast %437 : vector<1x1x32xf32> to vector<1x32xf32>
    %c0_191 = arith.constant 0 : index
    %c0_192 = arith.constant 0 : index
    %c0_193 = arith.constant 0 : index
    %439 = vector.load %arg22[%c0_191, %c0_192, %c0_193] : memref<2x1x32xf32, #tpu.memory_space<vmem>>, vector<1x1x32xf32>
    %440 = vector.shape_cast %439 : vector<1x1x32xf32> to vector<1x32xf32>
    %cst_194 = arith.constant dense<0.000000e+00> : vector<16xf32>
    %441 = vector.multi_reduction <add>, %436, %cst_194 [1] : vector<16x32xf32> to vector<16xf32>
    %442 = vector.shape_cast %441 : vector<16xf32> to vector<16x1xf32>
    %cst_195 = arith.constant 3.200000e+01 : f32
    %443 = vector.broadcast %cst_195 : f32 to vector<16x1xf32>
    %444 = arith.divf %442, %443 : vector<16x1xf32>
    %445 = vector.broadcast %444 : vector<16x1xf32> to vector<16x32xf32>
    %446 = arith.subf %436, %445 : vector<16x32xf32>
    %447 = arith.mulf %446, %446 : vector<16x32xf32>
    %cst_196 = arith.constant dense<0.000000e+00> : vector<16xf32>
    %448 = vector.multi_reduction <add>, %447, %cst_196 [1] : vector<16x32xf32> to vector<16xf32>
    %449 = vector.shape_cast %448 : vector<16xf32> to vector<16x1xf32>
    %cst_197 = arith.constant 3.200000e+01 : f32
    %450 = vector.broadcast %cst_197 : f32 to vector<16x1xf32>
    %451 = arith.divf %449, %450 : vector<16x1xf32>
    %cst_198 = arith.constant 9.99999974E-6 : f32
    %452 = vector.broadcast %cst_198 : f32 to vector<16x1xf32>
    %453 = arith.addf %451, %452 : vector<16x1xf32>
    %454 = math.rsqrt %453 : vector<16x1xf32>
    %455 = vector.broadcast %454 : vector<16x1xf32> to vector<16x32xf32>
    %456 = arith.mulf %446, %455 : vector<16x32xf32>
    %457 = vector.broadcast %438 : vector<1x32xf32> to vector<16x32xf32>
    %458 = arith.mulf %456, %457 : vector<16x32xf32>
    %459 = vector.broadcast %440 : vector<1x32xf32> to vector<16x32xf32>
    %460 = arith.addf %458, %459 : vector<16x32xf32>
    %c0_199 = arith.constant 0 : index
    %c0_200 = arith.constant 0 : index
    %c0_201 = arith.constant 0 : index
    %461 = vector.load %arg23[%c0_199, %c0_200, %c0_201] : memref<2x32x32xf32, #tpu.memory_space<vmem>>, vector<1x32x32xf32>
    %462 = vector.shape_cast %461 : vector<1x32x32xf32> to vector<32x32xf32>
    %cst_202 = arith.constant dense<0.000000e+00> : vector<16x32xf32>
    %463 = tpu.matmul %460, %462, %cst_202 {dimension_numbers = #tpu.dot_dimension_numbers<[1], [0], [0], [1], [0, 0, 1, 1], [], []>} : vector<16x32xf32>, vector<32x32xf32>, vector<16x32xf32> -> vector<16x32xf32>
    %c0_203 = arith.constant 0 : index
    %c0_204 = arith.constant 0 : index
    %c0_205 = arith.constant 0 : index
    %464 = vector.load %arg24[%c0_203, %c0_204, %c0_205] : memref<2x1x32xf32, #tpu.memory_space<vmem>>, vector<1x1x32xf32>
    %465 = vector.shape_cast %464 : vector<1x1x32xf32> to vector<1x32xf32>
    %466 = vector.broadcast %465 : vector<1x32xf32> to vector<16x32xf32>
    %467 = arith.addf %463, %466 : vector<16x32xf32>
    %468 = vector.extract_strided_slice %336 {offsets = [0, 0], sizes = [16, 32], strides = [1, 1]} : vector<16x128xf32> to vector<16x32xf32>
    %469 = vector.extract_strided_slice %336 {offsets = [0, 32], sizes = [16, 32], strides = [1, 1]} : vector<16x128xf32> to vector<16x32xf32>
    %c0_206 = arith.constant 0 : index
    %c0_207 = arith.constant 0 : index
    %c0_208 = arith.constant 0 : index
    %470 = vector.load %arg27[%c0_206, %c0_207, %c0_208] : memref<2x32x32xf32, #tpu.memory_space<vmem>>, vector<1x32x32xf32>
    %471 = vector.shape_cast %470 : vector<1x32x32xf32> to vector<32x32xf32>
    %c0_209 = arith.constant 0 : index
    %c0_210 = arith.constant 0 : index
    %c0_211 = arith.constant 0 : index
    %472 = vector.load %arg28[%c0_209, %c0_210, %c0_211] : memref<2x1x32xf32, #tpu.memory_space<vmem>>, vector<1x1x32xf32>
    %473 = vector.shape_cast %472 : vector<1x1x32xf32> to vector<1x32xf32>
    %474 = vector.shape_cast %467 : vector<16x32xf32> to vector<2x8x32xf32>
    %475 = vector.shape_cast %468 : vector<16x32xf32> to vector<2x8x32xf32>
    %476 = vector.shape_cast %469 : vector<16x32xf32> to vector<2x8x32xf32>
    %477 = vector.extract_strided_slice %474 {offsets = [0, 0, 0], sizes = [2, 8, 8], strides = [1, 1, 1]} : vector<2x8x32xf32> to vector<2x8x8xf32>
    %478 = vector.extract_strided_slice %475 {offsets = [0, 0, 0], sizes = [2, 8, 8], strides = [1, 1, 1]} : vector<2x8x32xf32> to vector<2x8x8xf32>
    %479 = vector.extract_strided_slice %476 {offsets = [0, 0, 0], sizes = [2, 8, 8], strides = [1, 1, 1]} : vector<2x8x32xf32> to vector<2x8x8xf32>
    "tpu.trace_start"() <{level = 10 : i32, message = "bqd,bkd->bqk"}> : () -> ()
    %cst_212 = arith.constant dense<0.000000e+00> : vector<2x8x8xf32>
    %480 = tpu.matmul %477, %478, %cst_212 {dimension_numbers = #tpu.dot_dimension_numbers<[2], [2], [1], [1], [0, 0, 0, 1, 1, 1], [0], [0]>} : vector<2x8x8xf32>, vector<2x8x8xf32>, vector<2x8x8xf32> -> vector<2x8x8xf32>
    "tpu.trace_stop"() : () -> ()
    %481 = arith.addf %480, %331 : vector<2x8x8xf32>
    %cst_213 = arith.constant dense<0xFF800000> : vector<2x8xf32>
    %482 = vector.multi_reduction <maximumf>, %481, %cst_213 [2] : vector<2x8x8xf32> to vector<2x8xf32>
    %483 = vector.shape_cast %482 : vector<2x8xf32> to vector<2x8x1xf32>
    %484 = vector.broadcast %483 : vector<2x8x1xf32> to vector<2x8x8xf32>
    %485 = arith.subf %481, %484 : vector<2x8x8xf32>
    %486 = math.exp %485 : vector<2x8x8xf32>
    %cst_214 = arith.constant dense<0.000000e+00> : vector<2x8xf32>
    %487 = vector.multi_reduction <add>, %486, %cst_214 [2] : vector<2x8x8xf32> to vector<2x8xf32>
    %488 = vector.shape_cast %487 : vector<2x8xf32> to vector<2x8x1xf32>
    %489 = tpu.reciprocal %488 {approx = true} : vector<2x8x1xf32> -> vector<2x8x1xf32>
    %490 = vector.broadcast %489 : vector<2x8x1xf32> to vector<2x8x8xf32>
    %491 = arith.mulf %486, %490 : vector<2x8x8xf32>
    "tpu.trace_start"() <{level = 10 : i32, message = "bqk,bkd->bqd"}> : () -> ()
    %cst_215 = arith.constant dense<0.000000e+00> : vector<2x8x8xf32>
    %492 = tpu.matmul %491, %479, %cst_215 {dimension_numbers = #tpu.dot_dimension_numbers<[2], [1], [1], [2], [0, 0, 0, 1, 1, 2], [0], [0]>} : vector<2x8x8xf32>, vector<2x8x8xf32>, vector<2x8x8xf32> -> vector<2x8x8xf32>
    "tpu.trace_stop"() : () -> ()
    %493 = vector.shape_cast %492 : vector<2x8x8xf32> to vector<16x8xf32>
    %494 = vector.extract_strided_slice %471 {offsets = [0, 0], sizes = [8, 32], strides = [1, 1]} : vector<32x32xf32> to vector<8x32xf32>
    %cst_216 = arith.constant dense<0.000000e+00> : vector<16x32xf32>
    %495 = tpu.matmul %493, %494, %cst_216 {dimension_numbers = #tpu.dot_dimension_numbers<[1], [0], [0], [1], [0, 0, 1, 1], [], []>} : vector<16x8xf32>, vector<8x32xf32>, vector<16x32xf32> -> vector<16x32xf32>
    %496 = vector.extract_strided_slice %474 {offsets = [0, 0, 8], sizes = [2, 8, 8], strides = [1, 1, 1]} : vector<2x8x32xf32> to vector<2x8x8xf32>
    %497 = vector.extract_strided_slice %475 {offsets = [0, 0, 8], sizes = [2, 8, 8], strides = [1, 1, 1]} : vector<2x8x32xf32> to vector<2x8x8xf32>
    %498 = vector.extract_strided_slice %476 {offsets = [0, 0, 8], sizes = [2, 8, 8], strides = [1, 1, 1]} : vector<2x8x32xf32> to vector<2x8x8xf32>
    "tpu.trace_start"() <{level = 10 : i32, message = "bqd,bkd->bqk"}> : () -> ()
    %cst_217 = arith.constant dense<0.000000e+00> : vector<2x8x8xf32>
    %499 = tpu.matmul %496, %497, %cst_217 {dimension_numbers = #tpu.dot_dimension_numbers<[2], [2], [1], [1], [0, 0, 0, 1, 1, 1], [0], [0]>} : vector<2x8x8xf32>, vector<2x8x8xf32>, vector<2x8x8xf32> -> vector<2x8x8xf32>
    "tpu.trace_stop"() : () -> ()
    %500 = arith.addf %499, %331 : vector<2x8x8xf32>
    %cst_218 = arith.constant dense<0xFF800000> : vector<2x8xf32>
    %501 = vector.multi_reduction <maximumf>, %500, %cst_218 [2] : vector<2x8x8xf32> to vector<2x8xf32>
    %502 = vector.shape_cast %501 : vector<2x8xf32> to vector<2x8x1xf32>
    %503 = vector.broadcast %502 : vector<2x8x1xf32> to vector<2x8x8xf32>
    %504 = arith.subf %500, %503 : vector<2x8x8xf32>
    %505 = math.exp %504 : vector<2x8x8xf32>
    %cst_219 = arith.constant dense<0.000000e+00> : vector<2x8xf32>
    %506 = vector.multi_reduction <add>, %505, %cst_219 [2] : vector<2x8x8xf32> to vector<2x8xf32>
    %507 = vector.shape_cast %506 : vector<2x8xf32> to vector<2x8x1xf32>
    %508 = tpu.reciprocal %507 {approx = true} : vector<2x8x1xf32> -> vector<2x8x1xf32>
    %509 = vector.broadcast %508 : vector<2x8x1xf32> to vector<2x8x8xf32>
    %510 = arith.mulf %505, %509 : vector<2x8x8xf32>
    "tpu.trace_start"() <{level = 10 : i32, message = "bqk,bkd->bqd"}> : () -> ()
    %cst_220 = arith.constant dense<0.000000e+00> : vector<2x8x8xf32>
    %511 = tpu.matmul %510, %498, %cst_220 {dimension_numbers = #tpu.dot_dimension_numbers<[2], [1], [1], [2], [0, 0, 0, 1, 1, 2], [0], [0]>} : vector<2x8x8xf32>, vector<2x8x8xf32>, vector<2x8x8xf32> -> vector<2x8x8xf32>
    "tpu.trace_stop"() : () -> ()
    %512 = vector.shape_cast %511 : vector<2x8x8xf32> to vector<16x8xf32>
    %513 = vector.extract_strided_slice %471 {offsets = [8, 0], sizes = [8, 32], strides = [1, 1]} : vector<32x32xf32> to vector<8x32xf32>
    %cst_221 = arith.constant dense<0.000000e+00> : vector<16x32xf32>
    %514 = tpu.matmul %512, %513, %cst_221 {dimension_numbers = #tpu.dot_dimension_numbers<[1], [0], [0], [1], [0, 0, 1, 1], [], []>} : vector<16x8xf32>, vector<8x32xf32>, vector<16x32xf32> -> vector<16x32xf32>
    %515 = arith.addf %495, %514 : vector<16x32xf32>
    %516 = vector.extract_strided_slice %474 {offsets = [0, 0, 16], sizes = [2, 8, 8], strides = [1, 1, 1]} : vector<2x8x32xf32> to vector<2x8x8xf32>
    %517 = vector.extract_strided_slice %475 {offsets = [0, 0, 16], sizes = [2, 8, 8], strides = [1, 1, 1]} : vector<2x8x32xf32> to vector<2x8x8xf32>
    %518 = vector.extract_strided_slice %476 {offsets = [0, 0, 16], sizes = [2, 8, 8], strides = [1, 1, 1]} : vector<2x8x32xf32> to vector<2x8x8xf32>
    "tpu.trace_start"() <{level = 10 : i32, message = "bqd,bkd->bqk"}> : () -> ()
    %cst_222 = arith.constant dense<0.000000e+00> : vector<2x8x8xf32>
    %519 = tpu.matmul %516, %517, %cst_222 {dimension_numbers = #tpu.dot_dimension_numbers<[2], [2], [1], [1], [0, 0, 0, 1, 1, 1], [0], [0]>} : vector<2x8x8xf32>, vector<2x8x8xf32>, vector<2x8x8xf32> -> vector<2x8x8xf32>
    "tpu.trace_stop"() : () -> ()
    %520 = arith.addf %519, %331 : vector<2x8x8xf32>
    %cst_223 = arith.constant dense<0xFF800000> : vector<2x8xf32>
    %521 = vector.multi_reduction <maximumf>, %520, %cst_223 [2] : vector<2x8x8xf32> to vector<2x8xf32>
    %522 = vector.shape_cast %521 : vector<2x8xf32> to vector<2x8x1xf32>
    %523 = vector.broadcast %522 : vector<2x8x1xf32> to vector<2x8x8xf32>
    %524 = arith.subf %520, %523 : vector<2x8x8xf32>
    %525 = math.exp %524 : vector<2x8x8xf32>
    %cst_224 = arith.constant dense<0.000000e+00> : vector<2x8xf32>
    %526 = vector.multi_reduction <add>, %525, %cst_224 [2] : vector<2x8x8xf32> to vector<2x8xf32>
    %527 = vector.shape_cast %526 : vector<2x8xf32> to vector<2x8x1xf32>
    %528 = tpu.reciprocal %527 {approx = true} : vector<2x8x1xf32> -> vector<2x8x1xf32>
    %529 = vector.broadcast %528 : vector<2x8x1xf32> to vector<2x8x8xf32>
    %530 = arith.mulf %525, %529 : vector<2x8x8xf32>
    "tpu.trace_start"() <{level = 10 : i32, message = "bqk,bkd->bqd"}> : () -> ()
    %cst_225 = arith.constant dense<0.000000e+00> : vector<2x8x8xf32>
    %531 = tpu.matmul %530, %518, %cst_225 {dimension_numbers = #tpu.dot_dimension_numbers<[2], [1], [1], [2], [0, 0, 0, 1, 1, 2], [0], [0]>} : vector<2x8x8xf32>, vector<2x8x8xf32>, vector<2x8x8xf32> -> vector<2x8x8xf32>
    "tpu.trace_stop"() : () -> ()
    %532 = vector.shape_cast %531 : vector<2x8x8xf32> to vector<16x8xf32>
    %533 = vector.extract_strided_slice %471 {offsets = [16, 0], sizes = [8, 32], strides = [1, 1]} : vector<32x32xf32> to vector<8x32xf32>
    %cst_226 = arith.constant dense<0.000000e+00> : vector<16x32xf32>
    %534 = tpu.matmul %532, %533, %cst_226 {dimension_numbers = #tpu.dot_dimension_numbers<[1], [0], [0], [1], [0, 0, 1, 1], [], []>} : vector<16x8xf32>, vector<8x32xf32>, vector<16x32xf32> -> vector<16x32xf32>
    %535 = arith.addf %515, %534 : vector<16x32xf32>
    %536 = vector.extract_strided_slice %474 {offsets = [0, 0, 24], sizes = [2, 8, 8], strides = [1, 1, 1]} : vector<2x8x32xf32> to vector<2x8x8xf32>
    %537 = vector.extract_strided_slice %475 {offsets = [0, 0, 24], sizes = [2, 8, 8], strides = [1, 1, 1]} : vector<2x8x32xf32> to vector<2x8x8xf32>
    %538 = vector.extract_strided_slice %476 {offsets = [0, 0, 24], sizes = [2, 8, 8], strides = [1, 1, 1]} : vector<2x8x32xf32> to vector<2x8x8xf32>
    "tpu.trace_start"() <{level = 10 : i32, message = "bqd,bkd->bqk"}> : () -> ()
    %cst_227 = arith.constant dense<0.000000e+00> : vector<2x8x8xf32>
    %539 = tpu.matmul %536, %537, %cst_227 {dimension_numbers = #tpu.dot_dimension_numbers<[2], [2], [1], [1], [0, 0, 0, 1, 1, 1], [0], [0]>} : vector<2x8x8xf32>, vector<2x8x8xf32>, vector<2x8x8xf32> -> vector<2x8x8xf32>
    "tpu.trace_stop"() : () -> ()
    %540 = arith.addf %539, %331 : vector<2x8x8xf32>
    %cst_228 = arith.constant dense<0xFF800000> : vector<2x8xf32>
    %541 = vector.multi_reduction <maximumf>, %540, %cst_228 [2] : vector<2x8x8xf32> to vector<2x8xf32>
    %542 = vector.shape_cast %541 : vector<2x8xf32> to vector<2x8x1xf32>
    %543 = vector.broadcast %542 : vector<2x8x1xf32> to vector<2x8x8xf32>
    %544 = arith.subf %540, %543 : vector<2x8x8xf32>
    %545 = math.exp %544 : vector<2x8x8xf32>
    %cst_229 = arith.constant dense<0.000000e+00> : vector<2x8xf32>
    %546 = vector.multi_reduction <add>, %545, %cst_229 [2] : vector<2x8x8xf32> to vector<2x8xf32>
    %547 = vector.shape_cast %546 : vector<2x8xf32> to vector<2x8x1xf32>
    %548 = tpu.reciprocal %547 {approx = true} : vector<2x8x1xf32> -> vector<2x8x1xf32>
    %549 = vector.broadcast %548 : vector<2x8x1xf32> to vector<2x8x8xf32>
    %550 = arith.mulf %545, %549 : vector<2x8x8xf32>
    "tpu.trace_start"() <{level = 10 : i32, message = "bqk,bkd->bqd"}> : () -> ()
    %cst_230 = arith.constant dense<0.000000e+00> : vector<2x8x8xf32>
    %551 = tpu.matmul %550, %538, %cst_230 {dimension_numbers = #tpu.dot_dimension_numbers<[2], [1], [1], [2], [0, 0, 0, 1, 1, 2], [0], [0]>} : vector<2x8x8xf32>, vector<2x8x8xf32>, vector<2x8x8xf32> -> vector<2x8x8xf32>
    "tpu.trace_stop"() : () -> ()
    %552 = vector.shape_cast %551 : vector<2x8x8xf32> to vector<16x8xf32>
    %553 = vector.extract_strided_slice %471 {offsets = [24, 0], sizes = [8, 32], strides = [1, 1]} : vector<32x32xf32> to vector<8x32xf32>
    %cst_231 = arith.constant dense<0.000000e+00> : vector<16x32xf32>
    %554 = tpu.matmul %552, %553, %cst_231 {dimension_numbers = #tpu.dot_dimension_numbers<[1], [0], [0], [1], [0, 0, 1, 1], [], []>} : vector<16x8xf32>, vector<8x32xf32>, vector<16x32xf32> -> vector<16x32xf32>
    %555 = arith.addf %535, %554 : vector<16x32xf32>
    %556 = vector.broadcast %473 : vector<1x32xf32> to vector<16x32xf32>
    %557 = arith.addf %555, %556 : vector<16x32xf32>
    %558 = arith.addf %460, %557 : vector<16x32xf32>
    %c0_232 = arith.constant 0 : index
    %c0_233 = arith.constant 0 : index
    %c0_234 = arith.constant 0 : index
    %559 = vector.load %arg29[%c0_232, %c0_233, %c0_234] : memref<2x1x32xf32, #tpu.memory_space<vmem>>, vector<1x1x32xf32>
    %560 = vector.shape_cast %559 : vector<1x1x32xf32> to vector<1x32xf32>
    %c0_235 = arith.constant 0 : index
    %c0_236 = arith.constant 0 : index
    %c0_237 = arith.constant 0 : index
    %561 = vector.load %arg30[%c0_235, %c0_236, %c0_237] : memref<2x1x32xf32, #tpu.memory_space<vmem>>, vector<1x1x32xf32>
    %562 = vector.shape_cast %561 : vector<1x1x32xf32> to vector<1x32xf32>
    %cst_238 = arith.constant dense<0.000000e+00> : vector<16xf32>
    %563 = vector.multi_reduction <add>, %558, %cst_238 [1] : vector<16x32xf32> to vector<16xf32>
    %564 = vector.shape_cast %563 : vector<16xf32> to vector<16x1xf32>
    %cst_239 = arith.constant 3.200000e+01 : f32
    %565 = vector.broadcast %cst_239 : f32 to vector<16x1xf32>
    %566 = arith.divf %564, %565 : vector<16x1xf32>
    %567 = vector.broadcast %566 : vector<16x1xf32> to vector<16x32xf32>
    %568 = arith.subf %558, %567 : vector<16x32xf32>
    %569 = arith.mulf %568, %568 : vector<16x32xf32>
    %cst_240 = arith.constant dense<0.000000e+00> : vector<16xf32>
    %570 = vector.multi_reduction <add>, %569, %cst_240 [1] : vector<16x32xf32> to vector<16xf32>
    %571 = vector.shape_cast %570 : vector<16xf32> to vector<16x1xf32>
    %cst_241 = arith.constant 3.200000e+01 : f32
    %572 = vector.broadcast %cst_241 : f32 to vector<16x1xf32>
    %573 = arith.divf %571, %572 : vector<16x1xf32>
    %cst_242 = arith.constant 9.99999974E-6 : f32
    %574 = vector.broadcast %cst_242 : f32 to vector<16x1xf32>
    %575 = arith.addf %573, %574 : vector<16x1xf32>
    %576 = math.rsqrt %575 : vector<16x1xf32>
    %577 = vector.broadcast %576 : vector<16x1xf32> to vector<16x32xf32>
    %578 = arith.mulf %568, %577 : vector<16x32xf32>
    %579 = vector.broadcast %560 : vector<1x32xf32> to vector<16x32xf32>
    %580 = arith.mulf %578, %579 : vector<16x32xf32>
    %581 = vector.broadcast %562 : vector<1x32xf32> to vector<16x32xf32>
    %582 = arith.addf %580, %581 : vector<16x32xf32>
    %c0_243 = arith.constant 0 : index
    %c0_244 = arith.constant 0 : index
    %c0_245 = arith.constant 0 : index
    %583 = vector.load %arg31[%c0_243, %c0_244, %c0_245] : memref<2x32x64xf32, #tpu.memory_space<vmem>>, vector<1x32x64xf32>
    %584 = vector.shape_cast %583 : vector<1x32x64xf32> to vector<32x64xf32>
    %cst_246 = arith.constant dense<0.000000e+00> : vector<16x64xf32>
    %585 = tpu.matmul %582, %584, %cst_246 {dimension_numbers = #tpu.dot_dimension_numbers<[1], [0], [0], [1], [0, 0, 1, 1], [], []>} : vector<16x32xf32>, vector<32x64xf32>, vector<16x64xf32> -> vector<16x64xf32>
    %c0_247 = arith.constant 0 : index
    %c0_248 = arith.constant 0 : index
    %c0_249 = arith.constant 0 : index
    %586 = vector.load %arg32[%c0_247, %c0_248, %c0_249] : memref<2x1x64xf32, #tpu.memory_space<vmem>>, vector<1x1x64xf32>
    %587 = vector.shape_cast %586 : vector<1x1x64xf32> to vector<1x64xf32>
    %588 = vector.broadcast %587 : vector<1x64xf32> to vector<16x64xf32>
    %589 = arith.addf %585, %588 : vector<16x64xf32>
    %cst_250 = arith.constant 0.000000e+00 : f32
    %590 = vector.broadcast %cst_250 : f32 to vector<16x64xf32>
    %591 = arith.maximumf %589, %590 : vector<16x64xf32>
    %c0_251 = arith.constant 0 : index
    %c0_252 = arith.constant 0 : index
    %c0_253 = arith.constant 0 : index
    %592 = vector.load %arg33[%c0_251, %c0_252, %c0_253] : memref<2x64x32xf32, #tpu.memory_space<vmem>>, vector<1x64x32xf32>
    %593 = vector.shape_cast %592 : vector<1x64x32xf32> to vector<64x32xf32>
    %cst_254 = arith.constant dense<0.000000e+00> : vector<16x32xf32>
    %594 = tpu.matmul %591, %593, %cst_254 {dimension_numbers = #tpu.dot_dimension_numbers<[1], [0], [0], [1], [0, 0, 1, 1], [], []>} : vector<16x64xf32>, vector<64x32xf32>, vector<16x32xf32> -> vector<16x32xf32>
    %c0_255 = arith.constant 0 : index
    %c0_256 = arith.constant 0 : index
    %c0_257 = arith.constant 0 : index
    %595 = vector.load %arg34[%c0_255, %c0_256, %c0_257] : memref<2x1x32xf32, #tpu.memory_space<vmem>>, vector<1x1x32xf32>
    %596 = vector.shape_cast %595 : vector<1x1x32xf32> to vector<1x32xf32>
    %597 = vector.broadcast %596 : vector<1x32xf32> to vector<16x32xf32>
    %598 = arith.addf %594, %597 : vector<16x32xf32>
    %599 = arith.addf %582, %598 : vector<16x32xf32>
    %c0_258 = arith.constant 0 : index
    %c0_259 = arith.constant 0 : index
    %c0_260 = arith.constant 0 : index
    %600 = vector.load %arg35[%c0_258, %c0_259, %c0_260] : memref<2x1x32xf32, #tpu.memory_space<vmem>>, vector<1x1x32xf32>
    %601 = vector.shape_cast %600 : vector<1x1x32xf32> to vector<1x32xf32>
    %c0_261 = arith.constant 0 : index
    %c0_262 = arith.constant 0 : index
    %c0_263 = arith.constant 0 : index
    %602 = vector.load %arg36[%c0_261, %c0_262, %c0_263] : memref<2x1x32xf32, #tpu.memory_space<vmem>>, vector<1x1x32xf32>
    %603 = vector.shape_cast %602 : vector<1x1x32xf32> to vector<1x32xf32>
    %cst_264 = arith.constant dense<0.000000e+00> : vector<16xf32>
    %604 = vector.multi_reduction <add>, %599, %cst_264 [1] : vector<16x32xf32> to vector<16xf32>
    %605 = vector.shape_cast %604 : vector<16xf32> to vector<16x1xf32>
    %cst_265 = arith.constant 3.200000e+01 : f32
    %606 = vector.broadcast %cst_265 : f32 to vector<16x1xf32>
    %607 = arith.divf %605, %606 : vector<16x1xf32>
    %608 = vector.broadcast %607 : vector<16x1xf32> to vector<16x32xf32>
    %609 = arith.subf %599, %608 : vector<16x32xf32>
    %610 = arith.mulf %609, %609 : vector<16x32xf32>
    %cst_266 = arith.constant dense<0.000000e+00> : vector<16xf32>
    %611 = vector.multi_reduction <add>, %610, %cst_266 [1] : vector<16x32xf32> to vector<16xf32>
    %612 = vector.shape_cast %611 : vector<16xf32> to vector<16x1xf32>
    %cst_267 = arith.constant 3.200000e+01 : f32
    %613 = vector.broadcast %cst_267 : f32 to vector<16x1xf32>
    %614 = arith.divf %612, %613 : vector<16x1xf32>
    %cst_268 = arith.constant 9.99999974E-6 : f32
    %615 = vector.broadcast %cst_268 : f32 to vector<16x1xf32>
    %616 = arith.addf %614, %615 : vector<16x1xf32>
    %617 = math.rsqrt %616 : vector<16x1xf32>
    %618 = vector.broadcast %617 : vector<16x1xf32> to vector<16x32xf32>
    %619 = arith.mulf %609, %618 : vector<16x32xf32>
    %620 = vector.broadcast %601 : vector<1x32xf32> to vector<16x32xf32>
    %621 = arith.mulf %619, %620 : vector<16x32xf32>
    %622 = vector.broadcast %603 : vector<1x32xf32> to vector<16x32xf32>
    %623 = arith.addf %621, %622 : vector<16x32xf32>
    %c1_269 = arith.constant 1 : index
    %c0_270 = arith.constant 0 : index
    %c0_271 = arith.constant 0 : index
    %624 = vector.load %arg17[%c1_269, %c0_270, %c0_271] : memref<2x32x96xf32, #tpu.memory_space<vmem>>, vector<1x32x96xf32>
    %625 = vector.shape_cast %624 : vector<1x32x96xf32> to vector<32x96xf32>
    %cst_272 = arith.constant dense<0.000000e+00> : vector<16x96xf32>
    %626 = tpu.matmul %623, %625, %cst_272 {dimension_numbers = #tpu.dot_dimension_numbers<[1], [0], [0], [1], [0, 0, 1, 1], [], []>} : vector<16x32xf32>, vector<32x96xf32>, vector<16x96xf32> -> vector<16x96xf32>
    %c1_273 = arith.constant 1 : index
    %c0_274 = arith.constant 0 : index
    %c0_275 = arith.constant 0 : index
    %627 = vector.load %arg18[%c1_273, %c0_274, %c0_275] : memref<2x1x96xf32, #tpu.memory_space<vmem>>, vector<1x1x96xf32>
    %628 = vector.shape_cast %627 : vector<1x1x96xf32> to vector<1x96xf32>
    %629 = vector.broadcast %628 : vector<1x96xf32> to vector<16x96xf32>
    %630 = arith.addf %626, %629 : vector<16x96xf32>
    %631 = vector.extract_strided_slice %630 {offsets = [0, 0], sizes = [16, 32], strides = [1, 1]} : vector<16x96xf32> to vector<16x32xf32>
    %632 = vector.extract_strided_slice %630 {offsets = [0, 32], sizes = [16, 32], strides = [1, 1]} : vector<16x96xf32> to vector<16x32xf32>
    %633 = vector.extract_strided_slice %630 {offsets = [0, 64], sizes = [16, 32], strides = [1, 1]} : vector<16x96xf32> to vector<16x32xf32>
    %c1_276 = arith.constant 1 : index
    %c0_277 = arith.constant 0 : index
    %c0_278 = arith.constant 0 : index
    %634 = vector.load %arg19[%c1_276, %c0_277, %c0_278] : memref<2x32x32xf32, #tpu.memory_space<vmem>>, vector<1x32x32xf32>
    %635 = vector.shape_cast %634 : vector<1x32x32xf32> to vector<32x32xf32>
    %c1_279 = arith.constant 1 : index
    %c0_280 = arith.constant 0 : index
    %c0_281 = arith.constant 0 : index
    %636 = vector.load %arg20[%c1_279, %c0_280, %c0_281] : memref<2x1x32xf32, #tpu.memory_space<vmem>>, vector<1x1x32xf32>
    %637 = vector.shape_cast %636 : vector<1x1x32xf32> to vector<1x32xf32>
    %638 = vector.shape_cast %631 : vector<16x32xf32> to vector<2x8x32xf32>
    %639 = vector.shape_cast %632 : vector<16x32xf32> to vector<2x8x32xf32>
    %640 = vector.shape_cast %633 : vector<16x32xf32> to vector<2x8x32xf32>
    %641 = vector.extract_strided_slice %638 {offsets = [0, 0, 0], sizes = [2, 8, 8], strides = [1, 1, 1]} : vector<2x8x32xf32> to vector<2x8x8xf32>
    %642 = vector.extract_strided_slice %639 {offsets = [0, 0, 0], sizes = [2, 8, 8], strides = [1, 1, 1]} : vector<2x8x32xf32> to vector<2x8x8xf32>
    %643 = vector.extract_strided_slice %640 {offsets = [0, 0, 0], sizes = [2, 8, 8], strides = [1, 1, 1]} : vector<2x8x32xf32> to vector<2x8x8xf32>
    "tpu.trace_start"() <{level = 10 : i32, message = "bqd,bkd->bqk"}> : () -> ()
    %cst_282 = arith.constant dense<0.000000e+00> : vector<2x8x8xf32>
    %644 = tpu.matmul %641, %642, %cst_282 {dimension_numbers = #tpu.dot_dimension_numbers<[2], [2], [1], [1], [0, 0, 0, 1, 1, 1], [0], [0]>} : vector<2x8x8xf32>, vector<2x8x8xf32>, vector<2x8x8xf32> -> vector<2x8x8xf32>
    "tpu.trace_stop"() : () -> ()
    %645 = arith.addf %644, %330 : vector<2x8x8xf32>
    %cst_283 = arith.constant dense<0xFF800000> : vector<2x8xf32>
    %646 = vector.multi_reduction <maximumf>, %645, %cst_283 [2] : vector<2x8x8xf32> to vector<2x8xf32>
    %647 = vector.shape_cast %646 : vector<2x8xf32> to vector<2x8x1xf32>
    %648 = vector.broadcast %647 : vector<2x8x1xf32> to vector<2x8x8xf32>
    %649 = arith.subf %645, %648 : vector<2x8x8xf32>
    %650 = math.exp %649 : vector<2x8x8xf32>
    %cst_284 = arith.constant dense<0.000000e+00> : vector<2x8xf32>
    %651 = vector.multi_reduction <add>, %650, %cst_284 [2] : vector<2x8x8xf32> to vector<2x8xf32>
    %652 = vector.shape_cast %651 : vector<2x8xf32> to vector<2x8x1xf32>
    %653 = tpu.reciprocal %652 {approx = true} : vector<2x8x1xf32> -> vector<2x8x1xf32>
    %654 = vector.broadcast %653 : vector<2x8x1xf32> to vector<2x8x8xf32>
    %655 = arith.mulf %650, %654 : vector<2x8x8xf32>
    "tpu.trace_start"() <{level = 10 : i32, message = "bqk,bkd->bqd"}> : () -> ()
    %cst_285 = arith.constant dense<0.000000e+00> : vector<2x8x8xf32>
    %656 = tpu.matmul %655, %643, %cst_285 {dimension_numbers = #tpu.dot_dimension_numbers<[2], [1], [1], [2], [0, 0, 0, 1, 1, 2], [0], [0]>} : vector<2x8x8xf32>, vector<2x8x8xf32>, vector<2x8x8xf32> -> vector<2x8x8xf32>
    "tpu.trace_stop"() : () -> ()
    %657 = vector.shape_cast %656 : vector<2x8x8xf32> to vector<16x8xf32>
    %658 = vector.extract_strided_slice %635 {offsets = [0, 0], sizes = [8, 32], strides = [1, 1]} : vector<32x32xf32> to vector<8x32xf32>
    %cst_286 = arith.constant dense<0.000000e+00> : vector<16x32xf32>
    %659 = tpu.matmul %657, %658, %cst_286 {dimension_numbers = #tpu.dot_dimension_numbers<[1], [0], [0], [1], [0, 0, 1, 1], [], []>} : vector<16x8xf32>, vector<8x32xf32>, vector<16x32xf32> -> vector<16x32xf32>
    %660 = vector.extract_strided_slice %638 {offsets = [0, 0, 8], sizes = [2, 8, 8], strides = [1, 1, 1]} : vector<2x8x32xf32> to vector<2x8x8xf32>
    %661 = vector.extract_strided_slice %639 {offsets = [0, 0, 8], sizes = [2, 8, 8], strides = [1, 1, 1]} : vector<2x8x32xf32> to vector<2x8x8xf32>
    %662 = vector.extract_strided_slice %640 {offsets = [0, 0, 8], sizes = [2, 8, 8], strides = [1, 1, 1]} : vector<2x8x32xf32> to vector<2x8x8xf32>
    "tpu.trace_start"() <{level = 10 : i32, message = "bqd,bkd->bqk"}> : () -> ()
    %cst_287 = arith.constant dense<0.000000e+00> : vector<2x8x8xf32>
    %663 = tpu.matmul %660, %661, %cst_287 {dimension_numbers = #tpu.dot_dimension_numbers<[2], [2], [1], [1], [0, 0, 0, 1, 1, 1], [0], [0]>} : vector<2x8x8xf32>, vector<2x8x8xf32>, vector<2x8x8xf32> -> vector<2x8x8xf32>
    "tpu.trace_stop"() : () -> ()
    %664 = arith.addf %663, %330 : vector<2x8x8xf32>
    %cst_288 = arith.constant dense<0xFF800000> : vector<2x8xf32>
    %665 = vector.multi_reduction <maximumf>, %664, %cst_288 [2] : vector<2x8x8xf32> to vector<2x8xf32>
    %666 = vector.shape_cast %665 : vector<2x8xf32> to vector<2x8x1xf32>
    %667 = vector.broadcast %666 : vector<2x8x1xf32> to vector<2x8x8xf32>
    %668 = arith.subf %664, %667 : vector<2x8x8xf32>
    %669 = math.exp %668 : vector<2x8x8xf32>
    %cst_289 = arith.constant dense<0.000000e+00> : vector<2x8xf32>
    %670 = vector.multi_reduction <add>, %669, %cst_289 [2] : vector<2x8x8xf32> to vector<2x8xf32>
    %671 = vector.shape_cast %670 : vector<2x8xf32> to vector<2x8x1xf32>
    %672 = tpu.reciprocal %671 {approx = true} : vector<2x8x1xf32> -> vector<2x8x1xf32>
    %673 = vector.broadcast %672 : vector<2x8x1xf32> to vector<2x8x8xf32>
    %674 = arith.mulf %669, %673 : vector<2x8x8xf32>
    "tpu.trace_start"() <{level = 10 : i32, message = "bqk,bkd->bqd"}> : () -> ()
    %cst_290 = arith.constant dense<0.000000e+00> : vector<2x8x8xf32>
    %675 = tpu.matmul %674, %662, %cst_290 {dimension_numbers = #tpu.dot_dimension_numbers<[2], [1], [1], [2], [0, 0, 0, 1, 1, 2], [0], [0]>} : vector<2x8x8xf32>, vector<2x8x8xf32>, vector<2x8x8xf32> -> vector<2x8x8xf32>
    "tpu.trace_stop"() : () -> ()
    %676 = vector.shape_cast %675 : vector<2x8x8xf32> to vector<16x8xf32>
    %677 = vector.extract_strided_slice %635 {offsets = [8, 0], sizes = [8, 32], strides = [1, 1]} : vector<32x32xf32> to vector<8x32xf32>
    %cst_291 = arith.constant dense<0.000000e+00> : vector<16x32xf32>
    %678 = tpu.matmul %676, %677, %cst_291 {dimension_numbers = #tpu.dot_dimension_numbers<[1], [0], [0], [1], [0, 0, 1, 1], [], []>} : vector<16x8xf32>, vector<8x32xf32>, vector<16x32xf32> -> vector<16x32xf32>
    %679 = arith.addf %659, %678 : vector<16x32xf32>
    %680 = vector.extract_strided_slice %638 {offsets = [0, 0, 16], sizes = [2, 8, 8], strides = [1, 1, 1]} : vector<2x8x32xf32> to vector<2x8x8xf32>
    %681 = vector.extract_strided_slice %639 {offsets = [0, 0, 16], sizes = [2, 8, 8], strides = [1, 1, 1]} : vector<2x8x32xf32> to vector<2x8x8xf32>
    %682 = vector.extract_strided_slice %640 {offsets = [0, 0, 16], sizes = [2, 8, 8], strides = [1, 1, 1]} : vector<2x8x32xf32> to vector<2x8x8xf32>
    "tpu.trace_start"() <{level = 10 : i32, message = "bqd,bkd->bqk"}> : () -> ()
    %cst_292 = arith.constant dense<0.000000e+00> : vector<2x8x8xf32>
    %683 = tpu.matmul %680, %681, %cst_292 {dimension_numbers = #tpu.dot_dimension_numbers<[2], [2], [1], [1], [0, 0, 0, 1, 1, 1], [0], [0]>} : vector<2x8x8xf32>, vector<2x8x8xf32>, vector<2x8x8xf32> -> vector<2x8x8xf32>
    "tpu.trace_stop"() : () -> ()
    %684 = arith.addf %683, %330 : vector<2x8x8xf32>
    %cst_293 = arith.constant dense<0xFF800000> : vector<2x8xf32>
    %685 = vector.multi_reduction <maximumf>, %684, %cst_293 [2] : vector<2x8x8xf32> to vector<2x8xf32>
    %686 = vector.shape_cast %685 : vector<2x8xf32> to vector<2x8x1xf32>
    %687 = vector.broadcast %686 : vector<2x8x1xf32> to vector<2x8x8xf32>
    %688 = arith.subf %684, %687 : vector<2x8x8xf32>
    %689 = math.exp %688 : vector<2x8x8xf32>
    %cst_294 = arith.constant dense<0.000000e+00> : vector<2x8xf32>
    %690 = vector.multi_reduction <add>, %689, %cst_294 [2] : vector<2x8x8xf32> to vector<2x8xf32>
    %691 = vector.shape_cast %690 : vector<2x8xf32> to vector<2x8x1xf32>
    %692 = tpu.reciprocal %691 {approx = true} : vector<2x8x1xf32> -> vector<2x8x1xf32>
    %693 = vector.broadcast %692 : vector<2x8x1xf32> to vector<2x8x8xf32>
    %694 = arith.mulf %689, %693 : vector<2x8x8xf32>
    "tpu.trace_start"() <{level = 10 : i32, message = "bqk,bkd->bqd"}> : () -> ()
    %cst_295 = arith.constant dense<0.000000e+00> : vector<2x8x8xf32>
    %695 = tpu.matmul %694, %682, %cst_295 {dimension_numbers = #tpu.dot_dimension_numbers<[2], [1], [1], [2], [0, 0, 0, 1, 1, 2], [0], [0]>} : vector<2x8x8xf32>, vector<2x8x8xf32>, vector<2x8x8xf32> -> vector<2x8x8xf32>
    "tpu.trace_stop"() : () -> ()
    %696 = vector.shape_cast %695 : vector<2x8x8xf32> to vector<16x8xf32>
    %697 = vector.extract_strided_slice %635 {offsets = [16, 0], sizes = [8, 32], strides = [1, 1]} : vector<32x32xf32> to vector<8x32xf32>
    %cst_296 = arith.constant dense<0.000000e+00> : vector<16x32xf32>
    %698 = tpu.matmul %696, %697, %cst_296 {dimension_numbers = #tpu.dot_dimension_numbers<[1], [0], [0], [1], [0, 0, 1, 1], [], []>} : vector<16x8xf32>, vector<8x32xf32>, vector<16x32xf32> -> vector<16x32xf32>
    %699 = arith.addf %679, %698 : vector<16x32xf32>
    %700 = vector.extract_strided_slice %638 {offsets = [0, 0, 24], sizes = [2, 8, 8], strides = [1, 1, 1]} : vector<2x8x32xf32> to vector<2x8x8xf32>
    %701 = vector.extract_strided_slice %639 {offsets = [0, 0, 24], sizes = [2, 8, 8], strides = [1, 1, 1]} : vector<2x8x32xf32> to vector<2x8x8xf32>
    %702 = vector.extract_strided_slice %640 {offsets = [0, 0, 24], sizes = [2, 8, 8], strides = [1, 1, 1]} : vector<2x8x32xf32> to vector<2x8x8xf32>
    "tpu.trace_start"() <{level = 10 : i32, message = "bqd,bkd->bqk"}> : () -> ()
    %cst_297 = arith.constant dense<0.000000e+00> : vector<2x8x8xf32>
    %703 = tpu.matmul %700, %701, %cst_297 {dimension_numbers = #tpu.dot_dimension_numbers<[2], [2], [1], [1], [0, 0, 0, 1, 1, 1], [0], [0]>} : vector<2x8x8xf32>, vector<2x8x8xf32>, vector<2x8x8xf32> -> vector<2x8x8xf32>
    "tpu.trace_stop"() : () -> ()
    %704 = arith.addf %703, %330 : vector<2x8x8xf32>
    %cst_298 = arith.constant dense<0xFF800000> : vector<2x8xf32>
    %705 = vector.multi_reduction <maximumf>, %704, %cst_298 [2] : vector<2x8x8xf32> to vector<2x8xf32>
    %706 = vector.shape_cast %705 : vector<2x8xf32> to vector<2x8x1xf32>
    %707 = vector.broadcast %706 : vector<2x8x1xf32> to vector<2x8x8xf32>
    %708 = arith.subf %704, %707 : vector<2x8x8xf32>
    %709 = math.exp %708 : vector<2x8x8xf32>
    %cst_299 = arith.constant dense<0.000000e+00> : vector<2x8xf32>
    %710 = vector.multi_reduction <add>, %709, %cst_299 [2] : vector<2x8x8xf32> to vector<2x8xf32>
    %711 = vector.shape_cast %710 : vector<2x8xf32> to vector<2x8x1xf32>
    %712 = tpu.reciprocal %711 {approx = true} : vector<2x8x1xf32> -> vector<2x8x1xf32>
    %713 = vector.broadcast %712 : vector<2x8x1xf32> to vector<2x8x8xf32>
    %714 = arith.mulf %709, %713 : vector<2x8x8xf32>
    "tpu.trace_start"() <{level = 10 : i32, message = "bqk,bkd->bqd"}> : () -> ()
    %cst_300 = arith.constant dense<0.000000e+00> : vector<2x8x8xf32>
    %715 = tpu.matmul %714, %702, %cst_300 {dimension_numbers = #tpu.dot_dimension_numbers<[2], [1], [1], [2], [0, 0, 0, 1, 1, 2], [0], [0]>} : vector<2x8x8xf32>, vector<2x8x8xf32>, vector<2x8x8xf32> -> vector<2x8x8xf32>
    "tpu.trace_stop"() : () -> ()
    %716 = vector.shape_cast %715 : vector<2x8x8xf32> to vector<16x8xf32>
    %717 = vector.extract_strided_slice %635 {offsets = [24, 0], sizes = [8, 32], strides = [1, 1]} : vector<32x32xf32> to vector<8x32xf32>
    %cst_301 = arith.constant dense<0.000000e+00> : vector<16x32xf32>
    %718 = tpu.matmul %716, %717, %cst_301 {dimension_numbers = #tpu.dot_dimension_numbers<[1], [0], [0], [1], [0, 0, 1, 1], [], []>} : vector<16x8xf32>, vector<8x32xf32>, vector<16x32xf32> -> vector<16x32xf32>
    %719 = arith.addf %699, %718 : vector<16x32xf32>
    %720 = vector.broadcast %637 : vector<1x32xf32> to vector<16x32xf32>
    %721 = arith.addf %719, %720 : vector<16x32xf32>
    %722 = arith.addf %623, %721 : vector<16x32xf32>
    %c1_302 = arith.constant 1 : index
    %c0_303 = arith.constant 0 : index
    %c0_304 = arith.constant 0 : index
    %723 = vector.load %arg21[%c1_302, %c0_303, %c0_304] : memref<2x1x32xf32, #tpu.memory_space<vmem>>, vector<1x1x32xf32>
    %724 = vector.shape_cast %723 : vector<1x1x32xf32> to vector<1x32xf32>
    %c1_305 = arith.constant 1 : index
    %c0_306 = arith.constant 0 : index
    %c0_307 = arith.constant 0 : index
    %725 = vector.load %arg22[%c1_305, %c0_306, %c0_307] : memref<2x1x32xf32, #tpu.memory_space<vmem>>, vector<1x1x32xf32>
    %726 = vector.shape_cast %725 : vector<1x1x32xf32> to vector<1x32xf32>
    %cst_308 = arith.constant dense<0.000000e+00> : vector<16xf32>
    %727 = vector.multi_reduction <add>, %722, %cst_308 [1] : vector<16x32xf32> to vector<16xf32>
    %728 = vector.shape_cast %727 : vector<16xf32> to vector<16x1xf32>
    %cst_309 = arith.constant 3.200000e+01 : f32
    %729 = vector.broadcast %cst_309 : f32 to vector<16x1xf32>
    %730 = arith.divf %728, %729 : vector<16x1xf32>
    %731 = vector.broadcast %730 : vector<16x1xf32> to vector<16x32xf32>
    %732 = arith.subf %722, %731 : vector<16x32xf32>
    %733 = arith.mulf %732, %732 : vector<16x32xf32>
    %cst_310 = arith.constant dense<0.000000e+00> : vector<16xf32>
    %734 = vector.multi_reduction <add>, %733, %cst_310 [1] : vector<16x32xf32> to vector<16xf32>
    %735 = vector.shape_cast %734 : vector<16xf32> to vector<16x1xf32>
    %cst_311 = arith.constant 3.200000e+01 : f32
    %736 = vector.broadcast %cst_311 : f32 to vector<16x1xf32>
    %737 = arith.divf %735, %736 : vector<16x1xf32>
    %cst_312 = arith.constant 9.99999974E-6 : f32
    %738 = vector.broadcast %cst_312 : f32 to vector<16x1xf32>
    %739 = arith.addf %737, %738 : vector<16x1xf32>
    %740 = math.rsqrt %739 : vector<16x1xf32>
    %741 = vector.broadcast %740 : vector<16x1xf32> to vector<16x32xf32>
    %742 = arith.mulf %732, %741 : vector<16x32xf32>
    %743 = vector.broadcast %724 : vector<1x32xf32> to vector<16x32xf32>
    %744 = arith.mulf %742, %743 : vector<16x32xf32>
    %745 = vector.broadcast %726 : vector<1x32xf32> to vector<16x32xf32>
    %746 = arith.addf %744, %745 : vector<16x32xf32>
    %c1_313 = arith.constant 1 : index
    %c0_314 = arith.constant 0 : index
    %c0_315 = arith.constant 0 : index
    %747 = vector.load %arg23[%c1_313, %c0_314, %c0_315] : memref<2x32x32xf32, #tpu.memory_space<vmem>>, vector<1x32x32xf32>
    %748 = vector.shape_cast %747 : vector<1x32x32xf32> to vector<32x32xf32>
    %cst_316 = arith.constant dense<0.000000e+00> : vector<16x32xf32>
    %749 = tpu.matmul %746, %748, %cst_316 {dimension_numbers = #tpu.dot_dimension_numbers<[1], [0], [0], [1], [0, 0, 1, 1], [], []>} : vector<16x32xf32>, vector<32x32xf32>, vector<16x32xf32> -> vector<16x32xf32>
    %c1_317 = arith.constant 1 : index
    %c0_318 = arith.constant 0 : index
    %c0_319 = arith.constant 0 : index
    %750 = vector.load %arg24[%c1_317, %c0_318, %c0_319] : memref<2x1x32xf32, #tpu.memory_space<vmem>>, vector<1x1x32xf32>
    %751 = vector.shape_cast %750 : vector<1x1x32xf32> to vector<1x32xf32>
    %752 = vector.broadcast %751 : vector<1x32xf32> to vector<16x32xf32>
    %753 = arith.addf %749, %752 : vector<16x32xf32>
    %754 = vector.extract_strided_slice %336 {offsets = [0, 64], sizes = [16, 32], strides = [1, 1]} : vector<16x128xf32> to vector<16x32xf32>
    %755 = vector.extract_strided_slice %336 {offsets = [0, 96], sizes = [16, 32], strides = [1, 1]} : vector<16x128xf32> to vector<16x32xf32>
    %c1_320 = arith.constant 1 : index
    %c0_321 = arith.constant 0 : index
    %c0_322 = arith.constant 0 : index
    %756 = vector.load %arg27[%c1_320, %c0_321, %c0_322] : memref<2x32x32xf32, #tpu.memory_space<vmem>>, vector<1x32x32xf32>
    %757 = vector.shape_cast %756 : vector<1x32x32xf32> to vector<32x32xf32>
    %c1_323 = arith.constant 1 : index
    %c0_324 = arith.constant 0 : index
    %c0_325 = arith.constant 0 : index
    %758 = vector.load %arg28[%c1_323, %c0_324, %c0_325] : memref<2x1x32xf32, #tpu.memory_space<vmem>>, vector<1x1x32xf32>
    %759 = vector.shape_cast %758 : vector<1x1x32xf32> to vector<1x32xf32>
    %760 = vector.shape_cast %753 : vector<16x32xf32> to vector<2x8x32xf32>
    %761 = vector.shape_cast %754 : vector<16x32xf32> to vector<2x8x32xf32>
    %762 = vector.shape_cast %755 : vector<16x32xf32> to vector<2x8x32xf32>
    %763 = vector.extract_strided_slice %760 {offsets = [0, 0, 0], sizes = [2, 8, 8], strides = [1, 1, 1]} : vector<2x8x32xf32> to vector<2x8x8xf32>
    %764 = vector.extract_strided_slice %761 {offsets = [0, 0, 0], sizes = [2, 8, 8], strides = [1, 1, 1]} : vector<2x8x32xf32> to vector<2x8x8xf32>
    %765 = vector.extract_strided_slice %762 {offsets = [0, 0, 0], sizes = [2, 8, 8], strides = [1, 1, 1]} : vector<2x8x32xf32> to vector<2x8x8xf32>
    "tpu.trace_start"() <{level = 10 : i32, message = "bqd,bkd->bqk"}> : () -> ()
    %cst_326 = arith.constant dense<0.000000e+00> : vector<2x8x8xf32>
    %766 = tpu.matmul %763, %764, %cst_326 {dimension_numbers = #tpu.dot_dimension_numbers<[2], [2], [1], [1], [0, 0, 0, 1, 1, 1], [0], [0]>} : vector<2x8x8xf32>, vector<2x8x8xf32>, vector<2x8x8xf32> -> vector<2x8x8xf32>
    "tpu.trace_stop"() : () -> ()
    %767 = arith.addf %766, %331 : vector<2x8x8xf32>
    %cst_327 = arith.constant dense<0xFF800000> : vector<2x8xf32>
    %768 = vector.multi_reduction <maximumf>, %767, %cst_327 [2] : vector<2x8x8xf32> to vector<2x8xf32>
    %769 = vector.shape_cast %768 : vector<2x8xf32> to vector<2x8x1xf32>
    %770 = vector.broadcast %769 : vector<2x8x1xf32> to vector<2x8x8xf32>
    %771 = arith.subf %767, %770 : vector<2x8x8xf32>
    %772 = math.exp %771 : vector<2x8x8xf32>
    %cst_328 = arith.constant dense<0.000000e+00> : vector<2x8xf32>
    %773 = vector.multi_reduction <add>, %772, %cst_328 [2] : vector<2x8x8xf32> to vector<2x8xf32>
    %774 = vector.shape_cast %773 : vector<2x8xf32> to vector<2x8x1xf32>
    %775 = vector.broadcast %774 : vector<2x8x1xf32> to vector<2x8x8xf32>
    %776 = arith.divf %772, %775 : vector<2x8x8xf32>
    %c0_329 = arith.constant 0 : index
    %c0_330 = arith.constant 0 : index
    %c0_331 = arith.constant 0 : index
    %c0_332 = arith.constant 0 : index
    %777 = vector.load %arg40[%c0_329, %c0_330, %c0_331, %c0_332] : memref<4x2x8x8xf32, #tpu.memory_space<vmem>>, vector<1x2x8x8xf32>
    %778 = vector.shape_cast %777 : vector<1x2x8x8xf32> to vector<2x8x8xf32>
    %779 = vector.shape_cast %776 : vector<2x8x8xf32> to vector<1x2x8x8xf32>
    tpu.vector_store %arg40[%c0_329, %c0_330, %c0_331, %c0_332], %779 {strides = array<i32>} : memref<4x2x8x8xf32, #tpu.memory_space<vmem>>, vector<1x2x8x8xf32>,
    "tpu.trace_start"() <{level = 10 : i32, message = "bqk,bkd->bqd"}> : () -> ()
    %cst_333 = arith.constant dense<0.000000e+00> : vector<2x8x8xf32>
    %780 = tpu.matmul %776, %765, %cst_333 {dimension_numbers = #tpu.dot_dimension_numbers<[2], [1], [1], [2], [0, 0, 0, 1, 1, 2], [0], [0]>} : vector<2x8x8xf32>, vector<2x8x8xf32>, vector<2x8x8xf32> -> vector<2x8x8xf32>
    "tpu.trace_stop"() : () -> ()
    %781 = vector.shape_cast %780 : vector<2x8x8xf32> to vector<16x8xf32>
    %782 = vector.extract_strided_slice %757 {offsets = [0, 0], sizes = [8, 32], strides = [1, 1]} : vector<32x32xf32> to vector<8x32xf32>
    %cst_334 = arith.constant dense<0.000000e+00> : vector<16x32xf32>
    %783 = tpu.matmul %781, %782, %cst_334 {dimension_numbers = #tpu.dot_dimension_numbers<[1], [0], [0], [1], [0, 0, 1, 1], [], []>} : vector<16x8xf32>, vector<8x32xf32>, vector<16x32xf32> -> vector<16x32xf32>
    %784 = vector.extract_strided_slice %760 {offsets = [0, 0, 8], sizes = [2, 8, 8], strides = [1, 1, 1]} : vector<2x8x32xf32> to vector<2x8x8xf32>
    %785 = vector.extract_strided_slice %761 {offsets = [0, 0, 8], sizes = [2, 8, 8], strides = [1, 1, 1]} : vector<2x8x32xf32> to vector<2x8x8xf32>
    %786 = vector.extract_strided_slice %762 {offsets = [0, 0, 8], sizes = [2, 8, 8], strides = [1, 1, 1]} : vector<2x8x32xf32> to vector<2x8x8xf32>
    "tpu.trace_start"() <{level = 10 : i32, message = "bqd,bkd->bqk"}> : () -> ()
    %cst_335 = arith.constant dense<0.000000e+00> : vector<2x8x8xf32>
    %787 = tpu.matmul %784, %785, %cst_335 {dimension_numbers = #tpu.dot_dimension_numbers<[2], [2], [1], [1], [0, 0, 0, 1, 1, 1], [0], [0]>} : vector<2x8x8xf32>, vector<2x8x8xf32>, vector<2x8x8xf32> -> vector<2x8x8xf32>
    "tpu.trace_stop"() : () -> ()
    %788 = arith.addf %787, %331 : vector<2x8x8xf32>
    %cst_336 = arith.constant dense<0xFF800000> : vector<2x8xf32>
    %789 = vector.multi_reduction <maximumf>, %788, %cst_336 [2] : vector<2x8x8xf32> to vector<2x8xf32>
    %790 = vector.shape_cast %789 : vector<2x8xf32> to vector<2x8x1xf32>
    %791 = vector.broadcast %790 : vector<2x8x1xf32> to vector<2x8x8xf32>
    %792 = arith.subf %788, %791 : vector<2x8x8xf32>
    %793 = math.exp %792 : vector<2x8x8xf32>
    %cst_337 = arith.constant dense<0.000000e+00> : vector<2x8xf32>
    %794 = vector.multi_reduction <add>, %793, %cst_337 [2] : vector<2x8x8xf32> to vector<2x8xf32>
    %795 = vector.shape_cast %794 : vector<2x8xf32> to vector<2x8x1xf32>
    %796 = vector.broadcast %795 : vector<2x8x1xf32> to vector<2x8x8xf32>
    %797 = arith.divf %793, %796 : vector<2x8x8xf32>
    %c1_338 = arith.constant 1 : index
    %c0_339 = arith.constant 0 : index
    %c0_340 = arith.constant 0 : index
    %c0_341 = arith.constant 0 : index
    %798 = vector.load %arg40[%c1_338, %c0_339, %c0_340, %c0_341] : memref<4x2x8x8xf32, #tpu.memory_space<vmem>>, vector<1x2x8x8xf32>
    %799 = vector.shape_cast %798 : vector<1x2x8x8xf32> to vector<2x8x8xf32>
    %800 = vector.shape_cast %797 : vector<2x8x8xf32> to vector<1x2x8x8xf32>
    tpu.vector_store %arg40[%c1_338, %c0_339, %c0_340, %c0_341], %800 {strides = array<i32>} : memref<4x2x8x8xf32, #tpu.memory_space<vmem>>, vector<1x2x8x8xf32>,
    "tpu.trace_start"() <{level = 10 : i32, message = "bqk,bkd->bqd"}> : () -> ()
    %cst_342 = arith.constant dense<0.000000e+00> : vector<2x8x8xf32>
    %801 = tpu.matmul %797, %786, %cst_342 {dimension_numbers = #tpu.dot_dimension_numbers<[2], [1], [1], [2], [0, 0, 0, 1, 1, 2], [0], [0]>} : vector<2x8x8xf32>, vector<2x8x8xf32>, vector<2x8x8xf32> -> vector<2x8x8xf32>
    "tpu.trace_stop"() : () -> ()
    %802 = vector.shape_cast %801 : vector<2x8x8xf32> to vector<16x8xf32>
    %803 = vector.extract_strided_slice %757 {offsets = [8, 0], sizes = [8, 32], strides = [1, 1]} : vector<32x32xf32> to vector<8x32xf32>
    %cst_343 = arith.constant dense<0.000000e+00> : vector<16x32xf32>
    %804 = tpu.matmul %802, %803, %cst_343 {dimension_numbers = #tpu.dot_dimension_numbers<[1], [0], [0], [1], [0, 0, 1, 1], [], []>} : vector<16x8xf32>, vector<8x32xf32>, vector<16x32xf32> -> vector<16x32xf32>
    %805 = arith.addf %783, %804 : vector<16x32xf32>
    %806 = vector.extract_strided_slice %760 {offsets = [0, 0, 16], sizes = [2, 8, 8], strides = [1, 1, 1]} : vector<2x8x32xf32> to vector<2x8x8xf32>
    %807 = vector.extract_strided_slice %761 {offsets = [0, 0, 16], sizes = [2, 8, 8], strides = [1, 1, 1]} : vector<2x8x32xf32> to vector<2x8x8xf32>
    %808 = vector.extract_strided_slice %762 {offsets = [0, 0, 16], sizes = [2, 8, 8], strides = [1, 1, 1]} : vector<2x8x32xf32> to vector<2x8x8xf32>
    "tpu.trace_start"() <{level = 10 : i32, message = "bqd,bkd->bqk"}> : () -> ()
    %cst_344 = arith.constant dense<0.000000e+00> : vector<2x8x8xf32>
    %809 = tpu.matmul %806, %807, %cst_344 {dimension_numbers = #tpu.dot_dimension_numbers<[2], [2], [1], [1], [0, 0, 0, 1, 1, 1], [0], [0]>} : vector<2x8x8xf32>, vector<2x8x8xf32>, vector<2x8x8xf32> -> vector<2x8x8xf32>
    "tpu.trace_stop"() : () -> ()
    %810 = arith.addf %809, %331 : vector<2x8x8xf32>
    %cst_345 = arith.constant dense<0xFF800000> : vector<2x8xf32>
    %811 = vector.multi_reduction <maximumf>, %810, %cst_345 [2] : vector<2x8x8xf32> to vector<2x8xf32>
    %812 = vector.shape_cast %811 : vector<2x8xf32> to vector<2x8x1xf32>
    %813 = vector.broadcast %812 : vector<2x8x1xf32> to vector<2x8x8xf32>
    %814 = arith.subf %810, %813 : vector<2x8x8xf32>
    %815 = math.exp %814 : vector<2x8x8xf32>
    %cst_346 = arith.constant dense<0.000000e+00> : vector<2x8xf32>
    %816 = vector.multi_reduction <add>, %815, %cst_346 [2] : vector<2x8x8xf32> to vector<2x8xf32>
    %817 = vector.shape_cast %816 : vector<2x8xf32> to vector<2x8x1xf32>
    %818 = vector.broadcast %817 : vector<2x8x1xf32> to vector<2x8x8xf32>
    %819 = arith.divf %815, %818 : vector<2x8x8xf32>
    %c2 = arith.constant 2 : index
    %c0_347 = arith.constant 0 : index
    %c0_348 = arith.constant 0 : index
    %c0_349 = arith.constant 0 : index
    %820 = vector.load %arg40[%c2, %c0_347, %c0_348, %c0_349] : memref<4x2x8x8xf32, #tpu.memory_space<vmem>>, vector<1x2x8x8xf32>
    %821 = vector.shape_cast %820 : vector<1x2x8x8xf32> to vector<2x8x8xf32>
    %822 = vector.shape_cast %819 : vector<2x8x8xf32> to vector<1x2x8x8xf32>
    tpu.vector_store %arg40[%c2, %c0_347, %c0_348, %c0_349], %822 {strides = array<i32>} : memref<4x2x8x8xf32, #tpu.memory_space<vmem>>, vector<1x2x8x8xf32>,
    "tpu.trace_start"() <{level = 10 : i32, message = "bqk,bkd->bqd"}> : () -> ()
    %cst_350 = arith.constant dense<0.000000e+00> : vector<2x8x8xf32>
    %823 = tpu.matmul %819, %808, %cst_350 {dimension_numbers = #tpu.dot_dimension_numbers<[2], [1], [1], [2], [0, 0, 0, 1, 1, 2], [0], [0]>} : vector<2x8x8xf32>, vector<2x8x8xf32>, vector<2x8x8xf32> -> vector<2x8x8xf32>
    "tpu.trace_stop"() : () -> ()
    %824 = vector.shape_cast %823 : vector<2x8x8xf32> to vector<16x8xf32>
    %825 = vector.extract_strided_slice %757 {offsets = [16, 0], sizes = [8, 32], strides = [1, 1]} : vector<32x32xf32> to vector<8x32xf32>
    %cst_351 = arith.constant dense<0.000000e+00> : vector<16x32xf32>
    %826 = tpu.matmul %824, %825, %cst_351 {dimension_numbers = #tpu.dot_dimension_numbers<[1], [0], [0], [1], [0, 0, 1, 1], [], []>} : vector<16x8xf32>, vector<8x32xf32>, vector<16x32xf32> -> vector<16x32xf32>
    %827 = arith.addf %805, %826 : vector<16x32xf32>
    %828 = vector.extract_strided_slice %760 {offsets = [0, 0, 24], sizes = [2, 8, 8], strides = [1, 1, 1]} : vector<2x8x32xf32> to vector<2x8x8xf32>
    %829 = vector.extract_strided_slice %761 {offsets = [0, 0, 24], sizes = [2, 8, 8], strides = [1, 1, 1]} : vector<2x8x32xf32> to vector<2x8x8xf32>
    %830 = vector.extract_strided_slice %762 {offsets = [0, 0, 24], sizes = [2, 8, 8], strides = [1, 1, 1]} : vector<2x8x32xf32> to vector<2x8x8xf32>
    "tpu.trace_start"() <{level = 10 : i32, message = "bqd,bkd->bqk"}> : () -> ()
    %cst_352 = arith.constant dense<0.000000e+00> : vector<2x8x8xf32>
    %831 = tpu.matmul %828, %829, %cst_352 {dimension_numbers = #tpu.dot_dimension_numbers<[2], [2], [1], [1], [0, 0, 0, 1, 1, 1], [0], [0]>} : vector<2x8x8xf32>, vector<2x8x8xf32>, vector<2x8x8xf32> -> vector<2x8x8xf32>
    "tpu.trace_stop"() : () -> ()
    %832 = arith.addf %831, %331 : vector<2x8x8xf32>
    %cst_353 = arith.constant dense<0xFF800000> : vector<2x8xf32>
    %833 = vector.multi_reduction <maximumf>, %832, %cst_353 [2] : vector<2x8x8xf32> to vector<2x8xf32>
    %834 = vector.shape_cast %833 : vector<2x8xf32> to vector<2x8x1xf32>
    %835 = vector.broadcast %834 : vector<2x8x1xf32> to vector<2x8x8xf32>
    %836 = arith.subf %832, %835 : vector<2x8x8xf32>
    %837 = math.exp %836 : vector<2x8x8xf32>
    %cst_354 = arith.constant dense<0.000000e+00> : vector<2x8xf32>
    %838 = vector.multi_reduction <add>, %837, %cst_354 [2] : vector<2x8x8xf32> to vector<2x8xf32>
    %839 = vector.shape_cast %838 : vector<2x8xf32> to vector<2x8x1xf32>
    %840 = vector.broadcast %839 : vector<2x8x1xf32> to vector<2x8x8xf32>
    %841 = arith.divf %837, %840 : vector<2x8x8xf32>
    %c3 = arith.constant 3 : index
    %c0_355 = arith.constant 0 : index
    %c0_356 = arith.constant 0 : index
    %c0_357 = arith.constant 0 : index
    %842 = vector.load %arg40[%c3, %c0_355, %c0_356, %c0_357] : memref<4x2x8x8xf32, #tpu.memory_space<vmem>>, vector<1x2x8x8xf32>
    %843 = vector.shape_cast %842 : vector<1x2x8x8xf32> to vector<2x8x8xf32>
    %844 = vector.shape_cast %841 : vector<2x8x8xf32> to vector<1x2x8x8xf32>
    tpu.vector_store %arg40[%c3, %c0_355, %c0_356, %c0_357], %844 {strides = array<i32>} : memref<4x2x8x8xf32, #tpu.memory_space<vmem>>, vector<1x2x8x8xf32>,
    "tpu.trace_start"() <{level = 10 : i32, message = "bqk,bkd->bqd"}> : () -> ()
    %cst_358 = arith.constant dense<0.000000e+00> : vector<2x8x8xf32>
    %845 = tpu.matmul %841, %830, %cst_358 {dimension_numbers = #tpu.dot_dimension_numbers<[2], [1], [1], [2], [0, 0, 0, 1, 1, 2], [0], [0]>} : vector<2x8x8xf32>, vector<2x8x8xf32>, vector<2x8x8xf32> -> vector<2x8x8xf32>
    "tpu.trace_stop"() : () -> ()
    %846 = vector.shape_cast %845 : vector<2x8x8xf32> to vector<16x8xf32>
    %847 = vector.extract_strided_slice %757 {offsets = [24, 0], sizes = [8, 32], strides = [1, 1]} : vector<32x32xf32> to vector<8x32xf32>
    %cst_359 = arith.constant dense<0.000000e+00> : vector<16x32xf32>
    %848 = tpu.matmul %846, %847, %cst_359 {dimension_numbers = #tpu.dot_dimension_numbers<[1], [0], [0], [1], [0, 0, 1, 1], [], []>} : vector<16x8xf32>, vector<8x32xf32>, vector<16x32xf32> -> vector<16x32xf32>
    %849 = arith.addf %827, %848 : vector<16x32xf32>
    %850 = vector.broadcast %759 : vector<1x32xf32> to vector<16x32xf32>
    %851 = arith.addf %849, %850 : vector<16x32xf32>
    %852 = arith.addf %746, %851 : vector<16x32xf32>
    %c1_360 = arith.constant 1 : index
    %c0_361 = arith.constant 0 : index
    %c0_362 = arith.constant 0 : index
    %853 = vector.load %arg29[%c1_360, %c0_361, %c0_362] : memref<2x1x32xf32, #tpu.memory_space<vmem>>, vector<1x1x32xf32>
    %854 = vector.shape_cast %853 : vector<1x1x32xf32> to vector<1x32xf32>
    %c1_363 = arith.constant 1 : index
    %c0_364 = arith.constant 0 : index
    %c0_365 = arith.constant 0 : index
    %855 = vector.load %arg30[%c1_363, %c0_364, %c0_365] : memref<2x1x32xf32, #tpu.memory_space<vmem>>, vector<1x1x32xf32>
    %856 = vector.shape_cast %855 : vector<1x1x32xf32> to vector<1x32xf32>
    %cst_366 = arith.constant dense<0.000000e+00> : vector<16xf32>
    %857 = vector.multi_reduction <add>, %852, %cst_366 [1] : vector<16x32xf32> to vector<16xf32>
    %858 = vector.shape_cast %857 : vector<16xf32> to vector<16x1xf32>
    %cst_367 = arith.constant 3.200000e+01 : f32
    %859 = vector.broadcast %cst_367 : f32 to vector<16x1xf32>
    %860 = arith.divf %858, %859 : vector<16x1xf32>
    %861 = vector.broadcast %860 : vector<16x1xf32> to vector<16x32xf32>
    %862 = arith.subf %852, %861 : vector<16x32xf32>
    %863 = arith.mulf %862, %862 : vector<16x32xf32>
    %cst_368 = arith.constant dense<0.000000e+00> : vector<16xf32>
    %864 = vector.multi_reduction <add>, %863, %cst_368 [1] : vector<16x32xf32> to vector<16xf32>
    %865 = vector.shape_cast %864 : vector<16xf32> to vector<16x1xf32>
    %cst_369 = arith.constant 3.200000e+01 : f32
    %866 = vector.broadcast %cst_369 : f32 to vector<16x1xf32>
    %867 = arith.divf %865, %866 : vector<16x1xf32>
    %cst_370 = arith.constant 9.99999974E-6 : f32
    %868 = vector.broadcast %cst_370 : f32 to vector<16x1xf32>
    %869 = arith.addf %867, %868 : vector<16x1xf32>
    %870 = math.rsqrt %869 : vector<16x1xf32>
    %871 = vector.broadcast %870 : vector<16x1xf32> to vector<16x32xf32>
    %872 = arith.mulf %862, %871 : vector<16x32xf32>
    %873 = vector.broadcast %854 : vector<1x32xf32> to vector<16x32xf32>
    %874 = arith.mulf %872, %873 : vector<16x32xf32>
    %875 = vector.broadcast %856 : vector<1x32xf32> to vector<16x32xf32>
    %876 = arith.addf %874, %875 : vector<16x32xf32>
    %c1_371 = arith.constant 1 : index
    %c0_372 = arith.constant 0 : index
    %c0_373 = arith.constant 0 : index
    %877 = vector.load %arg31[%c1_371, %c0_372, %c0_373] : memref<2x32x64xf32, #tpu.memory_space<vmem>>, vector<1x32x64xf32>
    %878 = vector.shape_cast %877 : vector<1x32x64xf32> to vector<32x64xf32>
    %cst_374 = arith.constant dense<0.000000e+00> : vector<16x64xf32>
    %879 = tpu.matmul %876, %878, %cst_374 {dimension_numbers = #tpu.dot_dimension_numbers<[1], [0], [0], [1], [0, 0, 1, 1], [], []>} : vector<16x32xf32>, vector<32x64xf32>, vector<16x64xf32> -> vector<16x64xf32>
    %c1_375 = arith.constant 1 : index
    %c0_376 = arith.constant 0 : index
    %c0_377 = arith.constant 0 : index
    %880 = vector.load %arg32[%c1_375, %c0_376, %c0_377] : memref<2x1x64xf32, #tpu.memory_space<vmem>>, vector<1x1x64xf32>
    %881 = vector.shape_cast %880 : vector<1x1x64xf32> to vector<1x64xf32>
    %882 = vector.broadcast %881 : vector<1x64xf32> to vector<16x64xf32>
    %883 = arith.addf %879, %882 : vector<16x64xf32>
    %cst_378 = arith.constant 0.000000e+00 : f32
    %884 = vector.broadcast %cst_378 : f32 to vector<16x64xf32>
    %885 = arith.maximumf %883, %884 : vector<16x64xf32>
    %c1_379 = arith.constant 1 : index
    %c0_380 = arith.constant 0 : index
    %c0_381 = arith.constant 0 : index
    %886 = vector.load %arg33[%c1_379, %c0_380, %c0_381] : memref<2x64x32xf32, #tpu.memory_space<vmem>>, vector<1x64x32xf32>
    %887 = vector.shape_cast %886 : vector<1x64x32xf32> to vector<64x32xf32>
    %cst_382 = arith.constant dense<0.000000e+00> : vector<16x32xf32>
    %888 = tpu.matmul %885, %887, %cst_382 {dimension_numbers = #tpu.dot_dimension_numbers<[1], [0], [0], [1], [0, 0, 1, 1], [], []>} : vector<16x64xf32>, vector<64x32xf32>, vector<16x32xf32> -> vector<16x32xf32>
    %c1_383 = arith.constant 1 : index
    %c0_384 = arith.constant 0 : index
    %c0_385 = arith.constant 0 : index
    %889 = vector.load %arg34[%c1_383, %c0_384, %c0_385] : memref<2x1x32xf32, #tpu.memory_space<vmem>>, vector<1x1x32xf32>
    %890 = vector.shape_cast %889 : vector<1x1x32xf32> to vector<1x32xf32>
    %891 = vector.broadcast %890 : vector<1x32xf32> to vector<16x32xf32>
    %892 = arith.addf %888, %891 : vector<16x32xf32>
    %893 = arith.addf %876, %892 : vector<16x32xf32>
    %c1_386 = arith.constant 1 : index
    %c0_387 = arith.constant 0 : index
    %c0_388 = arith.constant 0 : index
    %894 = vector.load %arg35[%c1_386, %c0_387, %c0_388] : memref<2x1x32xf32, #tpu.memory_space<vmem>>, vector<1x1x32xf32>
    %895 = vector.shape_cast %894 : vector<1x1x32xf32> to vector<1x32xf32>
    %c1_389 = arith.constant 1 : index
    %c0_390 = arith.constant 0 : index
    %c0_391 = arith.constant 0 : index
    %896 = vector.load %arg36[%c1_389, %c0_390, %c0_391] : memref<2x1x32xf32, #tpu.memory_space<vmem>>, vector<1x1x32xf32>
    %897 = vector.shape_cast %896 : vector<1x1x32xf32> to vector<1x32xf32>
    %cst_392 = arith.constant dense<0.000000e+00> : vector<16xf32>
    %898 = vector.multi_reduction <add>, %893, %cst_392 [1] : vector<16x32xf32> to vector<16xf32>
    %899 = vector.shape_cast %898 : vector<16xf32> to vector<16x1xf32>
    %cst_393 = arith.constant 3.200000e+01 : f32
    %900 = vector.broadcast %cst_393 : f32 to vector<16x1xf32>
    %901 = arith.divf %899, %900 : vector<16x1xf32>
    %902 = vector.broadcast %901 : vector<16x1xf32> to vector<16x32xf32>
    %903 = arith.subf %893, %902 : vector<16x32xf32>
    %904 = arith.mulf %903, %903 : vector<16x32xf32>
    %cst_394 = arith.constant dense<0.000000e+00> : vector<16xf32>
    %905 = vector.multi_reduction <add>, %904, %cst_394 [1] : vector<16x32xf32> to vector<16xf32>
    %906 = vector.shape_cast %905 : vector<16xf32> to vector<16x1xf32>
    %cst_395 = arith.constant 3.200000e+01 : f32
    %907 = vector.broadcast %cst_395 : f32 to vector<16x1xf32>
    %908 = arith.divf %906, %907 : vector<16x1xf32>
    %cst_396 = arith.constant 9.99999974E-6 : f32
    %909 = vector.broadcast %cst_396 : f32 to vector<16x1xf32>
    %910 = arith.addf %908, %909 : vector<16x1xf32>
    %911 = math.rsqrt %910 : vector<16x1xf32>
    %912 = vector.broadcast %911 : vector<16x1xf32> to vector<16x32xf32>
    %913 = arith.mulf %903, %912 : vector<16x32xf32>
    %914 = vector.broadcast %895 : vector<1x32xf32> to vector<16x32xf32>
    %915 = arith.mulf %913, %914 : vector<16x32xf32>
    %916 = vector.broadcast %897 : vector<1x32xf32> to vector<16x32xf32>
    %917 = arith.addf %915, %916 : vector<16x32xf32>
    %c0_397 = arith.constant 0 : index
    %c0_398 = arith.constant 0 : index
    %918 = vector.load %arg37[%c0_397, %c0_398] : memref<32x128xf32, #tpu.memory_space<vmem>>, vector<32x128xf32>
    %cst_399 = arith.constant dense<0.000000e+00> : vector<16x128xf32>
    %919 = tpu.matmul %917, %918, %cst_399 {dimension_numbers = #tpu.dot_dimension_numbers<[1], [0], [0], [1], [0, 0, 1, 1], [], []>} : vector<16x32xf32>, vector<32x128xf32>, vector<16x128xf32> -> vector<16x128xf32>
    %c0_400 = arith.constant 0 : index
    %c0_401 = arith.constant 0 : index
    %920 = vector.load %arg38[%c0_400, %c0_401] : memref<1x128xf32, #tpu.memory_space<vmem>>, vector<1x128xf32>
    %921 = vector.broadcast %920 : vector<1x128xf32> to vector<16x128xf32>
    %922 = arith.addf %919, %921 : vector<16x128xf32>
    %c0_402 = arith.constant 0 : index
    %c0_403 = arith.constant 0 : index
    %923 = vector.load %arg39[%c0_402, %c0_403] : memref<16x128xf32, #tpu.memory_space<vmem>>, vector<16x128xf32>
    tpu.vector_store %arg39[%c0_402, %c0_403], %922 {strides = array<i32>} : memref<16x128xf32, #tpu.memory_space<vmem>>, vector<16x128xf32>,
    return
  }
}

</mosaic_0001>

<llo_original>
// kernel: seq2seq_forward.1
$region0: #{seq2seq_forward.1}
  #allocation0 [shape = 'u32[]', space=smem, size = 0x4, offset = 0x4, fixed_abs, tag = 'smem constant byte address 0x4 - core index']
  #allocation1 [shape = 'u32[72,128]{1,0:T(1,128)}', space=vmem, size = 0x9000, scoped, tag = 'internal scratch']
  %s0 = inlined_call_operand.smem [shape: u32[41], index: -1, kind: input, shape index: {}]
  %s1 = sld [smem:[%s0]]
  %s2 = scalar_lea.smem %s0, 1
  %s3 = sld [smem:[%s2]]
  %s4 = scalar_lea.smem %s0, 2
  %s5 = sld [smem:[%s4]]
  %s6 = scalar_lea.smem %s0, 3
  %s7 = sld [smem:[%s6]]
  %s8 = scalar_lea.smem %s0, 4
  %s9 = sld [smem:[%s8]]
  %s10 = scalar_lea.smem %s0, 5
  %s11 = sld [smem:[%s10]]
  %s12 = scalar_lea.smem %s0, 6
  %s13 = sld [smem:[%s12]]
  %s14 = scalar_lea.smem %s0, 7
  %s15 = sld [smem:[%s14]]
  %s16 = scalar_lea.smem %s0, 8
  %s17 = sld [smem:[%s16]]
  %s18 = scalar_lea.smem %s0, 9
  %s19 = sld [smem:[%s18]]
  %s20 = scalar_lea.smem %s0, 10
  %s21 = sld [smem:[%s20]]
  %s22 = scalar_lea.smem %s0, 11
  %s23 = sld [smem:[%s22]]
  %s24 = scalar_lea.smem %s0, 12
  %s25 = sld [smem:[%s24]]
  %s26 = scalar_lea.smem %s0, 13
  %s27 = sld [smem:[%s26]]
  %s28 = scalar_lea.smem %s0, 14
  %s29 = sld [smem:[%s28]]
  %s30 = scalar_lea.smem %s0, 15
  %s31 = sld [smem:[%s30]]
  %s32 = scalar_lea.smem %s0, 16
  %s33 = sld [smem:[%s32]]
  %s34 = scalar_lea.smem %s0, 17
  %s35 = sld [smem:[%s34]]
  %s36 = scalar_lea.smem %s0, 18
  %s37 = sld [smem:[%s36]]
  %s38 = scalar_lea.smem %s0, 19
  %s39 = sld [smem:[%s38]]
  %s40 = scalar_lea.smem %s0, 20
  %s41 = sld [smem:[%s40]]
  %s42 = scalar_lea.smem %s0, 21
  %s43 = sld [smem:[%s42]]
  %s44 = scalar_lea.smem %s0, 22
  %s45 = sld [smem:[%s44]]
  %s46 = scalar_lea.smem %s0, 23
  %s47 = sld [smem:[%s46]]
  %s48 = scalar_lea.smem %s0, 24
  %s49 = sld [smem:[%s48]]
  %s50 = scalar_lea.smem %s0, 25
  %s51 = sld [smem:[%s50]]
  %s52 = scalar_lea.smem %s0, 26
  %s53 = sld [smem:[%s52]]
  %s54 = scalar_lea.smem %s0, 27
  %s55 = sld [smem:[%s54]]
  %s56 = scalar_lea.smem %s0, 28
  %s57 = sld [smem:[%s56]]
  %s58 = scalar_lea.smem %s0, 29
  %s59 = sld [smem:[%s58]]
  %s60 = scalar_lea.smem %s0, 30
  %s61 = sld [smem:[%s60]]
  %s62 = scalar_lea.smem %s0, 31
  %s63 = sld [smem:[%s62]]
  %s64 = scalar_lea.smem %s0, 32
  %s65 = sld [smem:[%s64]]
  %s66 = scalar_lea.smem %s0, 33
  %s67 = sld [smem:[%s66]]
  %s68 = scalar_lea.smem %s0, 34
  %s69 = sld [smem:[%s68]]
  %s70 = scalar_lea.smem %s0, 35
  %s71 = sld [smem:[%s70]]
  %s72 = scalar_lea.smem %s0, 36
  %s73 = sld [smem:[%s72]]
  %s74 = scalar_lea.smem %s0, 37
  %s75 = sld [smem:[%s74]]
  %s76 = scalar_lea.smem %s0, 38
  %s77 = sld [smem:[%s76]]
  %s78 = scalar_lea.smem %s0, 39
  %s79 = sld [smem:[%s78]]
  %s80 = scalar_lea.smem %s0, 40
  %s81 = sld [smem:[%s80]]
  %82 = xla_tuple %s79, %s81
  %s83 = sld [smem:[#allocation0]]
  $region174: #{seq2seq_forward.1} parent=0
    _
  %s85 = ssub.s32 1, %s83
  %s86 = scalar_select 0, %s85, %s83
  // Predicated region
  $region2: #{seq2seq_forward.1} parent=0 // pred_check
    _
  $region3: #{seq2seq_forward.1} parent=0 // pred_check_branch
    %88 = sbr.rel (0) target = $region5
  $region4: #{seq2seq_forward.1} parent=0 // pred_region
    _
  $region5: #{seq2seq_forward.1} parent=0 // pred_fallthru
    _
  // Predicated region
  $region6: #{seq2seq_forward.1} parent=0 // pred_check
    _
  $region7: #{seq2seq_forward.1} parent=0 // pred_check_branch
    %90 = sbr.rel (0) target = $region9
  $region8: #{seq2seq_forward.1} parent=0 // pred_region
    _
  $region9: #{seq2seq_forward.1} parent=0 // pred_fallthru
    _
  // Predicated region
  $region10: #{seq2seq_forward.1} parent=0 // pred_check
    _
  $region11: #{seq2seq_forward.1} parent=0 // pred_check_branch
    %92 = sbr.rel (0) target = $region13
  $region12: #{seq2seq_forward.1} parent=0 // pred_region
    _
  $region13: #{seq2seq_forward.1} parent=0 // pred_fallthru
    _
  // Predicated region
  $region14: #{seq2seq_forward.1} parent=0 // pred_check
    _
  $region15: #{seq2seq_forward.1} parent=0 // pred_check_branch
    %94 = sbr.rel (0) target = $region17
  $region16: #{seq2seq_forward.1} parent=0 // pred_region
    _
  $region17: #{seq2seq_forward.1} parent=0 // pred_fallthru
    _
  // Predicated region
  $region18: #{seq2seq_forward.1} parent=0 // pred_check
    _
  $region19: #{seq2seq_forward.1} parent=0 // pred_check_branch
    %96 = sbr.rel (0) target = $region21
  $region20: #{seq2seq_forward.1} parent=0 // pred_region
    _
  $region21: #{seq2seq_forward.1} parent=0 // pred_fallthru
    _
  // Predicated region
  $region22: #{seq2seq_forward.1} parent=0 // pred_check
    _
  $region23: #{seq2seq_forward.1} parent=0 // pred_check_branch
    %98 = sbr.rel (0) target = $region25
  $region24: #{seq2seq_forward.1} parent=0 // pred_region
    _
  $region25: #{seq2seq_forward.1} parent=0 // pred_fallthru
    _
  // Predicated region
  $region26: #{seq2seq_forward.1} parent=0 // pred_check
    _
  $region27: #{seq2seq_forward.1} parent=0 // pred_check_branch
    %100 = sbr.rel (0) target = $region29
  $region28: #{seq2seq_forward.1} parent=0 // pred_region
    _
  $region29: #{seq2seq_forward.1} parent=0 // pred_fallthru
    _
  // Predicated region
  $region30: #{seq2seq_forward.1} parent=0 // pred_check
    _
  $region31: #{seq2seq_forward.1} parent=0 // pred_check_branch
    %102 = sbr.rel (0) target = $region33
  $region32: #{seq2seq_forward.1} parent=0 // pred_region
    _
  $region33: #{seq2seq_forward.1} parent=0 // pred_fallthru
    _
  // Predicated region
  $region34: #{seq2seq_forward.1} parent=0 // pred_check
    _
  $region35: #{seq2seq_forward.1} parent=0 // pred_check_branch
    %104 = sbr.rel (0) target = $region37
  $region36: #{seq2seq_forward.1} parent=0 // pred_region
    _
  $region37: #{seq2seq_forward.1} parent=0 // pred_fallthru
    _
  // Predicated region
  $region38: #{seq2seq_forward.1} parent=0 // pred_check
    _
  $region39: #{seq2seq_forward.1} parent=0 // pred_check_branch
    %106 = sbr.rel (0) target = $region41
  $region40: #{seq2seq_forward.1} parent=0 // pred_region
    _
  $region41: #{seq2seq_forward.1} parent=0 // pred_fallthru
    _
  // Predicated region
  $region42: #{seq2seq_forward.1} parent=0 // pred_check
    _
  $region43: #{seq2seq_forward.1} parent=0 // pred_check_branch
    %108 = sbr.rel (0) target = $region45
  $region44: #{seq2seq_forward.1} parent=0 // pred_region
    _
  $region45: #{seq2seq_forward.1} parent=0 // pred_fallthru
    _
  // Predicated region
  $region46: #{seq2seq_forward.1} parent=0 // pred_check
    _
  $region47: #{seq2seq_forward.1} parent=0 // pred_check_branch
    %110 = sbr.rel (0) target = $region49
  $region48: #{seq2seq_forward.1} parent=0 // pred_region
    _
  $region49: #{seq2seq_forward.1} parent=0 // pred_fallthru
    _
  // Predicated region
  $region50: #{seq2seq_forward.1} parent=0 // pred_check
    _
  $region51: #{seq2seq_forward.1} parent=0 // pred_check_branch
    %112 = sbr.rel (0) target = $region53
  $region52: #{seq2seq_forward.1} parent=0 // pred_region
    _
  $region53: #{seq2seq_forward.1} parent=0 // pred_fallthru
    _
  // Predicated region
  $region54: #{seq2seq_forward.1} parent=0 // pred_check
    _
  $region55: #{seq2seq_forward.1} parent=0 // pred_check_branch
    %114 = sbr.rel (0) target = $region57
  $region56: #{seq2seq_forward.1} parent=0 // pred_region
    _
  $region57: #{seq2seq_forward.1} parent=0 // pred_fallthru
    _
  // Predicated region
  $region58: #{seq2seq_forward.1} parent=0 // pred_check
    _
  $region59: #{seq2seq_forward.1} parent=0 // pred_check_branch
    %116 = sbr.rel (0) target = $region61
  $region60: #{seq2seq_forward.1} parent=0 // pred_region
    _
  $region61: #{seq2seq_forward.1} parent=0 // pred_fallthru
    _
  // Predicated region
  $region62: #{seq2seq_forward.1} parent=0 // pred_check
    _
  $region63: #{seq2seq_forward.1} parent=0 // pred_check_branch
    %118 = sbr.rel (0) target = $region65
  $region64: #{seq2seq_forward.1} parent=0 // pred_region
    _
  $region65: #{seq2seq_forward.1} parent=0 // pred_fallthru
    _
  // Predicated region
  $region66: #{seq2seq_forward.1} parent=0 // pred_check
    _
  $region67: #{seq2seq_forward.1} parent=0 // pred_check_branch
    %120 = sbr.rel (0) target = $region69
  $region68: #{seq2seq_forward.1} parent=0 // pred_region
    _
  $region69: #{seq2seq_forward.1} parent=0 // pred_fallthru
    _
  // Predicated region
  $region70: #{seq2seq_forward.1} parent=0 // pred_check
    _
  $region71: #{seq2seq_forward.1} parent=0 // pred_check_branch
    %122 = sbr.rel (0) target = $region73
  $region72: #{seq2seq_forward.1} parent=0 // pred_region
    _
  $region73: #{seq2seq_forward.1} parent=0 // pred_fallthru
    _
  // Predicated region
  $region74: #{seq2seq_forward.1} parent=0 // pred_check
    _
  $region75: #{seq2seq_forward.1} parent=0 // pred_check_branch
    %124 = sbr.rel (0) target = $region77
  $region76: #{seq2seq_forward.1} parent=0 // pred_region
    _
  $region77: #{seq2seq_forward.1} parent=0 // pred_fallthru
    _
  // Predicated region
  $region78: #{seq2seq_forward.1} parent=0 // pred_check
    _
  $region79: #{seq2seq_forward.1} parent=0 // pred_check_branch
    %126 = sbr.rel (0) target = $region81
  $region80: #{seq2seq_forward.1} parent=0 // pred_region
    _
  $region81: #{seq2seq_forward.1} parent=0 // pred_fallthru
    _
  // Predicated region
  $region82: #{seq2seq_forward.1} parent=0 // pred_check
    _
  $region83: #{seq2seq_forward.1} parent=0 // pred_check_branch
    %128 = sbr.rel (0) target = $region85
  $region84: #{seq2seq_forward.1} parent=0 // pred_region
    _
  $region85: #{seq2seq_forward.1} parent=0 // pred_fallthru
    _
  // Predicated region
  $region86: #{seq2seq_forward.1} parent=0 // pred_check
    _
  $region87: #{seq2seq_forward.1} parent=0 // pred_check_branch
    %130 = sbr.rel (0) target = $region89
  $region88: #{seq2seq_forward.1} parent=0 // pred_region
    _
  $region89: #{seq2seq_forward.1} parent=0 // pred_fallthru
    _
  // Predicated region
  $region90: #{seq2seq_forward.1} parent=0 // pred_check
    _
  $region91: #{seq2seq_forward.1} parent=0 // pred_check_branch
    %132 = sbr.rel (0) target = $region93
  $region92: #{seq2seq_forward.1} parent=0 // pred_region
    _
  $region93: #{seq2seq_forward.1} parent=0 // pred_fallthru
    _
  // Predicated region
  $region94: #{seq2seq_forward.1} parent=0 // pred_check
    _
  $region95: #{seq2seq_forward.1} parent=0 // pred_check_branch
    %134 = sbr.rel (0) target = $region97
  $region96: #{seq2seq_forward.1} parent=0 // pred_region
    _
  $region97: #{seq2seq_forward.1} parent=0 // pred_fallthru
    _
  // Predicated region
  $region98: #{seq2seq_forward.1} parent=0 // pred_check
    _
  $region99: #{seq2seq_forward.1} parent=0 // pred_check_branch
    %136 = sbr.rel (0) target = $region101
  $region100: #{seq2seq_forward.1} parent=0 // pred_region
    _
  $region101: #{seq2seq_forward.1} parent=0 // pred_fallthru
    _
  // Predicated region
  $region102: #{seq2seq_forward.1} parent=0 // pred_check
    _
  $region103: #{seq2seq_forward.1} parent=0 // pred_check_branch
    %138 = sbr.rel (0) target = $region105
  $region104: #{seq2seq_forward.1} parent=0 // pred_region
    _
  $region105: #{seq2seq_forward.1} parent=0 // pred_fallthru
    _
  // Predicated region
  $region106: #{seq2seq_forward.1} parent=0 // pred_check
    _
  $region107: #{seq2seq_forward.1} parent=0 // pred_check_branch
    %140 = sbr.rel (0) target = $region109
  $region108: #{seq2seq_forward.1} parent=0 // pred_region
    _
  $region109: #{seq2seq_forward.1} parent=0 // pred_fallthru
    _
  // Predicated region
  $region110: #{seq2seq_forward.1} parent=0 // pred_check
    _
  $region111: #{seq2seq_forward.1} parent=0 // pred_check_branch
    %142 = sbr.rel (0) target = $region113
  $region112: #{seq2seq_forward.1} parent=0 // pred_region
    _
  $region113: #{seq2seq_forward.1} parent=0 // pred_fallthru
    _
  // Predicated region
  $region114: #{seq2seq_forward.1} parent=0 // pred_check
    _
  $region115: #{seq2seq_forward.1} parent=0 // pred_check_branch
    %144 = sbr.rel (0) target = $region117
  $region116: #{seq2seq_forward.1} parent=0 // pred_region
    _
  $region117: #{seq2seq_forward.1} parent=0 // pred_fallthru
    _
  // Predicated region
  $region118: #{seq2seq_forward.1} parent=0 // pred_check
    _
  $region119: #{seq2seq_forward.1} parent=0 // pred_check_branch
    %146 = sbr.rel (0) target = $region121
  $region120: #{seq2seq_forward.1} parent=0 // pred_region
    _
  $region121: #{seq2seq_forward.1} parent=0 // pred_fallthru
    _
  // Predicated region
  $region122: #{seq2seq_forward.1} parent=0 // pred_check
    _
  $region123: #{seq2seq_forward.1} parent=0 // pred_check_branch
    %148 = sbr.rel (0) target = $region125
  $region124: #{seq2seq_forward.1} parent=0 // pred_region
    _
  $region125: #{seq2seq_forward.1} parent=0 // pred_fallthru
    _
  // Predicated region
  $region126: #{seq2seq_forward.1} parent=0 // pred_check
    _
  $region127: #{seq2seq_forward.1} parent=0 // pred_check_branch
    %150 = sbr.rel (0) target = $region129
  $region128: #{seq2seq_forward.1} parent=0 // pred_region
    _
  $region129: #{seq2seq_forward.1} parent=0 // pred_fallthru
    _
  // Predicated region
  $region130: #{seq2seq_forward.1} parent=0 // pred_check
    _
  $region131: #{seq2seq_forward.1} parent=0 // pred_check_branch
    %152 = sbr.rel (0) target = $region133
  $region132: #{seq2seq_forward.1} parent=0 // pred_region
    _
  $region133: #{seq2seq_forward.1} parent=0 // pred_fallthru
    _
  // Predicated region
  $region134: #{seq2seq_forward.1} parent=0 // pred_check
    _
  $region135: #{seq2seq_forward.1} parent=0 // pred_check_branch
    %154 = sbr.rel (0) target = $region137
  $region136: #{seq2seq_forward.1} parent=0 // pred_region
    _
  $region137: #{seq2seq_forward.1} parent=0 // pred_fallthru
    _
  // Predicated region
  $region138: #{seq2seq_forward.1} parent=0 // pred_check
    _
  $region139: #{seq2seq_forward.1} parent=0 // pred_check_branch
    %156 = sbr.rel (0) target = $region141
  $region140: #{seq2seq_forward.1} parent=0 // pred_region
    _
  $region141: #{seq2seq_forward.1} parent=0 // pred_fallthru
    _
  // Predicated region
  $region142: #{seq2seq_forward.1} parent=0 // pred_check
    _
  $region143: #{seq2seq_forward.1} parent=0 // pred_check_branch
    %158 = sbr.rel (0) target = $region145
  $region144: #{seq2seq_forward.1} parent=0 // pred_region
    _
  $region145: #{seq2seq_forward.1} parent=0 // pred_fallthru
    _
  // Predicated region
  $region146: #{seq2seq_forward.1} parent=0 // pred_check
    _
  $region147: #{seq2seq_forward.1} parent=0 // pred_check_branch
    %160 = sbr.rel (0) target = $region149
  $region148: #{seq2seq_forward.1} parent=0 // pred_region
    _
  $region149: #{seq2seq_forward.1} parent=0 // pred_fallthru
    _
  // Predicated region
  $region150: #{seq2seq_forward.1} parent=0 // pred_check
    _
  $region151: #{seq2seq_forward.1} parent=0 // pred_check_branch
    %162 = sbr.rel (0) target = $region153
  $region152: #{seq2seq_forward.1} parent=0 // pred_region
    _
  $region153: #{seq2seq_forward.1} parent=0 // pred_fallthru
    _
  // Predicated region
  $region154: #{seq2seq_forward.1} parent=0 // pred_check
    _
  $region155: #{seq2seq_forward.1} parent=0 // pred_check_branch
    %164 = sbr.rel (0) target = $region157
  $region156: #{seq2seq_forward.1} parent=0 // pred_region
    _
  $region157: #{seq2seq_forward.1} parent=0 // pred_fallthru
    _
  %v165 = vld [vmem:[%s1] sm:$0xff]
  %v166 = vld [vmem:[%s1 + $0x8] sm:$0xff]
  %v167 = vld [vmem:[%s5] sm:$0xff]
  %v168 = vld [vmem:[%s5 + $0x8] sm:$0xff]
  %v169 = vld [vmem:[%s11] sm:$0xff]
  %v170 = vld [vmem:[%s11 + $0x8] sm:$0xff]
  %v171 = vld [vmem:[%s11 + $0x10] sm:$0xff]
  %v172 = vld [vmem:[%s11 + $0x18] sm:$0xff]
  %v173 = vld [vmem:[%s13] sm:$0x1]
  %v175 = vperm.slane %v173, 0
  %vm177 = vcmask 261120
  %v179 = vsel %vm177, %v165, 0
  %v182 = vsel %vm177, %v166, 0
  %184 = vmatpush.msra.mxu0 0.0
  %185 = vmatpush.msra.mxu0 0.0
  %186 = vmatpush.msra.mxu0 0.0
  %187 = vmatpush.msra.mxu0 0.0
  %188 = vmatpush.msra.mxu0 0.0
  %189 = vmatpush.msra.mxu0 0.0
  %190 = vmatpush.msra.mxu0 0.0
  %191 = vmatpush.msra.mxu0 0.0
  %192 = vmatpush.msra.mxu0 0.0
  %193 = vmatpush.msra.mxu0 0.0
  %194 = vmatpush.msra.mxu0 0.0
  %195 = vmatpush.msra.mxu0 0.0
  %196 = vmatpush.msra.mxu0 %v172
  %197 = vmatpush.msra.mxu0 %v171
  %198 = vmatpush.msra.mxu0 %v170
  %199 = vmatpush.msra.mxu0 %v169
  %200 = vmatmul.f32.gmra.mxu0 %v179
  %v201 = vpop.f32.mrf.mxu0
  %v202 = vadd.f32 %v175, %v201
  %203 = vmatmul.f32.gmra.mxu0 %v182
  %v204 = vpop.f32.mrf.mxu0
  %v205 = vadd.f32 %v175, %v204
  %206 = vdwg.mxu0
  %v207 = vld [vmem:[%s15] sm:$0xff]
  %v208 = vld [vmem:[%s15 + $0x8] sm:$0xff]
  %v209 = vld [vmem:[%s15 + $0x10] sm:$0xff]
  %v210 = vld [vmem:[%s15 + $0x18] sm:$0xff]
  %v211 = vld [vmem:[%s17] sm:$0x1]
  %213 = vrot.lane.b32.xlu0 %v202, 96
  %v214 = vpop.permute.xlu0 %213
  %vm215 = vcmask 64512
  %v216 = vsel %vm215, %v202, 0
  %v218 = vsel %vm215, %v214, 0
  %220 = vmatpush.xpose.msra.mxu0 0.0
  %221 = vmatpush.xpose.msra.mxu0 0.0
  %222 = vmatpush.xpose.msra.mxu0 0.0
  %223 = vmatpush.xpose.msra.mxu0 0.0
  %224 = vmatpush.xpose.msra.mxu0 0.0
  %225 = vmatpush.xpose.msra.mxu0 0.0
  %226 = vmatpush.xpose.msra.mxu0 0.0
  %227 = vmatpush.xpose.msra.mxu0 0.0
  %228 = vmatpush.xpose.msra.mxu0 0.0
  %229 = vmatpush.xpose.msra.mxu0 0.0
  %230 = vmatpush.xpose.msra.mxu0 0.0
  %231 = vmatpush.xpose.msra.mxu0 0.0
  %232 = vmatpush.xpose.msra.mxu0 0.0
  %233 = vmatpush.xpose.msra.mxu0 0.0
  %234 = vmatpush.xpose.msra.mxu0 0.0
  %235 = vmatpush.xpose.msra.mxu0 %v218
  %236 = vmatmul.f32.gmra.mxu0 %v216
  %v237 = vpop.f32.mrf.mxu0
  %v238 = vadd.f32 %v167, %v237
  %239 = vdwg.mxu0
  %241 = vrot.lane.b32.xlu0 %v205, 96
  %v242 = vpop.permute.xlu0 %241
  %v243 = vsel %vm215, %v205, 0
  %v245 = vsel %vm215, %v242, 0
  %247 = vmatpush.xpose.msra.mxu0 0.0
  %248 = vmatpush.xpose.msra.mxu0 0.0
  %249 = vmatpush.xpose.msra.mxu0 0.0
  %250 = vmatpush.xpose.msra.mxu0 0.0
  %251 = vmatpush.xpose.msra.mxu0 0.0
  %252 = vmatpush.xpose.msra.mxu0 0.0
  %253 = vmatpush.xpose.msra.mxu0 0.0
  %254 = vmatpush.xpose.msra.mxu0 0.0
  %255 = vmatpush.xpose.msra.mxu0 0.0
  %256 = vmatpush.xpose.msra.mxu0 0.0
  %257 = vmatpush.xpose.msra.mxu0 0.0
  %258 = vmatpush.xpose.msra.mxu0 0.0
  %259 = vmatpush.xpose.msra.mxu0 0.0
  %260 = vmatpush.xpose.msra.mxu0 0.0
  %261 = vmatpush.xpose.msra.mxu0 0.0
  %262 = vmatpush.xpose.msra.mxu0 %v245
  %263 = vmatmul.f32.gmra.mxu0 %v243
  %v264 = vpop.f32.mrf.mxu0
  %v265 = vadd.f32 %v168, %v264
  %266 = vdwg.mxu0
  %v267 = vsel %vm215, %v238, -inf
  %268 = vmax.xlane.f32.xlu0 %v267
  %v269 = vpop.xlane.xlu0 %268
  %v270 = vsel %vm215, %v265, -inf
  %271 = vmax.xlane.f32.xlu0 %v270
  %v272 = vpop.xlane.xlu0 %271
  %v273 = vsub.f32 %v238, %v269
  %v274 = vsub.f32 %v265, %v272
  %v275 = vmul.f32 %v273, 1.442695
  %v276 = vpow.pop %v275
  %v277 = vmul.f32 %v274, 1.442695
  %v278 = vpow.pop %v277
  %v279 = vsel %vm215, %v276, 0.0
  %280 = vadd.xlane.f32.xlu0 %v279
  %v281 = vpop.xlane.xlu0 %280
  %v282 = vsel %vm215, %v278, 0.0
  %283 = vadd.xlane.f32.xlu0 %v282
  %v284 = vpop.xlane.xlu0 %283
  %v285 = vrcp.pop %v281
  %v286 = vrcp.pop %v284
  %v287 = vmul.f32 %v276, %v285
  %v288 = vmul.f32 %v278, %v286
  %289 = vrot.lane.b32.xlu0 %v202, 64
  %v290 = vpop.permute.xlu0 %289
  %v293 = vsel %vm215, %v287, 0
  %295 = vmatpush.msra.mxu0 0.0
  %296 = vmatpush.msra.mxu0 0.0
  %297 = vmatpush.msra.mxu0 0.0
  %298 = vmatpush.msra.mxu0 0.0
  %299 = vmatpush.msra.mxu0 0.0
  %300 = vmatpush.msra.mxu0 0.0
  %301 = vmatpush.msra.mxu0 0.0
  %302 = vmatpush.msra.mxu0 0.0
  %303 = vmatpush.msra.mxu0 0.0
  %304 = vmatpush.msra.mxu0 0.0
  %305 = vmatpush.msra.mxu0 0.0
  %306 = vmatpush.msra.mxu0 0.0
  %307 = vmatpush.msra.mxu0 0.0
  %308 = vmatpush.msra.mxu0 0.0
  %309 = vmatpush.msra.mxu0 0.0
  %310 = vmatpush.msra.mxu0 %v290
  %311 = vmatmul.f32.gmra.mxu0 %v293
  %v312 = vpop.f32.mrf.mxu0
  %v313 = vadd.f32 0.0, %v312
  %314 = vdwg.mxu0
  %315 = vrot.lane.b32.xlu0 %v205, 64
  %v316 = vpop.permute.xlu0 %315
  %v319 = vsel %vm215, %v288, 0
  %321 = vmatpush.msra.mxu0 0.0
  %322 = vmatpush.msra.mxu0 0.0
  %323 = vmatpush.msra.mxu0 0.0
  %324 = vmatpush.msra.mxu0 0.0
  %325 = vmatpush.msra.mxu0 0.0
  %326 = vmatpush.msra.mxu0 0.0
  %327 = vmatpush.msra.mxu0 0.0
  %328 = vmatpush.msra.mxu0 0.0
  %329 = vmatpush.msra.mxu0 0.0
  %330 = vmatpush.msra.mxu0 0.0
  %331 = vmatpush.msra.mxu0 0.0
  %332 = vmatpush.msra.mxu0 0.0
  %333 = vmatpush.msra.mxu0 0.0
  %334 = vmatpush.msra.mxu0 0.0
  %335 = vmatpush.msra.mxu0 0.0
  %336 = vmatpush.msra.mxu0 %v316
  %337 = vmatmul.f32.gmra.mxu0 %v319
  %v338 = vpop.f32.mrf.mxu0
  %v339 = vadd.f32 0.0, %v338
  %340 = vdwg.mxu0
  %341 = vrot.lane.b32.xlu0 %v202, 120
  %v342 = vpop.permute.xlu0 %341
  %343 = vrot.lane.b32.xlu0 %v202, 88
  %v344 = vpop.permute.xlu0 %343
  %v345 = vsel %vm215, %v342, 0
  %v347 = vsel %vm215, %v344, 0
  %349 = vmatpush.xpose.msra.mxu0 0.0
  %350 = vmatpush.xpose.msra.mxu0 0.0
  %351 = vmatpush.xpose.msra.mxu0 0.0
  %352 = vmatpush.xpose.msra.mxu0 0.0
  %353 = vmatpush.xpose.msra.mxu0 0.0
  %354 = vmatpush.xpose.msra.mxu0 0.0
  %355 = vmatpush.xpose.msra.mxu0 0.0
  %356 = vmatpush.xpose.msra.mxu0 0.0
  %357 = vmatpush.xpose.msra.mxu0 0.0
  %358 = vmatpush.xpose.msra.mxu0 0.0
  %359 = vmatpush.xpose.msra.mxu0 0.0
  %360 = vmatpush.xpose.msra.mxu0 0.0
  %361 = vmatpush.xpose.msra.mxu0 0.0
  %362 = vmatpush.xpose.msra.mxu0 0.0
  %363 = vmatpush.xpose.msra.mxu0 0.0
  %364 = vmatpush.xpose.msra.mxu0 %v347
  %365 = vmatmul.f32.gmra.mxu0 %v345
  %v366 = vpop.f32.mrf.mxu0
  %v367 = vadd.f32 %v167, %v366
  %368 = vdwg.mxu0
  %369 = vrot.lane.b32.xlu0 %v205, 120
  %v370 = vpop.permute.xlu0 %369
  %371 = vrot.lane.b32.xlu0 %v205, 88
  %v372 = vpop.permute.xlu0 %371
  %v373 = vsel %vm215, %v370, 0
  %v375 = vsel %vm215, %v372, 0
  %377 = vmatpush.xpose.msra.mxu0 0.0
  %378 = vmatpush.xpose.msra.mxu0 0.0
  %379 = vmatpush.xpose.msra.mxu0 0.0
  %380 = vmatpush.xpose.msra.mxu0 0.0
  %381 = vmatpush.xpose.msra.mxu0 0.0
  %382 = vmatpush.xpose.msra.mxu0 0.0
  %383 = vmatpush.xpose.msra.mxu0 0.0
  %384 = vmatpush.xpose.msra.mxu0 0.0
  %385 = vmatpush.xpose.msra.mxu0 0.0
  %386 = vmatpush.xpose.msra.mxu0 0.0
  %387 = vmatpush.xpose.msra.mxu0 0.0
  %388 = vmatpush.xpose.msra.mxu0 0.0
  %389 = vmatpush.xpose.msra.mxu0 0.0
  %390 = vmatpush.xpose.msra.mxu0 0.0
  %391 = vmatpush.xpose.msra.mxu0 0.0
  %392 = vmatpush.xpose.msra.mxu0 %v375
  %393 = vmatmul.f32.gmra.mxu0 %v373
  %v394 = vpop.f32.mrf.mxu0
  %v395 = vadd.f32 %v168, %v394
  %396 = vdwg.mxu0
  %v397 = vsel %vm215, %v367, -inf
  %398 = vmax.xlane.f32.xlu0 %v397
  %v399 = vpop.xlane.xlu0 %398
  %v400 = vsel %vm215, %v395, -inf
  %401 = vmax.xlane.f32.xlu0 %v400
  %v402 = vpop.xlane.xlu0 %401
  %v403 = vsub.f32 %v367, %v399
  %v404 = vsub.f32 %v395, %v402
  %v405 = vmul.f32 %v403, 1.442695
  %v406 = vpow.pop %v405
  %v407 = vmul.f32 %v404, 1.442695
  %v408 = vpow.pop %v407
  %v409 = vsel %vm215, %v406, 0.0
  %410 = vadd.xlane.f32.xlu0 %v409
  %v411 = vpop.xlane.xlu0 %410
  %v412 = vsel %vm215, %v408, 0.0
  %413 = vadd.xlane.f32.xlu0 %v412
  %v414 = vpop.xlane.xlu0 %413
  %v415 = vrcp.pop %v411
  %v416 = vrcp.pop %v414
  %v417 = vmul.f32 %v406, %v415
  %v418 = vmul.f32 %v408, %v416
  %419 = vrot.lane.b32.xlu0 %v202, 56
  %v420 = vpop.permute.xlu0 %419
  %v423 = vsel %vm215, %v417, 0
  %425 = vmatpush.msra.mxu0 0.0
  %426 = vmatpush.msra.mxu0 0.0
  %427 = vmatpush.msra.mxu0 0.0
  %428 = vmatpush.msra.mxu0 0.0
  %429 = vmatpush.msra.mxu0 0.0
  %430 = vmatpush.msra.mxu0 0.0
  %431 = vmatpush.msra.mxu0 0.0
  %432 = vmatpush.msra.mxu0 0.0
  %433 = vmatpush.msra.mxu0 0.0
  %434 = vmatpush.msra.mxu0 0.0
  %435 = vmatpush.msra.mxu0 0.0
  %436 = vmatpush.msra.mxu0 0.0
  %437 = vmatpush.msra.mxu0 0.0
  %438 = vmatpush.msra.mxu0 0.0
  %439 = vmatpush.msra.mxu0 0.0
  %440 = vmatpush.msra.mxu0 %v420
  %441 = vmatmul.f32.gmra.mxu0 %v423
  %v442 = vpop.f32.mrf.mxu0
  %v443 = vadd.f32 0.0, %v442
  %444 = vdwg.mxu0
  %445 = vrot.lane.b32.xlu0 %v205, 56
  %v446 = vpop.permute.xlu0 %445
  %v449 = vsel %vm215, %v418, 0
  %451 = vmatpush.msra.mxu0 0.0
  %452 = vmatpush.msra.mxu0 0.0
  %453 = vmatpush.msra.mxu0 0.0
  %454 = vmatpush.msra.mxu0 0.0
  %455 = vmatpush.msra.mxu0 0.0
  %456 = vmatpush.msra.mxu0 0.0
  %457 = vmatpush.msra.mxu0 0.0
  %458 = vmatpush.msra.mxu0 0.0
  %459 = vmatpush.msra.mxu0 0.0
  %460 = vmatpush.msra.mxu0 0.0
  %461 = vmatpush.msra.mxu0 0.0
  %462 = vmatpush.msra.mxu0 0.0
  %463 = vmatpush.msra.mxu0 0.0
  %464 = vmatpush.msra.mxu0 0.0
  %465 = vmatpush.msra.mxu0 0.0
  %466 = vmatpush.msra.mxu0 %v446
  %467 = vmatmul.f32.gmra.mxu0 %v449
  %v468 = vpop.f32.mrf.mxu0
  %v469 = vadd.f32 0.0, %v468
  %470 = vdwg.mxu0
  %v472 = vsel %vm215, %v443, 0
  %v475 = vsel %vm215, %v469, 0
  %477 = vmatpush.msra.mxu0 0.0
  %478 = vmatpush.msra.mxu0 0.0
  %479 = vmatpush.msra.mxu0 0.0
  %480 = vmatpush.msra.mxu0 0.0
  %481 = vmatpush.msra.mxu0 0.0
  %482 = vmatpush.msra.mxu0 0.0
  %483 = vmatpush.msra.mxu0 0.0
  %484 = vmatpush.msra.mxu0 0.0
  %485 = vmatpush.msra.mxu0 0.0
  %486 = vmatpush.msra.mxu0 0.0
  %487 = vmatpush.msra.mxu0 0.0
  %488 = vmatpush.msra.mxu0 0.0
  %489 = vmatpush.msra.mxu0 0.0
  %490 = vmatpush.msra.mxu0 0.0
  %491 = vmatpush.msra.mxu0 0.0
  %492 = vmatpush.msra.mxu0 %v208
  %493 = vmatmul.f32.gmra.mxu0 %v472
  %v494 = vpop.f32.mrf.mxu0
  %v495 = vadd.f32 0.0, %v494
  %496 = vmatmul.f32.gmra.mxu0 %v475
  %v497 = vpop.f32.mrf.mxu0
  %v498 = vadd.f32 0.0, %v497
  %499 = vdwg.mxu0
  %v501 = vsel %vm215, %v313, 0
  %v504 = vsel %vm215, %v339, 0
  %506 = vmatpush.msra.mxu0 0.0
  %507 = vmatpush.msra.mxu0 0.0
  %508 = vmatpush.msra.mxu0 0.0
  %509 = vmatpush.msra.mxu0 0.0
  %510 = vmatpush.msra.mxu0 0.0
  %511 = vmatpush.msra.mxu0 0.0
  %512 = vmatpush.msra.mxu0 0.0
  %513 = vmatpush.msra.mxu0 0.0
  %514 = vmatpush.msra.mxu0 0.0
  %515 = vmatpush.msra.mxu0 0.0
  %516 = vmatpush.msra.mxu0 0.0
  %517 = vmatpush.msra.mxu0 0.0
  %518 = vmatpush.msra.mxu0 0.0
  %519 = vmatpush.msra.mxu0 0.0
  %520 = vmatpush.msra.mxu0 0.0
  %521 = vmatpush.msra.mxu0 %v207
  %522 = vmatmul.f32.gmra.mxu0 %v501
  %v523 = vpop.f32.mrf.mxu0
  %v524 = vadd.f32 %v495, %v523
  %525 = vmatmul.f32.gmra.mxu0 %v504
  %v526 = vpop.f32.mrf.mxu0
  %v527 = vadd.f32 %v498, %v526
  %528 = vdwg.mxu0
  %529 = vrot.lane.b32.xlu0 %v202, 112
  %v530 = vpop.permute.xlu0 %529
  %531 = vrot.lane.b32.xlu0 %v202, 80
  %v532 = vpop.permute.xlu0 %531
  %v533 = vsel %vm215, %v530, 0
  %v535 = vsel %vm215, %v532, 0
  %537 = vmatpush.xpose.msra.mxu0 0.0
  %538 = vmatpush.xpose.msra.mxu0 0.0
  %539 = vmatpush.xpose.msra.mxu0 0.0
  %540 = vmatpush.xpose.msra.mxu0 0.0
  %541 = vmatpush.xpose.msra.mxu0 0.0
  %542 = vmatpush.xpose.msra.mxu0 0.0
  %543 = vmatpush.xpose.msra.mxu0 0.0
  %544 = vmatpush.xpose.msra.mxu0 0.0
  %545 = vmatpush.xpose.msra.mxu0 0.0
  %546 = vmatpush.xpose.msra.mxu0 0.0
  %547 = vmatpush.xpose.msra.mxu0 0.0
  %548 = vmatpush.xpose.msra.mxu0 0.0
  %549 = vmatpush.xpose.msra.mxu0 0.0
  %550 = vmatpush.xpose.msra.mxu0 0.0
  %551 = vmatpush.xpose.msra.mxu0 0.0
  %552 = vmatpush.xpose.msra.mxu0 %v535
  %553 = vmatmul.f32.gmra.mxu0 %v533
  %v554 = vpop.f32.mrf.mxu0
  %v555 = vadd.f32 %v167, %v554
  %556 = vdwg.mxu0
  %557 = vrot.lane.b32.xlu0 %v205, 112
  %v558 = vpop.permute.xlu0 %557
  %559 = vrot.lane.b32.xlu0 %v205, 80
  %v560 = vpop.permute.xlu0 %559
  %v561 = vsel %vm215, %v558, 0
  %v563 = vsel %vm215, %v560, 0
  %565 = vmatpush.xpose.msra.mxu0 0.0
  %566 = vmatpush.xpose.msra.mxu0 0.0
  %567 = vmatpush.xpose.msra.mxu0 0.0
  %568 = vmatpush.xpose.msra.mxu0 0.0
  %569 = vmatpush.xpose.msra.mxu0 0.0
  %570 = vmatpush.xpose.msra.mxu0 0.0
  %571 = vmatpush.xpose.msra.mxu0 0.0
  %572 = vmatpush.xpose.msra.mxu0 0.0
  %573 = vmatpush.xpose.msra.mxu0 0.0
  %574 = vmatpush.xpose.msra.mxu0 0.0
  %575 = vmatpush.xpose.msra.mxu0 0.0
  %576 = vmatpush.xpose.msra.mxu0 0.0
  %577 = vmatpush.xpose.msra.mxu0 0.0
  %578 = vmatpush.xpose.msra.mxu0 0.0
  %579 = vmatpush.xpose.msra.mxu0 0.0
  %580 = vmatpush.xpose.msra.mxu0 %v563
  %581 = vmatmul.f32.gmra.mxu0 %v561
  %v582 = vpop.f32.mrf.mxu0
  %v583 = vadd.f32 %v168, %v582
  %584 = vdwg.mxu0
  %v585 = vsel %vm215, %v555, -inf
  %586 = vmax.xlane.f32.xlu0 %v585
  %v587 = vpop.xlane.xlu0 %586
  %v588 = vsel %vm215, %v583, -inf
  %589 = vmax.xlane.f32.xlu0 %v588
  %v590 = vpop.xlane.xlu0 %589
  %v591 = vsub.f32 %v555, %v587
  %v592 = vsub.f32 %v583, %v590
  %v593 = vmul.f32 %v591, 1.442695
  %v594 = vpow.pop %v593
  %v595 = vmul.f32 %v592, 1.442695
  %v596 = vpow.pop %v595
  %v597 = vsel %vm215, %v594, 0.0
  %598 = vadd.xlane.f32.xlu0 %v597
  %v599 = vpop.xlane.xlu0 %598
  %v600 = vsel %vm215, %v596, 0.0
  %601 = vadd.xlane.f32.xlu0 %v600
  %v602 = vpop.xlane.xlu0 %601
  %v603 = vrcp.pop %v599
  %v604 = vrcp.pop %v602
  %v605 = vmul.f32 %v594, %v603
  %v606 = vmul.f32 %v596, %v604
  %607 = vrot.lane.b32.xlu0 %v202, 48
  %v608 = vpop.permute.xlu0 %607
  %v611 = vsel %vm215, %v605, 0
  %613 = vmatpush.msra.mxu0 0.0
  %614 = vmatpush.msra.mxu0 0.0
  %615 = vmatpush.msra.mxu0 0.0
  %616 = vmatpush.msra.mxu0 0.0
  %617 = vmatpush.msra.mxu0 0.0
  %618 = vmatpush.msra.mxu0 0.0
  %619 = vmatpush.msra.mxu0 0.0
  %620 = vmatpush.msra.mxu0 0.0
  %621 = vmatpush.msra.mxu0 0.0
  %622 = vmatpush.msra.mxu0 0.0
  %623 = vmatpush.msra.mxu0 0.0
  %624 = vmatpush.msra.mxu0 0.0
  %625 = vmatpush.msra.mxu0 0.0
  %626 = vmatpush.msra.mxu0 0.0
  %627 = vmatpush.msra.mxu0 0.0
  %628 = vmatpush.msra.mxu0 %v608
  %629 = vmatmul.f32.gmra.mxu0 %v611
  %v630 = vpop.f32.mrf.mxu0
  %v631 = vadd.f32 0.0, %v630
  %632 = vdwg.mxu0
  %633 = vrot.lane.b32.xlu0 %v205, 48
  %v634 = vpop.permute.xlu0 %633
  %v637 = vsel %vm215, %v606, 0
  %639 = vmatpush.msra.mxu0 0.0
  %640 = vmatpush.msra.mxu0 0.0
  %641 = vmatpush.msra.mxu0 0.0
  %642 = vmatpush.msra.mxu0 0.0
  %643 = vmatpush.msra.mxu0 0.0
  %644 = vmatpush.msra.mxu0 0.0
  %645 = vmatpush.msra.mxu0 0.0
  %646 = vmatpush.msra.mxu0 0.0
  %647 = vmatpush.msra.mxu0 0.0
  %648 = vmatpush.msra.mxu0 0.0
  %649 = vmatpush.msra.mxu0 0.0
  %650 = vmatpush.msra.mxu0 0.0
  %651 = vmatpush.msra.mxu0 0.0
  %652 = vmatpush.msra.mxu0 0.0
  %653 = vmatpush.msra.mxu0 0.0
  %654 = vmatpush.msra.mxu0 %v634
  %655 = vmatmul.f32.gmra.mxu0 %v637
  %v656 = vpop.f32.mrf.mxu0
  %v657 = vadd.f32 0.0, %v656
  %658 = vdwg.mxu0
  %v660 = vsel %vm215, %v631, 0
  %v663 = vsel %vm215, %v657, 0
  %665 = vmatpush.msra.mxu0 0.0
  %666 = vmatpush.msra.mxu0 0.0
  %667 = vmatpush.msra.mxu0 0.0
  %668 = vmatpush.msra.mxu0 0.0
  %669 = vmatpush.msra.mxu0 0.0
  %670 = vmatpush.msra.mxu0 0.0
  %671 = vmatpush.msra.mxu0 0.0
  %672 = vmatpush.msra.mxu0 0.0
  %673 = vmatpush.msra.mxu0 0.0
  %674 = vmatpush.msra.mxu0 0.0
  %675 = vmatpush.msra.mxu0 0.0
  %676 = vmatpush.msra.mxu0 0.0
  %677 = vmatpush.msra.mxu0 0.0
  %678 = vmatpush.msra.mxu0 0.0
  %679 = vmatpush.msra.mxu0 0.0
  %680 = vmatpush.msra.mxu0 %v209
  %681 = vmatmul.f32.gmra.mxu0 %v660
  %v682 = vpop.f32.mrf.mxu0
  %v683 = vadd.f32 0.0, %v682
  %684 = vmatmul.f32.gmra.mxu0 %v663
  %v685 = vpop.f32.mrf.mxu0
  %v686 = vadd.f32 0.0, %v685
  %687 = vdwg.mxu0
  %v688 = vadd.f32 %v524, %v683
  %v689 = vadd.f32 %v527, %v686
  %690 = vrot.lane.b32.xlu0 %v202, 104
  %v691 = vpop.permute.xlu0 %690
  %692 = vrot.lane.b32.xlu0 %v202, 72
  %v693 = vpop.permute.xlu0 %692
  %v694 = vsel %vm215, %v691, 0
  %v696 = vsel %vm215, %v693, 0
  %698 = vmatpush.xpose.msra.mxu0 0.0
  %699 = vmatpush.xpose.msra.mxu0 0.0
  %700 = vmatpush.xpose.msra.mxu0 0.0
  %701 = vmatpush.xpose.msra.mxu0 0.0
  %702 = vmatpush.xpose.msra.mxu0 0.0
  %703 = vmatpush.xpose.msra.mxu0 0.0
  %704 = vmatpush.xpose.msra.mxu0 0.0
  %705 = vmatpush.xpose.msra.mxu0 0.0
  %706 = vmatpush.xpose.msra.mxu0 0.0
  %707 = vmatpush.xpose.msra.mxu0 0.0
  %708 = vmatpush.xpose.msra.mxu0 0.0
  %709 = vmatpush.xpose.msra.mxu0 0.0
  %710 = vmatpush.xpose.msra.mxu0 0.0
  %711 = vmatpush.xpose.msra.mxu0 0.0
  %712 = vmatpush.xpose.msra.mxu0 0.0
  %713 = vmatpush.xpose.msra.mxu0 %v696
  %714 = vmatmul.f32.gmra.mxu0 %v694
  %v715 = vpop.f32.mrf.mxu0
  %v716 = vadd.f32 %v167, %v715
  %717 = vdwg.mxu0
  %718 = vrot.lane.b32.xlu0 %v205, 104
  %v719 = vpop.permute.xlu0 %718
  %720 = vrot.lane.b32.xlu0 %v205, 72
  %v721 = vpop.permute.xlu0 %720
  %v722 = vsel %vm215, %v719, 0
  %v724 = vsel %vm215, %v721, 0
  %726 = vmatpush.xpose.msra.mxu0 0.0
  %727 = vmatpush.xpose.msra.mxu0 0.0
  %728 = vmatpush.xpose.msra.mxu0 0.0
  %729 = vmatpush.xpose.msra.mxu0 0.0
  %730 = vmatpush.xpose.msra.mxu0 0.0
  %731 = vmatpush.xpose.msra.mxu0 0.0
  %732 = vmatpush.xpose.msra.mxu0 0.0
  %733 = vmatpush.xpose.msra.mxu0 0.0
  %734 = vmatpush.xpose.msra.mxu0 0.0
  %735 = vmatpush.xpose.msra.mxu0 0.0
  %736 = vmatpush.xpose.msra.mxu0 0.0
  %737 = vmatpush.xpose.msra.mxu0 0.0
  %738 = vmatpush.xpose.msra.mxu0 0.0
  %739 = vmatpush.xpose.msra.mxu0 0.0
  %740 = vmatpush.xpose.msra.mxu0 0.0
  %741 = vmatpush.xpose.msra.mxu0 %v724
  %742 = vmatmul.f32.gmra.mxu0 %v722
  %v743 = vpop.f32.mrf.mxu0
  %v744 = vadd.f32 %v168, %v743
  %745 = vdwg.mxu0
  %v746 = vsel %vm215, %v716, -inf
  %747 = vmax.xlane.f32.xlu0 %v746
  %v748 = vpop.xlane.xlu0 %747
  %v749 = vsel %vm215, %v744, -inf
  %750 = vmax.xlane.f32.xlu0 %v749
  %v751 = vpop.xlane.xlu0 %750
  %v752 = vsub.f32 %v716, %v748
  %v753 = vsub.f32 %v744, %v751
  %v754 = vmul.f32 %v752, 1.442695
  %v755 = vpow.pop %v754
  %v756 = vmul.f32 %v753, 1.442695
  %v757 = vpow.pop %v756
  %v758 = vsel %vm215, %v755, 0.0
  %759 = vadd.xlane.f32.xlu0 %v758
  %v760 = vpop.xlane.xlu0 %759
  %v761 = vsel %vm215, %v757, 0.0
  %762 = vadd.xlane.f32.xlu0 %v761
  %v763 = vpop.xlane.xlu0 %762
  %v764 = vrcp.pop %v760
  %v765 = vrcp.pop %v763
  %v766 = vmul.f32 %v755, %v764
  %v767 = vmul.f32 %v757, %v765
  %768 = vrot.lane.b32.xlu0 %v202, 40
  %v769 = vpop.permute.xlu0 %768
  %v772 = vsel %vm215, %v766, 0
  %774 = vmatpush.msra.mxu0 0.0
  %775 = vmatpush.msra.mxu0 0.0
  %776 = vmatpush.msra.mxu0 0.0
  %777 = vmatpush.msra.mxu0 0.0
  %778 = vmatpush.msra.mxu0 0.0
  %779 = vmatpush.msra.mxu0 0.0
  %780 = vmatpush.msra.mxu0 0.0
  %781 = vmatpush.msra.mxu0 0.0
  %782 = vmatpush.msra.mxu0 0.0
  %783 = vmatpush.msra.mxu0 0.0
  %784 = vmatpush.msra.mxu0 0.0
  %785 = vmatpush.msra.mxu0 0.0
  %786 = vmatpush.msra.mxu0 0.0
  %787 = vmatpush.msra.mxu0 0.0
  %788 = vmatpush.msra.mxu0 0.0
  %789 = vmatpush.msra.mxu0 %v769
  %790 = vmatmul.f32.gmra.mxu0 %v772
  %v791 = vpop.f32.mrf.mxu0
  %v792 = vadd.f32 0.0, %v791
  %793 = vdwg.mxu0
  %794 = vrot.lane.b32.xlu0 %v205, 40
  %v795 = vpop.permute.xlu0 %794
  %v798 = vsel %vm215, %v767, 0
  %800 = vmatpush.msra.mxu0 0.0
  %801 = vmatpush.msra.mxu0 0.0
  %802 = vmatpush.msra.mxu0 0.0
  %803 = vmatpush.msra.mxu0 0.0
  %804 = vmatpush.msra.mxu0 0.0
  %805 = vmatpush.msra.mxu0 0.0
  %806 = vmatpush.msra.mxu0 0.0
  %807 = vmatpush.msra.mxu0 0.0
  %808 = vmatpush.msra.mxu0 0.0
  %809 = vmatpush.msra.mxu0 0.0
  %810 = vmatpush.msra.mxu0 0.0
  %811 = vmatpush.msra.mxu0 0.0
  %812 = vmatpush.msra.mxu0 0.0
  %813 = vmatpush.msra.mxu0 0.0
  %814 = vmatpush.msra.mxu0 0.0
  %815 = vmatpush.msra.mxu0 %v795
  %816 = vmatmul.f32.gmra.mxu0 %v798
  %v817 = vpop.f32.mrf.mxu0
  %v818 = vadd.f32 0.0, %v817
  %819 = vdwg.mxu0
  %v821 = vsel %vm215, %v792, 0
  %v824 = vsel %vm215, %v818, 0
  %826 = vmatpush.msra.mxu0 0.0
  %827 = vmatpush.msra.mxu0 0.0
  %828 = vmatpush.msra.mxu0 0.0
  %829 = vmatpush.msra.mxu0 0.0
  %830 = vmatpush.msra.mxu0 0.0
  %831 = vmatpush.msra.mxu0 0.0
  %832 = vmatpush.msra.mxu0 0.0
  %833 = vmatpush.msra.mxu0 0.0
  %834 = vmatpush.msra.mxu0 0.0
  %835 = vmatpush.msra.mxu0 0.0
  %836 = vmatpush.msra.mxu0 0.0
  %837 = vmatpush.msra.mxu0 0.0
  %838 = vmatpush.msra.mxu0 0.0
  %839 = vmatpush.msra.mxu0 0.0
  %840 = vmatpush.msra.mxu0 0.0
  %841 = vmatpush.msra.mxu0 %v210
  %842 = vmatmul.f32.gmra.mxu0 %v821
  %v843 = vpop.f32.mrf.mxu0
  %v844 = vadd.f32 0.0, %v843
  %845 = vmatmul.f32.gmra.mxu0 %v824
  %v846 = vpop.f32.mrf.mxu0
  %v847 = vadd.f32 0.0, %v846
  %848 = vdwg.mxu0
  %v849 = vadd.f32 %v688, %v844
  %v850 = vadd.f32 %v689, %v847
  %v852 = vperm.slane %v211, 0
  %v854 = vadd.f32 %v849, %v852
  %v855 = vadd.f32 %v850, %v852
  %v856 = vadd.f32 %v165, %v854
  %v857 = vadd.f32 %v166, %v855
  %v858 = vld [vmem:[%s19] sm:$0x1]
  %v859 = vld [vmem:[%s21] sm:$0x1]
  %v860 = vsel %vm177, %v856, 0.0
  %861 = vadd.xlane.f32.xlu0 %v860
  %v862 = vpop.xlane.xlu0 %861
  %v863 = vsel %vm177, %v857, 0.0
  %864 = vadd.xlane.f32.xlu0 %v863
  %v865 = vpop.xlane.xlu0 %864
  %v866 = vrcp.pop 32.0
  %v867 = vmul.f32 32.0, %v866
  %v868 = vsub.f32 1.0, %v867
  %v869 = vmul.f32 %v866, %v868
  %v870 = vadd.f32 %v866, %v869
  %vm871 = vweird.f32 %v866
  %v872 = vsel %vm871, %v866, %v870
  %v873 = vmul.f32 %v862, %v872
  %v874 = vmul.f32 %v865, %v872
  %v875 = vsub.f32 %v856, %v873
  %v876 = vsub.f32 %v857, %v874
  %v877 = vmul.f32 %v875, %v875
  %v878 = vmul.f32 %v876, %v876
  %v879 = vsel %vm177, %v877, 0.0
  %880 = vadd.xlane.f32.xlu0 %v879
  %v881 = vpop.xlane.xlu0 %880
  %v882 = vsel %vm177, %v878, 0.0
  %883 = vadd.xlane.f32.xlu0 %v882
  %v884 = vpop.xlane.xlu0 %883
  %v885 = vmul.f32 %v881, %v872
  %v886 = vmul.f32 %v884, %v872
  %v887 = vadd.f32 %v885, 1e-05
  %v888 = vadd.f32 %v886, 1e-05
  %v889 = vrsqrt.pop %v887
  %v890 = vmul.f32 %v889, %v887
  %v891 = vmul.f32 %v890, %v889
  %v892 = vmul.f32 0.5, %v891
  %v893 = vsub.f32 1.5, %v892
  %v894 = vmul.f32 %v889, %v893
  %vm895 = vweird.f32 %v887
  %vm896 = vweird.f32 %v889
  %vm897 = vmor %vm895, %vm896
  %v898 = vsel %vm897, %v889, %v894
  %v899 = vrsqrt.pop %v888
  %v900 = vmul.f32 %v899, %v888
  %v901 = vmul.f32 %v900, %v899
  %v902 = vmul.f32 0.5, %v901
  %v903 = vsub.f32 1.5, %v902
  %v904 = vmul.f32 %v899, %v903
  %vm905 = vweird.f32 %v888
  %vm906 = vweird.f32 %v899
  %vm907 = vmor %vm905, %vm906
  %v908 = vsel %vm907, %v899, %v904
  %v909 = vmul.f32 %v875, %v898
  %v910 = vmul.f32 %v876, %v908
  %v912 = vperm.slane %v858, 0
  %v914 = vmul.f32 %v909, %v912
  %v915 = vmul.f32 %v910, %v912
  %v917 = vperm.slane %v859, 0
  %v919 = vadd.f32 %v914, %v917
  %v920 = vadd.f32 %v915, %v917
  %v921 = vld [vmem:[%s23] sm:$0xff]
  %v922 = vld [vmem:[%s23 + $0x8] sm:$0xff]
  %v923 = vld [vmem:[%s23 + $0x10] sm:$0xff]
  %v924 = vld [vmem:[%s23 + $0x18] sm:$0xff]
  %v925 = vld [vmem:[%s25] sm:$0x1]
  %v927 = vperm.slane %v925, 0
  %v930 = vsel %vm177, %v919, 0
  %v933 = vsel %vm177, %v920, 0
  %935 = vmatpush.msra.mxu0 0.0
  %936 = vmatpush.msra.mxu0 0.0
  %937 = vmatpush.msra.mxu0 0.0
  %938 = vmatpush.msra.mxu0 0.0
  %939 = vmatpush.msra.mxu0 0.0
  %940 = vmatpush.msra.mxu0 0.0
  %941 = vmatpush.msra.mxu0 0.0
  %942 = vmatpush.msra.mxu0 0.0
  %943 = vmatpush.msra.mxu0 0.0
  %944 = vmatpush.msra.mxu0 0.0
  %945 = vmatpush.msra.mxu0 0.0
  %946 = vmatpush.msra.mxu0 0.0
  %947 = vmatpush.msra.mxu0 %v924
  %948 = vmatpush.msra.mxu0 %v923
  %949 = vmatpush.msra.mxu0 %v922
  %950 = vmatpush.msra.mxu0 %v921
  %951 = vmatmul.f32.gmra.mxu0 %v930
  %v952 = vpop.f32.mrf.mxu0
  %v953 = vadd.f32 %v927, %v952
  %954 = vmatmul.f32.gmra.mxu0 %v933
  %v955 = vpop.f32.mrf.mxu0
  %v956 = vadd.f32 %v927, %v955
  %957 = vdwg.mxu0
  %v958 = vmax.f32 %v953, 0.0
  %v959 = vmax.f32 %v956, 0.0
  %v960 = vld [vmem:[%s27] sm:$0xff]
  %v961 = vld [vmem:[%s27 + $0x8] sm:$0xff]
  %v962 = vld [vmem:[%s27 + $0x10] sm:$0xff]
  %v963 = vld [vmem:[%s27 + $0x18] sm:$0xff]
  %v964 = vld [vmem:[%s27 + $0x20] sm:$0xff]
  %v965 = vld [vmem:[%s27 + $0x28] sm:$0xff]
  %v966 = vld [vmem:[%s27 + $0x30] sm:$0xff]
  %v967 = vld [vmem:[%s27 + $0x38] sm:$0xff]
  %v968 = vld [vmem:[%s29] sm:$0x1]
  %v970 = vperm.slane %v968, 0
  %vm972 = vcmask 523264
  %v974 = vsel %vm972, %v958, 0
  %v977 = vsel %vm972, %v959, 0
  %979 = vmatpush.msra.mxu0 0.0
  %980 = vmatpush.msra.mxu0 0.0
  %981 = vmatpush.msra.mxu0 0.0
  %982 = vmatpush.msra.mxu0 0.0
  %983 = vmatpush.msra.mxu0 0.0
  %984 = vmatpush.msra.mxu0 0.0
  %985 = vmatpush.msra.mxu0 0.0
  %986 = vmatpush.msra.mxu0 0.0
  %987 = vmatpush.msra.mxu0 %v967
  %988 = vmatpush.msra.mxu0 %v966
  %989 = vmatpush.msra.mxu0 %v965
  %990 = vmatpush.msra.mxu0 %v964
  %991 = vmatpush.msra.mxu0 %v963
  %992 = vmatpush.msra.mxu0 %v962
  %993 = vmatpush.msra.mxu0 %v961
  %994 = vmatpush.msra.mxu0 %v960
  %995 = vmatmul.f32.gmra.mxu0 %v974
  %v996 = vpop.f32.mrf.mxu0
  %v997 = vadd.f32 %v970, %v996
  %998 = vmatmul.f32.gmra.mxu0 %v977
  %v999 = vpop.f32.mrf.mxu0
  %v1000 = vadd.f32 %v970, %v999
  %1001 = vdwg.mxu0
  %v1002 = vadd.f32 %v919, %v997
  %v1003 = vadd.f32 %v920, %v1000
  %v1004 = vld [vmem:[%s31] sm:$0x1]
  %v1005 = vld [vmem:[%s33] sm:$0x1]
  %v1006 = vsel %vm177, %v1002, 0.0
  %1007 = vadd.xlane.f32.xlu0 %v1006
  %v1008 = vpop.xlane.xlu0 %1007
  %v1009 = vsel %vm177, %v1003, 0.0
  %1010 = vadd.xlane.f32.xlu0 %v1009
  %v1011 = vpop.xlane.xlu0 %1010
  %v1012 = vmul.f32 %v1008, %v872
  %v1013 = vmul.f32 %v1011, %v872
  %v1014 = vsub.f32 %v1002, %v1012
  %v1015 = vsub.f32 %v1003, %v1013
  %v1016 = vmul.f32 %v1014, %v1014
  %v1017 = vmul.f32 %v1015, %v1015
  %v1018 = vsel %vm177, %v1016, 0.0
  %1019 = vadd.xlane.f32.xlu0 %v1018
  %v1020 = vpop.xlane.xlu0 %1019
  %v1021 = vsel %vm177, %v1017, 0.0
  %1022 = vadd.xlane.f32.xlu0 %v1021
  %v1023 = vpop.xlane.xlu0 %1022
  %v1024 = vmul.f32 %v1020, %v872
  %v1025 = vmul.f32 %v1023, %v872
  %v1026 = vadd.f32 %v1024, 1e-05
  %v1027 = vadd.f32 %v1025, 1e-05
  %v1028 = vrsqrt.pop %v1026
  %v1029 = vmul.f32 %v1028, %v1026
  %v1030 = vmul.f32 %v1029, %v1028
  %v1031 = vmul.f32 0.5, %v1030
  %v1032 = vsub.f32 1.5, %v1031
  %v1033 = vmul.f32 %v1028, %v1032
  %vm1034 = vweird.f32 %v1026
  %vm1035 = vweird.f32 %v1028
  %vm1036 = vmor %vm1034, %vm1035
  %v1037 = vsel %vm1036, %v1028, %v1033
  %v1038 = vrsqrt.pop %v1027
  %v1039 = vmul.f32 %v1038, %v1027
  %v1040 = vmul.f32 %v1039, %v1038
  %v1041 = vmul.f32 0.5, %v1040
  %v1042 = vsub.f32 1.5, %v1041
  %v1043 = vmul.f32 %v1038, %v1042
  %vm1044 = vweird.f32 %v1027
  %vm1045 = vweird.f32 %v1038
  %vm1046 = vmor %vm1044, %vm1045
  %v1047 = vsel %vm1046, %v1038, %v1043
  %v1048 = vmul.f32 %v1014, %v1037
  %v1049 = vmul.f32 %v1015, %v1047
  %v1051 = vperm.slane %v1004, 0
  %v1053 = vmul.f32 %v1048, %v1051
  %v1054 = vmul.f32 %v1049, %v1051
  %v1056 = vperm.slane %v1005, 0
  %v1058 = vadd.f32 %v1053, %v1056
  %v1059 = vadd.f32 %v1054, %v1056
  %s1060 = scalar_lea.vmem %s11, 32
  %v1061 = vld [vmem:[%s1060] sm:$0xff]
  %v1062 = vld [vmem:[%s1060 + $0x8] sm:$0xff]
  %v1063 = vld [vmem:[%s1060 + $0x10] sm:$0xff]
  %v1064 = vld [vmem:[%s1060 + $0x18] sm:$0xff]
  %s1065 = scalar_lea.vmem %s13, 1
  %v1066 = vld [vmem:[%s1065] sm:$0x1]
  %v1068 = vperm.slane %v1066, 0
  %v1071 = vsel %vm177, %v1058, 0
  %v1074 = vsel %vm177, %v1059, 0
  %1076 = vmatpush.msra.mxu0 0.0
  %1077 = vmatpush.msra.mxu0 0.0
  %1078 = vmatpush.msra.mxu0 0.0
  %1079 = vmatpush.msra.mxu0 0.0
  %1080 = vmatpush.msra.mxu0 0.0
  %1081 = vmatpush.msra.mxu0 0.0
  %1082 = vmatpush.msra.mxu0 0.0
  %1083 = vmatpush.msra.mxu0 0.0
  %1084 = vmatpush.msra.mxu0 0.0
  %1085 = vmatpush.msra.mxu0 0.0
  %1086 = vmatpush.msra.mxu0 0.0
  %1087 = vmatpush.msra.mxu0 0.0
  %1088 = vmatpush.msra.mxu0 %v1064
  %1089 = vmatpush.msra.mxu0 %v1063
  %1090 = vmatpush.msra.mxu0 %v1062
  %1091 = vmatpush.msra.mxu0 %v1061
  %1092 = vmatmul.f32.gmra.mxu0 %v1071
  %v1093 = vpop.f32.mrf.mxu0
  %v1094 = vadd.f32 %v1068, %v1093
  %1095 = vmatmul.f32.gmra.mxu0 %v1074
  %v1096 = vpop.f32.mrf.mxu0
  %v1097 = vadd.f32 %v1068, %v1096
  %1098 = vdwg.mxu0
  %s1099 = scalar_lea.vmem %s15, 32
  %v1100 = vld [vmem:[%s1099] sm:$0xff]
  %v1101 = vld [vmem:[%s1099 + $0x8] sm:$0xff]
  %v1102 = vld [vmem:[%s1099 + $0x10] sm:$0xff]
  %v1103 = vld [vmem:[%s1099 + $0x18] sm:$0xff]
  %s1104 = scalar_lea.vmem %s17, 1
  %v1105 = vld [vmem:[%s1104] sm:$0x1]
  %1107 = vrot.lane.b32.xlu0 %v1094, 96
  %v1108 = vpop.permute.xlu0 %1107
  %v1109 = vsel %vm215, %v1094, 0
  %v1111 = vsel %vm215, %v1108, 0
  %1113 = vmatpush.xpose.msra.mxu0 0.0
  %1114 = vmatpush.xpose.msra.mxu0 0.0
  %1115 = vmatpush.xpose.msra.mxu0 0.0
  %1116 = vmatpush.xpose.msra.mxu0 0.0
  %1117 = vmatpush.xpose.msra.mxu0 0.0
  %1118 = vmatpush.xpose.msra.mxu0 0.0
  %1119 = vmatpush.xpose.msra.mxu0 0.0
  %1120 = vmatpush.xpose.msra.mxu0 0.0
  %1121 = vmatpush.xpose.msra.mxu0 0.0
  %1122 = vmatpush.xpose.msra.mxu0 0.0
  %1123 = vmatpush.xpose.msra.mxu0 0.0
  %1124 = vmatpush.xpose.msra.mxu0 0.0
  %1125 = vmatpush.xpose.msra.mxu0 0.0
  %1126 = vmatpush.xpose.msra.mxu0 0.0
  %1127 = vmatpush.xpose.msra.mxu0 0.0
  %1128 = vmatpush.xpose.msra.mxu0 %v1111
  %1129 = vmatmul.f32.gmra.mxu0 %v1109
  %v1130 = vpop.f32.mrf.mxu0
  %v1131 = vadd.f32 %v167, %v1130
  %1132 = vdwg.mxu0
  %1134 = vrot.lane.b32.xlu0 %v1097, 96
  %v1135 = vpop.permute.xlu0 %1134
  %v1136 = vsel %vm215, %v1097, 0
  %v1138 = vsel %vm215, %v1135, 0
  %1140 = vmatpush.xpose.msra.mxu0 0.0
  %1141 = vmatpush.xpose.msra.mxu0 0.0
  %1142 = vmatpush.xpose.msra.mxu0 0.0
  %1143 = vmatpush.xpose.msra.mxu0 0.0
  %1144 = vmatpush.xpose.msra.mxu0 0.0
  %1145 = vmatpush.xpose.msra.mxu0 0.0
  %1146 = vmatpush.xpose.msra.mxu0 0.0
  %1147 = vmatpush.xpose.msra.mxu0 0.0
  %1148 = vmatpush.xpose.msra.mxu0 0.0
  %1149 = vmatpush.xpose.msra.mxu0 0.0
  %1150 = vmatpush.xpose.msra.mxu0 0.0
  %1151 = vmatpush.xpose.msra.mxu0 0.0
  %1152 = vmatpush.xpose.msra.mxu0 0.0
  %1153 = vmatpush.xpose.msra.mxu0 0.0
  %1154 = vmatpush.xpose.msra.mxu0 0.0
  %1155 = vmatpush.xpose.msra.mxu0 %v1138
  %1156 = vmatmul.f32.gmra.mxu0 %v1136
  %v1157 = vpop.f32.mrf.mxu0
  %v1158 = vadd.f32 %v168, %v1157
  %1159 = vdwg.mxu0
  %v1160 = vsel %vm215, %v1131, -inf
  %1161 = vmax.xlane.f32.xlu0 %v1160
  %v1162 = vpop.xlane.xlu0 %1161
  %v1163 = vsel %vm215, %v1158, -inf
  %1164 = vmax.xlane.f32.xlu0 %v1163
  %v1165 = vpop.xlane.xlu0 %1164
  %v1166 = vsub.f32 %v1131, %v1162
  %v1167 = vsub.f32 %v1158, %v1165
  %v1168 = vmul.f32 %v1166, 1.442695
  %v1169 = vpow.pop %v1168
  %v1170 = vmul.f32 %v1167, 1.442695
  %v1171 = vpow.pop %v1170
  %v1172 = vsel %vm215, %v1169, 0.0
  %1173 = vadd.xlane.f32.xlu0 %v1172
  %v1174 = vpop.xlane.xlu0 %1173
  %v1175 = vsel %vm215, %v1171, 0.0
  %1176 = vadd.xlane.f32.xlu0 %v1175
  %v1177 = vpop.xlane.xlu0 %1176
  %v1178 = vrcp.pop %v1174
  %v1179 = vrcp.pop %v1177
  %v1180 = vmul.f32 %v1169, %v1178
  %v1181 = vmul.f32 %v1171, %v1179
  %1182 = vrot.lane.b32.xlu0 %v1094, 64
  %v1183 = vpop.permute.xlu0 %1182
  %v1186 = vsel %vm215, %v1180, 0
  %1188 = vmatpush.msra.mxu0 0.0
  %1189 = vmatpush.msra.mxu0 0.0
  %1190 = vmatpush.msra.mxu0 0.0
  %1191 = vmatpush.msra.mxu0 0.0
  %1192 = vmatpush.msra.mxu0 0.0
  %1193 = vmatpush.msra.mxu0 0.0
  %1194 = vmatpush.msra.mxu0 0.0
  %1195 = vmatpush.msra.mxu0 0.0
  %1196 = vmatpush.msra.mxu0 0.0
  %1197 = vmatpush.msra.mxu0 0.0
  %1198 = vmatpush.msra.mxu0 0.0
  %1199 = vmatpush.msra.mxu0 0.0
  %1200 = vmatpush.msra.mxu0 0.0
  %1201 = vmatpush.msra.mxu0 0.0
  %1202 = vmatpush.msra.mxu0 0.0
  %1203 = vmatpush.msra.mxu0 %v1183
  %1204 = vmatmul.f32.gmra.mxu0 %v1186
  %v1205 = vpop.f32.mrf.mxu0
  %v1206 = vadd.f32 0.0, %v1205
  %1207 = vdwg.mxu0
  %1208 = vrot.lane.b32.xlu0 %v1097, 64
  %v1209 = vpop.permute.xlu0 %1208
  %v1212 = vsel %vm215, %v1181, 0
  %1214 = vmatpush.msra.mxu0 0.0
  %1215 = vmatpush.msra.mxu0 0.0
  %1216 = vmatpush.msra.mxu0 0.0
  %1217 = vmatpush.msra.mxu0 0.0
  %1218 = vmatpush.msra.mxu0 0.0
  %1219 = vmatpush.msra.mxu0 0.0
  %1220 = vmatpush.msra.mxu0 0.0
  %1221 = vmatpush.msra.mxu0 0.0
  %1222 = vmatpush.msra.mxu0 0.0
  %1223 = vmatpush.msra.mxu0 0.0
  %1224 = vmatpush.msra.mxu0 0.0
  %1225 = vmatpush.msra.mxu0 0.0
  %1226 = vmatpush.msra.mxu0 0.0
  %1227 = vmatpush.msra.mxu0 0.0
  %1228 = vmatpush.msra.mxu0 0.0
  %1229 = vmatpush.msra.mxu0 %v1209
  %1230 = vmatmul.f32.gmra.mxu0 %v1212
  %v1231 = vpop.f32.mrf.mxu0
  %v1232 = vadd.f32 0.0, %v1231
  %1233 = vdwg.mxu0
  %1234 = vrot.lane.b32.xlu0 %v1094, 120
  %v1235 = vpop.permute.xlu0 %1234
  %1236 = vrot.lane.b32.xlu0 %v1094, 88
  %v1237 = vpop.permute.xlu0 %1236
  %v1238 = vsel %vm215, %v1235, 0
  %v1240 = vsel %vm215, %v1237, 0
  %1242 = vmatpush.xpose.msra.mxu0 0.0
  %1243 = vmatpush.xpose.msra.mxu0 0.0
  %1244 = vmatpush.xpose.msra.mxu0 0.0
  %1245 = vmatpush.xpose.msra.mxu0 0.0
  %1246 = vmatpush.xpose.msra.mxu0 0.0
  %1247 = vmatpush.xpose.msra.mxu0 0.0
  %1248 = vmatpush.xpose.msra.mxu0 0.0
  %1249 = vmatpush.xpose.msra.mxu0 0.0
  %1250 = vmatpush.xpose.msra.mxu0 0.0
  %1251 = vmatpush.xpose.msra.mxu0 0.0
  %1252 = vmatpush.xpose.msra.mxu0 0.0
  %1253 = vmatpush.xpose.msra.mxu0 0.0
  %1254 = vmatpush.xpose.msra.mxu0 0.0
  %1255 = vmatpush.xpose.msra.mxu0 0.0
  %1256 = vmatpush.xpose.msra.mxu0 0.0
  %1257 = vmatpush.xpose.msra.mxu0 %v1240
  %1258 = vmatmul.f32.gmra.mxu0 %v1238
  %v1259 = vpop.f32.mrf.mxu0
  %v1260 = vadd.f32 %v167, %v1259
  %1261 = vdwg.mxu0
  %1262 = vrot.lane.b32.xlu0 %v1097, 120
  %v1263 = vpop.permute.xlu0 %1262
  %1264 = vrot.lane.b32.xlu0 %v1097, 88
  %v1265 = vpop.permute.xlu0 %1264
  %v1266 = vsel %vm215, %v1263, 0
  %v1268 = vsel %vm215, %v1265, 0
  %1270 = vmatpush.xpose.msra.mxu0 0.0
  %1271 = vmatpush.xpose.msra.mxu0 0.0
  %1272 = vmatpush.xpose.msra.mxu0 0.0
  %1273 = vmatpush.xpose.msra.mxu0 0.0
  %1274 = vmatpush.xpose.msra.mxu0 0.0
  %1275 = vmatpush.xpose.msra.mxu0 0.0
  %1276 = vmatpush.xpose.msra.mxu0 0.0
  %1277 = vmatpush.xpose.msra.mxu0 0.0
  %1278 = vmatpush.xpose.msra.mxu0 0.0
  %1279 = vmatpush.xpose.msra.mxu0 0.0
  %1280 = vmatpush.xpose.msra.mxu0 0.0
  %1281 = vmatpush.xpose.msra.mxu0 0.0
  %1282 = vmatpush.xpose.msra.mxu0 0.0
  %1283 = vmatpush.xpose.msra.mxu0 0.0
  %1284 = vmatpush.xpose.msra.mxu0 0.0
  %1285 = vmatpush.xpose.msra.mxu0 %v1268
  %1286 = vmatmul.f32.gmra.mxu0 %v1266
  %v1287 = vpop.f32.mrf.mxu0
  %v1288 = vadd.f32 %v168, %v1287
  %1289 = vdwg.mxu0
  %v1290 = vsel %vm215, %v1260, -inf
  %1291 = vmax.xlane.f32.xlu0 %v1290
  %v1292 = vpop.xlane.xlu0 %1291
  %v1293 = vsel %vm215, %v1288, -inf
  %1294 = vmax.xlane.f32.xlu0 %v1293
  %v1295 = vpop.xlane.xlu0 %1294
  %v1296 = vsub.f32 %v1260, %v1292
  %v1297 = vsub.f32 %v1288, %v1295
  %v1298 = vmul.f32 %v1296, 1.442695
  %v1299 = vpow.pop %v1298
  %v1300 = vmul.f32 %v1297, 1.442695
  %v1301 = vpow.pop %v1300
  %v1302 = vsel %vm215, %v1299, 0.0
  %1303 = vadd.xlane.f32.xlu0 %v1302
  %v1304 = vpop.xlane.xlu0 %1303
  %v1305 = vsel %vm215, %v1301, 0.0
  %1306 = vadd.xlane.f32.xlu0 %v1305
  %v1307 = vpop.xlane.xlu0 %1306
  %v1308 = vrcp.pop %v1304
  %v1309 = vrcp.pop %v1307
  %v1310 = vmul.f32 %v1299, %v1308
  %v1311 = vmul.f32 %v1301, %v1309
  %1312 = vrot.lane.b32.xlu0 %v1094, 56
  %v1313 = vpop.permute.xlu0 %1312
  %v1316 = vsel %vm215, %v1310, 0
  %1318 = vmatpush.msra.mxu0 0.0
  %1319 = vmatpush.msra.mxu0 0.0
  %1320 = vmatpush.msra.mxu0 0.0
  %1321 = vmatpush.msra.mxu0 0.0
  %1322 = vmatpush.msra.mxu0 0.0
  %1323 = vmatpush.msra.mxu0 0.0
  %1324 = vmatpush.msra.mxu0 0.0
  %1325 = vmatpush.msra.mxu0 0.0
  %1326 = vmatpush.msra.mxu0 0.0
  %1327 = vmatpush.msra.mxu0 0.0
  %1328 = vmatpush.msra.mxu0 0.0
  %1329 = vmatpush.msra.mxu0 0.0
  %1330 = vmatpush.msra.mxu0 0.0
  %1331 = vmatpush.msra.mxu0 0.0
  %1332 = vmatpush.msra.mxu0 0.0
  %1333 = vmatpush.msra.mxu0 %v1313
  %1334 = vmatmul.f32.gmra.mxu0 %v1316
  %v1335 = vpop.f32.mrf.mxu0
  %v1336 = vadd.f32 0.0, %v1335
  %1337 = vdwg.mxu0
  %1338 = vrot.lane.b32.xlu0 %v1097, 56
  %v1339 = vpop.permute.xlu0 %1338
  %v1342 = vsel %vm215, %v1311, 0
  %1344 = vmatpush.msra.mxu0 0.0
  %1345 = vmatpush.msra.mxu0 0.0
  %1346 = vmatpush.msra.mxu0 0.0
  %1347 = vmatpush.msra.mxu0 0.0
  %1348 = vmatpush.msra.mxu0 0.0
  %1349 = vmatpush.msra.mxu0 0.0
  %1350 = vmatpush.msra.mxu0 0.0
  %1351 = vmatpush.msra.mxu0 0.0
  %1352 = vmatpush.msra.mxu0 0.0
  %1353 = vmatpush.msra.mxu0 0.0
  %1354 = vmatpush.msra.mxu0 0.0
  %1355 = vmatpush.msra.mxu0 0.0
  %1356 = vmatpush.msra.mxu0 0.0
  %1357 = vmatpush.msra.mxu0 0.0
  %1358 = vmatpush.msra.mxu0 0.0
  %1359 = vmatpush.msra.mxu0 %v1339
  %1360 = vmatmul.f32.gmra.mxu0 %v1342
  %v1361 = vpop.f32.mrf.mxu0
  %v1362 = vadd.f32 0.0, %v1361
  %1363 = vdwg.mxu0
  %v1365 = vsel %vm215, %v1336, 0
  %v1368 = vsel %vm215, %v1362, 0
  %1370 = vmatpush.msra.mxu0 0.0
  %1371 = vmatpush.msra.mxu0 0.0
  %1372 = vmatpush.msra.mxu0 0.0
  %1373 = vmatpush.msra.mxu0 0.0
  %1374 = vmatpush.msra.mxu0 0.0
  %1375 = vmatpush.msra.mxu0 0.0
  %1376 = vmatpush.msra.mxu0 0.0
  %1377 = vmatpush.msra.mxu0 0.0
  %1378 = vmatpush.msra.mxu0 0.0
  %1379 = vmatpush.msra.mxu0 0.0
  %1380 = vmatpush.msra.mxu0 0.0
  %1381 = vmatpush.msra.mxu0 0.0
  %1382 = vmatpush.msra.mxu0 0.0
  %1383 = vmatpush.msra.mxu0 0.0
  %1384 = vmatpush.msra.mxu0 0.0
  %1385 = vmatpush.msra.mxu0 %v1101
  %1386 = vmatmul.f32.gmra.mxu0 %v1365
  %v1387 = vpop.f32.mrf.mxu0
  %v1388 = vadd.f32 0.0, %v1387
  %1389 = vmatmul.f32.gmra.mxu0 %v1368
  %v1390 = vpop.f32.mrf.mxu0
  %v1391 = vadd.f32 0.0, %v1390
  %1392 = vdwg.mxu0
  %v1394 = vsel %vm215, %v1206, 0
  %v1397 = vsel %vm215, %v1232, 0
  %1399 = vmatpush.msra.mxu0 0.0
  %1400 = vmatpush.msra.mxu0 0.0
  %1401 = vmatpush.msra.mxu0 0.0
  %1402 = vmatpush.msra.mxu0 0.0
  %1403 = vmatpush.msra.mxu0 0.0
  %1404 = vmatpush.msra.mxu0 0.0
  %1405 = vmatpush.msra.mxu0 0.0
  %1406 = vmatpush.msra.mxu0 0.0
  %1407 = vmatpush.msra.mxu0 0.0
  %1408 = vmatpush.msra.mxu0 0.0
  %1409 = vmatpush.msra.mxu0 0.0
  %1410 = vmatpush.msra.mxu0 0.0
  %1411 = vmatpush.msra.mxu0 0.0
  %1412 = vmatpush.msra.mxu0 0.0
  %1413 = vmatpush.msra.mxu0 0.0
  %1414 = vmatpush.msra.mxu0 %v1100
  %1415 = vmatmul.f32.gmra.mxu0 %v1394
  %v1416 = vpop.f32.mrf.mxu0
  %v1417 = vadd.f32 %v1388, %v1416
  %1418 = vmatmul.f32.gmra.mxu0 %v1397
  %v1419 = vpop.f32.mrf.mxu0
  %v1420 = vadd.f32 %v1391, %v1419
  %1421 = vdwg.mxu0
  %1422 = vrot.lane.b32.xlu0 %v1094, 112
  %v1423 = vpop.permute.xlu0 %1422
  %1424 = vrot.lane.b32.xlu0 %v1094, 80
  %v1425 = vpop.permute.xlu0 %1424
  %v1426 = vsel %vm215, %v1423, 0
  %v1428 = vsel %vm215, %v1425, 0
  %1430 = vmatpush.xpose.msra.mxu0 0.0
  %1431 = vmatpush.xpose.msra.mxu0 0.0
  %1432 = vmatpush.xpose.msra.mxu0 0.0
  %1433 = vmatpush.xpose.msra.mxu0 0.0
  %1434 = vmatpush.xpose.msra.mxu0 0.0
  %1435 = vmatpush.xpose.msra.mxu0 0.0
  %1436 = vmatpush.xpose.msra.mxu0 0.0
  %1437 = vmatpush.xpose.msra.mxu0 0.0
  %1438 = vmatpush.xpose.msra.mxu0 0.0
  %1439 = vmatpush.xpose.msra.mxu0 0.0
  %1440 = vmatpush.xpose.msra.mxu0 0.0
  %1441 = vmatpush.xpose.msra.mxu0 0.0
  %1442 = vmatpush.xpose.msra.mxu0 0.0
  %1443 = vmatpush.xpose.msra.mxu0 0.0
  %1444 = vmatpush.xpose.msra.mxu0 0.0
  %1445 = vmatpush.xpose.msra.mxu0 %v1428
  %1446 = vmatmul.f32.gmra.mxu0 %v1426
  %v1447 = vpop.f32.mrf.mxu0
  %v1448 = vadd.f32 %v167, %v1447
  %1449 = vdwg.mxu0
  %1450 = vrot.lane.b32.xlu0 %v1097, 112
  %v1451 = vpop.permute.xlu0 %1450
  %1452 = vrot.lane.b32.xlu0 %v1097, 80
  %v1453 = vpop.permute.xlu0 %1452
  %v1454 = vsel %vm215, %v1451, 0
  %v1456 = vsel %vm215, %v1453, 0
  %1458 = vmatpush.xpose.msra.mxu0 0.0
  %1459 = vmatpush.xpose.msra.mxu0 0.0
  %1460 = vmatpush.xpose.msra.mxu0 0.0
  %1461 = vmatpush.xpose.msra.mxu0 0.0
  %1462 = vmatpush.xpose.msra.mxu0 0.0
  %1463 = vmatpush.xpose.msra.mxu0 0.0
  %1464 = vmatpush.xpose.msra.mxu0 0.0
  %1465 = vmatpush.xpose.msra.mxu0 0.0
  %1466 = vmatpush.xpose.msra.mxu0 0.0
  %1467 = vmatpush.xpose.msra.mxu0 0.0
  %1468 = vmatpush.xpose.msra.mxu0 0.0
  %1469 = vmatpush.xpose.msra.mxu0 0.0
  %1470 = vmatpush.xpose.msra.mxu0 0.0
  %1471 = vmatpush.xpose.msra.mxu0 0.0
  %1472 = vmatpush.xpose.msra.mxu0 0.0
  %1473 = vmatpush.xpose.msra.mxu0 %v1456
  %1474 = vmatmul.f32.gmra.mxu0 %v1454
  %v1475 = vpop.f32.mrf.mxu0
  %v1476 = vadd.f32 %v168, %v1475
  %1477 = vdwg.mxu0
  %v1478 = vsel %vm215, %v1448, -inf
  %1479 = vmax.xlane.f32.xlu0 %v1478
  %v1480 = vpop.xlane.xlu0 %1479
  %v1481 = vsel %vm215, %v1476, -inf
  %1482 = vmax.xlane.f32.xlu0 %v1481
  %v1483 = vpop.xlane.xlu0 %1482
  %v1484 = vsub.f32 %v1448, %v1480
  %v1485 = vsub.f32 %v1476, %v1483
  %v1486 = vmul.f32 %v1484, 1.442695
  %v1487 = vpow.pop %v1486
  %v1488 = vmul.f32 %v1485, 1.442695
  %v1489 = vpow.pop %v1488
  %v1490 = vsel %vm215, %v1487, 0.0
  %1491 = vadd.xlane.f32.xlu0 %v1490
  %v1492 = vpop.xlane.xlu0 %1491
  %v1493 = vsel %vm215, %v1489, 0.0
  %1494 = vadd.xlane.f32.xlu0 %v1493
  %v1495 = vpop.xlane.xlu0 %1494
  %v1496 = vrcp.pop %v1492
  %v1497 = vrcp.pop %v1495
  %v1498 = vmul.f32 %v1487, %v1496
  %v1499 = vmul.f32 %v1489, %v1497
  %1500 = vrot.lane.b32.xlu0 %v1094, 48
  %v1501 = vpop.permute.xlu0 %1500
  %v1504 = vsel %vm215, %v1498, 0
  %1506 = vmatpush.msra.mxu0 0.0
  %1507 = vmatpush.msra.mxu0 0.0
  %1508 = vmatpush.msra.mxu0 0.0
  %1509 = vmatpush.msra.mxu0 0.0
  %1510 = vmatpush.msra.mxu0 0.0
  %1511 = vmatpush.msra.mxu0 0.0
  %1512 = vmatpush.msra.mxu0 0.0
  %1513 = vmatpush.msra.mxu0 0.0
  %1514 = vmatpush.msra.mxu0 0.0
  %1515 = vmatpush.msra.mxu0 0.0
  %1516 = vmatpush.msra.mxu0 0.0
  %1517 = vmatpush.msra.mxu0 0.0
  %1518 = vmatpush.msra.mxu0 0.0
  %1519 = vmatpush.msra.mxu0 0.0
  %1520 = vmatpush.msra.mxu0 0.0
  %1521 = vmatpush.msra.mxu0 %v1501
  %1522 = vmatmul.f32.gmra.mxu0 %v1504
  %v1523 = vpop.f32.mrf.mxu0
  %v1524 = vadd.f32 0.0, %v1523
  %1525 = vdwg.mxu0
  %1526 = vrot.lane.b32.xlu0 %v1097, 48
  %v1527 = vpop.permute.xlu0 %1526
  %v1530 = vsel %vm215, %v1499, 0
  %1532 = vmatpush.msra.mxu0 0.0
  %1533 = vmatpush.msra.mxu0 0.0
  %1534 = vmatpush.msra.mxu0 0.0
  %1535 = vmatpush.msra.mxu0 0.0
  %1536 = vmatpush.msra.mxu0 0.0
  %1537 = vmatpush.msra.mxu0 0.0
  %1538 = vmatpush.msra.mxu0 0.0
  %1539 = vmatpush.msra.mxu0 0.0
  %1540 = vmatpush.msra.mxu0 0.0
  %1541 = vmatpush.msra.mxu0 0.0
  %1542 = vmatpush.msra.mxu0 0.0
  %1543 = vmatpush.msra.mxu0 0.0
  %1544 = vmatpush.msra.mxu0 0.0
  %1545 = vmatpush.msra.mxu0 0.0
  %1546 = vmatpush.msra.mxu0 0.0
  %1547 = vmatpush.msra.mxu0 %v1527
  %1548 = vmatmul.f32.gmra.mxu0 %v1530
  %v1549 = vpop.f32.mrf.mxu0
  %v1550 = vadd.f32 0.0, %v1549
  %1551 = vdwg.mxu0
  %v1553 = vsel %vm215, %v1524, 0
  %v1556 = vsel %vm215, %v1550, 0
  %1558 = vmatpush.msra.mxu0 0.0
  %1559 = vmatpush.msra.mxu0 0.0
  %1560 = vmatpush.msra.mxu0 0.0
  %1561 = vmatpush.msra.mxu0 0.0
  %1562 = vmatpush.msra.mxu0 0.0
  %1563 = vmatpush.msra.mxu0 0.0
  %1564 = vmatpush.msra.mxu0 0.0
  %1565 = vmatpush.msra.mxu0 0.0
  %1566 = vmatpush.msra.mxu0 0.0
  %1567 = vmatpush.msra.mxu0 0.0
  %1568 = vmatpush.msra.mxu0 0.0
  %1569 = vmatpush.msra.mxu0 0.0
  %1570 = vmatpush.msra.mxu0 0.0
  %1571 = vmatpush.msra.mxu0 0.0
  %1572 = vmatpush.msra.mxu0 0.0
  %1573 = vmatpush.msra.mxu0 %v1102
  %1574 = vmatmul.f32.gmra.mxu0 %v1553
  %v1575 = vpop.f32.mrf.mxu0
  %v1576 = vadd.f32 0.0, %v1575
  %1577 = vmatmul.f32.gmra.mxu0 %v1556
  %v1578 = vpop.f32.mrf.mxu0
  %v1579 = vadd.f32 0.0, %v1578
  %1580 = vdwg.mxu0
  %v1581 = vadd.f32 %v1417, %v1576
  %v1582 = vadd.f32 %v1420, %v1579
  %1583 = vrot.lane.b32.xlu0 %v1094, 104
  %v1584 = vpop.permute.xlu0 %1583
  %1585 = vrot.lane.b32.xlu0 %v1094, 72
  %v1586 = vpop.permute.xlu0 %1585
  %v1587 = vsel %vm215, %v1584, 0
  %v1589 = vsel %vm215, %v1586, 0
  %1591 = vmatpush.xpose.msra.mxu0 0.0
  %1592 = vmatpush.xpose.msra.mxu0 0.0
  %1593 = vmatpush.xpose.msra.mxu0 0.0
  %1594 = vmatpush.xpose.msra.mxu0 0.0
  %1595 = vmatpush.xpose.msra.mxu0 0.0
  %1596 = vmatpush.xpose.msra.mxu0 0.0
  %1597 = vmatpush.xpose.msra.mxu0 0.0
  %1598 = vmatpush.xpose.msra.mxu0 0.0
  %1599 = vmatpush.xpose.msra.mxu0 0.0
  %1600 = vmatpush.xpose.msra.mxu0 0.0
  %1601 = vmatpush.xpose.msra.mxu0 0.0
  %1602 = vmatpush.xpose.msra.mxu0 0.0
  %1603 = vmatpush.xpose.msra.mxu0 0.0
  %1604 = vmatpush.xpose.msra.mxu0 0.0
  %1605 = vmatpush.xpose.msra.mxu0 0.0
  %1606 = vmatpush.xpose.msra.mxu0 %v1589
  %1607 = vmatmul.f32.gmra.mxu0 %v1587
  %v1608 = vpop.f32.mrf.mxu0
  %v1609 = vadd.f32 %v167, %v1608
  %1610 = vdwg.mxu0
  %1611 = vrot.lane.b32.xlu0 %v1097, 104
  %v1612 = vpop.permute.xlu0 %1611
  %1613 = vrot.lane.b32.xlu0 %v1097, 72
  %v1614 = vpop.permute.xlu0 %1613
  %v1615 = vsel %vm215, %v1612, 0
  %v1617 = vsel %vm215, %v1614, 0
  %1619 = vmatpush.xpose.msra.mxu0 0.0
  %1620 = vmatpush.xpose.msra.mxu0 0.0
  %1621 = vmatpush.xpose.msra.mxu0 0.0
  %1622 = vmatpush.xpose.msra.mxu0 0.0
  %1623 = vmatpush.xpose.msra.mxu0 0.0
  %1624 = vmatpush.xpose.msra.mxu0 0.0
  %1625 = vmatpush.xpose.msra.mxu0 0.0
  %1626 = vmatpush.xpose.msra.mxu0 0.0
  %1627 = vmatpush.xpose.msra.mxu0 0.0
  %1628 = vmatpush.xpose.msra.mxu0 0.0
  %1629 = vmatpush.xpose.msra.mxu0 0.0
  %1630 = vmatpush.xpose.msra.mxu0 0.0
  %1631 = vmatpush.xpose.msra.mxu0 0.0
  %1632 = vmatpush.xpose.msra.mxu0 0.0
  %1633 = vmatpush.xpose.msra.mxu0 0.0
  %1634 = vmatpush.xpose.msra.mxu0 %v1617
  %1635 = vmatmul.f32.gmra.mxu0 %v1615
  %v1636 = vpop.f32.mrf.mxu0
  %v1637 = vadd.f32 %v168, %v1636
  %1638 = vdwg.mxu0
  %v1639 = vsel %vm215, %v1609, -inf
  %1640 = vmax.xlane.f32.xlu0 %v1639
  %v1641 = vpop.xlane.xlu0 %1640
  %v1642 = vsel %vm215, %v1637, -inf
  %1643 = vmax.xlane.f32.xlu0 %v1642
  %v1644 = vpop.xlane.xlu0 %1643
  %v1645 = vsub.f32 %v1609, %v1641
  %v1646 = vsub.f32 %v1637, %v1644
  %v1647 = vmul.f32 %v1645, 1.442695
  %v1648 = vpow.pop %v1647
  %v1649 = vmul.f32 %v1646, 1.442695
  %v1650 = vpow.pop %v1649
  %v1651 = vsel %vm215, %v1648, 0.0
  %1652 = vadd.xlane.f32.xlu0 %v1651
  %v1653 = vpop.xlane.xlu0 %1652
  %v1654 = vsel %vm215, %v1650, 0.0
  %1655 = vadd.xlane.f32.xlu0 %v1654
  %v1656 = vpop.xlane.xlu0 %1655
  %v1657 = vrcp.pop %v1653
  %v1658 = vrcp.pop %v1656
  %v1659 = vmul.f32 %v1648, %v1657
  %v1660 = vmul.f32 %v1650, %v1658
  %1661 = vrot.lane.b32.xlu0 %v1094, 40
  %v1662 = vpop.permute.xlu0 %1661
  %v1665 = vsel %vm215, %v1659, 0
  %1667 = vmatpush.msra.mxu0 0.0
  %1668 = vmatpush.msra.mxu0 0.0
  %1669 = vmatpush.msra.mxu0 0.0
  %1670 = vmatpush.msra.mxu0 0.0
  %1671 = vmatpush.msra.mxu0 0.0
  %1672 = vmatpush.msra.mxu0 0.0
  %1673 = vmatpush.msra.mxu0 0.0
  %1674 = vmatpush.msra.mxu0 0.0
  %1675 = vmatpush.msra.mxu0 0.0
  %1676 = vmatpush.msra.mxu0 0.0
  %1677 = vmatpush.msra.mxu0 0.0
  %1678 = vmatpush.msra.mxu0 0.0
  %1679 = vmatpush.msra.mxu0 0.0
  %1680 = vmatpush.msra.mxu0 0.0
  %1681 = vmatpush.msra.mxu0 0.0
  %1682 = vmatpush.msra.mxu0 %v1662
  %1683 = vmatmul.f32.gmra.mxu0 %v1665
  %v1684 = vpop.f32.mrf.mxu0
  %v1685 = vadd.f32 0.0, %v1684
  %1686 = vdwg.mxu0
  %1687 = vrot.lane.b32.xlu0 %v1097, 40
  %v1688 = vpop.permute.xlu0 %1687
  %v1691 = vsel %vm215, %v1660, 0
  %1693 = vmatpush.msra.mxu0 0.0
  %1694 = vmatpush.msra.mxu0 0.0
  %1695 = vmatpush.msra.mxu0 0.0
  %1696 = vmatpush.msra.mxu0 0.0
  %1697 = vmatpush.msra.mxu0 0.0
  %1698 = vmatpush.msra.mxu0 0.0
  %1699 = vmatpush.msra.mxu0 0.0
  %1700 = vmatpush.msra.mxu0 0.0
  %1701 = vmatpush.msra.mxu0 0.0
  %1702 = vmatpush.msra.mxu0 0.0
  %1703 = vmatpush.msra.mxu0 0.0
  %1704 = vmatpush.msra.mxu0 0.0
  %1705 = vmatpush.msra.mxu0 0.0
  %1706 = vmatpush.msra.mxu0 0.0
  %1707 = vmatpush.msra.mxu0 0.0
  %1708 = vmatpush.msra.mxu0 %v1688
  %1709 = vmatmul.f32.gmra.mxu0 %v1691
  %v1710 = vpop.f32.mrf.mxu0
  %v1711 = vadd.f32 0.0, %v1710
  %1712 = vdwg.mxu0
  %v1714 = vsel %vm215, %v1685, 0
  %v1717 = vsel %vm215, %v1711, 0
  %1719 = vmatpush.msra.mxu0 0.0
  %1720 = vmatpush.msra.mxu0 0.0
  %1721 = vmatpush.msra.mxu0 0.0
  %1722 = vmatpush.msra.mxu0 0.0
  %1723 = vmatpush.msra.mxu0 0.0
  %1724 = vmatpush.msra.mxu0 0.0
  %1725 = vmatpush.msra.mxu0 0.0
  %1726 = vmatpush.msra.mxu0 0.0
  %1727 = vmatpush.msra.mxu0 0.0
  %1728 = vmatpush.msra.mxu0 0.0
  %1729 = vmatpush.msra.mxu0 0.0
  %1730 = vmatpush.msra.mxu0 0.0
  %1731 = vmatpush.msra.mxu0 0.0
  %1732 = vmatpush.msra.mxu0 0.0
  %1733 = vmatpush.msra.mxu0 0.0
  %1734 = vmatpush.msra.mxu0 %v1103
  %1735 = vmatmul.f32.gmra.mxu0 %v1714
  %v1736 = vpop.f32.mrf.mxu0
  %v1737 = vadd.f32 0.0, %v1736
  %1738 = vmatmul.f32.gmra.mxu0 %v1717
  %v1739 = vpop.f32.mrf.mxu0
  %v1740 = vadd.f32 0.0, %v1739
  %1741 = vdwg.mxu0
  %v1742 = vadd.f32 %v1581, %v1737
  %v1743 = vadd.f32 %v1582, %v1740
  %v1745 = vperm.slane %v1105, 0
  %v1747 = vadd.f32 %v1742, %v1745
  %v1748 = vadd.f32 %v1743, %v1745
  %v1749 = vadd.f32 %v1058, %v1747
  %v1750 = vadd.f32 %v1059, %v1748
  %s1751 = scalar_lea.vmem %s19, 1
  %v1752 = vld [vmem:[%s1751] sm:$0x1]
  %s1753 = scalar_lea.vmem %s21, 1
  %v1754 = vld [vmem:[%s1753] sm:$0x1]
  %v1755 = vsel %vm177, %v1749, 0.0
  %1756 = vadd.xlane.f32.xlu0 %v1755
  %v1757 = vpop.xlane.xlu0 %1756
  %v1758 = vsel %vm177, %v1750, 0.0
  %1759 = vadd.xlane.f32.xlu0 %v1758
  %v1760 = vpop.xlane.xlu0 %1759
  %v1761 = vmul.f32 %v1757, %v872
  %v1762 = vmul.f32 %v1760, %v872
  %v1763 = vsub.f32 %v1749, %v1761
  %v1764 = vsub.f32 %v1750, %v1762
  %v1765 = vmul.f32 %v1763, %v1763
  %v1766 = vmul.f32 %v1764, %v1764
  %v1767 = vsel %vm177, %v1765, 0.0
  %1768 = vadd.xlane.f32.xlu0 %v1767
  %v1769 = vpop.xlane.xlu0 %1768
  %v1770 = vsel %vm177, %v1766, 0.0
  %1771 = vadd.xlane.f32.xlu0 %v1770
  %v1772 = vpop.xlane.xlu0 %1771
  %v1773 = vmul.f32 %v1769, %v872
  %v1774 = vmul.f32 %v1772, %v872
  %v1775 = vadd.f32 %v1773, 1e-05
  %v1776 = vadd.f32 %v1774, 1e-05
  %v1777 = vrsqrt.pop %v1775
  %v1778 = vmul.f32 %v1777, %v1775
  %v1779 = vmul.f32 %v1778, %v1777
  %v1780 = vmul.f32 0.5, %v1779
  %v1781 = vsub.f32 1.5, %v1780
  %v1782 = vmul.f32 %v1777, %v1781
  %vm1783 = vweird.f32 %v1775
  %vm1784 = vweird.f32 %v1777
  %vm1785 = vmor %vm1783, %vm1784
  %v1786 = vsel %vm1785, %v1777, %v1782
  %v1787 = vrsqrt.pop %v1776
  %v1788 = vmul.f32 %v1787, %v1776
  %v1789 = vmul.f32 %v1788, %v1787
  %v1790 = vmul.f32 0.5, %v1789
  %v1791 = vsub.f32 1.5, %v1790
  %v1792 = vmul.f32 %v1787, %v1791
  %vm1793 = vweird.f32 %v1776
  %vm1794 = vweird.f32 %v1787
  %vm1795 = vmor %vm1793, %vm1794
  %v1796 = vsel %vm1795, %v1787, %v1792
  %v1797 = vmul.f32 %v1763, %v1786
  %v1798 = vmul.f32 %v1764, %v1796
  %v1800 = vperm.slane %v1752, 0
  %v1802 = vmul.f32 %v1797, %v1800
  %v1803 = vmul.f32 %v1798, %v1800
  %v1805 = vperm.slane %v1754, 0
  %v1807 = vadd.f32 %v1802, %v1805
  %v1808 = vadd.f32 %v1803, %v1805
  %s1809 = scalar_lea.vmem %s23, 32
  %v1810 = vld [vmem:[%s1809] sm:$0xff]
  %v1811 = vld [vmem:[%s1809 + $0x8] sm:$0xff]
  %v1812 = vld [vmem:[%s1809 + $0x10] sm:$0xff]
  %v1813 = vld [vmem:[%s1809 + $0x18] sm:$0xff]
  %s1814 = scalar_lea.vmem %s25, 1
  %v1815 = vld [vmem:[%s1814] sm:$0x1]
  %v1817 = vperm.slane %v1815, 0
  %v1820 = vsel %vm177, %v1807, 0
  %v1823 = vsel %vm177, %v1808, 0
  %1825 = vmatpush.msra.mxu0 0.0
  %1826 = vmatpush.msra.mxu0 0.0
  %1827 = vmatpush.msra.mxu0 0.0
  %1828 = vmatpush.msra.mxu0 0.0
  %1829 = vmatpush.msra.mxu0 0.0
  %1830 = vmatpush.msra.mxu0 0.0
  %1831 = vmatpush.msra.mxu0 0.0
  %1832 = vmatpush.msra.mxu0 0.0
  %1833 = vmatpush.msra.mxu0 0.0
  %1834 = vmatpush.msra.mxu0 0.0
  %1835 = vmatpush.msra.mxu0 0.0
  %1836 = vmatpush.msra.mxu0 0.0
  %1837 = vmatpush.msra.mxu0 %v1813
  %1838 = vmatpush.msra.mxu0 %v1812
  %1839 = vmatpush.msra.mxu0 %v1811
  %1840 = vmatpush.msra.mxu0 %v1810
  %1841 = vmatmul.f32.gmra.mxu0 %v1820
  %v1842 = vpop.f32.mrf.mxu0
  %v1843 = vadd.f32 %v1817, %v1842
  %1844 = vmatmul.f32.gmra.mxu0 %v1823
  %v1845 = vpop.f32.mrf.mxu0
  %v1846 = vadd.f32 %v1817, %v1845
  %1847 = vdwg.mxu0
  %v1848 = vmax.f32 %v1843, 0.0
  %v1849 = vmax.f32 %v1846, 0.0
  %s1850 = scalar_lea.vmem %s27, 64
  %v1851 = vld [vmem:[%s1850] sm:$0xff]
  %v1852 = vld [vmem:[%s1850 + $0x8] sm:$0xff]
  %v1853 = vld [vmem:[%s1850 + $0x10] sm:$0xff]
  %v1854 = vld [vmem:[%s1850 + $0x18] sm:$0xff]
  %v1855 = vld [vmem:[%s1850 + $0x20] sm:$0xff]
  %v1856 = vld [vmem:[%s1850 + $0x28] sm:$0xff]
  %v1857 = vld [vmem:[%s1850 + $0x30] sm:$0xff]
  %v1858 = vld [vmem:[%s1850 + $0x38] sm:$0xff]
  %s1859 = scalar_lea.vmem %s29, 1
  %v1860 = vld [vmem:[%s1859] sm:$0x1]
  %v1862 = vperm.slane %v1860, 0
  %v1865 = vsel %vm972, %v1848, 0
  %v1868 = vsel %vm972, %v1849, 0
  %1870 = vmatpush.msra.mxu0 0.0
  %1871 = vmatpush.msra.mxu0 0.0
  %1872 = vmatpush.msra.mxu0 0.0
  %1873 = vmatpush.msra.mxu0 0.0
  %1874 = vmatpush.msra.mxu0 0.0
  %1875 = vmatpush.msra.mxu0 0.0
  %1876 = vmatpush.msra.mxu0 0.0
  %1877 = vmatpush.msra.mxu0 0.0
  %1878 = vmatpush.msra.mxu0 %v1858
  %1879 = vmatpush.msra.mxu0 %v1857
  %1880 = vmatpush.msra.mxu0 %v1856
  %1881 = vmatpush.msra.mxu0 %v1855
  %1882 = vmatpush.msra.mxu0 %v1854
  %1883 = vmatpush.msra.mxu0 %v1853
  %1884 = vmatpush.msra.mxu0 %v1852
  %1885 = vmatpush.msra.mxu0 %v1851
  %1886 = vmatmul.f32.gmra.mxu0 %v1865
  %v1887 = vpop.f32.mrf.mxu0
  %v1888 = vadd.f32 %v1862, %v1887
  %1889 = vmatmul.f32.gmra.mxu0 %v1868
  %v1890 = vpop.f32.mrf.mxu0
  %v1891 = vadd.f32 %v1862, %v1890
  %1892 = vdwg.mxu0
  %v1893 = vadd.f32 %v1807, %v1888
  %v1894 = vadd.f32 %v1808, %v1891
  %s1895 = scalar_lea.vmem %s31, 1
  %v1896 = vld [vmem:[%s1895] sm:$0x1]
  %s1897 = scalar_lea.vmem %s33, 1
  %v1898 = vld [vmem:[%s1897] sm:$0x1]
  %v1899 = vsel %vm177, %v1893, 0.0
  %1900 = vadd.xlane.f32.xlu0 %v1899
  %v1901 = vpop.xlane.xlu0 %1900
  %v1902 = vsel %vm177, %v1894, 0.0
  %1903 = vadd.xlane.f32.xlu0 %v1902
  %v1904 = vpop.xlane.xlu0 %1903
  %v1905 = vmul.f32 %v1901, %v872
  %v1906 = vmul.f32 %v1904, %v872
  %v1907 = vsub.f32 %v1893, %v1905
  %v1908 = vsub.f32 %v1894, %v1906
  %v1909 = vmul.f32 %v1907, %v1907
  %v1910 = vmul.f32 %v1908, %v1908
  %v1911 = vsel %vm177, %v1909, 0.0
  %1912 = vadd.xlane.f32.xlu0 %v1911
  %v1913 = vpop.xlane.xlu0 %1912
  %v1914 = vsel %vm177, %v1910, 0.0
  %1915 = vadd.xlane.f32.xlu0 %v1914
  %v1916 = vpop.xlane.xlu0 %1915
  %v1917 = vmul.f32 %v1913, %v872
  %v1918 = vmul.f32 %v1916, %v872
  %v1919 = vadd.f32 %v1917, 1e-05
  %v1920 = vadd.f32 %v1918, 1e-05
  %v1921 = vrsqrt.pop %v1919
  %v1922 = vmul.f32 %v1921, %v1919
  %v1923 = vmul.f32 %v1922, %v1921
  %v1924 = vmul.f32 0.5, %v1923
  %v1925 = vsub.f32 1.5, %v1924
  %v1926 = vmul.f32 %v1921, %v1925
  %vm1927 = vweird.f32 %v1919
  %vm1928 = vweird.f32 %v1921
  %vm1929 = vmor %vm1927, %vm1928
  %v1930 = vsel %vm1929, %v1921, %v1926
  %v1931 = vrsqrt.pop %v1920
  %v1932 = vmul.f32 %v1931, %v1920
  %v1933 = vmul.f32 %v1932, %v1931
  %v1934 = vmul.f32 0.5, %v1933
  %v1935 = vsub.f32 1.5, %v1934
  %v1936 = vmul.f32 %v1931, %v1935
  %vm1937 = vweird.f32 %v1920
  %vm1938 = vweird.f32 %v1931
  %vm1939 = vmor %vm1937, %vm1938
  %v1940 = vsel %vm1939, %v1931, %v1936
  %v1941 = vmul.f32 %v1907, %v1930
  %v1942 = vmul.f32 %v1908, %v1940
  %v1944 = vperm.slane %v1896, 0
  %v1946 = vmul.f32 %v1941, %v1944
  %v1947 = vmul.f32 %v1942, %v1944
  %v1949 = vperm.slane %v1898, 0
  %v1951 = vadd.f32 %v1946, %v1949
  %v1952 = vadd.f32 %v1947, %v1949
  %v1953 = vld [vmem:[%s7] sm:$0xff]
  %v1954 = vld [vmem:[%s7 + $0x8] sm:$0xff]
  %v1955 = vld [vmem:[%s9] sm:$0xff]
  %v1956 = vld [vmem:[%s9 + $0x8] sm:$0xff]
  %v1957 = vld [vmem:[%s51] sm:$0xff]
  %v1958 = vld [vmem:[%s51 + $0x8] sm:$0xff]
  %v1959 = vld [vmem:[%s51 + $0x10] sm:$0xff]
  %v1960 = vld [vmem:[%s51 + $0x18] sm:$0xff]
  %v1961 = vld [vmem:[%s53] sm:$0x1]
  %v1963 = vperm.slane %v1961, 0
  %v1966 = vsel %vm177, %v1951, 0
  %v1969 = vsel %vm177, %v1952, 0
  %1971 = vmatpush.msra.mxu0 0.0
  %1972 = vmatpush.msra.mxu0 0.0
  %1973 = vmatpush.msra.mxu0 0.0
  %1974 = vmatpush.msra.mxu0 0.0
  %1975 = vmatpush.msra.mxu0 0.0
  %1976 = vmatpush.msra.mxu0 0.0
  %1977 = vmatpush.msra.mxu0 0.0
  %1978 = vmatpush.msra.mxu0 0.0
  %1979 = vmatpush.msra.mxu0 0.0
  %1980 = vmatpush.msra.mxu0 0.0
  %1981 = vmatpush.msra.mxu0 0.0
  %1982 = vmatpush.msra.mxu0 0.0
  %1983 = vmatpush.msra.mxu0 %v1960
  %1984 = vmatpush.msra.mxu0 %v1959
  %1985 = vmatpush.msra.mxu0 %v1958
  %1986 = vmatpush.msra.mxu0 %v1957
  %1987 = vmatmul.f32.gmra.mxu0 %v1966
  %v1988 = vpop.f32.mrf.mxu0
  %v1989 = vadd.f32 %v1963, %v1988
  %1990 = vmatmul.f32.gmra.mxu0 %v1969
  %v1991 = vpop.f32.mrf.mxu0
  %v1992 = vadd.f32 %v1963, %v1991
  %1993 = vdwg.mxu0
  %v1994 = vld [vmem:[%s3] sm:$0xff]
  %v1995 = vld [vmem:[%s3 + $0x8] sm:$0xff]
  %v1996 = vld [vmem:[%s35] sm:$0xff]
  %v1997 = vld [vmem:[%s35 + $0x8] sm:$0xff]
  %v1998 = vld [vmem:[%s35 + $0x10] sm:$0xff]
  %v1999 = vld [vmem:[%s35 + $0x18] sm:$0xff]
  %v2000 = vld [vmem:[%s37] sm:$0x1]
  %v2002 = vperm.slane %v2000, 0
  %v2005 = vsel %vm177, %v1994, 0
  %v2008 = vsel %vm177, %v1995, 0
  %2010 = vmatpush.msra.mxu0 0.0
  %2011 = vmatpush.msra.mxu0 0.0
  %2012 = vmatpush.msra.mxu0 0.0
  %2013 = vmatpush.msra.mxu0 0.0
  %2014 = vmatpush.msra.mxu0 0.0
  %2015 = vmatpush.msra.mxu0 0.0
  %2016 = vmatpush.msra.mxu0 0.0
  %2017 = vmatpush.msra.mxu0 0.0
  %2018 = vmatpush.msra.mxu0 0.0
  %2019 = vmatpush.msra.mxu0 0.0
  %2020 = vmatpush.msra.mxu0 0.0
  %2021 = vmatpush.msra.mxu0 0.0
  %2022 = vmatpush.msra.mxu0 %v1999
  %2023 = vmatpush.msra.mxu0 %v1998
  %2024 = vmatpush.msra.mxu0 %v1997
  %2025 = vmatpush.msra.mxu0 %v1996
  %2026 = vmatmul.f32.gmra.mxu0 %v2005
  %v2027 = vpop.f32.mrf.mxu0
  %v2028 = vadd.f32 %v2002, %v2027
  %2029 = vmatmul.f32.gmra.mxu0 %v2008
  %v2030 = vpop.f32.mrf.mxu0
  %v2031 = vadd.f32 %v2002, %v2030
  %2032 = vdwg.mxu0
  %v2033 = vld [vmem:[%s39] sm:$0xff]
  %v2034 = vld [vmem:[%s39 + $0x8] sm:$0xff]
  %v2035 = vld [vmem:[%s39 + $0x10] sm:$0xff]
  %v2036 = vld [vmem:[%s39 + $0x18] sm:$0xff]
  %v2037 = vld [vmem:[%s41] sm:$0x1]
  %2039 = vrot.lane.b32.xlu0 %v2028, 96
  %v2040 = vpop.permute.xlu0 %2039
  %v2041 = vsel %vm215, %v2028, 0
  %v2043 = vsel %vm215, %v2040, 0
  %2045 = vmatpush.xpose.msra.mxu0 0.0
  %2046 = vmatpush.xpose.msra.mxu0 0.0
  %2047 = vmatpush.xpose.msra.mxu0 0.0
  %2048 = vmatpush.xpose.msra.mxu0 0.0
  %2049 = vmatpush.xpose.msra.mxu0 0.0
  %2050 = vmatpush.xpose.msra.mxu0 0.0
  %2051 = vmatpush.xpose.msra.mxu0 0.0
  %2052 = vmatpush.xpose.msra.mxu0 0.0
  %2053 = vmatpush.xpose.msra.mxu0 0.0
  %2054 = vmatpush.xpose.msra.mxu0 0.0
  %2055 = vmatpush.xpose.msra.mxu0 0.0
  %2056 = vmatpush.xpose.msra.mxu0 0.0
  %2057 = vmatpush.xpose.msra.mxu0 0.0
  %2058 = vmatpush.xpose.msra.mxu0 0.0
  %2059 = vmatpush.xpose.msra.mxu0 0.0
  %2060 = vmatpush.xpose.msra.mxu0 %v2043
  %2061 = vmatmul.f32.gmra.mxu0 %v2041
  %v2062 = vpop.f32.mrf.mxu0
  %v2063 = vadd.f32 %v1953, %v2062
  %2064 = vdwg.mxu0
  %2066 = vrot.lane.b32.xlu0 %v2031, 96
  %v2067 = vpop.permute.xlu0 %2066
  %v2068 = vsel %vm215, %v2031, 0
  %v2070 = vsel %vm215, %v2067, 0
  %2072 = vmatpush.xpose.msra.mxu0 0.0
  %2073 = vmatpush.xpose.msra.mxu0 0.0
  %2074 = vmatpush.xpose.msra.mxu0 0.0
  %2075 = vmatpush.xpose.msra.mxu0 0.0
  %2076 = vmatpush.xpose.msra.mxu0 0.0
  %2077 = vmatpush.xpose.msra.mxu0 0.0
  %2078 = vmatpush.xpose.msra.mxu0 0.0
  %2079 = vmatpush.xpose.msra.mxu0 0.0
  %2080 = vmatpush.xpose.msra.mxu0 0.0
  %2081 = vmatpush.xpose.msra.mxu0 0.0
  %2082 = vmatpush.xpose.msra.mxu0 0.0
  %2083 = vmatpush.xpose.msra.mxu0 0.0
  %2084 = vmatpush.xpose.msra.mxu0 0.0
  %2085 = vmatpush.xpose.msra.mxu0 0.0
  %2086 = vmatpush.xpose.msra.mxu0 0.0
  %2087 = vmatpush.xpose.msra.mxu0 %v2070
  %2088 = vmatmul.f32.gmra.mxu0 %v2068
  %v2089 = vpop.f32.mrf.mxu0
  %v2090 = vadd.f32 %v1954, %v2089
  %2091 = vdwg.mxu0
  %v2092 = vsel %vm215, %v2063, -inf
  %2093 = vmax.xlane.f32.xlu0 %v2092
  %v2094 = vpop.xlane.xlu0 %2093
  %v2095 = vsel %vm215, %v2090, -inf
  %2096 = vmax.xlane.f32.xlu0 %v2095
  %v2097 = vpop.xlane.xlu0 %2096
  %v2098 = vsub.f32 %v2063, %v2094
  %v2099 = vsub.f32 %v2090, %v2097
  %v2100 = vmul.f32 %v2098, 1.442695
  %v2101 = vpow.pop %v2100
  %v2102 = vmul.f32 %v2099, 1.442695
  %v2103 = vpow.pop %v2102
  %v2104 = vsel %vm215, %v2101, 0.0
  %2105 = vadd.xlane.f32.xlu0 %v2104
  %v2106 = vpop.xlane.xlu0 %2105
  %v2107 = vsel %vm215, %v2103, 0.0
  %2108 = vadd.xlane.f32.xlu0 %v2107
  %v2109 = vpop.xlane.xlu0 %2108
  %v2110 = vrcp.pop %v2106
  %v2111 = vrcp.pop %v2109
  %v2112 = vmul.f32 %v2101, %v2110
  %v2113 = vmul.f32 %v2103, %v2111
  %2114 = vrot.lane.b32.xlu0 %v2028, 64
  %v2115 = vpop.permute.xlu0 %2114
  %v2118 = vsel %vm215, %v2112, 0
  %2120 = vmatpush.msra.mxu0 0.0
  %2121 = vmatpush.msra.mxu0 0.0
  %2122 = vmatpush.msra.mxu0 0.0
  %2123 = vmatpush.msra.mxu0 0.0
  %2124 = vmatpush.msra.mxu0 0.0
  %2125 = vmatpush.msra.mxu0 0.0
  %2126 = vmatpush.msra.mxu0 0.0
  %2127 = vmatpush.msra.mxu0 0.0
  %2128 = vmatpush.msra.mxu0 0.0
  %2129 = vmatpush.msra.mxu0 0.0
  %2130 = vmatpush.msra.mxu0 0.0
  %2131 = vmatpush.msra.mxu0 0.0
  %2132 = vmatpush.msra.mxu0 0.0
  %2133 = vmatpush.msra.mxu0 0.0
  %2134 = vmatpush.msra.mxu0 0.0
  %2135 = vmatpush.msra.mxu0 %v2115
  %2136 = vmatmul.f32.gmra.mxu0 %v2118
  %v2137 = vpop.f32.mrf.mxu0
  %v2138 = vadd.f32 0.0, %v2137
  %2139 = vdwg.mxu0
  %2140 = vrot.lane.b32.xlu0 %v2031, 64
  %v2141 = vpop.permute.xlu0 %2140
  %v2144 = vsel %vm215, %v2113, 0
  %2146 = vmatpush.msra.mxu0 0.0
  %2147 = vmatpush.msra.mxu0 0.0
  %2148 = vmatpush.msra.mxu0 0.0
  %2149 = vmatpush.msra.mxu0 0.0
  %2150 = vmatpush.msra.mxu0 0.0
  %2151 = vmatpush.msra.mxu0 0.0
  %2152 = vmatpush.msra.mxu0 0.0
  %2153 = vmatpush.msra.mxu0 0.0
  %2154 = vmatpush.msra.mxu0 0.0
  %2155 = vmatpush.msra.mxu0 0.0
  %2156 = vmatpush.msra.mxu0 0.0
  %2157 = vmatpush.msra.mxu0 0.0
  %2158 = vmatpush.msra.mxu0 0.0
  %2159 = vmatpush.msra.mxu0 0.0
  %2160 = vmatpush.msra.mxu0 0.0
  %2161 = vmatpush.msra.mxu0 %v2141
  %2162 = vmatmul.f32.gmra.mxu0 %v2144
  %v2163 = vpop.f32.mrf.mxu0
  %v2164 = vadd.f32 0.0, %v2163
  %2165 = vdwg.mxu0
  %2166 = vrot.lane.b32.xlu0 %v2028, 120
  %v2167 = vpop.permute.xlu0 %2166
  %2168 = vrot.lane.b32.xlu0 %v2028, 88
  %v2169 = vpop.permute.xlu0 %2168
  %v2170 = vsel %vm215, %v2167, 0
  %v2172 = vsel %vm215, %v2169, 0
  %2174 = vmatpush.xpose.msra.mxu0 0.0
  %2175 = vmatpush.xpose.msra.mxu0 0.0
  %2176 = vmatpush.xpose.msra.mxu0 0.0
  %2177 = vmatpush.xpose.msra.mxu0 0.0
  %2178 = vmatpush.xpose.msra.mxu0 0.0
  %2179 = vmatpush.xpose.msra.mxu0 0.0
  %2180 = vmatpush.xpose.msra.mxu0 0.0
  %2181 = vmatpush.xpose.msra.mxu0 0.0
  %2182 = vmatpush.xpose.msra.mxu0 0.0
  %2183 = vmatpush.xpose.msra.mxu0 0.0
  %2184 = vmatpush.xpose.msra.mxu0 0.0
  %2185 = vmatpush.xpose.msra.mxu0 0.0
  %2186 = vmatpush.xpose.msra.mxu0 0.0
  %2187 = vmatpush.xpose.msra.mxu0 0.0
  %2188 = vmatpush.xpose.msra.mxu0 0.0
  %2189 = vmatpush.xpose.msra.mxu0 %v2172
  %2190 = vmatmul.f32.gmra.mxu0 %v2170
  %v2191 = vpop.f32.mrf.mxu0
  %v2192 = vadd.f32 %v1953, %v2191
  %2193 = vdwg.mxu0
  %2194 = vrot.lane.b32.xlu0 %v2031, 120
  %v2195 = vpop.permute.xlu0 %2194
  %2196 = vrot.lane.b32.xlu0 %v2031, 88
  %v2197 = vpop.permute.xlu0 %2196
  %v2198 = vsel %vm215, %v2195, 0
  %v2200 = vsel %vm215, %v2197, 0
  %2202 = vmatpush.xpose.msra.mxu0 0.0
  %2203 = vmatpush.xpose.msra.mxu0 0.0
  %2204 = vmatpush.xpose.msra.mxu0 0.0
  %2205 = vmatpush.xpose.msra.mxu0 0.0
  %2206 = vmatpush.xpose.msra.mxu0 0.0
  %2207 = vmatpush.xpose.msra.mxu0 0.0
  %2208 = vmatpush.xpose.msra.mxu0 0.0
  %2209 = vmatpush.xpose.msra.mxu0 0.0
  %2210 = vmatpush.xpose.msra.mxu0 0.0
  %2211 = vmatpush.xpose.msra.mxu0 0.0
  %2212 = vmatpush.xpose.msra.mxu0 0.0
  %2213 = vmatpush.xpose.msra.mxu0 0.0
  %2214 = vmatpush.xpose.msra.mxu0 0.0
  %2215 = vmatpush.xpose.msra.mxu0 0.0
  %2216 = vmatpush.xpose.msra.mxu0 0.0
  %2217 = vmatpush.xpose.msra.mxu0 %v2200
  %2218 = vmatmul.f32.gmra.mxu0 %v2198
  %v2219 = vpop.f32.mrf.mxu0
  %v2220 = vadd.f32 %v1954, %v2219
  %2221 = vdwg.mxu0
  %v2222 = vsel %vm215, %v2192, -inf
  %2223 = vmax.xlane.f32.xlu0 %v2222
  %v2224 = vpop.xlane.xlu0 %2223
  %v2225 = vsel %vm215, %v2220, -inf
  %2226 = vmax.xlane.f32.xlu0 %v2225
  %v2227 = vpop.xlane.xlu0 %2226
  %v2228 = vsub.f32 %v2192, %v2224
  %v2229 = vsub.f32 %v2220, %v2227
  %v2230 = vmul.f32 %v2228, 1.442695
  %v2231 = vpow.pop %v2230
  %v2232 = vmul.f32 %v2229, 1.442695
  %v2233 = vpow.pop %v2232
  %v2234 = vsel %vm215, %v2231, 0.0
  %2235 = vadd.xlane.f32.xlu0 %v2234
  %v2236 = vpop.xlane.xlu0 %2235
  %v2237 = vsel %vm215, %v2233, 0.0
  %2238 = vadd.xlane.f32.xlu0 %v2237
  %v2239 = vpop.xlane.xlu0 %2238
  %v2240 = vrcp.pop %v2236
  %v2241 = vrcp.pop %v2239
  %v2242 = vmul.f32 %v2231, %v2240
  %v2243 = vmul.f32 %v2233, %v2241
  %2244 = vrot.lane.b32.xlu0 %v2028, 56
  %v2245 = vpop.permute.xlu0 %2244
  %v2248 = vsel %vm215, %v2242, 0
  %2250 = vmatpush.msra.mxu0 0.0
  %2251 = vmatpush.msra.mxu0 0.0
  %2252 = vmatpush.msra.mxu0 0.0
  %2253 = vmatpush.msra.mxu0 0.0
  %2254 = vmatpush.msra.mxu0 0.0
  %2255 = vmatpush.msra.mxu0 0.0
  %2256 = vmatpush.msra.mxu0 0.0
  %2257 = vmatpush.msra.mxu0 0.0
  %2258 = vmatpush.msra.mxu0 0.0
  %2259 = vmatpush.msra.mxu0 0.0
  %2260 = vmatpush.msra.mxu0 0.0
  %2261 = vmatpush.msra.mxu0 0.0
  %2262 = vmatpush.msra.mxu0 0.0
  %2263 = vmatpush.msra.mxu0 0.0
  %2264 = vmatpush.msra.mxu0 0.0
  %2265 = vmatpush.msra.mxu0 %v2245
  %2266 = vmatmul.f32.gmra.mxu0 %v2248
  %v2267 = vpop.f32.mrf.mxu0
  %v2268 = vadd.f32 0.0, %v2267
  %2269 = vdwg.mxu0
  %2270 = vrot.lane.b32.xlu0 %v2031, 56
  %v2271 = vpop.permute.xlu0 %2270
  %v2274 = vsel %vm215, %v2243, 0
  %2276 = vmatpush.msra.mxu0 0.0
  %2277 = vmatpush.msra.mxu0 0.0
  %2278 = vmatpush.msra.mxu0 0.0
  %2279 = vmatpush.msra.mxu0 0.0
  %2280 = vmatpush.msra.mxu0 0.0
  %2281 = vmatpush.msra.mxu0 0.0
  %2282 = vmatpush.msra.mxu0 0.0
  %2283 = vmatpush.msra.mxu0 0.0
  %2284 = vmatpush.msra.mxu0 0.0
  %2285 = vmatpush.msra.mxu0 0.0
  %2286 = vmatpush.msra.mxu0 0.0
  %2287 = vmatpush.msra.mxu0 0.0
  %2288 = vmatpush.msra.mxu0 0.0
  %2289 = vmatpush.msra.mxu0 0.0
  %2290 = vmatpush.msra.mxu0 0.0
  %2291 = vmatpush.msra.mxu0 %v2271
  %2292 = vmatmul.f32.gmra.mxu0 %v2274
  %v2293 = vpop.f32.mrf.mxu0
  %v2294 = vadd.f32 0.0, %v2293
  %2295 = vdwg.mxu0
  %v2297 = vsel %vm215, %v2268, 0
  %v2300 = vsel %vm215, %v2294, 0
  %2302 = vmatpush.msra.mxu0 0.0
  %2303 = vmatpush.msra.mxu0 0.0
  %2304 = vmatpush.msra.mxu0 0.0
  %2305 = vmatpush.msra.mxu0 0.0
  %2306 = vmatpush.msra.mxu0 0.0
  %2307 = vmatpush.msra.mxu0 0.0
  %2308 = vmatpush.msra.mxu0 0.0
  %2309 = vmatpush.msra.mxu0 0.0
  %2310 = vmatpush.msra.mxu0 0.0
  %2311 = vmatpush.msra.mxu0 0.0
  %2312 = vmatpush.msra.mxu0 0.0
  %2313 = vmatpush.msra.mxu0 0.0
  %2314 = vmatpush.msra.mxu0 0.0
  %2315 = vmatpush.msra.mxu0 0.0
  %2316 = vmatpush.msra.mxu0 0.0
  %2317 = vmatpush.msra.mxu0 %v2034
  %2318 = vmatmul.f32.gmra.mxu0 %v2297
  %v2319 = vpop.f32.mrf.mxu0
  %v2320 = vadd.f32 0.0, %v2319
  %2321 = vmatmul.f32.gmra.mxu0 %v2300
  %v2322 = vpop.f32.mrf.mxu0
  %v2323 = vadd.f32 0.0, %v2322
  %2324 = vdwg.mxu0
  %v2326 = vsel %vm215, %v2138, 0
  %v2329 = vsel %vm215, %v2164, 0
  %2331 = vmatpush.msra.mxu0 0.0
  %2332 = vmatpush.msra.mxu0 0.0
  %2333 = vmatpush.msra.mxu0 0.0
  %2334 = vmatpush.msra.mxu0 0.0
  %2335 = vmatpush.msra.mxu0 0.0
  %2336 = vmatpush.msra.mxu0 0.0
  %2337 = vmatpush.msra.mxu0 0.0
  %2338 = vmatpush.msra.mxu0 0.0
  %2339 = vmatpush.msra.mxu0 0.0
  %2340 = vmatpush.msra.mxu0 0.0
  %2341 = vmatpush.msra.mxu0 0.0
  %2342 = vmatpush.msra.mxu0 0.0
  %2343 = vmatpush.msra.mxu0 0.0
  %2344 = vmatpush.msra.mxu0 0.0
  %2345 = vmatpush.msra.mxu0 0.0
  %2346 = vmatpush.msra.mxu0 %v2033
  %2347 = vmatmul.f32.gmra.mxu0 %v2326
  %v2348 = vpop.f32.mrf.mxu0
  %v2349 = vadd.f32 %v2320, %v2348
  %2350 = vmatmul.f32.gmra.mxu0 %v2329
  %v2351 = vpop.f32.mrf.mxu0
  %v2352 = vadd.f32 %v2323, %v2351
  %2353 = vdwg.mxu0
  %2354 = vrot.lane.b32.xlu0 %v2028, 112
  %v2355 = vpop.permute.xlu0 %2354
  %2356 = vrot.lane.b32.xlu0 %v2028, 80
  %v2357 = vpop.permute.xlu0 %2356
  %v2358 = vsel %vm215, %v2355, 0
  %v2360 = vsel %vm215, %v2357, 0
  %2362 = vmatpush.xpose.msra.mxu0 0.0
  %2363 = vmatpush.xpose.msra.mxu0 0.0
  %2364 = vmatpush.xpose.msra.mxu0 0.0
  %2365 = vmatpush.xpose.msra.mxu0 0.0
  %2366 = vmatpush.xpose.msra.mxu0 0.0
  %2367 = vmatpush.xpose.msra.mxu0 0.0
  %2368 = vmatpush.xpose.msra.mxu0 0.0
  %2369 = vmatpush.xpose.msra.mxu0 0.0
  %2370 = vmatpush.xpose.msra.mxu0 0.0
  %2371 = vmatpush.xpose.msra.mxu0 0.0
  %2372 = vmatpush.xpose.msra.mxu0 0.0
  %2373 = vmatpush.xpose.msra.mxu0 0.0
  %2374 = vmatpush.xpose.msra.mxu0 0.0
  %2375 = vmatpush.xpose.msra.mxu0 0.0
  %2376 = vmatpush.xpose.msra.mxu0 0.0
  %2377 = vmatpush.xpose.msra.mxu0 %v2360
  %2378 = vmatmul.f32.gmra.mxu0 %v2358
  %v2379 = vpop.f32.mrf.mxu0
  %v2380 = vadd.f32 %v1953, %v2379
  %2381 = vdwg.mxu0
  %2382 = vrot.lane.b32.xlu0 %v2031, 112
  %v2383 = vpop.permute.xlu0 %2382
  %2384 = vrot.lane.b32.xlu0 %v2031, 80
  %v2385 = vpop.permute.xlu0 %2384
  %v2386 = vsel %vm215, %v2383, 0
  %v2388 = vsel %vm215, %v2385, 0
  %2390 = vmatpush.xpose.msra.mxu0 0.0
  %2391 = vmatpush.xpose.msra.mxu0 0.0
  %2392 = vmatpush.xpose.msra.mxu0 0.0
  %2393 = vmatpush.xpose.msra.mxu0 0.0
  %2394 = vmatpush.xpose.msra.mxu0 0.0
  %2395 = vmatpush.xpose.msra.mxu0 0.0
  %2396 = vmatpush.xpose.msra.mxu0 0.0
  %2397 = vmatpush.xpose.msra.mxu0 0.0
  %2398 = vmatpush.xpose.msra.mxu0 0.0
  %2399 = vmatpush.xpose.msra.mxu0 0.0
  %2400 = vmatpush.xpose.msra.mxu0 0.0
  %2401 = vmatpush.xpose.msra.mxu0 0.0
  %2402 = vmatpush.xpose.msra.mxu0 0.0
  %2403 = vmatpush.xpose.msra.mxu0 0.0
  %2404 = vmatpush.xpose.msra.mxu0 0.0
  %2405 = vmatpush.xpose.msra.mxu0 %v2388
  %2406 = vmatmul.f32.gmra.mxu0 %v2386
  %v2407 = vpop.f32.mrf.mxu0
  %v2408 = vadd.f32 %v1954, %v2407
  %2409 = vdwg.mxu0
  %v2410 = vsel %vm215, %v2380, -inf
  %2411 = vmax.xlane.f32.xlu0 %v2410
  %v2412 = vpop.xlane.xlu0 %2411
  %v2413 = vsel %vm215, %v2408, -inf
  %2414 = vmax.xlane.f32.xlu0 %v2413
  %v2415 = vpop.xlane.xlu0 %2414
  %v2416 = vsub.f32 %v2380, %v2412
  %v2417 = vsub.f32 %v2408, %v2415
  %v2418 = vmul.f32 %v2416, 1.442695
  %v2419 = vpow.pop %v2418
  %v2420 = vmul.f32 %v2417, 1.442695
  %v2421 = vpow.pop %v2420
  %v2422 = vsel %vm215, %v2419, 0.0
  %2423 = vadd.xlane.f32.xlu0 %v2422
  %v2424 = vpop.xlane.xlu0 %2423
  %v2425 = vsel %vm215, %v2421, 0.0
  %2426 = vadd.xlane.f32.xlu0 %v2425
  %v2427 = vpop.xlane.xlu0 %2426
  %v2428 = vrcp.pop %v2424
  %v2429 = vrcp.pop %v2427
  %v2430 = vmul.f32 %v2419, %v2428
  %v2431 = vmul.f32 %v2421, %v2429
  %2432 = vrot.lane.b32.xlu0 %v2028, 48
  %v2433 = vpop.permute.xlu0 %2432
  %v2436 = vsel %vm215, %v2430, 0
  %2438 = vmatpush.msra.mxu0 0.0
  %2439 = vmatpush.msra.mxu0 0.0
  %2440 = vmatpush.msra.mxu0 0.0
  %2441 = vmatpush.msra.mxu0 0.0
  %2442 = vmatpush.msra.mxu0 0.0
  %2443 = vmatpush.msra.mxu0 0.0
  %2444 = vmatpush.msra.mxu0 0.0
  %2445 = vmatpush.msra.mxu0 0.0
  %2446 = vmatpush.msra.mxu0 0.0
  %2447 = vmatpush.msra.mxu0 0.0
  %2448 = vmatpush.msra.mxu0 0.0
  %2449 = vmatpush.msra.mxu0 0.0
  %2450 = vmatpush.msra.mxu0 0.0
  %2451 = vmatpush.msra.mxu0 0.0
  %2452 = vmatpush.msra.mxu0 0.0
  %2453 = vmatpush.msra.mxu0 %v2433
  %2454 = vmatmul.f32.gmra.mxu0 %v2436
  %v2455 = vpop.f32.mrf.mxu0
  %v2456 = vadd.f32 0.0, %v2455
  %2457 = vdwg.mxu0
  %2458 = vrot.lane.b32.xlu0 %v2031, 48
  %v2459 = vpop.permute.xlu0 %2458
  %v2462 = vsel %vm215, %v2431, 0
  %2464 = vmatpush.msra.mxu0 0.0
  %2465 = vmatpush.msra.mxu0 0.0
  %2466 = vmatpush.msra.mxu0 0.0
  %2467 = vmatpush.msra.mxu0 0.0
  %2468 = vmatpush.msra.mxu0 0.0
  %2469 = vmatpush.msra.mxu0 0.0
  %2470 = vmatpush.msra.mxu0 0.0
  %2471 = vmatpush.msra.mxu0 0.0
  %2472 = vmatpush.msra.mxu0 0.0
  %2473 = vmatpush.msra.mxu0 0.0
  %2474 = vmatpush.msra.mxu0 0.0
  %2475 = vmatpush.msra.mxu0 0.0
  %2476 = vmatpush.msra.mxu0 0.0
  %2477 = vmatpush.msra.mxu0 0.0
  %2478 = vmatpush.msra.mxu0 0.0
  %2479 = vmatpush.msra.mxu0 %v2459
  %2480 = vmatmul.f32.gmra.mxu0 %v2462
  %v2481 = vpop.f32.mrf.mxu0
  %v2482 = vadd.f32 0.0, %v2481
  %2483 = vdwg.mxu0
  %v2485 = vsel %vm215, %v2456, 0
  %v2488 = vsel %vm215, %v2482, 0
  %2490 = vmatpush.msra.mxu0 0.0
  %2491 = vmatpush.msra.mxu0 0.0
  %2492 = vmatpush.msra.mxu0 0.0
  %2493 = vmatpush.msra.mxu0 0.0
  %2494 = vmatpush.msra.mxu0 0.0
  %2495 = vmatpush.msra.mxu0 0.0
  %2496 = vmatpush.msra.mxu0 0.0
  %2497 = vmatpush.msra.mxu0 0.0
  %2498 = vmatpush.msra.mxu0 0.0
  %2499 = vmatpush.msra.mxu0 0.0
  %2500 = vmatpush.msra.mxu0 0.0
  %2501 = vmatpush.msra.mxu0 0.0
  %2502 = vmatpush.msra.mxu0 0.0
  %2503 = vmatpush.msra.mxu0 0.0
  %2504 = vmatpush.msra.mxu0 0.0
  %2505 = vmatpush.msra.mxu0 %v2035
  %2506 = vmatmul.f32.gmra.mxu0 %v2485
  %v2507 = vpop.f32.mrf.mxu0
  %v2508 = vadd.f32 0.0, %v2507
  %2509 = vmatmul.f32.gmra.mxu0 %v2488
  %v2510 = vpop.f32.mrf.mxu0
  %v2511 = vadd.f32 0.0, %v2510
  %2512 = vdwg.mxu0
  %v2513 = vadd.f32 %v2349, %v2508
  %v2514 = vadd.f32 %v2352, %v2511
  %2515 = vrot.lane.b32.xlu0 %v2028, 104
  %v2516 = vpop.permute.xlu0 %2515
  %2517 = vrot.lane.b32.xlu0 %v2028, 72
  %v2518 = vpop.permute.xlu0 %2517
  %v2519 = vsel %vm215, %v2516, 0
  %v2521 = vsel %vm215, %v2518, 0
  %2523 = vmatpush.xpose.msra.mxu0 0.0
  %2524 = vmatpush.xpose.msra.mxu0 0.0
  %2525 = vmatpush.xpose.msra.mxu0 0.0
  %2526 = vmatpush.xpose.msra.mxu0 0.0
  %2527 = vmatpush.xpose.msra.mxu0 0.0
  %2528 = vmatpush.xpose.msra.mxu0 0.0
  %2529 = vmatpush.xpose.msra.mxu0 0.0
  %2530 = vmatpush.xpose.msra.mxu0 0.0
  %2531 = vmatpush.xpose.msra.mxu0 0.0
  %2532 = vmatpush.xpose.msra.mxu0 0.0
  %2533 = vmatpush.xpose.msra.mxu0 0.0
  %2534 = vmatpush.xpose.msra.mxu0 0.0
  %2535 = vmatpush.xpose.msra.mxu0 0.0
  %2536 = vmatpush.xpose.msra.mxu0 0.0
  %2537 = vmatpush.xpose.msra.mxu0 0.0
  %2538 = vmatpush.xpose.msra.mxu0 %v2521
  %2539 = vmatmul.f32.gmra.mxu0 %v2519
  %v2540 = vpop.f32.mrf.mxu0
  %v2541 = vadd.f32 %v1953, %v2540
  %2542 = vdwg.mxu0
  %2543 = vrot.lane.b32.xlu0 %v2031, 104
  %v2544 = vpop.permute.xlu0 %2543
  %2545 = vrot.lane.b32.xlu0 %v2031, 72
  %v2546 = vpop.permute.xlu0 %2545
  %v2547 = vsel %vm215, %v2544, 0
  %v2549 = vsel %vm215, %v2546, 0
  %2551 = vmatpush.xpose.msra.mxu0 0.0
  %2552 = vmatpush.xpose.msra.mxu0 0.0
  %2553 = vmatpush.xpose.msra.mxu0 0.0
  %2554 = vmatpush.xpose.msra.mxu0 0.0
  %2555 = vmatpush.xpose.msra.mxu0 0.0
  %2556 = vmatpush.xpose.msra.mxu0 0.0
  %2557 = vmatpush.xpose.msra.mxu0 0.0
  %2558 = vmatpush.xpose.msra.mxu0 0.0
  %2559 = vmatpush.xpose.msra.mxu0 0.0
  %2560 = vmatpush.xpose.msra.mxu0 0.0
  %2561 = vmatpush.xpose.msra.mxu0 0.0
  %2562 = vmatpush.xpose.msra.mxu0 0.0
  %2563 = vmatpush.xpose.msra.mxu0 0.0
  %2564 = vmatpush.xpose.msra.mxu0 0.0
  %2565 = vmatpush.xpose.msra.mxu0 0.0
  %2566 = vmatpush.xpose.msra.mxu0 %v2549
  %2567 = vmatmul.f32.gmra.mxu0 %v2547
  %v2568 = vpop.f32.mrf.mxu0
  %v2569 = vadd.f32 %v1954, %v2568
  %2570 = vdwg.mxu0
  %v2571 = vsel %vm215, %v2541, -inf
  %2572 = vmax.xlane.f32.xlu0 %v2571
  %v2573 = vpop.xlane.xlu0 %2572
  %v2574 = vsel %vm215, %v2569, -inf
  %2575 = vmax.xlane.f32.xlu0 %v2574
  %v2576 = vpop.xlane.xlu0 %2575
  %v2577 = vsub.f32 %v2541, %v2573
  %v2578 = vsub.f32 %v2569, %v2576
  %v2579 = vmul.f32 %v2577, 1.442695
  %v2580 = vpow.pop %v2579
  %v2581 = vmul.f32 %v2578, 1.442695
  %v2582 = vpow.pop %v2581
  %v2583 = vsel %vm215, %v2580, 0.0
  %2584 = vadd.xlane.f32.xlu0 %v2583
  %v2585 = vpop.xlane.xlu0 %2584
  %v2586 = vsel %vm215, %v2582, 0.0
  %2587 = vadd.xlane.f32.xlu0 %v2586
  %v2588 = vpop.xlane.xlu0 %2587
  %v2589 = vrcp.pop %v2585
  %v2590 = vrcp.pop %v2588
  %v2591 = vmul.f32 %v2580, %v2589
  %v2592 = vmul.f32 %v2582, %v2590
  %2593 = vrot.lane.b32.xlu0 %v2028, 40
  %v2594 = vpop.permute.xlu0 %2593
  %v2597 = vsel %vm215, %v2591, 0
  %2599 = vmatpush.msra.mxu0 0.0
  %2600 = vmatpush.msra.mxu0 0.0
  %2601 = vmatpush.msra.mxu0 0.0
  %2602 = vmatpush.msra.mxu0 0.0
  %2603 = vmatpush.msra.mxu0 0.0
  %2604 = vmatpush.msra.mxu0 0.0
  %2605 = vmatpush.msra.mxu0 0.0
  %2606 = vmatpush.msra.mxu0 0.0
  %2607 = vmatpush.msra.mxu0 0.0
  %2608 = vmatpush.msra.mxu0 0.0
  %2609 = vmatpush.msra.mxu0 0.0
  %2610 = vmatpush.msra.mxu0 0.0
  %2611 = vmatpush.msra.mxu0 0.0
  %2612 = vmatpush.msra.mxu0 0.0
  %2613 = vmatpush.msra.mxu0 0.0
  %2614 = vmatpush.msra.mxu0 %v2594
  %2615 = vmatmul.f32.gmra.mxu0 %v2597
  %v2616 = vpop.f32.mrf.mxu0
  %v2617 = vadd.f32 0.0, %v2616
  %2618 = vdwg.mxu0
  %2619 = vrot.lane.b32.xlu0 %v2031, 40
  %v2620 = vpop.permute.xlu0 %2619
  %v2623 = vsel %vm215, %v2592, 0
  %2625 = vmatpush.msra.mxu0 0.0
  %2626 = vmatpush.msra.mxu0 0.0
  %2627 = vmatpush.msra.mxu0 0.0
  %2628 = vmatpush.msra.mxu0 0.0
  %2629 = vmatpush.msra.mxu0 0.0
  %2630 = vmatpush.msra.mxu0 0.0
  %2631 = vmatpush.msra.mxu0 0.0
  %2632 = vmatpush.msra.mxu0 0.0
  %2633 = vmatpush.msra.mxu0 0.0
  %2634 = vmatpush.msra.mxu0 0.0
  %2635 = vmatpush.msra.mxu0 0.0
  %2636 = vmatpush.msra.mxu0 0.0
  %2637 = vmatpush.msra.mxu0 0.0
  %2638 = vmatpush.msra.mxu0 0.0
  %2639 = vmatpush.msra.mxu0 0.0
  %2640 = vmatpush.msra.mxu0 %v2620
  %2641 = vmatmul.f32.gmra.mxu0 %v2623
  %v2642 = vpop.f32.mrf.mxu0
  %v2643 = vadd.f32 0.0, %v2642
  %2644 = vdwg.mxu0
  %v2646 = vsel %vm215, %v2617, 0
  %v2649 = vsel %vm215, %v2643, 0
  %2651 = vmatpush.msra.mxu0 0.0
  %2652 = vmatpush.msra.mxu0 0.0
  %2653 = vmatpush.msra.mxu0 0.0
  %2654 = vmatpush.msra.mxu0 0.0
  %2655 = vmatpush.msra.mxu0 0.0
  %2656 = vmatpush.msra.mxu0 0.0
  %2657 = vmatpush.msra.mxu0 0.0
  %2658 = vmatpush.msra.mxu0 0.0
  %2659 = vmatpush.msra.mxu0 0.0
  %2660 = vmatpush.msra.mxu0 0.0
  %2661 = vmatpush.msra.mxu0 0.0
  %2662 = vmatpush.msra.mxu0 0.0
  %2663 = vmatpush.msra.mxu0 0.0
  %2664 = vmatpush.msra.mxu0 0.0
  %2665 = vmatpush.msra.mxu0 0.0
  %2666 = vmatpush.msra.mxu0 %v2036
  %2667 = vmatmul.f32.gmra.mxu0 %v2646
  %v2668 = vpop.f32.mrf.mxu0
  %v2669 = vadd.f32 0.0, %v2668
  %2670 = vmatmul.f32.gmra.mxu0 %v2649
  %v2671 = vpop.f32.mrf.mxu0
  %v2672 = vadd.f32 0.0, %v2671
  %2673 = vdwg.mxu0
  %v2674 = vadd.f32 %v2513, %v2669
  %v2675 = vadd.f32 %v2514, %v2672
  %v2677 = vperm.slane %v2037, 0
  %v2679 = vadd.f32 %v2674, %v2677
  %v2680 = vadd.f32 %v2675, %v2677
  %v2681 = vadd.f32 %v1994, %v2679
  %v2682 = vadd.f32 %v1995, %v2680
  %v2683 = vld [vmem:[%s43] sm:$0x1]
  %v2684 = vld [vmem:[%s45] sm:$0x1]
  %v2685 = vsel %vm177, %v2681, 0.0
  %2686 = vadd.xlane.f32.xlu0 %v2685
  %v2687 = vpop.xlane.xlu0 %2686
  %v2688 = vsel %vm177, %v2682, 0.0
  %2689 = vadd.xlane.f32.xlu0 %v2688
  %v2690 = vpop.xlane.xlu0 %2689
  %v2691 = vmul.f32 %v2687, %v872
  %v2692 = vmul.f32 %v2690, %v872
  %v2693 = vsub.f32 %v2681, %v2691
  %v2694 = vsub.f32 %v2682, %v2692
  %v2695 = vmul.f32 %v2693, %v2693
  %v2696 = vmul.f32 %v2694, %v2694
  %v2697 = vsel %vm177, %v2695, 0.0
  %2698 = vadd.xlane.f32.xlu0 %v2697
  %v2699 = vpop.xlane.xlu0 %2698
  %v2700 = vsel %vm177, %v2696, 0.0
  %2701 = vadd.xlane.f32.xlu0 %v2700
  %v2702 = vpop.xlane.xlu0 %2701
  %v2703 = vmul.f32 %v2699, %v872
  %v2704 = vmul.f32 %v2702, %v872
  %v2705 = vadd.f32 %v2703, 1e-05
  %v2706 = vadd.f32 %v2704, 1e-05
  %v2707 = vrsqrt.pop %v2705
  %v2708 = vmul.f32 %v2707, %v2705
  %v2709 = vmul.f32 %v2708, %v2707
  %v2710 = vmul.f32 0.5, %v2709
  %v2711 = vsub.f32 1.5, %v2710
  %v2712 = vmul.f32 %v2707, %v2711
  %vm2713 = vweird.f32 %v2705
  %vm2714 = vweird.f32 %v2707
  %vm2715 = vmor %vm2713, %vm2714
  %v2716 = vsel %vm2715, %v2707, %v2712
  %v2717 = vrsqrt.pop %v2706
  %v2718 = vmul.f32 %v2717, %v2706
  %v2719 = vmul.f32 %v2718, %v2717
  %v2720 = vmul.f32 0.5, %v2719
  %v2721 = vsub.f32 1.5, %v2720
  %v2722 = vmul.f32 %v2717, %v2721
  %vm2723 = vweird.f32 %v2706
  %vm2724 = vweird.f32 %v2717
  %vm2725 = vmor %vm2723, %vm2724
  %v2726 = vsel %vm2725, %v2717, %v2722
  %v2727 = vmul.f32 %v2693, %v2716
  %v2728 = vmul.f32 %v2694, %v2726
  %v2730 = vperm.slane %v2683, 0
  %v2732 = vmul.f32 %v2727, %v2730
  %v2733 = vmul.f32 %v2728, %v2730
  %v2735 = vperm.slane %v2684, 0
  %v2737 = vadd.f32 %v2732, %v2735
  %v2738 = vadd.f32 %v2733, %v2735
  %v2739 = vld [vmem:[%s47] sm:$0xff]
  %v2740 = vld [vmem:[%s47 + $0x8] sm:$0xff]
  %v2741 = vld [vmem:[%s47 + $0x10] sm:$0xff]
  %v2742 = vld [vmem:[%s47 + $0x18] sm:$0xff]
  %v2743 = vld [vmem:[%s49] sm:$0x1]
  %v2745 = vperm.slane %v2743, 0
  %v2748 = vsel %vm177, %v2737, 0
  %v2751 = vsel %vm177, %v2738, 0
  %2753 = vmatpush.msra.mxu0 0.0
  %2754 = vmatpush.msra.mxu0 0.0
  %2755 = vmatpush.msra.mxu0 0.0
  %2756 = vmatpush.msra.mxu0 0.0
  %2757 = vmatpush.msra.mxu0 0.0
  %2758 = vmatpush.msra.mxu0 0.0
  %2759 = vmatpush.msra.mxu0 0.0
  %2760 = vmatpush.msra.mxu0 0.0
  %2761 = vmatpush.msra.mxu0 0.0
  %2762 = vmatpush.msra.mxu0 0.0
  %2763 = vmatpush.msra.mxu0 0.0
  %2764 = vmatpush.msra.mxu0 0.0
  %2765 = vmatpush.msra.mxu0 %v2742
  %2766 = vmatpush.msra.mxu0 %v2741
  %2767 = vmatpush.msra.mxu0 %v2740
  %2768 = vmatpush.msra.mxu0 %v2739
  %2769 = vmatmul.f32.gmra.mxu0 %v2748
  %v2770 = vpop.f32.mrf.mxu0
  %v2771 = vadd.f32 %v2745, %v2770
  %2772 = vmatmul.f32.gmra.mxu0 %v2751
  %v2773 = vpop.f32.mrf.mxu0
  %v2774 = vadd.f32 %v2745, %v2773
  %2775 = vdwg.mxu0
  %v2776 = vld [vmem:[%s55] sm:$0xff]
  %v2777 = vld [vmem:[%s55 + $0x8] sm:$0xff]
  %v2778 = vld [vmem:[%s55 + $0x10] sm:$0xff]
  %v2779 = vld [vmem:[%s55 + $0x18] sm:$0xff]
  %v2780 = vld [vmem:[%s57] sm:$0x1]
  %v2782 = vsel %vm215, %v2771, 0
  %v2785 = vsel %vm215, %v1989, 0
  %2787 = vmatpush.xpose.msra.mxu0 0.0
  %2788 = vmatpush.xpose.msra.mxu0 0.0
  %2789 = vmatpush.xpose.msra.mxu0 0.0
  %2790 = vmatpush.xpose.msra.mxu0 0.0
  %2791 = vmatpush.xpose.msra.mxu0 0.0
  %2792 = vmatpush.xpose.msra.mxu0 0.0
  %2793 = vmatpush.xpose.msra.mxu0 0.0
  %2794 = vmatpush.xpose.msra.mxu0 0.0
  %2795 = vmatpush.xpose.msra.mxu0 0.0
  %2796 = vmatpush.xpose.msra.mxu0 0.0
  %2797 = vmatpush.xpose.msra.mxu0 0.0
  %2798 = vmatpush.xpose.msra.mxu0 0.0
  %2799 = vmatpush.xpose.msra.mxu0 0.0
  %2800 = vmatpush.xpose.msra.mxu0 0.0
  %2801 = vmatpush.xpose.msra.mxu0 0.0
  %2802 = vmatpush.xpose.msra.mxu0 %v2785
  %2803 = vmatmul.f32.gmra.mxu0 %v2782
  %v2804 = vpop.f32.mrf.mxu0
  %v2805 = vadd.f32 %v1955, %v2804
  %2806 = vdwg.mxu0
  %v2808 = vsel %vm215, %v2774, 0
  %v2811 = vsel %vm215, %v1992, 0
  %2813 = vmatpush.xpose.msra.mxu0 0.0
  %2814 = vmatpush.xpose.msra.mxu0 0.0
  %2815 = vmatpush.xpose.msra.mxu0 0.0
  %2816 = vmatpush.xpose.msra.mxu0 0.0
  %2817 = vmatpush.xpose.msra.mxu0 0.0
  %2818 = vmatpush.xpose.msra.mxu0 0.0
  %2819 = vmatpush.xpose.msra.mxu0 0.0
  %2820 = vmatpush.xpose.msra.mxu0 0.0
  %2821 = vmatpush.xpose.msra.mxu0 0.0
  %2822 = vmatpush.xpose.msra.mxu0 0.0
  %2823 = vmatpush.xpose.msra.mxu0 0.0
  %2824 = vmatpush.xpose.msra.mxu0 0.0
  %2825 = vmatpush.xpose.msra.mxu0 0.0
  %2826 = vmatpush.xpose.msra.mxu0 0.0
  %2827 = vmatpush.xpose.msra.mxu0 0.0
  %2828 = vmatpush.xpose.msra.mxu0 %v2811
  %2829 = vmatmul.f32.gmra.mxu0 %v2808
  %v2830 = vpop.f32.mrf.mxu0
  %v2831 = vadd.f32 %v1956, %v2830
  %2832 = vdwg.mxu0
  %v2833 = vsel %vm215, %v2805, -inf
  %2834 = vmax.xlane.f32.xlu0 %v2833
  %v2835 = vpop.xlane.xlu0 %2834
  %v2836 = vsel %vm215, %v2831, -inf
  %2837 = vmax.xlane.f32.xlu0 %v2836
  %v2838 = vpop.xlane.xlu0 %2837
  %v2839 = vsub.f32 %v2805, %v2835
  %v2840 = vsub.f32 %v2831, %v2838
  %v2841 = vmul.f32 %v2839, 1.442695
  %v2842 = vpow.pop %v2841
  %v2843 = vmul.f32 %v2840, 1.442695
  %v2844 = vpow.pop %v2843
  %v2845 = vsel %vm215, %v2842, 0.0
  %2846 = vadd.xlane.f32.xlu0 %v2845
  %v2847 = vpop.xlane.xlu0 %2846
  %v2848 = vsel %vm215, %v2844, 0.0
  %2849 = vadd.xlane.f32.xlu0 %v2848
  %v2850 = vpop.xlane.xlu0 %2849
  %v2851 = vrcp.pop %v2847
  %v2852 = vrcp.pop %v2850
  %v2853 = vmul.f32 %v2842, %v2851
  %v2854 = vmul.f32 %v2844, %v2852
  %2855 = vrot.lane.b32.xlu0 %v1989, 96
  %v2856 = vpop.permute.xlu0 %2855
  %v2859 = vsel %vm215, %v2853, 0
  %2861 = vmatpush.msra.mxu0 0.0
  %2862 = vmatpush.msra.mxu0 0.0
  %2863 = vmatpush.msra.mxu0 0.0
  %2864 = vmatpush.msra.mxu0 0.0
  %2865 = vmatpush.msra.mxu0 0.0
  %2866 = vmatpush.msra.mxu0 0.0
  %2867 = vmatpush.msra.mxu0 0.0
  %2868 = vmatpush.msra.mxu0 0.0
  %2869 = vmatpush.msra.mxu0 0.0
  %2870 = vmatpush.msra.mxu0 0.0
  %2871 = vmatpush.msra.mxu0 0.0
  %2872 = vmatpush.msra.mxu0 0.0
  %2873 = vmatpush.msra.mxu0 0.0
  %2874 = vmatpush.msra.mxu0 0.0
  %2875 = vmatpush.msra.mxu0 0.0
  %2876 = vmatpush.msra.mxu0 %v2856
  %2877 = vmatmul.f32.gmra.mxu0 %v2859
  %v2878 = vpop.f32.mrf.mxu0
  %v2879 = vadd.f32 0.0, %v2878
  %2880 = vdwg.mxu0
  %2881 = vrot.lane.b32.xlu0 %v1992, 96
  %v2882 = vpop.permute.xlu0 %2881
  %v2885 = vsel %vm215, %v2854, 0
  %2887 = vmatpush.msra.mxu0 0.0
  %2888 = vmatpush.msra.mxu0 0.0
  %2889 = vmatpush.msra.mxu0 0.0
  %2890 = vmatpush.msra.mxu0 0.0
  %2891 = vmatpush.msra.mxu0 0.0
  %2892 = vmatpush.msra.mxu0 0.0
  %2893 = vmatpush.msra.mxu0 0.0
  %2894 = vmatpush.msra.mxu0 0.0
  %2895 = vmatpush.msra.mxu0 0.0
  %2896 = vmatpush.msra.mxu0 0.0
  %2897 = vmatpush.msra.mxu0 0.0
  %2898 = vmatpush.msra.mxu0 0.0
  %2899 = vmatpush.msra.mxu0 0.0
  %2900 = vmatpush.msra.mxu0 0.0
  %2901 = vmatpush.msra.mxu0 0.0
  %2902 = vmatpush.msra.mxu0 %v2882
  %2903 = vmatmul.f32.gmra.mxu0 %v2885
  %v2904 = vpop.f32.mrf.mxu0
  %v2905 = vadd.f32 0.0, %v2904
  %2906 = vdwg.mxu0
  %2907 = vrot.lane.b32.xlu0 %v2771, 120
  %v2908 = vpop.permute.xlu0 %2907
  %2909 = vrot.lane.b32.xlu0 %v1989, 120
  %v2910 = vpop.permute.xlu0 %2909
  %v2911 = vsel %vm215, %v2908, 0
  %v2913 = vsel %vm215, %v2910, 0
  %2915 = vmatpush.xpose.msra.mxu0 0.0
  %2916 = vmatpush.xpose.msra.mxu0 0.0
  %2917 = vmatpush.xpose.msra.mxu0 0.0
  %2918 = vmatpush.xpose.msra.mxu0 0.0
  %2919 = vmatpush.xpose.msra.mxu0 0.0
  %2920 = vmatpush.xpose.msra.mxu0 0.0
  %2921 = vmatpush.xpose.msra.mxu0 0.0
  %2922 = vmatpush.xpose.msra.mxu0 0.0
  %2923 = vmatpush.xpose.msra.mxu0 0.0
  %2924 = vmatpush.xpose.msra.mxu0 0.0
  %2925 = vmatpush.xpose.msra.mxu0 0.0
  %2926 = vmatpush.xpose.msra.mxu0 0.0
  %2927 = vmatpush.xpose.msra.mxu0 0.0
  %2928 = vmatpush.xpose.msra.mxu0 0.0
  %2929 = vmatpush.xpose.msra.mxu0 0.0
  %2930 = vmatpush.xpose.msra.mxu0 %v2913
  %2931 = vmatmul.f32.gmra.mxu0 %v2911
  %v2932 = vpop.f32.mrf.mxu0
  %v2933 = vadd.f32 %v1955, %v2932
  %2934 = vdwg.mxu0
  %2935 = vrot.lane.b32.xlu0 %v2774, 120
  %v2936 = vpop.permute.xlu0 %2935
  %2937 = vrot.lane.b32.xlu0 %v1992, 120
  %v2938 = vpop.permute.xlu0 %2937
  %v2939 = vsel %vm215, %v2936, 0
  %v2941 = vsel %vm215, %v2938, 0
  %2943 = vmatpush.xpose.msra.mxu0 0.0
  %2944 = vmatpush.xpose.msra.mxu0 0.0
  %2945 = vmatpush.xpose.msra.mxu0 0.0
  %2946 = vmatpush.xpose.msra.mxu0 0.0
  %2947 = vmatpush.xpose.msra.mxu0 0.0
  %2948 = vmatpush.xpose.msra.mxu0 0.0
  %2949 = vmatpush.xpose.msra.mxu0 0.0
  %2950 = vmatpush.xpose.msra.mxu0 0.0
  %2951 = vmatpush.xpose.msra.mxu0 0.0
  %2952 = vmatpush.xpose.msra.mxu0 0.0
  %2953 = vmatpush.xpose.msra.mxu0 0.0
  %2954 = vmatpush.xpose.msra.mxu0 0.0
  %2955 = vmatpush.xpose.msra.mxu0 0.0
  %2956 = vmatpush.xpose.msra.mxu0 0.0
  %2957 = vmatpush.xpose.msra.mxu0 0.0
  %2958 = vmatpush.xpose.msra.mxu0 %v2941
  %2959 = vmatmul.f32.gmra.mxu0 %v2939
  %v2960 = vpop.f32.mrf.mxu0
  %v2961 = vadd.f32 %v1956, %v2960
  %2962 = vdwg.mxu0
  %v2963 = vsel %vm215, %v2933, -inf
  %2964 = vmax.xlane.f32.xlu0 %v2963
  %v2965 = vpop.xlane.xlu0 %2964
  %v2966 = vsel %vm215, %v2961, -inf
  %2967 = vmax.xlane.f32.xlu0 %v2966
  %v2968 = vpop.xlane.xlu0 %2967
  %v2969 = vsub.f32 %v2933, %v2965
  %v2970 = vsub.f32 %v2961, %v2968
  %v2971 = vmul.f32 %v2969, 1.442695
  %v2972 = vpow.pop %v2971
  %v2973 = vmul.f32 %v2970, 1.442695
  %v2974 = vpow.pop %v2973
  %v2975 = vsel %vm215, %v2972, 0.0
  %2976 = vadd.xlane.f32.xlu0 %v2975
  %v2977 = vpop.xlane.xlu0 %2976
  %v2978 = vsel %vm215, %v2974, 0.0
  %2979 = vadd.xlane.f32.xlu0 %v2978
  %v2980 = vpop.xlane.xlu0 %2979
  %v2981 = vrcp.pop %v2977
  %v2982 = vrcp.pop %v2980
  %v2983 = vmul.f32 %v2972, %v2981
  %v2984 = vmul.f32 %v2974, %v2982
  %2985 = vrot.lane.b32.xlu0 %v1989, 88
  %v2986 = vpop.permute.xlu0 %2985
  %v2989 = vsel %vm215, %v2983, 0
  %2991 = vmatpush.msra.mxu0 0.0
  %2992 = vmatpush.msra.mxu0 0.0
  %2993 = vmatpush.msra.mxu0 0.0
  %2994 = vmatpush.msra.mxu0 0.0
  %2995 = vmatpush.msra.mxu0 0.0
  %2996 = vmatpush.msra.mxu0 0.0
  %2997 = vmatpush.msra.mxu0 0.0
  %2998 = vmatpush.msra.mxu0 0.0
  %2999 = vmatpush.msra.mxu0 0.0
  %3000 = vmatpush.msra.mxu0 0.0
  %3001 = vmatpush.msra.mxu0 0.0
  %3002 = vmatpush.msra.mxu0 0.0
  %3003 = vmatpush.msra.mxu0 0.0
  %3004 = vmatpush.msra.mxu0 0.0
  %3005 = vmatpush.msra.mxu0 0.0
  %3006 = vmatpush.msra.mxu0 %v2986
  %3007 = vmatmul.f32.gmra.mxu0 %v2989
  %v3008 = vpop.f32.mrf.mxu0
  %v3009 = vadd.f32 0.0, %v3008
  %3010 = vdwg.mxu0
  %3011 = vrot.lane.b32.xlu0 %v1992, 88
  %v3012 = vpop.permute.xlu0 %3011
  %v3015 = vsel %vm215, %v2984, 0
  %3017 = vmatpush.msra.mxu0 0.0
  %3018 = vmatpush.msra.mxu0 0.0
  %3019 = vmatpush.msra.mxu0 0.0
  %3020 = vmatpush.msra.mxu0 0.0
  %3021 = vmatpush.msra.mxu0 0.0
  %3022 = vmatpush.msra.mxu0 0.0
  %3023 = vmatpush.msra.mxu0 0.0
  %3024 = vmatpush.msra.mxu0 0.0
  %3025 = vmatpush.msra.mxu0 0.0
  %3026 = vmatpush.msra.mxu0 0.0
  %3027 = vmatpush.msra.mxu0 0.0
  %3028 = vmatpush.msra.mxu0 0.0
  %3029 = vmatpush.msra.mxu0 0.0
  %3030 = vmatpush.msra.mxu0 0.0
  %3031 = vmatpush.msra.mxu0 0.0
  %3032 = vmatpush.msra.mxu0 %v3012
  %3033 = vmatmul.f32.gmra.mxu0 %v3015
  %v3034 = vpop.f32.mrf.mxu0
  %v3035 = vadd.f32 0.0, %v3034
  %3036 = vdwg.mxu0
  %v3038 = vsel %vm215, %v3009, 0
  %v3041 = vsel %vm215, %v3035, 0
  %3043 = vmatpush.msra.mxu0 0.0
  %3044 = vmatpush.msra.mxu0 0.0
  %3045 = vmatpush.msra.mxu0 0.0
  %3046 = vmatpush.msra.mxu0 0.0
  %3047 = vmatpush.msra.mxu0 0.0
  %3048 = vmatpush.msra.mxu0 0.0
  %3049 = vmatpush.msra.mxu0 0.0
  %3050 = vmatpush.msra.mxu0 0.0
  %3051 = vmatpush.msra.mxu0 0.0
  %3052 = vmatpush.msra.mxu0 0.0
  %3053 = vmatpush.msra.mxu0 0.0
  %3054 = vmatpush.msra.mxu0 0.0
  %3055 = vmatpush.msra.mxu0 0.0
  %3056 = vmatpush.msra.mxu0 0.0
  %3057 = vmatpush.msra.mxu0 0.0
  %3058 = vmatpush.msra.mxu0 %v2777
  %3059 = vmatmul.f32.gmra.mxu0 %v3038
  %v3060 = vpop.f32.mrf.mxu0
  %v3061 = vadd.f32 0.0, %v3060
  %3062 = vmatmul.f32.gmra.mxu0 %v3041
  %v3063 = vpop.f32.mrf.mxu0
  %v3064 = vadd.f32 0.0, %v3063
  %3065 = vdwg.mxu0
  %v3067 = vsel %vm215, %v2879, 0
  %v3070 = vsel %vm215, %v2905, 0
  %3072 = vmatpush.msra.mxu0 0.0
  %3073 = vmatpush.msra.mxu0 0.0
  %3074 = vmatpush.msra.mxu0 0.0
  %3075 = vmatpush.msra.mxu0 0.0
  %3076 = vmatpush.msra.mxu0 0.0
  %3077 = vmatpush.msra.mxu0 0.0
  %3078 = vmatpush.msra.mxu0 0.0
  %3079 = vmatpush.msra.mxu0 0.0
  %3080 = vmatpush.msra.mxu0 0.0
  %3081 = vmatpush.msra.mxu0 0.0
  %3082 = vmatpush.msra.mxu0 0.0
  %3083 = vmatpush.msra.mxu0 0.0
  %3084 = vmatpush.msra.mxu0 0.0
  %3085 = vmatpush.msra.mxu0 0.0
  %3086 = vmatpush.msra.mxu0 0.0
  %3087 = vmatpush.msra.mxu0 %v2776
  %3088 = vmatmul.f32.gmra.mxu0 %v3067
  %v3089 = vpop.f32.mrf.mxu0
  %v3090 = vadd.f32 %v3061, %v3089
  %3091 = vmatmul.f32.gmra.mxu0 %v3070
  %v3092 = vpop.f32.mrf.mxu0
  %v3093 = vadd.f32 %v3064, %v3092
  %3094 = vdwg.mxu0
  %3095 = vrot.lane.b32.xlu0 %v2771, 112
  %v3096 = vpop.permute.xlu0 %3095
  %3097 = vrot.lane.b32.xlu0 %v1989, 112
  %v3098 = vpop.permute.xlu0 %3097
  %v3099 = vsel %vm215, %v3096, 0
  %v3101 = vsel %vm215, %v3098, 0
  %3103 = vmatpush.xpose.msra.mxu0 0.0
  %3104 = vmatpush.xpose.msra.mxu0 0.0
  %3105 = vmatpush.xpose.msra.mxu0 0.0
  %3106 = vmatpush.xpose.msra.mxu0 0.0
  %3107 = vmatpush.xpose.msra.mxu0 0.0
  %3108 = vmatpush.xpose.msra.mxu0 0.0
  %3109 = vmatpush.xpose.msra.mxu0 0.0
  %3110 = vmatpush.xpose.msra.mxu0 0.0
  %3111 = vmatpush.xpose.msra.mxu0 0.0
  %3112 = vmatpush.xpose.msra.mxu0 0.0
  %3113 = vmatpush.xpose.msra.mxu0 0.0
  %3114 = vmatpush.xpose.msra.mxu0 0.0
  %3115 = vmatpush.xpose.msra.mxu0 0.0
  %3116 = vmatpush.xpose.msra.mxu0 0.0
  %3117 = vmatpush.xpose.msra.mxu0 0.0
  %3118 = vmatpush.xpose.msra.mxu0 %v3101
  %3119 = vmatmul.f32.gmra.mxu0 %v3099
  %v3120 = vpop.f32.mrf.mxu0
  %v3121 = vadd.f32 %v1955, %v3120
  %3122 = vdwg.mxu0
  %3123 = vrot.lane.b32.xlu0 %v2774, 112
  %v3124 = vpop.permute.xlu0 %3123
  %3125 = vrot.lane.b32.xlu0 %v1992, 112
  %v3126 = vpop.permute.xlu0 %3125
  %v3127 = vsel %vm215, %v3124, 0
  %v3129 = vsel %vm215, %v3126, 0
  %3131 = vmatpush.xpose.msra.mxu0 0.0
  %3132 = vmatpush.xpose.msra.mxu0 0.0
  %3133 = vmatpush.xpose.msra.mxu0 0.0
  %3134 = vmatpush.xpose.msra.mxu0 0.0
  %3135 = vmatpush.xpose.msra.mxu0 0.0
  %3136 = vmatpush.xpose.msra.mxu0 0.0
  %3137 = vmatpush.xpose.msra.mxu0 0.0
  %3138 = vmatpush.xpose.msra.mxu0 0.0
  %3139 = vmatpush.xpose.msra.mxu0 0.0
  %3140 = vmatpush.xpose.msra.mxu0 0.0
  %3141 = vmatpush.xpose.msra.mxu0 0.0
  %3142 = vmatpush.xpose.msra.mxu0 0.0
  %3143 = vmatpush.xpose.msra.mxu0 0.0
  %3144 = vmatpush.xpose.msra.mxu0 0.0
  %3145 = vmatpush.xpose.msra.mxu0 0.0
  %3146 = vmatpush.xpose.msra.mxu0 %v3129
  %3147 = vmatmul.f32.gmra.mxu0 %v3127
  %v3148 = vpop.f32.mrf.mxu0
  %v3149 = vadd.f32 %v1956, %v3148
  %3150 = vdwg.mxu0
  %v3151 = vsel %vm215, %v3121, -inf
  %3152 = vmax.xlane.f32.xlu0 %v3151
  %v3153 = vpop.xlane.xlu0 %3152
  %v3154 = vsel %vm215, %v3149, -inf
  %3155 = vmax.xlane.f32.xlu0 %v3154
  %v3156 = vpop.xlane.xlu0 %3155
  %v3157 = vsub.f32 %v3121, %v3153
  %v3158 = vsub.f32 %v3149, %v3156
  %v3159 = vmul.f32 %v3157, 1.442695
  %v3160 = vpow.pop %v3159
  %v3161 = vmul.f32 %v3158, 1.442695
  %v3162 = vpow.pop %v3161
  %v3163 = vsel %vm215, %v3160, 0.0
  %3164 = vadd.xlane.f32.xlu0 %v3163
  %v3165 = vpop.xlane.xlu0 %3164
  %v3166 = vsel %vm215, %v3162, 0.0
  %3167 = vadd.xlane.f32.xlu0 %v3166
  %v3168 = vpop.xlane.xlu0 %3167
  %v3169 = vrcp.pop %v3165
  %v3170 = vrcp.pop %v3168
  %v3171 = vmul.f32 %v3160, %v3169
  %v3172 = vmul.f32 %v3162, %v3170
  %3173 = vrot.lane.b32.xlu0 %v1989, 80
  %v3174 = vpop.permute.xlu0 %3173
  %v3177 = vsel %vm215, %v3171, 0
  %3179 = vmatpush.msra.mxu0 0.0
  %3180 = vmatpush.msra.mxu0 0.0
  %3181 = vmatpush.msra.mxu0 0.0
  %3182 = vmatpush.msra.mxu0 0.0
  %3183 = vmatpush.msra.mxu0 0.0
  %3184 = vmatpush.msra.mxu0 0.0
  %3185 = vmatpush.msra.mxu0 0.0
  %3186 = vmatpush.msra.mxu0 0.0
  %3187 = vmatpush.msra.mxu0 0.0
  %3188 = vmatpush.msra.mxu0 0.0
  %3189 = vmatpush.msra.mxu0 0.0
  %3190 = vmatpush.msra.mxu0 0.0
  %3191 = vmatpush.msra.mxu0 0.0
  %3192 = vmatpush.msra.mxu0 0.0
  %3193 = vmatpush.msra.mxu0 0.0
  %3194 = vmatpush.msra.mxu0 %v3174
  %3195 = vmatmul.f32.gmra.mxu0 %v3177
  %v3196 = vpop.f32.mrf.mxu0
  %v3197 = vadd.f32 0.0, %v3196
  %3198 = vdwg.mxu0
  %3199 = vrot.lane.b32.xlu0 %v1992, 80
  %v3200 = vpop.permute.xlu0 %3199
  %v3203 = vsel %vm215, %v3172, 0
  %3205 = vmatpush.msra.mxu0 0.0
  %3206 = vmatpush.msra.mxu0 0.0
  %3207 = vmatpush.msra.mxu0 0.0
  %3208 = vmatpush.msra.mxu0 0.0
  %3209 = vmatpush.msra.mxu0 0.0
  %3210 = vmatpush.msra.mxu0 0.0
  %3211 = vmatpush.msra.mxu0 0.0
  %3212 = vmatpush.msra.mxu0 0.0
  %3213 = vmatpush.msra.mxu0 0.0
  %3214 = vmatpush.msra.mxu0 0.0
  %3215 = vmatpush.msra.mxu0 0.0
  %3216 = vmatpush.msra.mxu0 0.0
  %3217 = vmatpush.msra.mxu0 0.0
  %3218 = vmatpush.msra.mxu0 0.0
  %3219 = vmatpush.msra.mxu0 0.0
  %3220 = vmatpush.msra.mxu0 %v3200
  %3221 = vmatmul.f32.gmra.mxu0 %v3203
  %v3222 = vpop.f32.mrf.mxu0
  %v3223 = vadd.f32 0.0, %v3222
  %3224 = vdwg.mxu0
  %v3226 = vsel %vm215, %v3197, 0
  %v3229 = vsel %vm215, %v3223, 0
  %3231 = vmatpush.msra.mxu0 0.0
  %3232 = vmatpush.msra.mxu0 0.0
  %3233 = vmatpush.msra.mxu0 0.0
  %3234 = vmatpush.msra.mxu0 0.0
  %3235 = vmatpush.msra.mxu0 0.0
  %3236 = vmatpush.msra.mxu0 0.0
  %3237 = vmatpush.msra.mxu0 0.0
  %3238 = vmatpush.msra.mxu0 0.0
  %3239 = vmatpush.msra.mxu0 0.0
  %3240 = vmatpush.msra.mxu0 0.0
  %3241 = vmatpush.msra.mxu0 0.0
  %3242 = vmatpush.msra.mxu0 0.0
  %3243 = vmatpush.msra.mxu0 0.0
  %3244 = vmatpush.msra.mxu0 0.0
  %3245 = vmatpush.msra.mxu0 0.0
  %3246 = vmatpush.msra.mxu0 %v2778
  %3247 = vmatmul.f32.gmra.mxu0 %v3226
  %v3248 = vpop.f32.mrf.mxu0
  %v3249 = vadd.f32 0.0, %v3248
  %3250 = vmatmul.f32.gmra.mxu0 %v3229
  %v3251 = vpop.f32.mrf.mxu0
  %v3252 = vadd.f32 0.0, %v3251
  %3253 = vdwg.mxu0
  %v3254 = vadd.f32 %v3090, %v3249
  %v3255 = vadd.f32 %v3093, %v3252
  %3256 = vrot.lane.b32.xlu0 %v2771, 104
  %v3257 = vpop.permute.xlu0 %3256
  %3258 = vrot.lane.b32.xlu0 %v1989, 104
  %v3259 = vpop.permute.xlu0 %3258
  %v3260 = vsel %vm215, %v3257, 0
  %v3262 = vsel %vm215, %v3259, 0
  %3264 = vmatpush.xpose.msra.mxu0 0.0
  %3265 = vmatpush.xpose.msra.mxu0 0.0
  %3266 = vmatpush.xpose.msra.mxu0 0.0
  %3267 = vmatpush.xpose.msra.mxu0 0.0
  %3268 = vmatpush.xpose.msra.mxu0 0.0
  %3269 = vmatpush.xpose.msra.mxu0 0.0
  %3270 = vmatpush.xpose.msra.mxu0 0.0
  %3271 = vmatpush.xpose.msra.mxu0 0.0
  %3272 = vmatpush.xpose.msra.mxu0 0.0
  %3273 = vmatpush.xpose.msra.mxu0 0.0
  %3274 = vmatpush.xpose.msra.mxu0 0.0
  %3275 = vmatpush.xpose.msra.mxu0 0.0
  %3276 = vmatpush.xpose.msra.mxu0 0.0
  %3277 = vmatpush.xpose.msra.mxu0 0.0
  %3278 = vmatpush.xpose.msra.mxu0 0.0
  %3279 = vmatpush.xpose.msra.mxu0 %v3262
  %3280 = vmatmul.f32.gmra.mxu0 %v3260
  %v3281 = vpop.f32.mrf.mxu0
  %v3282 = vadd.f32 %v1955, %v3281
  %3283 = vdwg.mxu0
  %3284 = vrot.lane.b32.xlu0 %v2774, 104
  %v3285 = vpop.permute.xlu0 %3284
  %3286 = vrot.lane.b32.xlu0 %v1992, 104
  %v3287 = vpop.permute.xlu0 %3286
  %v3288 = vsel %vm215, %v3285, 0
  %v3290 = vsel %vm215, %v3287, 0
  %3292 = vmatpush.xpose.msra.mxu0 0.0
  %3293 = vmatpush.xpose.msra.mxu0 0.0
  %3294 = vmatpush.xpose.msra.mxu0 0.0
  %3295 = vmatpush.xpose.msra.mxu0 0.0
  %3296 = vmatpush.xpose.msra.mxu0 0.0
  %3297 = vmatpush.xpose.msra.mxu0 0.0
  %3298 = vmatpush.xpose.msra.mxu0 0.0
  %3299 = vmatpush.xpose.msra.mxu0 0.0
  %3300 = vmatpush.xpose.msra.mxu0 0.0
  %3301 = vmatpush.xpose.msra.mxu0 0.0
  %3302 = vmatpush.xpose.msra.mxu0 0.0
  %3303 = vmatpush.xpose.msra.mxu0 0.0
  %3304 = vmatpush.xpose.msra.mxu0 0.0
  %3305 = vmatpush.xpose.msra.mxu0 0.0
  %3306 = vmatpush.xpose.msra.mxu0 0.0
  %3307 = vmatpush.xpose.msra.mxu0 %v3290
  %3308 = vmatmul.f32.gmra.mxu0 %v3288
  %v3309 = vpop.f32.mrf.mxu0
  %v3310 = vadd.f32 %v1956, %v3309
  %3311 = vdwg.mxu0
  %v3312 = vsel %vm215, %v3282, -inf
  %3313 = vmax.xlane.f32.xlu0 %v3312
  %v3314 = vpop.xlane.xlu0 %3313
  %v3315 = vsel %vm215, %v3310, -inf
  %3316 = vmax.xlane.f32.xlu0 %v3315
  %v3317 = vpop.xlane.xlu0 %3316
  %v3318 = vsub.f32 %v3282, %v3314
  %v3319 = vsub.f32 %v3310, %v3317
  %v3320 = vmul.f32 %v3318, 1.442695
  %v3321 = vpow.pop %v3320
  %v3322 = vmul.f32 %v3319, 1.442695
  %v3323 = vpow.pop %v3322
  %v3324 = vsel %vm215, %v3321, 0.0
  %3325 = vadd.xlane.f32.xlu0 %v3324
  %v3326 = vpop.xlane.xlu0 %3325
  %v3327 = vsel %vm215, %v3323, 0.0
  %3328 = vadd.xlane.f32.xlu0 %v3327
  %v3329 = vpop.xlane.xlu0 %3328
  %v3330 = vrcp.pop %v3326
  %v3331 = vrcp.pop %v3329
  %v3332 = vmul.f32 %v3321, %v3330
  %v3333 = vmul.f32 %v3323, %v3331
  %3334 = vrot.lane.b32.xlu0 %v1989, 72
  %v3335 = vpop.permute.xlu0 %3334
  %v3338 = vsel %vm215, %v3332, 0
  %3340 = vmatpush.msra.mxu0 0.0
  %3341 = vmatpush.msra.mxu0 0.0
  %3342 = vmatpush.msra.mxu0 0.0
  %3343 = vmatpush.msra.mxu0 0.0
  %3344 = vmatpush.msra.mxu0 0.0
  %3345 = vmatpush.msra.mxu0 0.0
  %3346 = vmatpush.msra.mxu0 0.0
  %3347 = vmatpush.msra.mxu0 0.0
  %3348 = vmatpush.msra.mxu0 0.0
  %3349 = vmatpush.msra.mxu0 0.0
  %3350 = vmatpush.msra.mxu0 0.0
  %3351 = vmatpush.msra.mxu0 0.0
  %3352 = vmatpush.msra.mxu0 0.0
  %3353 = vmatpush.msra.mxu0 0.0
  %3354 = vmatpush.msra.mxu0 0.0
  %3355 = vmatpush.msra.mxu0 %v3335
  %3356 = vmatmul.f32.gmra.mxu0 %v3338
  %v3357 = vpop.f32.mrf.mxu0
  %v3358 = vadd.f32 0.0, %v3357
  %3359 = vdwg.mxu0
  %3360 = vrot.lane.b32.xlu0 %v1992, 72
  %v3361 = vpop.permute.xlu0 %3360
  %v3364 = vsel %vm215, %v3333, 0
  %3366 = vmatpush.msra.mxu0 0.0
  %3367 = vmatpush.msra.mxu0 0.0
  %3368 = vmatpush.msra.mxu0 0.0
  %3369 = vmatpush.msra.mxu0 0.0
  %3370 = vmatpush.msra.mxu0 0.0
  %3371 = vmatpush.msra.mxu0 0.0
  %3372 = vmatpush.msra.mxu0 0.0
  %3373 = vmatpush.msra.mxu0 0.0
  %3374 = vmatpush.msra.mxu0 0.0
  %3375 = vmatpush.msra.mxu0 0.0
  %3376 = vmatpush.msra.mxu0 0.0
  %3377 = vmatpush.msra.mxu0 0.0
  %3378 = vmatpush.msra.mxu0 0.0
  %3379 = vmatpush.msra.mxu0 0.0
  %3380 = vmatpush.msra.mxu0 0.0
  %3381 = vmatpush.msra.mxu0 %v3361
  %3382 = vmatmul.f32.gmra.mxu0 %v3364
  %v3383 = vpop.f32.mrf.mxu0
  %v3384 = vadd.f32 0.0, %v3383
  %3385 = vdwg.mxu0
  %v3387 = vsel %vm215, %v3358, 0
  %v3390 = vsel %vm215, %v3384, 0
  %3392 = vmatpush.msra.mxu0 0.0
  %3393 = vmatpush.msra.mxu0 0.0
  %3394 = vmatpush.msra.mxu0 0.0
  %3395 = vmatpush.msra.mxu0 0.0
  %3396 = vmatpush.msra.mxu0 0.0
  %3397 = vmatpush.msra.mxu0 0.0
  %3398 = vmatpush.msra.mxu0 0.0
  %3399 = vmatpush.msra.mxu0 0.0
  %3400 = vmatpush.msra.mxu0 0.0
  %3401 = vmatpush.msra.mxu0 0.0
  %3402 = vmatpush.msra.mxu0 0.0
  %3403 = vmatpush.msra.mxu0 0.0
  %3404 = vmatpush.msra.mxu0 0.0
  %3405 = vmatpush.msra.mxu0 0.0
  %3406 = vmatpush.msra.mxu0 0.0
  %3407 = vmatpush.msra.mxu0 %v2779
  %3408 = vmatmul.f32.gmra.mxu0 %v3387
  %v3409 = vpop.f32.mrf.mxu0
  %v3410 = vadd.f32 0.0, %v3409
  %3411 = vmatmul.f32.gmra.mxu0 %v3390
  %v3412 = vpop.f32.mrf.mxu0
  %v3413 = vadd.f32 0.0, %v3412
  %3414 = vdwg.mxu0
  %v3415 = vadd.f32 %v3254, %v3410
  %v3416 = vadd.f32 %v3255, %v3413
  %v3418 = vperm.slane %v2780, 0
  %v3420 = vadd.f32 %v3415, %v3418
  %v3421 = vadd.f32 %v3416, %v3418
  %v3422 = vadd.f32 %v2737, %v3420
  %v3423 = vadd.f32 %v2738, %v3421
  %v3424 = vld [vmem:[%s59] sm:$0x1]
  %v3425 = vld [vmem:[%s61] sm:$0x1]
  %v3426 = vsel %vm177, %v3422, 0.0
  %3427 = vadd.xlane.f32.xlu0 %v3426
  %v3428 = vpop.xlane.xlu0 %3427
  %v3429 = vsel %vm177, %v3423, 0.0
  %3430 = vadd.xlane.f32.xlu0 %v3429
  %v3431 = vpop.xlane.xlu0 %3430
  %v3432 = vmul.f32 %v3428, %v872
  %v3433 = vmul.f32 %v3431, %v872
  %v3434 = vsub.f32 %v3422, %v3432
  %v3435 = vsub.f32 %v3423, %v3433
  %v3436 = vmul.f32 %v3434, %v3434
  %v3437 = vmul.f32 %v3435, %v3435
  %v3438 = vsel %vm177, %v3436, 0.0
  %3439 = vadd.xlane.f32.xlu0 %v3438
  %v3440 = vpop.xlane.xlu0 %3439
  %v3441 = vsel %vm177, %v3437, 0.0
  %3442 = vadd.xlane.f32.xlu0 %v3441
  %v3443 = vpop.xlane.xlu0 %3442
  %v3444 = vmul.f32 %v3440, %v872
  %v3445 = vmul.f32 %v3443, %v872
  %v3446 = vadd.f32 %v3444, 1e-05
  %v3447 = vadd.f32 %v3445, 1e-05
  %v3448 = vrsqrt.pop %v3446
  %v3449 = vmul.f32 %v3448, %v3446
  %v3450 = vmul.f32 %v3449, %v3448
  %v3451 = vmul.f32 0.5, %v3450
  %v3452 = vsub.f32 1.5, %v3451
  %v3453 = vmul.f32 %v3448, %v3452
  %vm3454 = vweird.f32 %v3446
  %vm3455 = vweird.f32 %v3448
  %vm3456 = vmor %vm3454, %vm3455
  %v3457 = vsel %vm3456, %v3448, %v3453
  %v3458 = vrsqrt.pop %v3447
  %v3459 = vmul.f32 %v3458, %v3447
  %v3460 = vmul.f32 %v3459, %v3458
  %v3461 = vmul.f32 0.5, %v3460
  %v3462 = vsub.f32 1.5, %v3461
  %v3463 = vmul.f32 %v3458, %v3462
  %vm3464 = vweird.f32 %v3447
  %vm3465 = vweird.f32 %v3458
  %vm3466 = vmor %vm3464, %vm3465
  %v3467 = vsel %vm3466, %v3458, %v3463
  %v3468 = vmul.f32 %v3434, %v3457
  %v3469 = vmul.f32 %v3435, %v3467
  %v3471 = vperm.slane %v3424, 0
  %v3473 = vmul.f32 %v3468, %v3471
  %v3474 = vmul.f32 %v3469, %v3471
  %v3476 = vperm.slane %v3425, 0
  %v3478 = vadd.f32 %v3473, %v3476
  %v3479 = vadd.f32 %v3474, %v3476
  %v3480 = vld [vmem:[%s63] sm:$0xff]
  %v3481 = vld [vmem:[%s63 + $0x8] sm:$0xff]
  %v3482 = vld [vmem:[%s63 + $0x10] sm:$0xff]
  %v3483 = vld [vmem:[%s63 + $0x18] sm:$0xff]
  %v3484 = vld [vmem:[%s65] sm:$0x1]
  %v3486 = vperm.slane %v3484, 0
  %v3489 = vsel %vm177, %v3478, 0
  %v3492 = vsel %vm177, %v3479, 0
  %3494 = vmatpush.msra.mxu0 0.0
  %3495 = vmatpush.msra.mxu0 0.0
  %3496 = vmatpush.msra.mxu0 0.0
  %3497 = vmatpush.msra.mxu0 0.0
  %3498 = vmatpush.msra.mxu0 0.0
  %3499 = vmatpush.msra.mxu0 0.0
  %3500 = vmatpush.msra.mxu0 0.0
  %3501 = vmatpush.msra.mxu0 0.0
  %3502 = vmatpush.msra.mxu0 0.0
  %3503 = vmatpush.msra.mxu0 0.0
  %3504 = vmatpush.msra.mxu0 0.0
  %3505 = vmatpush.msra.mxu0 0.0
  %3506 = vmatpush.msra.mxu0 %v3483
  %3507 = vmatpush.msra.mxu0 %v3482
  %3508 = vmatpush.msra.mxu0 %v3481
  %3509 = vmatpush.msra.mxu0 %v3480
  %3510 = vmatmul.f32.gmra.mxu0 %v3489
  %v3511 = vpop.f32.mrf.mxu0
  %v3512 = vadd.f32 %v3486, %v3511
  %3513 = vmatmul.f32.gmra.mxu0 %v3492
  %v3514 = vpop.f32.mrf.mxu0
  %v3515 = vadd.f32 %v3486, %v3514
  %3516 = vdwg.mxu0
  %v3517 = vmax.f32 %v3512, 0.0
  %v3518 = vmax.f32 %v3515, 0.0
  %v3519 = vld [vmem:[%s67] sm:$0xff]
  %v3520 = vld [vmem:[%s67 + $0x8] sm:$0xff]
  %v3521 = vld [vmem:[%s67 + $0x10] sm:$0xff]
  %v3522 = vld [vmem:[%s67 + $0x18] sm:$0xff]
  %v3523 = vld [vmem:[%s67 + $0x20] sm:$0xff]
  %v3524 = vld [vmem:[%s67 + $0x28] sm:$0xff]
  %v3525 = vld [vmem:[%s67 + $0x30] sm:$0xff]
  %v3526 = vld [vmem:[%s67 + $0x38] sm:$0xff]
  %v3527 = vld [vmem:[%s69] sm:$0x1]
  %v3529 = vperm.slane %v3527, 0
  %v3532 = vsel %vm972, %v3517, 0
  %v3535 = vsel %vm972, %v3518, 0
  %3537 = vmatpush.msra.mxu0 0.0
  %3538 = vmatpush.msra.mxu0 0.0
  %3539 = vmatpush.msra.mxu0 0.0
  %3540 = vmatpush.msra.mxu0 0.0
  %3541 = vmatpush.msra.mxu0 0.0
  %3542 = vmatpush.msra.mxu0 0.0
  %3543 = vmatpush.msra.mxu0 0.0
  %3544 = vmatpush.msra.mxu0 0.0
  %3545 = vmatpush.msra.mxu0 %v3526
  %3546 = vmatpush.msra.mxu0 %v3525
  %3547 = vmatpush.msra.mxu0 %v3524
  %3548 = vmatpush.msra.mxu0 %v3523
  %3549 = vmatpush.msra.mxu0 %v3522
  %3550 = vmatpush.msra.mxu0 %v3521
  %3551 = vmatpush.msra.mxu0 %v3520
  %3552 = vmatpush.msra.mxu0 %v3519
  %3553 = vmatmul.f32.gmra.mxu0 %v3532
  %v3554 = vpop.f32.mrf.mxu0
  %v3555 = vadd.f32 %v3529, %v3554
  %3556 = vmatmul.f32.gmra.mxu0 %v3535
  %v3557 = vpop.f32.mrf.mxu0
  %v3558 = vadd.f32 %v3529, %v3557
  %3559 = vdwg.mxu0
  %v3560 = vadd.f32 %v3478, %v3555
  %v3561 = vadd.f32 %v3479, %v3558
  %v3562 = vld [vmem:[%s71] sm:$0x1]
  %v3563 = vld [vmem:[%s73] sm:$0x1]
  %v3564 = vsel %vm177, %v3560, 0.0
  %3565 = vadd.xlane.f32.xlu0 %v3564
  %v3566 = vpop.xlane.xlu0 %3565
  %v3567 = vsel %vm177, %v3561, 0.0
  %3568 = vadd.xlane.f32.xlu0 %v3567
  %v3569 = vpop.xlane.xlu0 %3568
  %v3570 = vmul.f32 %v3566, %v872
  %v3571 = vmul.f32 %v3569, %v872
  %v3572 = vsub.f32 %v3560, %v3570
  %v3573 = vsub.f32 %v3561, %v3571
  %v3574 = vmul.f32 %v3572, %v3572
  %v3575 = vmul.f32 %v3573, %v3573
  %v3576 = vsel %vm177, %v3574, 0.0
  %3577 = vadd.xlane.f32.xlu0 %v3576
  %v3578 = vpop.xlane.xlu0 %3577
  %v3579 = vsel %vm177, %v3575, 0.0
  %3580 = vadd.xlane.f32.xlu0 %v3579
  %v3581 = vpop.xlane.xlu0 %3580
  %v3582 = vmul.f32 %v3578, %v872
  %v3583 = vmul.f32 %v3581, %v872
  %v3584 = vadd.f32 %v3582, 1e-05
  %v3585 = vadd.f32 %v3583, 1e-05
  %v3586 = vrsqrt.pop %v3584
  %v3587 = vmul.f32 %v3586, %v3584
  %v3588 = vmul.f32 %v3587, %v3586
  %v3589 = vmul.f32 0.5, %v3588
  %v3590 = vsub.f32 1.5, %v3589
  %v3591 = vmul.f32 %v3586, %v3590
  %vm3592 = vweird.f32 %v3584
  %vm3593 = vweird.f32 %v3586
  %vm3594 = vmor %vm3592, %vm3593
  %v3595 = vsel %vm3594, %v3586, %v3591
  %v3596 = vrsqrt.pop %v3585
  %v3597 = vmul.f32 %v3596, %v3585
  %v3598 = vmul.f32 %v3597, %v3596
  %v3599 = vmul.f32 0.5, %v3598
  %v3600 = vsub.f32 1.5, %v3599
  %v3601 = vmul.f32 %v3596, %v3600
  %vm3602 = vweird.f32 %v3585
  %vm3603 = vweird.f32 %v3596
  %vm3604 = vmor %vm3602, %vm3603
  %v3605 = vsel %vm3604, %v3596, %v3601
  %v3606 = vmul.f32 %v3572, %v3595
  %v3607 = vmul.f32 %v3573, %v3605
  %v3609 = vperm.slane %v3562, 0
  %v3611 = vmul.f32 %v3606, %v3609
  %v3612 = vmul.f32 %v3607, %v3609
  %v3614 = vperm.slane %v3563, 0
  %v3616 = vadd.f32 %v3611, %v3614
  %v3617 = vadd.f32 %v3612, %v3614
  %s3618 = scalar_lea.vmem %s35, 32
  %v3619 = vld [vmem:[%s3618] sm:$0xff]
  %v3620 = vld [vmem:[%s3618 + $0x8] sm:$0xff]
  %v3621 = vld [vmem:[%s3618 + $0x10] sm:$0xff]
  %v3622 = vld [vmem:[%s3618 + $0x18] sm:$0xff]
  %s3623 = scalar_lea.vmem %s37, 1
  %v3624 = vld [vmem:[%s3623] sm:$0x1]
  %v3626 = vperm.slane %v3624, 0
  %v3629 = vsel %vm177, %v3616, 0
  %v3632 = vsel %vm177, %v3617, 0
  %3634 = vmatpush.msra.mxu0 0.0
  %3635 = vmatpush.msra.mxu0 0.0
  %3636 = vmatpush.msra.mxu0 0.0
  %3637 = vmatpush.msra.mxu0 0.0
  %3638 = vmatpush.msra.mxu0 0.0
  %3639 = vmatpush.msra.mxu0 0.0
  %3640 = vmatpush.msra.mxu0 0.0
  %3641 = vmatpush.msra.mxu0 0.0
  %3642 = vmatpush.msra.mxu0 0.0
  %3643 = vmatpush.msra.mxu0 0.0
  %3644 = vmatpush.msra.mxu0 0.0
  %3645 = vmatpush.msra.mxu0 0.0
  %3646 = vmatpush.msra.mxu0 %v3622
  %3647 = vmatpush.msra.mxu0 %v3621
  %3648 = vmatpush.msra.mxu0 %v3620
  %3649 = vmatpush.msra.mxu0 %v3619
  %3650 = vmatmul.f32.gmra.mxu0 %v3629
  %v3651 = vpop.f32.mrf.mxu0
  %v3652 = vadd.f32 %v3626, %v3651
  %3653 = vmatmul.f32.gmra.mxu0 %v3632
  %v3654 = vpop.f32.mrf.mxu0
  %v3655 = vadd.f32 %v3626, %v3654
  %3656 = vdwg.mxu0
  %s3657 = scalar_lea.vmem %s39, 32
  %v3658 = vld [vmem:[%s3657] sm:$0xff]
  %v3659 = vld [vmem:[%s3657 + $0x8] sm:$0xff]
  %v3660 = vld [vmem:[%s3657 + $0x10] sm:$0xff]
  %v3661 = vld [vmem:[%s3657 + $0x18] sm:$0xff]
  %s3662 = scalar_lea.vmem %s41, 1
  %v3663 = vld [vmem:[%s3662] sm:$0x1]
  %3665 = vrot.lane.b32.xlu0 %v3652, 96
  %v3666 = vpop.permute.xlu0 %3665
  %v3667 = vsel %vm215, %v3652, 0
  %v3669 = vsel %vm215, %v3666, 0
  %3671 = vmatpush.xpose.msra.mxu0 0.0
  %3672 = vmatpush.xpose.msra.mxu0 0.0
  %3673 = vmatpush.xpose.msra.mxu0 0.0
  %3674 = vmatpush.xpose.msra.mxu0 0.0
  %3675 = vmatpush.xpose.msra.mxu0 0.0
  %3676 = vmatpush.xpose.msra.mxu0 0.0
  %3677 = vmatpush.xpose.msra.mxu0 0.0
  %3678 = vmatpush.xpose.msra.mxu0 0.0
  %3679 = vmatpush.xpose.msra.mxu0 0.0
  %3680 = vmatpush.xpose.msra.mxu0 0.0
  %3681 = vmatpush.xpose.msra.mxu0 0.0
  %3682 = vmatpush.xpose.msra.mxu0 0.0
  %3683 = vmatpush.xpose.msra.mxu0 0.0
  %3684 = vmatpush.xpose.msra.mxu0 0.0
  %3685 = vmatpush.xpose.msra.mxu0 0.0
  %3686 = vmatpush.xpose.msra.mxu0 %v3669
  %3687 = vmatmul.f32.gmra.mxu0 %v3667
  %v3688 = vpop.f32.mrf.mxu0
  %v3689 = vadd.f32 %v1953, %v3688
  %3690 = vdwg.mxu0
  %3692 = vrot.lane.b32.xlu0 %v3655, 96
  %v3693 = vpop.permute.xlu0 %3692
  %v3694 = vsel %vm215, %v3655, 0
  %v3696 = vsel %vm215, %v3693, 0
  %3698 = vmatpush.xpose.msra.mxu0 0.0
  %3699 = vmatpush.xpose.msra.mxu0 0.0
  %3700 = vmatpush.xpose.msra.mxu0 0.0
  %3701 = vmatpush.xpose.msra.mxu0 0.0
  %3702 = vmatpush.xpose.msra.mxu0 0.0
  %3703 = vmatpush.xpose.msra.mxu0 0.0
  %3704 = vmatpush.xpose.msra.mxu0 0.0
  %3705 = vmatpush.xpose.msra.mxu0 0.0
  %3706 = vmatpush.xpose.msra.mxu0 0.0
  %3707 = vmatpush.xpose.msra.mxu0 0.0
  %3708 = vmatpush.xpose.msra.mxu0 0.0
  %3709 = vmatpush.xpose.msra.mxu0 0.0
  %3710 = vmatpush.xpose.msra.mxu0 0.0
  %3711 = vmatpush.xpose.msra.mxu0 0.0
  %3712 = vmatpush.xpose.msra.mxu0 0.0
  %3713 = vmatpush.xpose.msra.mxu0 %v3696
  %3714 = vmatmul.f32.gmra.mxu0 %v3694
  %v3715 = vpop.f32.mrf.mxu0
  %v3716 = vadd.f32 %v1954, %v3715
  %3717 = vdwg.mxu0
  %v3718 = vsel %vm215, %v3689, -inf
  %3719 = vmax.xlane.f32.xlu0 %v3718
  %v3720 = vpop.xlane.xlu0 %3719
  %v3721 = vsel %vm215, %v3716, -inf
  %3722 = vmax.xlane.f32.xlu0 %v3721
  %v3723 = vpop.xlane.xlu0 %3722
  %v3724 = vsub.f32 %v3689, %v3720
  %v3725 = vsub.f32 %v3716, %v3723
  %v3726 = vmul.f32 %v3724, 1.442695
  %v3727 = vpow.pop %v3726
  %v3728 = vmul.f32 %v3725, 1.442695
  %v3729 = vpow.pop %v3728
  %v3730 = vsel %vm215, %v3727, 0.0
  %3731 = vadd.xlane.f32.xlu0 %v3730
  %v3732 = vpop.xlane.xlu0 %3731
  %v3733 = vsel %vm215, %v3729, 0.0
  %3734 = vadd.xlane.f32.xlu0 %v3733
  %v3735 = vpop.xlane.xlu0 %3734
  %v3736 = vrcp.pop %v3732
  %v3737 = vrcp.pop %v3735
  %v3738 = vmul.f32 %v3727, %v3736
  %v3739 = vmul.f32 %v3729, %v3737
  %3740 = vrot.lane.b32.xlu0 %v3652, 64
  %v3741 = vpop.permute.xlu0 %3740
  %v3744 = vsel %vm215, %v3738, 0
  %3746 = vmatpush.msra.mxu0 0.0
  %3747 = vmatpush.msra.mxu0 0.0
  %3748 = vmatpush.msra.mxu0 0.0
  %3749 = vmatpush.msra.mxu0 0.0
  %3750 = vmatpush.msra.mxu0 0.0
  %3751 = vmatpush.msra.mxu0 0.0
  %3752 = vmatpush.msra.mxu0 0.0
  %3753 = vmatpush.msra.mxu0 0.0
  %3754 = vmatpush.msra.mxu0 0.0
  %3755 = vmatpush.msra.mxu0 0.0
  %3756 = vmatpush.msra.mxu0 0.0
  %3757 = vmatpush.msra.mxu0 0.0
  %3758 = vmatpush.msra.mxu0 0.0
  %3759 = vmatpush.msra.mxu0 0.0
  %3760 = vmatpush.msra.mxu0 0.0
  %3761 = vmatpush.msra.mxu0 %v3741
  %3762 = vmatmul.f32.gmra.mxu0 %v3744
  %v3763 = vpop.f32.mrf.mxu0
  %v3764 = vadd.f32 0.0, %v3763
  %3765 = vdwg.mxu0
  %3766 = vrot.lane.b32.xlu0 %v3655, 64
  %v3767 = vpop.permute.xlu0 %3766
  %v3770 = vsel %vm215, %v3739, 0
  %3772 = vmatpush.msra.mxu0 0.0
  %3773 = vmatpush.msra.mxu0 0.0
  %3774 = vmatpush.msra.mxu0 0.0
  %3775 = vmatpush.msra.mxu0 0.0
  %3776 = vmatpush.msra.mxu0 0.0
  %3777 = vmatpush.msra.mxu0 0.0
  %3778 = vmatpush.msra.mxu0 0.0
  %3779 = vmatpush.msra.mxu0 0.0
  %3780 = vmatpush.msra.mxu0 0.0
  %3781 = vmatpush.msra.mxu0 0.0
  %3782 = vmatpush.msra.mxu0 0.0
  %3783 = vmatpush.msra.mxu0 0.0
  %3784 = vmatpush.msra.mxu0 0.0
  %3785 = vmatpush.msra.mxu0 0.0
  %3786 = vmatpush.msra.mxu0 0.0
  %3787 = vmatpush.msra.mxu0 %v3767
  %3788 = vmatmul.f32.gmra.mxu0 %v3770
  %v3789 = vpop.f32.mrf.mxu0
  %v3790 = vadd.f32 0.0, %v3789
  %3791 = vdwg.mxu0
  %3792 = vrot.lane.b32.xlu0 %v3652, 120
  %v3793 = vpop.permute.xlu0 %3792
  %3794 = vrot.lane.b32.xlu0 %v3652, 88
  %v3795 = vpop.permute.xlu0 %3794
  %v3796 = vsel %vm215, %v3793, 0
  %v3798 = vsel %vm215, %v3795, 0
  %3800 = vmatpush.xpose.msra.mxu0 0.0
  %3801 = vmatpush.xpose.msra.mxu0 0.0
  %3802 = vmatpush.xpose.msra.mxu0 0.0
  %3803 = vmatpush.xpose.msra.mxu0 0.0
  %3804 = vmatpush.xpose.msra.mxu0 0.0
  %3805 = vmatpush.xpose.msra.mxu0 0.0
  %3806 = vmatpush.xpose.msra.mxu0 0.0
  %3807 = vmatpush.xpose.msra.mxu0 0.0
  %3808 = vmatpush.xpose.msra.mxu0 0.0
  %3809 = vmatpush.xpose.msra.mxu0 0.0
  %3810 = vmatpush.xpose.msra.mxu0 0.0
  %3811 = vmatpush.xpose.msra.mxu0 0.0
  %3812 = vmatpush.xpose.msra.mxu0 0.0
  %3813 = vmatpush.xpose.msra.mxu0 0.0
  %3814 = vmatpush.xpose.msra.mxu0 0.0
  %3815 = vmatpush.xpose.msra.mxu0 %v3798
  %3816 = vmatmul.f32.gmra.mxu0 %v3796
  %v3817 = vpop.f32.mrf.mxu0
  %v3818 = vadd.f32 %v1953, %v3817
  %3819 = vdwg.mxu0
  %3820 = vrot.lane.b32.xlu0 %v3655, 120
  %v3821 = vpop.permute.xlu0 %3820
  %3822 = vrot.lane.b32.xlu0 %v3655, 88
  %v3823 = vpop.permute.xlu0 %3822
  %v3824 = vsel %vm215, %v3821, 0
  %v3826 = vsel %vm215, %v3823, 0
  %3828 = vmatpush.xpose.msra.mxu0 0.0
  %3829 = vmatpush.xpose.msra.mxu0 0.0
  %3830 = vmatpush.xpose.msra.mxu0 0.0
  %3831 = vmatpush.xpose.msra.mxu0 0.0
  %3832 = vmatpush.xpose.msra.mxu0 0.0
  %3833 = vmatpush.xpose.msra.mxu0 0.0
  %3834 = vmatpush.xpose.msra.mxu0 0.0
  %3835 = vmatpush.xpose.msra.mxu0 0.0
  %3836 = vmatpush.xpose.msra.mxu0 0.0
  %3837 = vmatpush.xpose.msra.mxu0 0.0
  %3838 = vmatpush.xpose.msra.mxu0 0.0
  %3839 = vmatpush.xpose.msra.mxu0 0.0
  %3840 = vmatpush.xpose.msra.mxu0 0.0
  %3841 = vmatpush.xpose.msra.mxu0 0.0
  %3842 = vmatpush.xpose.msra.mxu0 0.0
  %3843 = vmatpush.xpose.msra.mxu0 %v3826
  %3844 = vmatmul.f32.gmra.mxu0 %v3824
  %v3845 = vpop.f32.mrf.mxu0
  %v3846 = vadd.f32 %v1954, %v3845
  %3847 = vdwg.mxu0
  %v3848 = vsel %vm215, %v3818, -inf
  %3849 = vmax.xlane.f32.xlu0 %v3848
  %v3850 = vpop.xlane.xlu0 %3849
  %v3851 = vsel %vm215, %v3846, -inf
  %3852 = vmax.xlane.f32.xlu0 %v3851
  %v3853 = vpop.xlane.xlu0 %3852
  %v3854 = vsub.f32 %v3818, %v3850
  %v3855 = vsub.f32 %v3846, %v3853
  %v3856 = vmul.f32 %v3854, 1.442695
  %v3857 = vpow.pop %v3856
  %v3858 = vmul.f32 %v3855, 1.442695
  %v3859 = vpow.pop %v3858
  %v3860 = vsel %vm215, %v3857, 0.0
  %3861 = vadd.xlane.f32.xlu0 %v3860
  %v3862 = vpop.xlane.xlu0 %3861
  %v3863 = vsel %vm215, %v3859, 0.0
  %3864 = vadd.xlane.f32.xlu0 %v3863
  %v3865 = vpop.xlane.xlu0 %3864
  %v3866 = vrcp.pop %v3862
  %v3867 = vrcp.pop %v3865
  %v3868 = vmul.f32 %v3857, %v3866
  %v3869 = vmul.f32 %v3859, %v3867
  %3870 = vrot.lane.b32.xlu0 %v3652, 56
  %v3871 = vpop.permute.xlu0 %3870
  %v3874 = vsel %vm215, %v3868, 0
  %3876 = vmatpush.msra.mxu0 0.0
  %3877 = vmatpush.msra.mxu0 0.0
  %3878 = vmatpush.msra.mxu0 0.0
  %3879 = vmatpush.msra.mxu0 0.0
  %3880 = vmatpush.msra.mxu0 0.0
  %3881 = vmatpush.msra.mxu0 0.0
  %3882 = vmatpush.msra.mxu0 0.0
  %3883 = vmatpush.msra.mxu0 0.0
  %3884 = vmatpush.msra.mxu0 0.0
  %3885 = vmatpush.msra.mxu0 0.0
  %3886 = vmatpush.msra.mxu0 0.0
  %3887 = vmatpush.msra.mxu0 0.0
  %3888 = vmatpush.msra.mxu0 0.0
  %3889 = vmatpush.msra.mxu0 0.0
  %3890 = vmatpush.msra.mxu0 0.0
  %3891 = vmatpush.msra.mxu0 %v3871
  %3892 = vmatmul.f32.gmra.mxu0 %v3874
  %v3893 = vpop.f32.mrf.mxu0
  %v3894 = vadd.f32 0.0, %v3893
  %3895 = vdwg.mxu0
  %3896 = vrot.lane.b32.xlu0 %v3655, 56
  %v3897 = vpop.permute.xlu0 %3896
  %v3900 = vsel %vm215, %v3869, 0
  %3902 = vmatpush.msra.mxu0 0.0
  %3903 = vmatpush.msra.mxu0 0.0
  %3904 = vmatpush.msra.mxu0 0.0
  %3905 = vmatpush.msra.mxu0 0.0
  %3906 = vmatpush.msra.mxu0 0.0
  %3907 = vmatpush.msra.mxu0 0.0
  %3908 = vmatpush.msra.mxu0 0.0
  %3909 = vmatpush.msra.mxu0 0.0
  %3910 = vmatpush.msra.mxu0 0.0
  %3911 = vmatpush.msra.mxu0 0.0
  %3912 = vmatpush.msra.mxu0 0.0
  %3913 = vmatpush.msra.mxu0 0.0
  %3914 = vmatpush.msra.mxu0 0.0
  %3915 = vmatpush.msra.mxu0 0.0
  %3916 = vmatpush.msra.mxu0 0.0
  %3917 = vmatpush.msra.mxu0 %v3897
  %3918 = vmatmul.f32.gmra.mxu0 %v3900
  %v3919 = vpop.f32.mrf.mxu0
  %v3920 = vadd.f32 0.0, %v3919
  %3921 = vdwg.mxu0
  %v3923 = vsel %vm215, %v3894, 0
  %v3926 = vsel %vm215, %v3920, 0
  %3928 = vmatpush.msra.mxu0 0.0
  %3929 = vmatpush.msra.mxu0 0.0
  %3930 = vmatpush.msra.mxu0 0.0
  %3931 = vmatpush.msra.mxu0 0.0
  %3932 = vmatpush.msra.mxu0 0.0
  %3933 = vmatpush.msra.mxu0 0.0
  %3934 = vmatpush.msra.mxu0 0.0
  %3935 = vmatpush.msra.mxu0 0.0
  %3936 = vmatpush.msra.mxu0 0.0
  %3937 = vmatpush.msra.mxu0 0.0
  %3938 = vmatpush.msra.mxu0 0.0
  %3939 = vmatpush.msra.mxu0 0.0
  %3940 = vmatpush.msra.mxu0 0.0
  %3941 = vmatpush.msra.mxu0 0.0
  %3942 = vmatpush.msra.mxu0 0.0
  %3943 = vmatpush.msra.mxu0 %v3659
  %3944 = vmatmul.f32.gmra.mxu0 %v3923
  %v3945 = vpop.f32.mrf.mxu0
  %v3946 = vadd.f32 0.0, %v3945
  %3947 = vmatmul.f32.gmra.mxu0 %v3926
  %v3948 = vpop.f32.mrf.mxu0
  %v3949 = vadd.f32 0.0, %v3948
  %3950 = vdwg.mxu0
  %v3952 = vsel %vm215, %v3764, 0
  %v3955 = vsel %vm215, %v3790, 0
  %3957 = vmatpush.msra.mxu0 0.0
  %3958 = vmatpush.msra.mxu0 0.0
  %3959 = vmatpush.msra.mxu0 0.0
  %3960 = vmatpush.msra.mxu0 0.0
  %3961 = vmatpush.msra.mxu0 0.0
  %3962 = vmatpush.msra.mxu0 0.0
  %3963 = vmatpush.msra.mxu0 0.0
  %3964 = vmatpush.msra.mxu0 0.0
  %3965 = vmatpush.msra.mxu0 0.0
  %3966 = vmatpush.msra.mxu0 0.0
  %3967 = vmatpush.msra.mxu0 0.0
  %3968 = vmatpush.msra.mxu0 0.0
  %3969 = vmatpush.msra.mxu0 0.0
  %3970 = vmatpush.msra.mxu0 0.0
  %3971 = vmatpush.msra.mxu0 0.0
  %3972 = vmatpush.msra.mxu0 %v3658
  %3973 = vmatmul.f32.gmra.mxu0 %v3952
  %v3974 = vpop.f32.mrf.mxu0
  %v3975 = vadd.f32 %v3946, %v3974
  %3976 = vmatmul.f32.gmra.mxu0 %v3955
  %v3977 = vpop.f32.mrf.mxu0
  %v3978 = vadd.f32 %v3949, %v3977
  %3979 = vdwg.mxu0
  %3980 = vrot.lane.b32.xlu0 %v3652, 112
  %v3981 = vpop.permute.xlu0 %3980
  %3982 = vrot.lane.b32.xlu0 %v3652, 80
  %v3983 = vpop.permute.xlu0 %3982
  %v3984 = vsel %vm215, %v3981, 0
  %v3986 = vsel %vm215, %v3983, 0
  %3988 = vmatpush.xpose.msra.mxu0 0.0
  %3989 = vmatpush.xpose.msra.mxu0 0.0
  %3990 = vmatpush.xpose.msra.mxu0 0.0
  %3991 = vmatpush.xpose.msra.mxu0 0.0
  %3992 = vmatpush.xpose.msra.mxu0 0.0
  %3993 = vmatpush.xpose.msra.mxu0 0.0
  %3994 = vmatpush.xpose.msra.mxu0 0.0
  %3995 = vmatpush.xpose.msra.mxu0 0.0
  %3996 = vmatpush.xpose.msra.mxu0 0.0
  %3997 = vmatpush.xpose.msra.mxu0 0.0
  %3998 = vmatpush.xpose.msra.mxu0 0.0
  %3999 = vmatpush.xpose.msra.mxu0 0.0
  %4000 = vmatpush.xpose.msra.mxu0 0.0
  %4001 = vmatpush.xpose.msra.mxu0 0.0
  %4002 = vmatpush.xpose.msra.mxu0 0.0
  %4003 = vmatpush.xpose.msra.mxu0 %v3986
  %4004 = vmatmul.f32.gmra.mxu0 %v3984
  %v4005 = vpop.f32.mrf.mxu0
  %v4006 = vadd.f32 %v1953, %v4005
  %4007 = vdwg.mxu0
  %4008 = vrot.lane.b32.xlu0 %v3655, 112
  %v4009 = vpop.permute.xlu0 %4008
  %4010 = vrot.lane.b32.xlu0 %v3655, 80
  %v4011 = vpop.permute.xlu0 %4010
  %v4012 = vsel %vm215, %v4009, 0
  %v4014 = vsel %vm215, %v4011, 0
  %4016 = vmatpush.xpose.msra.mxu0 0.0
  %4017 = vmatpush.xpose.msra.mxu0 0.0
  %4018 = vmatpush.xpose.msra.mxu0 0.0
  %4019 = vmatpush.xpose.msra.mxu0 0.0
  %4020 = vmatpush.xpose.msra.mxu0 0.0
  %4021 = vmatpush.xpose.msra.mxu0 0.0
  %4022 = vmatpush.xpose.msra.mxu0 0.0
  %4023 = vmatpush.xpose.msra.mxu0 0.0
  %4024 = vmatpush.xpose.msra.mxu0 0.0
  %4025 = vmatpush.xpose.msra.mxu0 0.0
  %4026 = vmatpush.xpose.msra.mxu0 0.0
  %4027 = vmatpush.xpose.msra.mxu0 0.0
  %4028 = vmatpush.xpose.msra.mxu0 0.0
  %4029 = vmatpush.xpose.msra.mxu0 0.0
  %4030 = vmatpush.xpose.msra.mxu0 0.0
  %4031 = vmatpush.xpose.msra.mxu0 %v4014
  %4032 = vmatmul.f32.gmra.mxu0 %v4012
  %v4033 = vpop.f32.mrf.mxu0
  %v4034 = vadd.f32 %v1954, %v4033
  %4035 = vdwg.mxu0
  %v4036 = vsel %vm215, %v4006, -inf
  %4037 = vmax.xlane.f32.xlu0 %v4036
  %v4038 = vpop.xlane.xlu0 %4037
  %v4039 = vsel %vm215, %v4034, -inf
  %4040 = vmax.xlane.f32.xlu0 %v4039
  %v4041 = vpop.xlane.xlu0 %4040
  %v4042 = vsub.f32 %v4006, %v4038
  %v4043 = vsub.f32 %v4034, %v4041
  %v4044 = vmul.f32 %v4042, 1.442695
  %v4045 = vpow.pop %v4044
  %v4046 = vmul.f32 %v4043, 1.442695
  %v4047 = vpow.pop %v4046
  %v4048 = vsel %vm215, %v4045, 0.0
  %4049 = vadd.xlane.f32.xlu0 %v4048
  %v4050 = vpop.xlane.xlu0 %4049
  %v4051 = vsel %vm215, %v4047, 0.0
  %4052 = vadd.xlane.f32.xlu0 %v4051
  %v4053 = vpop.xlane.xlu0 %4052
  %v4054 = vrcp.pop %v4050
  %v4055 = vrcp.pop %v4053
  %v4056 = vmul.f32 %v4045, %v4054
  %v4057 = vmul.f32 %v4047, %v4055
  %4058 = vrot.lane.b32.xlu0 %v3652, 48
  %v4059 = vpop.permute.xlu0 %4058
  %v4062 = vsel %vm215, %v4056, 0
  %4064 = vmatpush.msra.mxu0 0.0
  %4065 = vmatpush.msra.mxu0 0.0
  %4066 = vmatpush.msra.mxu0 0.0
  %4067 = vmatpush.msra.mxu0 0.0
  %4068 = vmatpush.msra.mxu0 0.0
  %4069 = vmatpush.msra.mxu0 0.0
  %4070 = vmatpush.msra.mxu0 0.0
  %4071 = vmatpush.msra.mxu0 0.0
  %4072 = vmatpush.msra.mxu0 0.0
  %4073 = vmatpush.msra.mxu0 0.0
  %4074 = vmatpush.msra.mxu0 0.0
  %4075 = vmatpush.msra.mxu0 0.0
  %4076 = vmatpush.msra.mxu0 0.0
  %4077 = vmatpush.msra.mxu0 0.0
  %4078 = vmatpush.msra.mxu0 0.0
  %4079 = vmatpush.msra.mxu0 %v4059
  %4080 = vmatmul.f32.gmra.mxu0 %v4062
  %v4081 = vpop.f32.mrf.mxu0
  %v4082 = vadd.f32 0.0, %v4081
  %4083 = vdwg.mxu0
  %4084 = vrot.lane.b32.xlu0 %v3655, 48
  %v4085 = vpop.permute.xlu0 %4084
  %v4088 = vsel %vm215, %v4057, 0
  %4090 = vmatpush.msra.mxu0 0.0
  %4091 = vmatpush.msra.mxu0 0.0
  %4092 = vmatpush.msra.mxu0 0.0
  %4093 = vmatpush.msra.mxu0 0.0
  %4094 = vmatpush.msra.mxu0 0.0
  %4095 = vmatpush.msra.mxu0 0.0
  %4096 = vmatpush.msra.mxu0 0.0
  %4097 = vmatpush.msra.mxu0 0.0
  %4098 = vmatpush.msra.mxu0 0.0
  %4099 = vmatpush.msra.mxu0 0.0
  %4100 = vmatpush.msra.mxu0 0.0
  %4101 = vmatpush.msra.mxu0 0.0
  %4102 = vmatpush.msra.mxu0 0.0
  %4103 = vmatpush.msra.mxu0 0.0
  %4104 = vmatpush.msra.mxu0 0.0
  %4105 = vmatpush.msra.mxu0 %v4085
  %4106 = vmatmul.f32.gmra.mxu0 %v4088
  %v4107 = vpop.f32.mrf.mxu0
  %v4108 = vadd.f32 0.0, %v4107
  %4109 = vdwg.mxu0
  %v4111 = vsel %vm215, %v4082, 0
  %v4114 = vsel %vm215, %v4108, 0
  %4116 = vmatpush.msra.mxu0 0.0
  %4117 = vmatpush.msra.mxu0 0.0
  %4118 = vmatpush.msra.mxu0 0.0
  %4119 = vmatpush.msra.mxu0 0.0
  %4120 = vmatpush.msra.mxu0 0.0
  %4121 = vmatpush.msra.mxu0 0.0
  %4122 = vmatpush.msra.mxu0 0.0
  %4123 = vmatpush.msra.mxu0 0.0
  %4124 = vmatpush.msra.mxu0 0.0
  %4125 = vmatpush.msra.mxu0 0.0
  %4126 = vmatpush.msra.mxu0 0.0
  %4127 = vmatpush.msra.mxu0 0.0
  %4128 = vmatpush.msra.mxu0 0.0
  %4129 = vmatpush.msra.mxu0 0.0
  %4130 = vmatpush.msra.mxu0 0.0
  %4131 = vmatpush.msra.mxu0 %v3660
  %4132 = vmatmul.f32.gmra.mxu0 %v4111
  %v4133 = vpop.f32.mrf.mxu0
  %v4134 = vadd.f32 0.0, %v4133
  %4135 = vmatmul.f32.gmra.mxu0 %v4114
  %v4136 = vpop.f32.mrf.mxu0
  %v4137 = vadd.f32 0.0, %v4136
  %4138 = vdwg.mxu0
  %v4139 = vadd.f32 %v3975, %v4134
  %v4140 = vadd.f32 %v3978, %v4137
  %4141 = vrot.lane.b32.xlu0 %v3652, 104
  %v4142 = vpop.permute.xlu0 %4141
  %4143 = vrot.lane.b32.xlu0 %v3652, 72
  %v4144 = vpop.permute.xlu0 %4143
  %v4145 = vsel %vm215, %v4142, 0
  %v4147 = vsel %vm215, %v4144, 0
  %4149 = vmatpush.xpose.msra.mxu0 0.0
  %4150 = vmatpush.xpose.msra.mxu0 0.0
  %4151 = vmatpush.xpose.msra.mxu0 0.0
  %4152 = vmatpush.xpose.msra.mxu0 0.0
  %4153 = vmatpush.xpose.msra.mxu0 0.0
  %4154 = vmatpush.xpose.msra.mxu0 0.0
  %4155 = vmatpush.xpose.msra.mxu0 0.0
  %4156 = vmatpush.xpose.msra.mxu0 0.0
  %4157 = vmatpush.xpose.msra.mxu0 0.0
  %4158 = vmatpush.xpose.msra.mxu0 0.0
  %4159 = vmatpush.xpose.msra.mxu0 0.0
  %4160 = vmatpush.xpose.msra.mxu0 0.0
  %4161 = vmatpush.xpose.msra.mxu0 0.0
  %4162 = vmatpush.xpose.msra.mxu0 0.0
  %4163 = vmatpush.xpose.msra.mxu0 0.0
  %4164 = vmatpush.xpose.msra.mxu0 %v4147
  %4165 = vmatmul.f32.gmra.mxu0 %v4145
  %v4166 = vpop.f32.mrf.mxu0
  %v4167 = vadd.f32 %v1953, %v4166
  %4168 = vdwg.mxu0
  %4169 = vrot.lane.b32.xlu0 %v3655, 104
  %v4170 = vpop.permute.xlu0 %4169
  %4171 = vrot.lane.b32.xlu0 %v3655, 72
  %v4172 = vpop.permute.xlu0 %4171
  %v4173 = vsel %vm215, %v4170, 0
  %v4175 = vsel %vm215, %v4172, 0
  %4177 = vmatpush.xpose.msra.mxu0 0.0
  %4178 = vmatpush.xpose.msra.mxu0 0.0
  %4179 = vmatpush.xpose.msra.mxu0 0.0
  %4180 = vmatpush.xpose.msra.mxu0 0.0
  %4181 = vmatpush.xpose.msra.mxu0 0.0
  %4182 = vmatpush.xpose.msra.mxu0 0.0
  %4183 = vmatpush.xpose.msra.mxu0 0.0
  %4184 = vmatpush.xpose.msra.mxu0 0.0
  %4185 = vmatpush.xpose.msra.mxu0 0.0
  %4186 = vmatpush.xpose.msra.mxu0 0.0
  %4187 = vmatpush.xpose.msra.mxu0 0.0
  %4188 = vmatpush.xpose.msra.mxu0 0.0
  %4189 = vmatpush.xpose.msra.mxu0 0.0
  %4190 = vmatpush.xpose.msra.mxu0 0.0
  %4191 = vmatpush.xpose.msra.mxu0 0.0
  %4192 = vmatpush.xpose.msra.mxu0 %v4175
  %4193 = vmatmul.f32.gmra.mxu0 %v4173
  %v4194 = vpop.f32.mrf.mxu0
  %v4195 = vadd.f32 %v1954, %v4194
  %4196 = vdwg.mxu0
  %v4197 = vsel %vm215, %v4167, -inf
  %4198 = vmax.xlane.f32.xlu0 %v4197
  %v4199 = vpop.xlane.xlu0 %4198
  %v4200 = vsel %vm215, %v4195, -inf
  %4201 = vmax.xlane.f32.xlu0 %v4200
  %v4202 = vpop.xlane.xlu0 %4201
  %v4203 = vsub.f32 %v4167, %v4199
  %v4204 = vsub.f32 %v4195, %v4202
  %v4205 = vmul.f32 %v4203, 1.442695
  %v4206 = vpow.pop %v4205
  %v4207 = vmul.f32 %v4204, 1.442695
  %v4208 = vpow.pop %v4207
  %v4209 = vsel %vm215, %v4206, 0.0
  %4210 = vadd.xlane.f32.xlu0 %v4209
  %v4211 = vpop.xlane.xlu0 %4210
  %v4212 = vsel %vm215, %v4208, 0.0
  %4213 = vadd.xlane.f32.xlu0 %v4212
  %v4214 = vpop.xlane.xlu0 %4213
  %v4215 = vrcp.pop %v4211
  %v4216 = vrcp.pop %v4214
  %v4217 = vmul.f32 %v4206, %v4215
  %v4218 = vmul.f32 %v4208, %v4216
  %4219 = vrot.lane.b32.xlu0 %v3652, 40
  %v4220 = vpop.permute.xlu0 %4219
  %v4223 = vsel %vm215, %v4217, 0
  %4225 = vmatpush.msra.mxu0 0.0
  %4226 = vmatpush.msra.mxu0 0.0
  %4227 = vmatpush.msra.mxu0 0.0
  %4228 = vmatpush.msra.mxu0 0.0
  %4229 = vmatpush.msra.mxu0 0.0
  %4230 = vmatpush.msra.mxu0 0.0
  %4231 = vmatpush.msra.mxu0 0.0
  %4232 = vmatpush.msra.mxu0 0.0
  %4233 = vmatpush.msra.mxu0 0.0
  %4234 = vmatpush.msra.mxu0 0.0
  %4235 = vmatpush.msra.mxu0 0.0
  %4236 = vmatpush.msra.mxu0 0.0
  %4237 = vmatpush.msra.mxu0 0.0
  %4238 = vmatpush.msra.mxu0 0.0
  %4239 = vmatpush.msra.mxu0 0.0
  %4240 = vmatpush.msra.mxu0 %v4220
  %4241 = vmatmul.f32.gmra.mxu0 %v4223
  %v4242 = vpop.f32.mrf.mxu0
  %v4243 = vadd.f32 0.0, %v4242
  %4244 = vdwg.mxu0
  %4245 = vrot.lane.b32.xlu0 %v3655, 40
  %v4246 = vpop.permute.xlu0 %4245
  %v4249 = vsel %vm215, %v4218, 0
  %4251 = vmatpush.msra.mxu0 0.0
  %4252 = vmatpush.msra.mxu0 0.0
  %4253 = vmatpush.msra.mxu0 0.0
  %4254 = vmatpush.msra.mxu0 0.0
  %4255 = vmatpush.msra.mxu0 0.0
  %4256 = vmatpush.msra.mxu0 0.0
  %4257 = vmatpush.msra.mxu0 0.0
  %4258 = vmatpush.msra.mxu0 0.0
  %4259 = vmatpush.msra.mxu0 0.0
  %4260 = vmatpush.msra.mxu0 0.0
  %4261 = vmatpush.msra.mxu0 0.0
  %4262 = vmatpush.msra.mxu0 0.0
  %4263 = vmatpush.msra.mxu0 0.0
  %4264 = vmatpush.msra.mxu0 0.0
  %4265 = vmatpush.msra.mxu0 0.0
  %4266 = vmatpush.msra.mxu0 %v4246
  %4267 = vmatmul.f32.gmra.mxu0 %v4249
  %v4268 = vpop.f32.mrf.mxu0
  %v4269 = vadd.f32 0.0, %v4268
  %4270 = vdwg.mxu0
  %v4272 = vsel %vm215, %v4243, 0
  %v4275 = vsel %vm215, %v4269, 0
  %4277 = vmatpush.msra.mxu0 0.0
  %4278 = vmatpush.msra.mxu0 0.0
  %4279 = vmatpush.msra.mxu0 0.0
  %4280 = vmatpush.msra.mxu0 0.0
  %4281 = vmatpush.msra.mxu0 0.0
  %4282 = vmatpush.msra.mxu0 0.0
  %4283 = vmatpush.msra.mxu0 0.0
  %4284 = vmatpush.msra.mxu0 0.0
  %4285 = vmatpush.msra.mxu0 0.0
  %4286 = vmatpush.msra.mxu0 0.0
  %4287 = vmatpush.msra.mxu0 0.0
  %4288 = vmatpush.msra.mxu0 0.0
  %4289 = vmatpush.msra.mxu0 0.0
  %4290 = vmatpush.msra.mxu0 0.0
  %4291 = vmatpush.msra.mxu0 0.0
  %4292 = vmatpush.msra.mxu0 %v3661
  %4293 = vmatmul.f32.gmra.mxu0 %v4272
  %v4294 = vpop.f32.mrf.mxu0
  %v4295 = vadd.f32 0.0, %v4294
  %4296 = vmatmul.f32.gmra.mxu0 %v4275
  %v4297 = vpop.f32.mrf.mxu0
  %v4298 = vadd.f32 0.0, %v4297
  %4299 = vdwg.mxu0
  %v4300 = vadd.f32 %v4139, %v4295
  %v4301 = vadd.f32 %v4140, %v4298
  %v4303 = vperm.slane %v3663, 0
  %v4305 = vadd.f32 %v4300, %v4303
  %v4306 = vadd.f32 %v4301, %v4303
  %v4307 = vadd.f32 %v3616, %v4305
  %v4308 = vadd.f32 %v3617, %v4306
  %s4309 = scalar_lea.vmem %s43, 1
  %v4310 = vld [vmem:[%s4309] sm:$0x1]
  %s4311 = scalar_lea.vmem %s45, 1
  %v4312 = vld [vmem:[%s4311] sm:$0x1]
  %v4313 = vsel %vm177, %v4307, 0.0
  %4314 = vadd.xlane.f32.xlu0 %v4313
  %v4315 = vpop.xlane.xlu0 %4314
  %v4316 = vsel %vm177, %v4308, 0.0
  %4317 = vadd.xlane.f32.xlu0 %v4316
  %v4318 = vpop.xlane.xlu0 %4317
  %v4319 = vmul.f32 %v4315, %v872
  %v4320 = vmul.f32 %v4318, %v872
  %v4321 = vsub.f32 %v4307, %v4319
  %v4322 = vsub.f32 %v4308, %v4320
  %v4323 = vmul.f32 %v4321, %v4321
  %v4324 = vmul.f32 %v4322, %v4322
  %v4325 = vsel %vm177, %v4323, 0.0
  %4326 = vadd.xlane.f32.xlu0 %v4325
  %v4327 = vpop.xlane.xlu0 %4326
  %v4328 = vsel %vm177, %v4324, 0.0
  %4329 = vadd.xlane.f32.xlu0 %v4328
  %v4330 = vpop.xlane.xlu0 %4329
  %v4331 = vmul.f32 %v4327, %v872
  %v4332 = vmul.f32 %v4330, %v872
  %v4333 = vadd.f32 %v4331, 1e-05
  %v4334 = vadd.f32 %v4332, 1e-05
  %v4335 = vrsqrt.pop %v4333
  %v4336 = vmul.f32 %v4335, %v4333
  %v4337 = vmul.f32 %v4336, %v4335
  %v4338 = vmul.f32 0.5, %v4337
  %v4339 = vsub.f32 1.5, %v4338
  %v4340 = vmul.f32 %v4335, %v4339
  %vm4341 = vweird.f32 %v4333
  %vm4342 = vweird.f32 %v4335
  %vm4343 = vmor %vm4341, %vm4342
  %v4344 = vsel %vm4343, %v4335, %v4340
  %v4345 = vrsqrt.pop %v4334
  %v4346 = vmul.f32 %v4345, %v4334
  %v4347 = vmul.f32 %v4346, %v4345
  %v4348 = vmul.f32 0.5, %v4347
  %v4349 = vsub.f32 1.5, %v4348
  %v4350 = vmul.f32 %v4345, %v4349
  %vm4351 = vweird.f32 %v4334
  %vm4352 = vweird.f32 %v4345
  %vm4353 = vmor %vm4351, %vm4352
  %v4354 = vsel %vm4353, %v4345, %v4350
  %v4355 = vmul.f32 %v4321, %v4344
  %v4356 = vmul.f32 %v4322, %v4354
  %v4358 = vperm.slane %v4310, 0
  %v4360 = vmul.f32 %v4355, %v4358
  %v4361 = vmul.f32 %v4356, %v4358
  %v4363 = vperm.slane %v4312, 0
  %v4365 = vadd.f32 %v4360, %v4363
  %v4366 = vadd.f32 %v4361, %v4363
  %s4367 = scalar_lea.vmem %s47, 32
  %v4368 = vld [vmem:[%s4367] sm:$0xff]
  %v4369 = vld [vmem:[%s4367 + $0x8] sm:$0xff]
  %v4370 = vld [vmem:[%s4367 + $0x10] sm:$0xff]
  %v4371 = vld [vmem:[%s4367 + $0x18] sm:$0xff]
  %s4372 = scalar_lea.vmem %s49, 1
  %v4373 = vld [vmem:[%s4372] sm:$0x1]
  %v4375 = vperm.slane %v4373, 0
  %v4378 = vsel %vm177, %v4365, 0
  %v4381 = vsel %vm177, %v4366, 0
  %4383 = vmatpush.msra.mxu0 0.0
  %4384 = vmatpush.msra.mxu0 0.0
  %4385 = vmatpush.msra.mxu0 0.0
  %4386 = vmatpush.msra.mxu0 0.0
  %4387 = vmatpush.msra.mxu0 0.0
  %4388 = vmatpush.msra.mxu0 0.0
  %4389 = vmatpush.msra.mxu0 0.0
  %4390 = vmatpush.msra.mxu0 0.0
  %4391 = vmatpush.msra.mxu0 0.0
  %4392 = vmatpush.msra.mxu0 0.0
  %4393 = vmatpush.msra.mxu0 0.0
  %4394 = vmatpush.msra.mxu0 0.0
  %4395 = vmatpush.msra.mxu0 %v4371
  %4396 = vmatpush.msra.mxu0 %v4370
  %4397 = vmatpush.msra.mxu0 %v4369
  %4398 = vmatpush.msra.mxu0 %v4368
  %4399 = vmatmul.f32.gmra.mxu0 %v4378
  %v4400 = vpop.f32.mrf.mxu0
  %v4401 = vadd.f32 %v4375, %v4400
  %4402 = vmatmul.f32.gmra.mxu0 %v4381
  %v4403 = vpop.f32.mrf.mxu0
  %v4404 = vadd.f32 %v4375, %v4403
  %4405 = vdwg.mxu0
  %s4406 = scalar_lea.vmem %s55, 32
  %v4407 = vld [vmem:[%s4406] sm:$0xff]
  %v4408 = vld [vmem:[%s4406 + $0x8] sm:$0xff]
  %v4409 = vld [vmem:[%s4406 + $0x10] sm:$0xff]
  %v4410 = vld [vmem:[%s4406 + $0x18] sm:$0xff]
  %s4411 = scalar_lea.vmem %s57, 1
  %v4412 = vld [vmem:[%s4411] sm:$0x1]
  %4413 = vrot.lane.b32.xlu0 %v1989, 64
  %v4414 = vpop.permute.xlu0 %4413
  %v4416 = vsel %vm215, %v4401, 0
  %v4418 = vsel %vm215, %v4414, 0
  %4420 = vmatpush.xpose.msra.mxu0 0.0
  %4421 = vmatpush.xpose.msra.mxu0 0.0
  %4422 = vmatpush.xpose.msra.mxu0 0.0
  %4423 = vmatpush.xpose.msra.mxu0 0.0
  %4424 = vmatpush.xpose.msra.mxu0 0.0
  %4425 = vmatpush.xpose.msra.mxu0 0.0
  %4426 = vmatpush.xpose.msra.mxu0 0.0
  %4427 = vmatpush.xpose.msra.mxu0 0.0
  %4428 = vmatpush.xpose.msra.mxu0 0.0
  %4429 = vmatpush.xpose.msra.mxu0 0.0
  %4430 = vmatpush.xpose.msra.mxu0 0.0
  %4431 = vmatpush.xpose.msra.mxu0 0.0
  %4432 = vmatpush.xpose.msra.mxu0 0.0
  %4433 = vmatpush.xpose.msra.mxu0 0.0
  %4434 = vmatpush.xpose.msra.mxu0 0.0
  %4435 = vmatpush.xpose.msra.mxu0 %v4418
  %4436 = vmatmul.f32.gmra.mxu0 %v4416
  %v4437 = vpop.f32.mrf.mxu0
  %v4438 = vadd.f32 %v1955, %v4437
  %4439 = vdwg.mxu0
  %4440 = vrot.lane.b32.xlu0 %v1992, 64
  %v4441 = vpop.permute.xlu0 %4440
  %v4443 = vsel %vm215, %v4404, 0
  %v4445 = vsel %vm215, %v4441, 0
  %4447 = vmatpush.xpose.msra.mxu0 0.0
  %4448 = vmatpush.xpose.msra.mxu0 0.0
  %4449 = vmatpush.xpose.msra.mxu0 0.0
  %4450 = vmatpush.xpose.msra.mxu0 0.0
  %4451 = vmatpush.xpose.msra.mxu0 0.0
  %4452 = vmatpush.xpose.msra.mxu0 0.0
  %4453 = vmatpush.xpose.msra.mxu0 0.0
  %4454 = vmatpush.xpose.msra.mxu0 0.0
  %4455 = vmatpush.xpose.msra.mxu0 0.0
  %4456 = vmatpush.xpose.msra.mxu0 0.0
  %4457 = vmatpush.xpose.msra.mxu0 0.0
  %4458 = vmatpush.xpose.msra.mxu0 0.0
  %4459 = vmatpush.xpose.msra.mxu0 0.0
  %4460 = vmatpush.xpose.msra.mxu0 0.0
  %4461 = vmatpush.xpose.msra.mxu0 0.0
  %4462 = vmatpush.xpose.msra.mxu0 %v4445
  %4463 = vmatmul.f32.gmra.mxu0 %v4443
  %v4464 = vpop.f32.mrf.mxu0
  %v4465 = vadd.f32 %v1956, %v4464
  %4466 = vdwg.mxu0
  %v4467 = vsel %vm215, %v4438, -inf
  %4468 = vmax.xlane.f32.xlu0 %v4467
  %v4469 = vpop.xlane.xlu0 %4468
  %v4470 = vsel %vm215, %v4465, -inf
  %4471 = vmax.xlane.f32.xlu0 %v4470
  %v4472 = vpop.xlane.xlu0 %4471
  %v4473 = vsub.f32 %v4438, %v4469
  %v4474 = vsub.f32 %v4465, %v4472
  %v4475 = vmul.f32 %v4473, 1.442695
  %v4476 = vpow.pop %v4475
  %v4477 = vmul.f32 %v4474, 1.442695
  %v4478 = vpow.pop %v4477
  %v4479 = vsel %vm215, %v4476, 0.0
  %4480 = vadd.xlane.f32.xlu0 %v4479
  %v4481 = vpop.xlane.xlu0 %4480
  %v4482 = vsel %vm215, %v4478, 0.0
  %4483 = vadd.xlane.f32.xlu0 %v4482
  %v4484 = vpop.xlane.xlu0 %4483
  %v4485 = vrcp.pop %v4481
  %v4486 = vmul.f32 %v4481, %v4485
  %v4487 = vsub.f32 1.0, %v4486
  %v4488 = vmul.f32 %v4485, %v4487
  %v4489 = vadd.f32 %v4485, %v4488
  %vm4490 = vweird.f32 %v4481
  %vm4491 = vweird.f32 %v4485
  %vm4492 = vmor %vm4490, %vm4491
  %v4493 = vsel %vm4492, %v4485, %v4489
  %v4494 = vand.u32 2147483647, %v4481
  %vm4495 = vcmp.eq.f32.partialorder %v4494, 8.507059e+37
  %v4496 = vand.u32 %v4481, 2147483648
  %v4497 = vor.u32 1.1754944e-38, %v4496
  %v4498 = vsel %vm4495, %v4497, %v4493
  %v4499 = vmul.f32 %v4476, %v4498
  %v4500 = vrcp.pop %v4484
  %v4501 = vmul.f32 %v4484, %v4500
  %v4502 = vsub.f32 1.0, %v4501
  %v4503 = vmul.f32 %v4500, %v4502
  %v4504 = vadd.f32 %v4500, %v4503
  %vm4505 = vweird.f32 %v4484
  %vm4506 = vweird.f32 %v4500
  %vm4507 = vmor %vm4505, %vm4506
  %v4508 = vsel %vm4507, %v4500, %v4504
  %v4509 = vand.u32 2147483647, %v4484
  %vm4510 = vcmp.eq.f32.partialorder %v4509, 8.507059e+37
  %v4511 = vand.u32 %v4484, 2147483648
  %v4512 = vor.u32 1.1754944e-38, %v4511
  %v4513 = vsel %vm4510, %v4512, %v4508
  %v4514 = vmul.f32 %v4478, %v4513
  %4515 = vst.msk [vmem:[%s81] sm:$0xff] %vm215, %v4499
  %4516 = vst.msk [vmem:[%s81 + $0x8] sm:$0xff] %vm215, %v4514
  %4517 = vrot.lane.b32.xlu0 %v1989, 32
  %v4518 = vpop.permute.xlu0 %4517
  %v4521 = vsel %vm215, %v4499, 0
  %4523 = vmatpush.msra.mxu0 0.0
  %4524 = vmatpush.msra.mxu0 0.0
  %4525 = vmatpush.msra.mxu0 0.0
  %4526 = vmatpush.msra.mxu0 0.0
  %4527 = vmatpush.msra.mxu0 0.0
  %4528 = vmatpush.msra.mxu0 0.0
  %4529 = vmatpush.msra.mxu0 0.0
  %4530 = vmatpush.msra.mxu0 0.0
  %4531 = vmatpush.msra.mxu0 0.0
  %4532 = vmatpush.msra.mxu0 0.0
  %4533 = vmatpush.msra.mxu0 0.0
  %4534 = vmatpush.msra.mxu0 0.0
  %4535 = vmatpush.msra.mxu0 0.0
  %4536 = vmatpush.msra.mxu0 0.0
  %4537 = vmatpush.msra.mxu0 0.0
  %4538 = vmatpush.msra.mxu0 %v4518
  %4539 = vmatmul.f32.gmra.mxu0 %v4521
  %v4540 = vpop.f32.mrf.mxu0
  %v4541 = vadd.f32 0.0, %v4540
  %4542 = vdwg.mxu0
  %4543 = vrot.lane.b32.xlu0 %v1992, 32
  %v4544 = vpop.permute.xlu0 %4543
  %v4547 = vsel %vm215, %v4514, 0
  %4549 = vmatpush.msra.mxu0 0.0
  %4550 = vmatpush.msra.mxu0 0.0
  %4551 = vmatpush.msra.mxu0 0.0
  %4552 = vmatpush.msra.mxu0 0.0
  %4553 = vmatpush.msra.mxu0 0.0
  %4554 = vmatpush.msra.mxu0 0.0
  %4555 = vmatpush.msra.mxu0 0.0
  %4556 = vmatpush.msra.mxu0 0.0
  %4557 = vmatpush.msra.mxu0 0.0
  %4558 = vmatpush.msra.mxu0 0.0
  %4559 = vmatpush.msra.mxu0 0.0
  %4560 = vmatpush.msra.mxu0 0.0
  %4561 = vmatpush.msra.mxu0 0.0
  %4562 = vmatpush.msra.mxu0 0.0
  %4563 = vmatpush.msra.mxu0 0.0
  %4564 = vmatpush.msra.mxu0 %v4544
  %4565 = vmatmul.f32.gmra.mxu0 %v4547
  %v4566 = vpop.f32.mrf.mxu0
  %v4567 = vadd.f32 0.0, %v4566
  %4568 = vdwg.mxu0
  %4569 = vrot.lane.b32.xlu0 %v4401, 120
  %v4570 = vpop.permute.xlu0 %4569
  %4571 = vrot.lane.b32.xlu0 %v1989, 56
  %v4572 = vpop.permute.xlu0 %4571
  %v4573 = vsel %vm215, %v4570, 0
  %v4575 = vsel %vm215, %v4572, 0
  %4577 = vmatpush.xpose.msra.mxu0 0.0
  %4578 = vmatpush.xpose.msra.mxu0 0.0
  %4579 = vmatpush.xpose.msra.mxu0 0.0
  %4580 = vmatpush.xpose.msra.mxu0 0.0
  %4581 = vmatpush.xpose.msra.mxu0 0.0
  %4582 = vmatpush.xpose.msra.mxu0 0.0
  %4583 = vmatpush.xpose.msra.mxu0 0.0
  %4584 = vmatpush.xpose.msra.mxu0 0.0
  %4585 = vmatpush.xpose.msra.mxu0 0.0
  %4586 = vmatpush.xpose.msra.mxu0 0.0
  %4587 = vmatpush.xpose.msra.mxu0 0.0
  %4588 = vmatpush.xpose.msra.mxu0 0.0
  %4589 = vmatpush.xpose.msra.mxu0 0.0
  %4590 = vmatpush.xpose.msra.mxu0 0.0
  %4591 = vmatpush.xpose.msra.mxu0 0.0
  %4592 = vmatpush.xpose.msra.mxu0 %v4575
  %4593 = vmatmul.f32.gmra.mxu0 %v4573
  %v4594 = vpop.f32.mrf.mxu0
  %v4595 = vadd.f32 %v1955, %v4594
  %4596 = vdwg.mxu0
  %4597 = vrot.lane.b32.xlu0 %v4404, 120
  %v4598 = vpop.permute.xlu0 %4597
  %4599 = vrot.lane.b32.xlu0 %v1992, 56
  %v4600 = vpop.permute.xlu0 %4599
  %v4601 = vsel %vm215, %v4598, 0
  %v4603 = vsel %vm215, %v4600, 0
  %4605 = vmatpush.xpose.msra.mxu0 0.0
  %4606 = vmatpush.xpose.msra.mxu0 0.0
  %4607 = vmatpush.xpose.msra.mxu0 0.0
  %4608 = vmatpush.xpose.msra.mxu0 0.0
  %4609 = vmatpush.xpose.msra.mxu0 0.0
  %4610 = vmatpush.xpose.msra.mxu0 0.0
  %4611 = vmatpush.xpose.msra.mxu0 0.0
  %4612 = vmatpush.xpose.msra.mxu0 0.0
  %4613 = vmatpush.xpose.msra.mxu0 0.0
  %4614 = vmatpush.xpose.msra.mxu0 0.0
  %4615 = vmatpush.xpose.msra.mxu0 0.0
  %4616 = vmatpush.xpose.msra.mxu0 0.0
  %4617 = vmatpush.xpose.msra.mxu0 0.0
  %4618 = vmatpush.xpose.msra.mxu0 0.0
  %4619 = vmatpush.xpose.msra.mxu0 0.0
  %4620 = vmatpush.xpose.msra.mxu0 %v4603
  %4621 = vmatmul.f32.gmra.mxu0 %v4601
  %v4622 = vpop.f32.mrf.mxu0
  %v4623 = vadd.f32 %v1956, %v4622
  %4624 = vdwg.mxu0
  %v4625 = vsel %vm215, %v4595, -inf
  %4626 = vmax.xlane.f32.xlu0 %v4625
  %v4627 = vpop.xlane.xlu0 %4626
  %v4628 = vsel %vm215, %v4623, -inf
  %4629 = vmax.xlane.f32.xlu0 %v4628
  %v4630 = vpop.xlane.xlu0 %4629
  %v4631 = vsub.f32 %v4595, %v4627
  %v4632 = vsub.f32 %v4623, %v4630
  %v4633 = vmul.f32 %v4631, 1.442695
  %v4634 = vpow.pop %v4633
  %v4635 = vmul.f32 %v4632, 1.442695
  %v4636 = vpow.pop %v4635
  %v4637 = vsel %vm215, %v4634, 0.0
  %4638 = vadd.xlane.f32.xlu0 %v4637
  %v4639 = vpop.xlane.xlu0 %4638
  %v4640 = vsel %vm215, %v4636, 0.0
  %4641 = vadd.xlane.f32.xlu0 %v4640
  %v4642 = vpop.xlane.xlu0 %4641
  %v4643 = vrcp.pop %v4639
  %v4644 = vmul.f32 %v4639, %v4643
  %v4645 = vsub.f32 1.0, %v4644
  %v4646 = vmul.f32 %v4643, %v4645
  %v4647 = vadd.f32 %v4643, %v4646
  %vm4648 = vweird.f32 %v4639
  %vm4649 = vweird.f32 %v4643
  %vm4650 = vmor %vm4648, %vm4649
  %v4651 = vsel %vm4650, %v4643, %v4647
  %v4652 = vand.u32 2147483647, %v4639
  %vm4653 = vcmp.eq.f32.partialorder %v4652, 8.507059e+37
  %v4654 = vand.u32 %v4639, 2147483648
  %v4655 = vor.u32 1.1754944e-38, %v4654
  %v4656 = vsel %vm4653, %v4655, %v4651
  %v4657 = vmul.f32 %v4634, %v4656
  %v4658 = vrcp.pop %v4642
  %v4659 = vmul.f32 %v4642, %v4658
  %v4660 = vsub.f32 1.0, %v4659
  %v4661 = vmul.f32 %v4658, %v4660
  %v4662 = vadd.f32 %v4658, %v4661
  %vm4663 = vweird.f32 %v4642
  %vm4664 = vweird.f32 %v4658
  %vm4665 = vmor %vm4663, %vm4664
  %v4666 = vsel %vm4665, %v4658, %v4662
  %v4667 = vand.u32 2147483647, %v4642
  %vm4668 = vcmp.eq.f32.partialorder %v4667, 8.507059e+37
  %v4669 = vand.u32 %v4642, 2147483648
  %v4670 = vor.u32 1.1754944e-38, %v4669
  %v4671 = vsel %vm4668, %v4670, %v4666
  %v4672 = vmul.f32 %v4636, %v4671
  %s4673 = scalar_lea.vmem %s81, 16
  %4674 = vst.msk [vmem:[%s4673] sm:$0xff] %vm215, %v4657
  %4675 = vst.msk [vmem:[%s4673 + $0x8] sm:$0xff] %vm215, %v4672
  %4676 = vrot.lane.b32.xlu0 %v1989, 24
  %v4677 = vpop.permute.xlu0 %4676
  %v4680 = vsel %vm215, %v4657, 0
  %4682 = vmatpush.msra.mxu0 0.0
  %4683 = vmatpush.msra.mxu0 0.0
  %4684 = vmatpush.msra.mxu0 0.0
  %4685 = vmatpush.msra.mxu0 0.0
  %4686 = vmatpush.msra.mxu0 0.0
  %4687 = vmatpush.msra.mxu0 0.0
  %4688 = vmatpush.msra.mxu0 0.0
  %4689 = vmatpush.msra.mxu0 0.0
  %4690 = vmatpush.msra.mxu0 0.0
  %4691 = vmatpush.msra.mxu0 0.0
  %4692 = vmatpush.msra.mxu0 0.0
  %4693 = vmatpush.msra.mxu0 0.0
  %4694 = vmatpush.msra.mxu0 0.0
  %4695 = vmatpush.msra.mxu0 0.0
  %4696 = vmatpush.msra.mxu0 0.0
  %4697 = vmatpush.msra.mxu0 %v4677
  %4698 = vmatmul.f32.gmra.mxu0 %v4680
  %v4699 = vpop.f32.mrf.mxu0
  %v4700 = vadd.f32 0.0, %v4699
  %4701 = vdwg.mxu0
  %4702 = vrot.lane.b32.xlu0 %v1992, 24
  %v4703 = vpop.permute.xlu0 %4702
  %v4706 = vsel %vm215, %v4672, 0
  %4708 = vmatpush.msra.mxu0 0.0
  %4709 = vmatpush.msra.mxu0 0.0
  %4710 = vmatpush.msra.mxu0 0.0
  %4711 = vmatpush.msra.mxu0 0.0
  %4712 = vmatpush.msra.mxu0 0.0
  %4713 = vmatpush.msra.mxu0 0.0
  %4714 = vmatpush.msra.mxu0 0.0
  %4715 = vmatpush.msra.mxu0 0.0
  %4716 = vmatpush.msra.mxu0 0.0
  %4717 = vmatpush.msra.mxu0 0.0
  %4718 = vmatpush.msra.mxu0 0.0
  %4719 = vmatpush.msra.mxu0 0.0
  %4720 = vmatpush.msra.mxu0 0.0
  %4721 = vmatpush.msra.mxu0 0.0
  %4722 = vmatpush.msra.mxu0 0.0
  %4723 = vmatpush.msra.mxu0 %v4703
  %4724 = vmatmul.f32.gmra.mxu0 %v4706
  %v4725 = vpop.f32.mrf.mxu0
  %v4726 = vadd.f32 0.0, %v4725
  %4727 = vdwg.mxu0
  %v4729 = vsel %vm215, %v4700, 0
  %v4732 = vsel %vm215, %v4726, 0
  %4734 = vmatpush.msra.mxu0 0.0
  %4735 = vmatpush.msra.mxu0 0.0
  %4736 = vmatpush.msra.mxu0 0.0
  %4737 = vmatpush.msra.mxu0 0.0
  %4738 = vmatpush.msra.mxu0 0.0
  %4739 = vmatpush.msra.mxu0 0.0
  %4740 = vmatpush.msra.mxu0 0.0
  %4741 = vmatpush.msra.mxu0 0.0
  %4742 = vmatpush.msra.mxu0 0.0
  %4743 = vmatpush.msra.mxu0 0.0
  %4744 = vmatpush.msra.mxu0 0.0
  %4745 = vmatpush.msra.mxu0 0.0
  %4746 = vmatpush.msra.mxu0 0.0
  %4747 = vmatpush.msra.mxu0 0.0
  %4748 = vmatpush.msra.mxu0 0.0
  %4749 = vmatpush.msra.mxu0 %v4408
  %4750 = vmatmul.f32.gmra.mxu0 %v4729
  %v4751 = vpop.f32.mrf.mxu0
  %v4752 = vadd.f32 0.0, %v4751
  %4753 = vmatmul.f32.gmra.mxu0 %v4732
  %v4754 = vpop.f32.mrf.mxu0
  %v4755 = vadd.f32 0.0, %v4754
  %4756 = vdwg.mxu0
  %v4758 = vsel %vm215, %v4541, 0
  %v4761 = vsel %vm215, %v4567, 0
  %4763 = vmatpush.msra.mxu0 0.0
  %4764 = vmatpush.msra.mxu0 0.0
  %4765 = vmatpush.msra.mxu0 0.0
  %4766 = vmatpush.msra.mxu0 0.0
  %4767 = vmatpush.msra.mxu0 0.0
  %4768 = vmatpush.msra.mxu0 0.0
  %4769 = vmatpush.msra.mxu0 0.0
  %4770 = vmatpush.msra.mxu0 0.0
  %4771 = vmatpush.msra.mxu0 0.0
  %4772 = vmatpush.msra.mxu0 0.0
  %4773 = vmatpush.msra.mxu0 0.0
  %4774 = vmatpush.msra.mxu0 0.0
  %4775 = vmatpush.msra.mxu0 0.0
  %4776 = vmatpush.msra.mxu0 0.0
  %4777 = vmatpush.msra.mxu0 0.0
  %4778 = vmatpush.msra.mxu0 %v4407
  %4779 = vmatmul.f32.gmra.mxu0 %v4758
  %v4780 = vpop.f32.mrf.mxu0
  %v4781 = vadd.f32 %v4752, %v4780
  %4782 = vmatmul.f32.gmra.mxu0 %v4761
  %v4783 = vpop.f32.mrf.mxu0
  %v4784 = vadd.f32 %v4755, %v4783
  %4785 = vdwg.mxu0
  %4786 = vrot.lane.b32.xlu0 %v4401, 112
  %v4787 = vpop.permute.xlu0 %4786
  %4788 = vrot.lane.b32.xlu0 %v1989, 48
  %v4789 = vpop.permute.xlu0 %4788
  %v4790 = vsel %vm215, %v4787, 0
  %v4792 = vsel %vm215, %v4789, 0
  %4794 = vmatpush.xpose.msra.mxu0 0.0
  %4795 = vmatpush.xpose.msra.mxu0 0.0
  %4796 = vmatpush.xpose.msra.mxu0 0.0
  %4797 = vmatpush.xpose.msra.mxu0 0.0
  %4798 = vmatpush.xpose.msra.mxu0 0.0
  %4799 = vmatpush.xpose.msra.mxu0 0.0
  %4800 = vmatpush.xpose.msra.mxu0 0.0
  %4801 = vmatpush.xpose.msra.mxu0 0.0
  %4802 = vmatpush.xpose.msra.mxu0 0.0
  %4803 = vmatpush.xpose.msra.mxu0 0.0
  %4804 = vmatpush.xpose.msra.mxu0 0.0
  %4805 = vmatpush.xpose.msra.mxu0 0.0
  %4806 = vmatpush.xpose.msra.mxu0 0.0
  %4807 = vmatpush.xpose.msra.mxu0 0.0
  %4808 = vmatpush.xpose.msra.mxu0 0.0
  %4809 = vmatpush.xpose.msra.mxu0 %v4792
  %4810 = vmatmul.f32.gmra.mxu0 %v4790
  %v4811 = vpop.f32.mrf.mxu0
  %v4812 = vadd.f32 %v1955, %v4811
  %4813 = vdwg.mxu0
  %4814 = vrot.lane.b32.xlu0 %v4404, 112
  %v4815 = vpop.permute.xlu0 %4814
  %4816 = vrot.lane.b32.xlu0 %v1992, 48
  %v4817 = vpop.permute.xlu0 %4816
  %v4818 = vsel %vm215, %v4815, 0
  %v4820 = vsel %vm215, %v4817, 0
  %4822 = vmatpush.xpose.msra.mxu0 0.0
  %4823 = vmatpush.xpose.msra.mxu0 0.0
  %4824 = vmatpush.xpose.msra.mxu0 0.0
  %4825 = vmatpush.xpose.msra.mxu0 0.0
  %4826 = vmatpush.xpose.msra.mxu0 0.0
  %4827 = vmatpush.xpose.msra.mxu0 0.0
  %4828 = vmatpush.xpose.msra.mxu0 0.0
  %4829 = vmatpush.xpose.msra.mxu0 0.0
  %4830 = vmatpush.xpose.msra.mxu0 0.0
  %4831 = vmatpush.xpose.msra.mxu0 0.0
  %4832 = vmatpush.xpose.msra.mxu0 0.0
  %4833 = vmatpush.xpose.msra.mxu0 0.0
  %4834 = vmatpush.xpose.msra.mxu0 0.0
  %4835 = vmatpush.xpose.msra.mxu0 0.0
  %4836 = vmatpush.xpose.msra.mxu0 0.0
  %4837 = vmatpush.xpose.msra.mxu0 %v4820
  %4838 = vmatmul.f32.gmra.mxu0 %v4818
  %v4839 = vpop.f32.mrf.mxu0
  %v4840 = vadd.f32 %v1956, %v4839
  %4841 = vdwg.mxu0
  %v4842 = vsel %vm215, %v4812, -inf
  %4843 = vmax.xlane.f32.xlu0 %v4842
  %v4844 = vpop.xlane.xlu0 %4843
  %v4845 = vsel %vm215, %v4840, -inf
  %4846 = vmax.xlane.f32.xlu0 %v4845
  %v4847 = vpop.xlane.xlu0 %4846
  %v4848 = vsub.f32 %v4812, %v4844
  %v4849 = vsub.f32 %v4840, %v4847
  %v4850 = vmul.f32 %v4848, 1.442695
  %v4851 = vpow.pop %v4850
  %v4852 = vmul.f32 %v4849, 1.442695
  %v4853 = vpow.pop %v4852
  %v4854 = vsel %vm215, %v4851, 0.0
  %4855 = vadd.xlane.f32.xlu0 %v4854
  %v4856 = vpop.xlane.xlu0 %4855
  %v4857 = vsel %vm215, %v4853, 0.0
  %4858 = vadd.xlane.f32.xlu0 %v4857
  %v4859 = vpop.xlane.xlu0 %4858
  %v4860 = vrcp.pop %v4856
  %v4861 = vmul.f32 %v4856, %v4860
  %v4862 = vsub.f32 1.0, %v4861
  %v4863 = vmul.f32 %v4860, %v4862
  %v4864 = vadd.f32 %v4860, %v4863
  %vm4865 = vweird.f32 %v4856
  %vm4866 = vweird.f32 %v4860
  %vm4867 = vmor %vm4865, %vm4866
  %v4868 = vsel %vm4867, %v4860, %v4864
  %v4869 = vand.u32 2147483647, %v4856
  %vm4870 = vcmp.eq.f32.partialorder %v4869, 8.507059e+37
  %v4871 = vand.u32 %v4856, 2147483648
  %v4872 = vor.u32 1.1754944e-38, %v4871
  %v4873 = vsel %vm4870, %v4872, %v4868
  %v4874 = vmul.f32 %v4851, %v4873
  %v4875 = vrcp.pop %v4859
  %v4876 = vmul.f32 %v4859, %v4875
  %v4877 = vsub.f32 1.0, %v4876
  %v4878 = vmul.f32 %v4875, %v4877
  %v4879 = vadd.f32 %v4875, %v4878
  %vm4880 = vweird.f32 %v4859
  %vm4881 = vweird.f32 %v4875
  %vm4882 = vmor %vm4880, %vm4881
  %v4883 = vsel %vm4882, %v4875, %v4879
  %v4884 = vand.u32 2147483647, %v4859
  %vm4885 = vcmp.eq.f32.partialorder %v4884, 8.507059e+37
  %v4886 = vand.u32 %v4859, 2147483648
  %v4887 = vor.u32 1.1754944e-38, %v4886
  %v4888 = vsel %vm4885, %v4887, %v4883
  %v4889 = vmul.f32 %v4853, %v4888
  %s4890 = scalar_lea.vmem %s81, 32
  %4891 = vst.msk [vmem:[%s4890] sm:$0xff] %vm215, %v4874
  %4892 = vst.msk [vmem:[%s4890 + $0x8] sm:$0xff] %vm215, %v4889
  %4893 = vrot.lane.b32.xlu0 %v1989, 16
  %v4894 = vpop.permute.xlu0 %4893
  %v4897 = vsel %vm215, %v4874, 0
  %4899 = vmatpush.msra.mxu0 0.0
  %4900 = vmatpush.msra.mxu0 0.0
  %4901 = vmatpush.msra.mxu0 0.0
  %4902 = vmatpush.msra.mxu0 0.0
  %4903 = vmatpush.msra.mxu0 0.0
  %4904 = vmatpush.msra.mxu0 0.0
  %4905 = vmatpush.msra.mxu0 0.0
  %4906 = vmatpush.msra.mxu0 0.0
  %4907 = vmatpush.msra.mxu0 0.0
  %4908 = vmatpush.msra.mxu0 0.0
  %4909 = vmatpush.msra.mxu0 0.0
  %4910 = vmatpush.msra.mxu0 0.0
  %4911 = vmatpush.msra.mxu0 0.0
  %4912 = vmatpush.msra.mxu0 0.0
  %4913 = vmatpush.msra.mxu0 0.0
  %4914 = vmatpush.msra.mxu0 %v4894
  %4915 = vmatmul.f32.gmra.mxu0 %v4897
  %v4916 = vpop.f32.mrf.mxu0
  %v4917 = vadd.f32 0.0, %v4916
  %4918 = vdwg.mxu0
  %4919 = vrot.lane.b32.xlu0 %v1992, 16
  %v4920 = vpop.permute.xlu0 %4919
  %v4923 = vsel %vm215, %v4889, 0
  %4925 = vmatpush.msra.mxu0 0.0
  %4926 = vmatpush.msra.mxu0 0.0
  %4927 = vmatpush.msra.mxu0 0.0
  %4928 = vmatpush.msra.mxu0 0.0
  %4929 = vmatpush.msra.mxu0 0.0
  %4930 = vmatpush.msra.mxu0 0.0
  %4931 = vmatpush.msra.mxu0 0.0
  %4932 = vmatpush.msra.mxu0 0.0
  %4933 = vmatpush.msra.mxu0 0.0
  %4934 = vmatpush.msra.mxu0 0.0
  %4935 = vmatpush.msra.mxu0 0.0
  %4936 = vmatpush.msra.mxu0 0.0
  %4937 = vmatpush.msra.mxu0 0.0
  %4938 = vmatpush.msra.mxu0 0.0
  %4939 = vmatpush.msra.mxu0 0.0
  %4940 = vmatpush.msra.mxu0 %v4920
  %4941 = vmatmul.f32.gmra.mxu0 %v4923
  %v4942 = vpop.f32.mrf.mxu0
  %v4943 = vadd.f32 0.0, %v4942
  %4944 = vdwg.mxu0
  %v4946 = vsel %vm215, %v4917, 0
  %v4949 = vsel %vm215, %v4943, 0
  %4951 = vmatpush.msra.mxu0 0.0
  %4952 = vmatpush.msra.mxu0 0.0
  %4953 = vmatpush.msra.mxu0 0.0
  %4954 = vmatpush.msra.mxu0 0.0
  %4955 = vmatpush.msra.mxu0 0.0
  %4956 = vmatpush.msra.mxu0 0.0
  %4957 = vmatpush.msra.mxu0 0.0
  %4958 = vmatpush.msra.mxu0 0.0
  %4959 = vmatpush.msra.mxu0 0.0
  %4960 = vmatpush.msra.mxu0 0.0
  %4961 = vmatpush.msra.mxu0 0.0
  %4962 = vmatpush.msra.mxu0 0.0
  %4963 = vmatpush.msra.mxu0 0.0
  %4964 = vmatpush.msra.mxu0 0.0
  %4965 = vmatpush.msra.mxu0 0.0
  %4966 = vmatpush.msra.mxu0 %v4409
  %4967 = vmatmul.f32.gmra.mxu0 %v4946
  %v4968 = vpop.f32.mrf.mxu0
  %v4969 = vadd.f32 0.0, %v4968
  %4970 = vmatmul.f32.gmra.mxu0 %v4949
  %v4971 = vpop.f32.mrf.mxu0
  %v4972 = vadd.f32 0.0, %v4971
  %4973 = vdwg.mxu0
  %v4974 = vadd.f32 %v4781, %v4969
  %v4975 = vadd.f32 %v4784, %v4972
  %4976 = vrot.lane.b32.xlu0 %v4401, 104
  %v4977 = vpop.permute.xlu0 %4976
  %4978 = vrot.lane.b32.xlu0 %v1989, 40
  %v4979 = vpop.permute.xlu0 %4978
  %v4980 = vsel %vm215, %v4977, 0
  %v4982 = vsel %vm215, %v4979, 0
  %4984 = vmatpush.xpose.msra.mxu0 0.0
  %4985 = vmatpush.xpose.msra.mxu0 0.0
  %4986 = vmatpush.xpose.msra.mxu0 0.0
  %4987 = vmatpush.xpose.msra.mxu0 0.0
  %4988 = vmatpush.xpose.msra.mxu0 0.0
  %4989 = vmatpush.xpose.msra.mxu0 0.0
  %4990 = vmatpush.xpose.msra.mxu0 0.0
  %4991 = vmatpush.xpose.msra.mxu0 0.0
  %4992 = vmatpush.xpose.msra.mxu0 0.0
  %4993 = vmatpush.xpose.msra.mxu0 0.0
  %4994 = vmatpush.xpose.msra.mxu0 0.0
  %4995 = vmatpush.xpose.msra.mxu0 0.0
  %4996 = vmatpush.xpose.msra.mxu0 0.0
  %4997 = vmatpush.xpose.msra.mxu0 0.0
  %4998 = vmatpush.xpose.msra.mxu0 0.0
  %4999 = vmatpush.xpose.msra.mxu0 %v4982
  %5000 = vmatmul.f32.gmra.mxu0 %v4980
  %v5001 = vpop.f32.mrf.mxu0
  %v5002 = vadd.f32 %v1955, %v5001
  %5003 = vdwg.mxu0
  %5004 = vrot.lane.b32.xlu0 %v4404, 104
  %v5005 = vpop.permute.xlu0 %5004
  %5006 = vrot.lane.b32.xlu0 %v1992, 40
  %v5007 = vpop.permute.xlu0 %5006
  %v5008 = vsel %vm215, %v5005, 0
  %v5010 = vsel %vm215, %v5007, 0
  %5012 = vmatpush.xpose.msra.mxu0 0.0
  %5013 = vmatpush.xpose.msra.mxu0 0.0
  %5014 = vmatpush.xpose.msra.mxu0 0.0
  %5015 = vmatpush.xpose.msra.mxu0 0.0
  %5016 = vmatpush.xpose.msra.mxu0 0.0
  %5017 = vmatpush.xpose.msra.mxu0 0.0
  %5018 = vmatpush.xpose.msra.mxu0 0.0
  %5019 = vmatpush.xpose.msra.mxu0 0.0
  %5020 = vmatpush.xpose.msra.mxu0 0.0
  %5021 = vmatpush.xpose.msra.mxu0 0.0
  %5022 = vmatpush.xpose.msra.mxu0 0.0
  %5023 = vmatpush.xpose.msra.mxu0 0.0
  %5024 = vmatpush.xpose.msra.mxu0 0.0
  %5025 = vmatpush.xpose.msra.mxu0 0.0
  %5026 = vmatpush.xpose.msra.mxu0 0.0
  %5027 = vmatpush.xpose.msra.mxu0 %v5010
  %5028 = vmatmul.f32.gmra.mxu0 %v5008
  %v5029 = vpop.f32.mrf.mxu0
  %v5030 = vadd.f32 %v1956, %v5029
  %5031 = vdwg.mxu0
  %v5032 = vsel %vm215, %v5002, -inf
  %5033 = vmax.xlane.f32.xlu0 %v5032
  %v5034 = vpop.xlane.xlu0 %5033
  %v5035 = vsel %vm215, %v5030, -inf
  %5036 = vmax.xlane.f32.xlu0 %v5035
  %v5037 = vpop.xlane.xlu0 %5036
  %v5038 = vsub.f32 %v5002, %v5034
  %v5039 = vsub.f32 %v5030, %v5037
  %v5040 = vmul.f32 %v5038, 1.442695
  %v5041 = vpow.pop %v5040
  %v5042 = vmul.f32 %v5039, 1.442695
  %v5043 = vpow.pop %v5042
  %v5044 = vsel %vm215, %v5041, 0.0
  %5045 = vadd.xlane.f32.xlu0 %v5044
  %v5046 = vpop.xlane.xlu0 %5045
  %v5047 = vsel %vm215, %v5043, 0.0
  %5048 = vadd.xlane.f32.xlu0 %v5047
  %v5049 = vpop.xlane.xlu0 %5048
  %v5050 = vrcp.pop %v5046
  %v5051 = vmul.f32 %v5046, %v5050
  %v5052 = vsub.f32 1.0, %v5051
  %v5053 = vmul.f32 %v5050, %v5052
  %v5054 = vadd.f32 %v5050, %v5053
  %vm5055 = vweird.f32 %v5046
  %vm5056 = vweird.f32 %v5050
  %vm5057 = vmor %vm5055, %vm5056
  %v5058 = vsel %vm5057, %v5050, %v5054
  %v5059 = vand.u32 2147483647, %v5046
  %vm5060 = vcmp.eq.f32.partialorder %v5059, 8.507059e+37
  %v5061 = vand.u32 %v5046, 2147483648
  %v5062 = vor.u32 1.1754944e-38, %v5061
  %v5063 = vsel %vm5060, %v5062, %v5058
  %v5064 = vmul.f32 %v5041, %v5063
  %v5065 = vrcp.pop %v5049
  %v5066 = vmul.f32 %v5049, %v5065
  %v5067 = vsub.f32 1.0, %v5066
  %v5068 = vmul.f32 %v5065, %v5067
  %v5069 = vadd.f32 %v5065, %v5068
  %vm5070 = vweird.f32 %v5049
  %vm5071 = vweird.f32 %v5065
  %vm5072 = vmor %vm5070, %vm5071
  %v5073 = vsel %vm5072, %v5065, %v5069
  %v5074 = vand.u32 2147483647, %v5049
  %vm5075 = vcmp.eq.f32.partialorder %v5074, 8.507059e+37
  %v5076 = vand.u32 %v5049, 2147483648
  %v5077 = vor.u32 1.1754944e-38, %v5076
  %v5078 = vsel %vm5075, %v5077, %v5073
  %v5079 = vmul.f32 %v5043, %v5078
  %s5080 = scalar_lea.vmem %s81, 48
  %5081 = vst.msk [vmem:[%s5080] sm:$0xff] %vm215, %v5064
  %5082 = vst.msk [vmem:[%s5080 + $0x8] sm:$0xff] %vm215, %v5079
  %5083 = vrot.lane.b32.xlu0 %v1989, 8
  %v5084 = vpop.permute.xlu0 %5083
  %v5087 = vsel %vm215, %v5064, 0
  %5089 = vmatpush.msra.mxu0 0.0
  %5090 = vmatpush.msra.mxu0 0.0
  %5091 = vmatpush.msra.mxu0 0.0
  %5092 = vmatpush.msra.mxu0 0.0
  %5093 = vmatpush.msra.mxu0 0.0
  %5094 = vmatpush.msra.mxu0 0.0
  %5095 = vmatpush.msra.mxu0 0.0
  %5096 = vmatpush.msra.mxu0 0.0
  %5097 = vmatpush.msra.mxu0 0.0
  %5098 = vmatpush.msra.mxu0 0.0
  %5099 = vmatpush.msra.mxu0 0.0
  %5100 = vmatpush.msra.mxu0 0.0
  %5101 = vmatpush.msra.mxu0 0.0
  %5102 = vmatpush.msra.mxu0 0.0
  %5103 = vmatpush.msra.mxu0 0.0
  %5104 = vmatpush.msra.mxu0 %v5084
  %5105 = vmatmul.f32.gmra.mxu0 %v5087
  %v5106 = vpop.f32.mrf.mxu0
  %v5107 = vadd.f32 0.0, %v5106
  %5108 = vdwg.mxu0
  %5109 = vrot.lane.b32.xlu0 %v1992, 8
  %v5110 = vpop.permute.xlu0 %5109
  %v5113 = vsel %vm215, %v5079, 0
  %5115 = vmatpush.msra.mxu0 0.0
  %5116 = vmatpush.msra.mxu0 0.0
  %5117 = vmatpush.msra.mxu0 0.0
  %5118 = vmatpush.msra.mxu0 0.0
  %5119 = vmatpush.msra.mxu0 0.0
  %5120 = vmatpush.msra.mxu0 0.0
  %5121 = vmatpush.msra.mxu0 0.0
  %5122 = vmatpush.msra.mxu0 0.0
  %5123 = vmatpush.msra.mxu0 0.0
  %5124 = vmatpush.msra.mxu0 0.0
  %5125 = vmatpush.msra.mxu0 0.0
  %5126 = vmatpush.msra.mxu0 0.0
  %5127 = vmatpush.msra.mxu0 0.0
  %5128 = vmatpush.msra.mxu0 0.0
  %5129 = vmatpush.msra.mxu0 0.0
  %5130 = vmatpush.msra.mxu0 %v5110
  %5131 = vmatmul.f32.gmra.mxu0 %v5113
  %v5132 = vpop.f32.mrf.mxu0
  %v5133 = vadd.f32 0.0, %v5132
  %5134 = vdwg.mxu0
  %v5136 = vsel %vm215, %v5107, 0
  %v5139 = vsel %vm215, %v5133, 0
  %5141 = vmatpush.msra.mxu0 0.0
  %5142 = vmatpush.msra.mxu0 0.0
  %5143 = vmatpush.msra.mxu0 0.0
  %5144 = vmatpush.msra.mxu0 0.0
  %5145 = vmatpush.msra.mxu0 0.0
  %5146 = vmatpush.msra.mxu0 0.0
  %5147 = vmatpush.msra.mxu0 0.0
  %5148 = vmatpush.msra.mxu0 0.0
  %5149 = vmatpush.msra.mxu0 0.0
  %5150 = vmatpush.msra.mxu0 0.0
  %5151 = vmatpush.msra.mxu0 0.0
  %5152 = vmatpush.msra.mxu0 0.0
  %5153 = vmatpush.msra.mxu0 0.0
  %5154 = vmatpush.msra.mxu0 0.0
  %5155 = vmatpush.msra.mxu0 0.0
  %5156 = vmatpush.msra.mxu0 %v4410
  %5157 = vmatmul.f32.gmra.mxu0 %v5136
  %v5158 = vpop.f32.mrf.mxu0
  %v5159 = vadd.f32 0.0, %v5158
  %5160 = vmatmul.f32.gmra.mxu0 %v5139
  %v5161 = vpop.f32.mrf.mxu0
  %v5162 = vadd.f32 0.0, %v5161
  %5163 = vdwg.mxu0
  %v5164 = vadd.f32 %v4974, %v5159
  %v5165 = vadd.f32 %v4975, %v5162
  %v5167 = vperm.slane %v4412, 0
  %v5169 = vadd.f32 %v5164, %v5167
  %v5170 = vadd.f32 %v5165, %v5167
  %v5171 = vadd.f32 %v4365, %v5169
  %v5172 = vadd.f32 %v4366, %v5170
  %s5173 = scalar_lea.vmem %s59, 1
  %v5174 = vld [vmem:[%s5173] sm:$0x1]
  %s5175 = scalar_lea.vmem %s61, 1
  %v5176 = vld [vmem:[%s5175] sm:$0x1]
  %v5177 = vsel %vm177, %v5171, 0.0
  %5178 = vadd.xlane.f32.xlu0 %v5177
  %v5179 = vpop.xlane.xlu0 %5178
  %v5180 = vsel %vm177, %v5172, 0.0
  %5181 = vadd.xlane.f32.xlu0 %v5180
  %v5182 = vpop.xlane.xlu0 %5181
  %v5183 = vmul.f32 %v5179, %v872
  %v5184 = vmul.f32 %v5182, %v872
  %v5185 = vsub.f32 %v5171, %v5183
  %v5186 = vsub.f32 %v5172, %v5184
  %v5187 = vmul.f32 %v5185, %v5185
  %v5188 = vmul.f32 %v5186, %v5186
  %v5189 = vsel %vm177, %v5187, 0.0
  %5190 = vadd.xlane.f32.xlu0 %v5189
  %v5191 = vpop.xlane.xlu0 %5190
  %v5192 = vsel %vm177, %v5188, 0.0
  %5193 = vadd.xlane.f32.xlu0 %v5192
  %v5194 = vpop.xlane.xlu0 %5193
  %v5195 = vmul.f32 %v5191, %v872
  %v5196 = vmul.f32 %v5194, %v872
  %v5197 = vadd.f32 %v5195, 1e-05
  %v5198 = vadd.f32 %v5196, 1e-05
  %v5199 = vrsqrt.pop %v5197
  %v5200 = vmul.f32 %v5199, %v5197
  %v5201 = vmul.f32 %v5200, %v5199
  %v5202 = vmul.f32 0.5, %v5201
  %v5203 = vsub.f32 1.5, %v5202
  %v5204 = vmul.f32 %v5199, %v5203
  %vm5205 = vweird.f32 %v5197
  %vm5206 = vweird.f32 %v5199
  %vm5207 = vmor %vm5205, %vm5206
  %v5208 = vsel %vm5207, %v5199, %v5204
  %v5209 = vrsqrt.pop %v5198
  %v5210 = vmul.f32 %v5209, %v5198
  %v5211 = vmul.f32 %v5210, %v5209
  %v5212 = vmul.f32 0.5, %v5211
  %v5213 = vsub.f32 1.5, %v5212
  %v5214 = vmul.f32 %v5209, %v5213
  %vm5215 = vweird.f32 %v5198
  %vm5216 = vweird.f32 %v5209
  %vm5217 = vmor %vm5215, %vm5216
  %v5218 = vsel %vm5217, %v5209, %v5214
  %v5219 = vmul.f32 %v5185, %v5208
  %v5220 = vmul.f32 %v5186, %v5218
  %v5222 = vperm.slane %v5174, 0
  %v5224 = vmul.f32 %v5219, %v5222
  %v5225 = vmul.f32 %v5220, %v5222
  %v5227 = vperm.slane %v5176, 0
  %v5229 = vadd.f32 %v5224, %v5227
  %v5230 = vadd.f32 %v5225, %v5227
  %s5231 = scalar_lea.vmem %s63, 32
  %v5232 = vld [vmem:[%s5231] sm:$0xff]
  %v5233 = vld [vmem:[%s5231 + $0x8] sm:$0xff]
  %v5234 = vld [vmem:[%s5231 + $0x10] sm:$0xff]
  %v5235 = vld [vmem:[%s5231 + $0x18] sm:$0xff]
  %s5236 = scalar_lea.vmem %s65, 1
  %v5237 = vld [vmem:[%s5236] sm:$0x1]
  %v5239 = vperm.slane %v5237, 0
  %v5242 = vsel %vm177, %v5229, 0
  %v5245 = vsel %vm177, %v5230, 0
  %5247 = vmatpush.msra.mxu0 0.0
  %5248 = vmatpush.msra.mxu0 0.0
  %5249 = vmatpush.msra.mxu0 0.0
  %5250 = vmatpush.msra.mxu0 0.0
  %5251 = vmatpush.msra.mxu0 0.0
  %5252 = vmatpush.msra.mxu0 0.0
  %5253 = vmatpush.msra.mxu0 0.0
  %5254 = vmatpush.msra.mxu0 0.0
  %5255 = vmatpush.msra.mxu0 0.0
  %5256 = vmatpush.msra.mxu0 0.0
  %5257 = vmatpush.msra.mxu0 0.0
  %5258 = vmatpush.msra.mxu0 0.0
  %5259 = vmatpush.msra.mxu0 %v5235
  %5260 = vmatpush.msra.mxu0 %v5234
  %5261 = vmatpush.msra.mxu0 %v5233
  %5262 = vmatpush.msra.mxu0 %v5232
  %5263 = vmatmul.f32.gmra.mxu0 %v5242
  %v5264 = vpop.f32.mrf.mxu0
  %v5265 = vadd.f32 %v5239, %v5264
  %5266 = vmatmul.f32.gmra.mxu0 %v5245
  %v5267 = vpop.f32.mrf.mxu0
  %v5268 = vadd.f32 %v5239, %v5267
  %5269 = vdwg.mxu0
  %v5270 = vmax.f32 %v5265, 0.0
  %v5271 = vmax.f32 %v5268, 0.0
  %s5272 = scalar_lea.vmem %s67, 64
  %v5273 = vld [vmem:[%s5272] sm:$0xff]
  %v5274 = vld [vmem:[%s5272 + $0x8] sm:$0xff]
  %v5275 = vld [vmem:[%s5272 + $0x10] sm:$0xff]
  %v5276 = vld [vmem:[%s5272 + $0x18] sm:$0xff]
  %v5277 = vld [vmem:[%s5272 + $0x20] sm:$0xff]
  %v5278 = vld [vmem:[%s5272 + $0x28] sm:$0xff]
  %v5279 = vld [vmem:[%s5272 + $0x30] sm:$0xff]
  %v5280 = vld [vmem:[%s5272 + $0x38] sm:$0xff]
  %s5281 = scalar_lea.vmem %s69, 1
  %v5282 = vld [vmem:[%s5281] sm:$0x1]
  %v5284 = vperm.slane %v5282, 0
  %v5287 = vsel %vm972, %v5270, 0
  %v5290 = vsel %vm972, %v5271, 0
  %5292 = vmatpush.msra.mxu0 0.0
  %5293 = vmatpush.msra.mxu0 0.0
  %5294 = vmatpush.msra.mxu0 0.0
  %5295 = vmatpush.msra.mxu0 0.0
  %5296 = vmatpush.msra.mxu0 0.0
  %5297 = vmatpush.msra.mxu0 0.0
  %5298 = vmatpush.msra.mxu0 0.0
  %5299 = vmatpush.msra.mxu0 0.0
  %5300 = vmatpush.msra.mxu0 %v5280
  %5301 = vmatpush.msra.mxu0 %v5279
  %5302 = vmatpush.msra.mxu0 %v5278
  %5303 = vmatpush.msra.mxu0 %v5277
  %5304 = vmatpush.msra.mxu0 %v5276
  %5305 = vmatpush.msra.mxu0 %v5275
  %5306 = vmatpush.msra.mxu0 %v5274
  %5307 = vmatpush.msra.mxu0 %v5273
  %5308 = vmatmul.f32.gmra.mxu0 %v5287
  %v5309 = vpop.f32.mrf.mxu0
  %v5310 = vadd.f32 %v5284, %v5309
  %5311 = vmatmul.f32.gmra.mxu0 %v5290
  %v5312 = vpop.f32.mrf.mxu0
  %v5313 = vadd.f32 %v5284, %v5312
  %5314 = vdwg.mxu0
  %v5315 = vadd.f32 %v5229, %v5310
  %v5316 = vadd.f32 %v5230, %v5313
  %s5317 = scalar_lea.vmem %s71, 1
  %v5318 = vld [vmem:[%s5317] sm:$0x1]
  %s5319 = scalar_lea.vmem %s73, 1
  %v5320 = vld [vmem:[%s5319] sm:$0x1]
  %v5321 = vsel %vm177, %v5315, 0.0
  %5322 = vadd.xlane.f32.xlu0 %v5321
  %v5323 = vpop.xlane.xlu0 %5322
  %v5324 = vsel %vm177, %v5316, 0.0
  %5325 = vadd.xlane.f32.xlu0 %v5324
  %v5326 = vpop.xlane.xlu0 %5325
  %v5327 = vmul.f32 %v5323, %v872
  %v5328 = vmul.f32 %v5326, %v872
  %v5329 = vsub.f32 %v5315, %v5327
  %v5330 = vsub.f32 %v5316, %v5328
  %v5331 = vmul.f32 %v5329, %v5329
  %v5332 = vmul.f32 %v5330, %v5330
  %v5333 = vsel %vm177, %v5331, 0.0
  %5334 = vadd.xlane.f32.xlu0 %v5333
  %v5335 = vpop.xlane.xlu0 %5334
  %v5336 = vsel %vm177, %v5332, 0.0
  %5337 = vadd.xlane.f32.xlu0 %v5336
  %v5338 = vpop.xlane.xlu0 %5337
  %v5339 = vmul.f32 %v5335, %v872
  %v5340 = vmul.f32 %v5338, %v872
  %v5341 = vadd.f32 %v5339, 1e-05
  %v5342 = vadd.f32 %v5340, 1e-05
  %v5343 = vrsqrt.pop %v5341
  %v5344 = vmul.f32 %v5343, %v5341
  %v5345 = vmul.f32 %v5344, %v5343
  %v5346 = vmul.f32 0.5, %v5345
  %v5347 = vsub.f32 1.5, %v5346
  %v5348 = vmul.f32 %v5343, %v5347
  %vm5349 = vweird.f32 %v5341
  %vm5350 = vweird.f32 %v5343
  %vm5351 = vmor %vm5349, %vm5350
  %v5352 = vsel %vm5351, %v5343, %v5348
  %v5353 = vrsqrt.pop %v5342
  %v5354 = vmul.f32 %v5353, %v5342
  %v5355 = vmul.f32 %v5354, %v5353
  %v5356 = vmul.f32 0.5, %v5355
  %v5357 = vsub.f32 1.5, %v5356
  %v5358 = vmul.f32 %v5353, %v5357
  %vm5359 = vweird.f32 %v5342
  %vm5360 = vweird.f32 %v5353
  %vm5361 = vmor %vm5359, %vm5360
  %v5362 = vsel %vm5361, %v5353, %v5358
  %v5363 = vmul.f32 %v5329, %v5352
  %v5364 = vmul.f32 %v5330, %v5362
  %v5366 = vperm.slane %v5318, 0
  %v5368 = vmul.f32 %v5363, %v5366
  %v5369 = vmul.f32 %v5364, %v5366
  %v5371 = vperm.slane %v5320, 0
  %v5373 = vadd.f32 %v5368, %v5371
  %v5374 = vadd.f32 %v5369, %v5371
  %v5375 = vld [vmem:[%s75] sm:$0xff]
  %v5376 = vld [vmem:[%s75 + $0x8] sm:$0xff]
  %v5377 = vld [vmem:[%s75 + $0x10] sm:$0xff]
  %v5378 = vld [vmem:[%s75 + $0x18] sm:$0xff]
  %v5379 = vld [vmem:[%s77] sm:$0x1]
  %v5381 = vperm.slane %v5379, 0
  %v5384 = vsel %vm177, %v5373, 0
  %v5387 = vsel %vm177, %v5374, 0
  %5389 = vmatpush.msra.mxu0 0.0
  %5390 = vmatpush.msra.mxu0 0.0
  %5391 = vmatpush.msra.mxu0 0.0
  %5392 = vmatpush.msra.mxu0 0.0
  %5393 = vmatpush.msra.mxu0 0.0
  %5394 = vmatpush.msra.mxu0 0.0
  %5395 = vmatpush.msra.mxu0 0.0
  %5396 = vmatpush.msra.mxu0 0.0
  %5397 = vmatpush.msra.mxu0 0.0
  %5398 = vmatpush.msra.mxu0 0.0
  %5399 = vmatpush.msra.mxu0 0.0
  %5400 = vmatpush.msra.mxu0 0.0
  %5401 = vmatpush.msra.mxu0 %v5378
  %5402 = vmatpush.msra.mxu0 %v5377
  %5403 = vmatpush.msra.mxu0 %v5376
  %5404 = vmatpush.msra.mxu0 %v5375
  %5405 = vmatmul.f32.gmra.mxu0 %v5384
  %v5406 = vpop.f32.mrf.mxu0
  %v5407 = vadd.f32 %v5381, %v5406
  %5408 = vmatmul.f32.gmra.mxu0 %v5387
  %v5409 = vpop.f32.mrf.mxu0
  %v5410 = vadd.f32 %v5381, %v5409
  %5411 = vdwg.mxu0
  %5412 = vst [vmem:[%s79] sm:$0xff] %v5407
  %5413 = vst [vmem:[%s79 + $0x8] sm:$0xff] %v5410
  // Predicated region
  $region158: #{seq2seq_forward.1} parent=0 // pred_check
    _
  $region159: #{seq2seq_forward.1} parent=0 // pred_check_branch
    %5415 = sbr.rel (0) target = $region161
  $region160: #{seq2seq_forward.1} parent=0 // pred_region
    _
  $region161: #{seq2seq_forward.1} parent=0 // pred_fallthru
    _
  // Predicated region
  $region162: #{seq2seq_forward.1} parent=0 // pred_check
    _
  $region163: #{seq2seq_forward.1} parent=0 // pred_check_branch
    %5417 = sbr.rel (0) target = $region165
  $region164: #{seq2seq_forward.1} parent=0 // pred_region
    _
  $region165: #{seq2seq_forward.1} parent=0 // pred_fallthru
    _
  // Predicated region
  $region166: #{seq2seq_forward.1} parent=0 // pred_check
    _
  $region167: #{seq2seq_forward.1} parent=0 // pred_check_branch
    %5419 = sbr.rel (0) target = $region169
  $region168: #{seq2seq_forward.1} parent=0 // pred_region
    _
  $region169: #{seq2seq_forward.1} parent=0 // pred_fallthru
    _
  // Predicated region
  $region170: #{seq2seq_forward.1} parent=0 // pred_check
    _
  $region171: #{seq2seq_forward.1} parent=0 // pred_check_branch
    %5421 = sbr.rel (0) target = $region173
  $region172: #{seq2seq_forward.1} parent=0 // pred_region
    _
  $region173: #{seq2seq_forward.1} parent=0 // pred_fallthru
    _

</llo_original>
